<compile_context>
chip_gen: v7x
topology: tpu7x:2x2x1
jax: 0.10.0
libtpu: 0.0.40
codegen_flags: <defaults>
</compile_context>

<pallas_src>
import numpy as np

import jax
import jax.numpy as jnp
from jax.experimental import pallas as pl
from jax.experimental.pallas import tpu as pltpu  # noqa: F401  (TPU backend)

# ----------------------------- configuration --------------------------------
B = 2            # batch
C_IN = 4         # input image channels
H = W = 16       # input spatial size
PATCH = 4        # patch size of the MAE patch-embed conv
EMBED_DIM = 32   # transformer embed dim
NUM_HEADS = 4
DEPTH = 2        # transformer blocks
MLP_RATIO = 4
META_DIM = 6     # meta vector (location + date features)
NUM_CLASSES = 3  # segmentation classes
FINAL_NORM = True

HP, WP = H // PATCH, W // PATCH
SEQ = HP * WP
HEAD_DIM = EMBED_DIM // NUM_HEADS


# -------------------------- host-side constants ------------------------------
def _bilinear_matrix_np(n_in, n_out):
    """Row-stochastic matrix A (n_out, n_in): y = A @ x == F.interpolate(
    mode='bilinear', align_corners=False) along one axis.  Pure NumPy so the
    result is a compile-time constant."""
    scale = n_in / n_out
    dst = np.arange(n_out, dtype=np.float64)
    src = np.maximum((dst + 0.5) * scale - 0.5, 0.0)      # PyTorch clamps lower bound
    x0 = np.minimum(np.floor(src), n_in - 1).astype(np.int64)
    x1 = np.minimum(x0 + 1, n_in - 1)
    w1 = src - x0
    w0 = 1.0 - w1
    A = np.zeros((n_out, n_in), np.float64)
    A[np.arange(n_out), x0] += w0
    A[np.arange(n_out), x1] += w1
    return A.astype(np.float32)


# ------------------------------ fused kernel ---------------------------------
def _aegis_fused_kernel(*refs):
    """Whole AeGIS forward in one kernel.  Operand order must match
    aegis_forward()."""
    out_ref = refs[-1]
    (patches_ref, meta_ref, pos_ref,
     pe_w_ref, pe_b_ref, me_w_ref, me_b_ref) = refs[:7]
    idx = 7
    block_refs = []
    for _ in range(DEPTH):
        block_refs.append(refs[idx:idx + 12])
        idx += 12
    fn_g_ref, fn_b_ref = refs[idx], refs[idx + 1]
    idx += 2
    fpn_w_ref, fpn_b_ref, dec_w_ref, dec_b_ref = refs[idx:idx + 4]
    idx += 4
    L0_ref, L1_ref, P0_ref, P1_ref = refs[idx:idx + 4]

    def mm(a, b):
        return jnp.dot(a, b, preferred_element_type=jnp.float32)

    def linear(x, w_ref, b_ref):
        return mm(x, w_ref[...]) + b_ref[...]

    def layernorm(x, g_ref, b_ref):
        mu = jnp.mean(x, axis=-1, keepdims=True)
        var = jnp.mean(jnp.square(x - mu), axis=-1, keepdims=True)
        return (x - mu) * jax.lax.rsqrt(var + 1e-5) * g_ref[...] + b_ref[...]

    def gelu(x):
        # TODO(synk): PyTorch nn.GELU() defaults to exact erf; the tanh
        # approximation is kept (matches the previous running kernel and is
        # guaranteed to lower in Mosaic).
        return jax.nn.gelu(x, approximate=True)

    # ---- encoder stem: patch-embed + meta embed + positional embed (fused) --
    tok = linear(patches_ref[...], pe_w_ref, pe_b_ref)            # (B*SEQ, D)
    m = linear(meta_ref[...], me_w_ref, me_b_ref)                 # (B, D)
    pos = pos_ref[...]                                            # (SEQ, D)
    tok = tok + jnp.concatenate([pos + m[b:b + 1, :] for b in range(B)], axis=0)

    scale = 1.0 / float(HEAD_DIM) ** 0.5

    # ---- transformer blocks (all heads unrolled in-kernel) ------------------
    for blk in block_refs:
        (ln1_g, ln1_b, wqkv_r, bqkv_r, wproj_r, bproj_r,
         ln2_g, ln2_b, wfc1_r, bfc1_r, wfc2_r, bfc2_r) = blk

        h = layernorm(tok, ln1_g, ln1_b)
        qkv = linear(h, wqkv_r, bqkv_r)                           # (B*SEQ, 3D)
        wproj = wproj_r[...]                                      # (D, D)
        batch_proj = []
        for b in range(B):
            r0 = b * SEQ
            proj_b = None
            for hh in range(NUM_HEADS):
                c = hh * HEAD_DIM
                q = qkv[r0:r0 + SEQ, c:c + HEAD_DIM]
                k = qkv[r0:r0 + SEQ, EMBED_DIM + c:EMBED_DIM + c + HEAD_DIM]
                v = qkv[r0:r0 + SEQ, 2 * EMBED_DIM + c:2 * EMBED_DIM + c + HEAD_DIM]
                s = mm(q, k.T) * scale                            # (SEQ, SEQ)
                s = s - jnp.max(s, axis=-1, keepdims=True)
                p = jnp.exp(s)
                p = p * pl.reciprocal(jnp.sum(p, axis=-1, keepdims=True), approx=True)
                o = mm(p, v)                                      # (SEQ, HEAD_DIM)
                # fold head output straight into the output projection
                contrib = mm(o, wproj[c:c + HEAD_DIM, :])         # (SEQ, D)
                proj_b = contrib if proj_b is None else proj_b + contrib
            batch_proj.append(proj_b)
        tok = tok + jnp.concatenate(batch_proj, axis=0) + bproj_r[...]

        h = layernorm(tok, ln2_g, ln2_b)
        h = gelu(linear(h, wfc1_r, bfc1_r))                       # (B*SEQ, 4D)
        tok = tok + linear(h, wfc2_r, bfc2_r)

    if FINAL_NORM:
        tok = layernorm(tok, fn_g_ref, fn_b_ref)

    # ---- neck: ConvTranspose2d(D, D, 2, stride=2) + GELU --------------------
    # weight columns pre-ordered (kh, kw, cout) on the host, so each 32-wide
    # column block is the full channel vector for one (kh, kw) sub-pixel.
    up = gelu(linear(tok, fpn_w_ref, fpn_b_ref))                  # (B*SEQ, 4D)

    # ---- decoder: 1x1 conv per (kh, kw) sub-block ----------------------------
    dec_w = dec_w_ref[...]                                        # (D, NC)
    dec_b = dec_b_ref[...]                                        # (1, NC)
    dec_blk = [mm(up[:, i * EMBED_DIM:(i + 1) * EMBED_DIM], dec_w) + dec_b
               for i in range(4)]                                 # each (B*SEQ, NC)

    # ---- pixel shuffle + bilinear resize via Kronecker matmuls --------------
    #   L_kh = kron(Ah[:, kh::2], I_WP)   : (H*WP, SEQ)
    #   P_kw = kron(I_H,  Aw[:, kw::2])   : (H*W,  H*WP)
    # out[b, y*W+x, nc] = sum_{kh,kw} P_kw @ (L_kh @ dec_{kh,kw}[b])
    Lk = (L0_ref[...], L1_ref[...])
    Pk = (P0_ref[...], P1_ref[...])
    for b in range(B):
        r0 = b * SEQ
        out_b = None
        for kw in range(2):
            t = (mm(Lk[0], dec_blk[0 * 2 + kw][r0:r0 + SEQ, :]) +
                 mm(Lk[1], dec_blk[1 * 2 + kw][r0:r0 + SEQ, :]))  # (H*WP, NC)
            o = mm(Pk[kw], t)                                     # (H*W, NC)
            out_b = o if out_b is None else out_b + o
        out_ref[b * H * W:(b + 1) * H * W, :] = out_b


# ------------------------------ parameters -----------------------------------
def init_params(key):
    keys = iter(jax.random.split(key, 64))

    def nrm(shape, s=0.02):
        return (s * jax.random.normal(next(keys), shape)).astype(jnp.float32)

    def zeros(shape):
        return jnp.zeros(shape, jnp.float32)

    def ones(shape):
        return jnp.ones(shape, jnp.float32)

    blocks = []
    for _ in range(DEPTH):
        blocks.append(dict(
            ln1_g=ones((EMBED_DIM,)), ln1_b=zeros((EMBED_DIM,)),
            wqkv=nrm((EMBED_DIM, 3 * EMBED_DIM)), bqkv=zeros((3 * EMBED_DIM,)),
            wproj=nrm((EMBED_DIM, EMBED_DIM)), bproj=zeros((EMBED_DIM,)),
            ln2_g=ones((EMBED_DIM,)), ln2_b=zeros((EMBED_DIM,)),
            wfc1=nrm((EMBED_DIM, MLP_RATIO * EMBED_DIM)), bfc1=zeros((MLP_RATIO * EMBED_DIM,)),
            wfc2=nrm((MLP_RATIO * EMBED_DIM, EMBED_DIM)), bfc2=zeros((EMBED_DIM,)),
        ))

    params = dict(
        # patch-embed conv (C_IN, EMBED_DIM, P, P) flattened to a matmul weight
        pe_w=nrm((C_IN * PATCH * PATCH, EMBED_DIM)), pe_b=zeros((EMBED_DIM,)),
        pos=nrm((SEQ, EMBED_DIM)),
        # meta (location/date) embedding
        me_w=nrm((META_DIM, EMBED_DIM)), me_b=zeros((EMBED_DIM,)),
        blocks=blocks,
        fn_g=ones((EMBED_DIM,)), fn_b=zeros((EMBED_DIM,)),
        # FPNUpscale: ConvTranspose2d(D, D, kernel=2, stride=2) weight (cin, cout, kh, kw)
        fpn_w=nrm((EMBED_DIM, EMBED_DIM, 2, 2)), fpn_b=zeros((EMBED_DIM,)),
        # decoder: 1x1 conv segmentation head
        dec_w=nrm((EMBED_DIM, NUM_CLASSES)), dec_b=zeros((NUM_CLASSES,)),
    )
    return params


# ------------------------------- forward pass --------------------------------
def aegis_forward(params, x, meta):
    """x: (B, C, H, W) NCHW float32; meta: (B, META_DIM). Returns (B, NUM_CLASSES, H, W)."""
    Bn = x.shape[0]

    # XLA glue: patch extraction (input layout prep only)
    patches = x.reshape(Bn, C_IN, HP, PATCH, WP, PATCH)
    patches = patches.transpose(0, 2, 4, 1, 3, 5).reshape(Bn * SEQ, C_IN * PATCH * PATCH)

    # ConvTranspose2d weight (cin, cout, kh, kw) -> columns ordered (kh, kw, cout)
    fpn_w2 = params["fpn_w"].transpose(0, 2, 3, 1).reshape(EMBED_DIM, 4 * EMBED_DIM)
    fpn_b2 = jnp.tile(params["fpn_b"], 4).reshape(1, 4 * EMBED_DIM)

    # host (NumPy) constants: bilinear interp + pixel shuffle as matmuls
    Ah = _bilinear_matrix_np(2 * HP, H)                      # (H, 2*HP)
    Aw = _bilinear_matrix_np(2 * WP, W)                      # (W, 2*WP)
    Lc = [np.kron(Ah[:, kh::2], np.eye(WP, dtype=np.float32)) for kh in range(2)]  # (H*WP, SEQ)
    Pc = [np.kron(np.eye(H, dtype=np.float32), Aw[:, kw::2]) for kw in range(2)]   # (H*W, H*WP)

    def b2(v):
        return v.reshape(1, -1)

    operands = [patches, meta, params["pos"],
                params["pe_w"], b2(params["pe_b"]),
                params["me_w"], b2(params["me_b"])]
    for blk in params["blocks"]:
        operands += [b2(blk["ln1_g"]), b2(blk["ln1_b"]),
                     blk["wqkv"], b2(blk["bqkv"]),
                     blk["wproj"], b2(blk["bproj"]),
                     b2(blk["ln2_g"]), b2(blk["ln2_b"]),
                     blk["wfc1"], b2(blk["bfc1"]),
                     blk["wfc2"], b2(blk["bfc2"])]
    operands += [b2(params["fn_g"]), b2(params["fn_b"]),
                 fpn_w2, fpn_b2,
                 params["dec_w"], b2(params["dec_b"]),
                 jnp.asarray(Lc[0]), jnp.asarray(Lc[1]),
                 jnp.asarray(Pc[0]), jnp.asarray(Pc[1])]

    # Single grid-less pallas_call: everything resident in VMEM.
    out_flat = pl.pallas_call(
        _aegis_fused_kernel,
        out_shape=jax.ShapeDtypeStruct((Bn * H * W, NUM_CLASSES), jnp.float32),
    )(*operands)

    # wrapper-side NHWC-flat -> NCHW (tiny, final output only)
    return out_flat.reshape(Bn, H, W, NUM_CLASSES).transpose(0, 3, 1, 2)


# ----------------------------------- main ------------------------------------
if __name__ == "__main__":
    key = jax.random.PRNGKey(0)
    k_param, k_x, k_meta = jax.random.split(key, 3)

    params = init_params(k_param)
    x = jax.random.normal(k_x, (B, C_IN, H, W), dtype=jnp.float32)
    meta = jax.random.normal(k_meta, (B, META_DIM), dtype=jnp.float32)

    fwd = jax.jit(aegis_forward)
    out = fwd(params, x, meta)
    out = jax.block_until_ready(out)

    assert out.shape == (B, NUM_CLASSES, H, W), out.shape
    assert bool(jnp.all(jnp.isfinite(out)))
    print("KERNEL_OK")
</pallas_src>

<mosaic_0001>
module attributes {stable_mosaic.version = 11 : i64} {
  func.func @_aegis_fused_kernel(%arg0: memref<32x64xf32, #tpu.memory_space<vmem>>, %arg1: memref<2x6xf32, #tpu.memory_space<vmem>>, %arg2: memref<16x32xf32, #tpu.memory_space<vmem>>, %arg3: memref<64x32xf32, #tpu.memory_space<vmem>>, %arg4: memref<1x32xf32, #tpu.memory_space<vmem>>, %arg5: memref<6x32xf32, #tpu.memory_space<vmem>>, %arg6: memref<1x32xf32, #tpu.memory_space<vmem>>, %arg7: memref<1x32xf32, #tpu.memory_space<vmem>>, %arg8: memref<1x32xf32, #tpu.memory_space<vmem>>, %arg9: memref<32x96xf32, #tpu.memory_space<vmem>>, %arg10: memref<1x96xf32, #tpu.memory_space<vmem>>, %arg11: memref<32x32xf32, #tpu.memory_space<vmem>>, %arg12: memref<1x32xf32, #tpu.memory_space<vmem>>, %arg13: memref<1x32xf32, #tpu.memory_space<vmem>>, %arg14: memref<1x32xf32, #tpu.memory_space<vmem>>, %arg15: memref<32x128xf32, #tpu.memory_space<vmem>>, %arg16: memref<1x128xf32, #tpu.memory_space<vmem>>, %arg17: memref<128x32xf32, #tpu.memory_space<vmem>>, %arg18: memref<1x32xf32, #tpu.memory_space<vmem>>, %arg19: memref<1x32xf32, #tpu.memory_space<vmem>>, %arg20: memref<1x32xf32, #tpu.memory_space<vmem>>, %arg21: memref<32x96xf32, #tpu.memory_space<vmem>>, %arg22: memref<1x96xf32, #tpu.memory_space<vmem>>, %arg23: memref<32x32xf32, #tpu.memory_space<vmem>>, %arg24: memref<1x32xf32, #tpu.memory_space<vmem>>, %arg25: memref<1x32xf32, #tpu.memory_space<vmem>>, %arg26: memref<1x32xf32, #tpu.memory_space<vmem>>, %arg27: memref<32x128xf32, #tpu.memory_space<vmem>>, %arg28: memref<1x128xf32, #tpu.memory_space<vmem>>, %arg29: memref<128x32xf32, #tpu.memory_space<vmem>>, %arg30: memref<1x32xf32, #tpu.memory_space<vmem>>, %arg31: memref<1x32xf32, #tpu.memory_space<vmem>>, %arg32: memref<1x32xf32, #tpu.memory_space<vmem>>, %arg33: memref<32x128xf32, #tpu.memory_space<vmem>>, %arg34: memref<1x128xf32, #tpu.memory_space<vmem>>, %arg35: memref<32x3xf32, #tpu.memory_space<vmem>>, %arg36: memref<1x3xf32, #tpu.memory_space<vmem>>, %arg37: memref<64x16xf32, #tpu.memory_space<vmem>>, %arg38: memref<64x16xf32, #tpu.memory_space<vmem>>, %arg39: memref<256x64xf32, #tpu.memory_space<vmem>>, %arg40: memref<256x64xf32, #tpu.memory_space<vmem>>, %arg41: memref<512x3xf32, #tpu.memory_space<vmem>>) attributes {dimension_semantics = [], scalar_prefetch = 0 : i64, scratch_operands = 0 : i64, tpu.core_type = #tpu.core_type<tc>} {
    %c0 = arith.constant 0 : index
    %c0_0 = arith.constant 0 : index
    %0 = vector.load %arg0[%c0, %c0_0] : memref<32x64xf32, #tpu.memory_space<vmem>>, vector<32x64xf32>
    %c0_1 = arith.constant 0 : index
    %c0_2 = arith.constant 0 : index
    %1 = vector.load %arg3[%c0_1, %c0_2] : memref<64x32xf32, #tpu.memory_space<vmem>>, vector<64x32xf32>
    %cst = arith.constant dense<0.000000e+00> : vector<32x32xf32>
    %2 = tpu.matmul %0, %1, %cst {dimension_numbers = #tpu.dot_dimension_numbers<[1], [0], [0], [1], [0, 0, 1, 1], [], []>} : vector<32x64xf32>, vector<64x32xf32>, vector<32x32xf32> -> vector<32x32xf32>
    %c0_3 = arith.constant 0 : index
    %c0_4 = arith.constant 0 : index
    %3 = vector.load %arg4[%c0_3, %c0_4] : memref<1x32xf32, #tpu.memory_space<vmem>>, vector<1x32xf32>
    %4 = vector.broadcast %3 : vector<1x32xf32> to vector<32x32xf32>
    %5 = arith.addf %2, %4 : vector<32x32xf32>
    %c0_5 = arith.constant 0 : index
    %c0_6 = arith.constant 0 : index
    %6 = vector.load %arg1[%c0_5, %c0_6] : memref<2x6xf32, #tpu.memory_space<vmem>>, vector<2x6xf32>
    %c0_7 = arith.constant 0 : index
    %c0_8 = arith.constant 0 : index
    %7 = vector.load %arg5[%c0_7, %c0_8] : memref<6x32xf32, #tpu.memory_space<vmem>>, vector<6x32xf32>
    %cst_9 = arith.constant dense<0.000000e+00> : vector<2x32xf32>
    %8 = tpu.matmul %6, %7, %cst_9 {dimension_numbers = #tpu.dot_dimension_numbers<[1], [0], [0], [1], [0, 0, 1, 1], [], []>} : vector<2x6xf32>, vector<6x32xf32>, vector<2x32xf32> -> vector<2x32xf32>
    %c0_10 = arith.constant 0 : index
    %c0_11 = arith.constant 0 : index
    %9 = vector.load %arg6[%c0_10, %c0_11] : memref<1x32xf32, #tpu.memory_space<vmem>>, vector<1x32xf32>
    %10 = vector.broadcast %9 : vector<1x32xf32> to vector<2x32xf32>
    %11 = arith.addf %8, %10 : vector<2x32xf32>
    %c0_12 = arith.constant 0 : index
    %c0_13 = arith.constant 0 : index
    %12 = vector.load %arg2[%c0_12, %c0_13] : memref<16x32xf32, #tpu.memory_space<vmem>>, vector<16x32xf32>
    %13 = vector.extract_strided_slice %11 {offsets = [0, 0], sizes = [1, 32], strides = [1, 1]} : vector<2x32xf32> to vector<1x32xf32>
    %14 = vector.broadcast %13 : vector<1x32xf32> to vector<16x32xf32>
    %15 = arith.addf %12, %14 : vector<16x32xf32>
    %16 = vector.extract_strided_slice %11 {offsets = [1, 0], sizes = [1, 32], strides = [1, 1]} : vector<2x32xf32> to vector<1x32xf32>
    %17 = vector.broadcast %16 : vector<1x32xf32> to vector<16x32xf32>
    %18 = arith.addf %12, %17 : vector<16x32xf32>
    %19 = tpu.concatenate %15, %18 in 0 : vector<16x32xf32>, vector<16x32xf32> -> vector<32x32xf32>
    %20 = arith.addf %5, %19 : vector<32x32xf32>
    %cst_14 = arith.constant dense<0.000000e+00> : vector<32xf32>
    %21 = vector.multi_reduction <add>, %20, %cst_14 [1] : vector<32x32xf32> to vector<32xf32>
    %22 = vector.shape_cast %21 : vector<32xf32> to vector<32x1xf32>
    %cst_15 = arith.constant 3.200000e+01 : f32
    %23 = vector.broadcast %cst_15 : f32 to vector<32x1xf32>
    %24 = arith.divf %22, %23 : vector<32x1xf32>
    %25 = vector.broadcast %24 : vector<32x1xf32> to vector<32x32xf32>
    %26 = arith.subf %20, %25 : vector<32x32xf32>
    %27 = arith.mulf %26, %26 : vector<32x32xf32>
    %cst_16 = arith.constant dense<0.000000e+00> : vector<32xf32>
    %28 = vector.multi_reduction <add>, %27, %cst_16 [1] : vector<32x32xf32> to vector<32xf32>
    %29 = vector.shape_cast %28 : vector<32xf32> to vector<32x1xf32>
    %cst_17 = arith.constant 3.200000e+01 : f32
    %30 = vector.broadcast %cst_17 : f32 to vector<32x1xf32>
    %31 = arith.divf %29, %30 : vector<32x1xf32>
    %32 = vector.broadcast %24 : vector<32x1xf32> to vector<32x32xf32>
    %33 = arith.subf %20, %32 : vector<32x32xf32>
    %cst_18 = arith.constant 9.99999974E-6 : f32
    %34 = vector.broadcast %cst_18 : f32 to vector<32x1xf32>
    %35 = arith.addf %31, %34 : vector<32x1xf32>
    %36 = math.rsqrt %35 : vector<32x1xf32>
    %37 = vector.broadcast %36 : vector<32x1xf32> to vector<32x32xf32>
    %38 = arith.mulf %33, %37 : vector<32x32xf32>
    %c0_19 = arith.constant 0 : index
    %c0_20 = arith.constant 0 : index
    %39 = vector.load %arg7[%c0_19, %c0_20] : memref<1x32xf32, #tpu.memory_space<vmem>>, vector<1x32xf32>
    %40 = vector.broadcast %39 : vector<1x32xf32> to vector<32x32xf32>
    %41 = arith.mulf %38, %40 : vector<32x32xf32>
    %c0_21 = arith.constant 0 : index
    %c0_22 = arith.constant 0 : index
    %42 = vector.load %arg8[%c0_21, %c0_22] : memref<1x32xf32, #tpu.memory_space<vmem>>, vector<1x32xf32>
    %43 = vector.broadcast %42 : vector<1x32xf32> to vector<32x32xf32>
    %44 = arith.addf %41, %43 : vector<32x32xf32>
    %c0_23 = arith.constant 0 : index
    %c0_24 = arith.constant 0 : index
    %45 = vector.load %arg9[%c0_23, %c0_24] : memref<32x96xf32, #tpu.memory_space<vmem>>, vector<32x96xf32>
    %cst_25 = arith.constant dense<0.000000e+00> : vector<32x96xf32>
    %46 = tpu.matmul %44, %45, %cst_25 {dimension_numbers = #tpu.dot_dimension_numbers<[1], [0], [0], [1], [0, 0, 1, 1], [], []>} : vector<32x32xf32>, vector<32x96xf32>, vector<32x96xf32> -> vector<32x96xf32>
    %c0_26 = arith.constant 0 : index
    %c0_27 = arith.constant 0 : index
    %47 = vector.load %arg10[%c0_26, %c0_27] : memref<1x96xf32, #tpu.memory_space<vmem>>, vector<1x96xf32>
    %48 = vector.broadcast %47 : vector<1x96xf32> to vector<32x96xf32>
    %49 = arith.addf %46, %48 : vector<32x96xf32>
    %c0_28 = arith.constant 0 : index
    %c0_29 = arith.constant 0 : index
    %50 = vector.load %arg11[%c0_28, %c0_29] : memref<32x32xf32, #tpu.memory_space<vmem>>, vector<32x32xf32>
    %51 = vector.extract_strided_slice %49 {offsets = [0, 0], sizes = [16, 8], strides = [1, 1]} : vector<32x96xf32> to vector<16x8xf32>
    %52 = vector.extract_strided_slice %49 {offsets = [0, 32], sizes = [16, 8], strides = [1, 1]} : vector<32x96xf32> to vector<16x8xf32>
    %53 = vector.extract_strided_slice %49 {offsets = [0, 64], sizes = [16, 8], strides = [1, 1]} : vector<32x96xf32> to vector<16x8xf32>
    %54 = tpu.transpose %52, [1, 0] : vector<16x8xf32> -> vector<8x16xf32>
    %cst_30 = arith.constant dense<0.000000e+00> : vector<16x16xf32>
    %55 = tpu.matmul %51, %54, %cst_30 {dimension_numbers = #tpu.dot_dimension_numbers<[1], [0], [0], [1], [0, 0, 1, 1], [], []>} : vector<16x8xf32>, vector<8x16xf32>, vector<16x16xf32> -> vector<16x16xf32>
    %cst_31 = arith.constant 0.353553385 : f32
    %56 = vector.broadcast %cst_31 : f32 to vector<16x16xf32>
    %57 = arith.mulf %55, %56 : vector<16x16xf32>
    %cst_32 = arith.constant dense<0xFF800000> : vector<16xf32>
    %58 = vector.multi_reduction <maximumf>, %57, %cst_32 [1] : vector<16x16xf32> to vector<16xf32>
    %59 = vector.shape_cast %58 : vector<16xf32> to vector<16x1xf32>
    %60 = vector.broadcast %59 : vector<16x1xf32> to vector<16x16xf32>
    %61 = arith.subf %57, %60 : vector<16x16xf32>
    %62 = math.exp %61 : vector<16x16xf32>
    %cst_33 = arith.constant dense<0.000000e+00> : vector<16xf32>
    %63 = vector.multi_reduction <add>, %62, %cst_33 [1] : vector<16x16xf32> to vector<16xf32>
    %64 = vector.shape_cast %63 : vector<16xf32> to vector<16x1xf32>
    %65 = tpu.reciprocal %64 {approx = true} : vector<16x1xf32> -> vector<16x1xf32>
    %66 = vector.broadcast %65 : vector<16x1xf32> to vector<16x16xf32>
    %67 = arith.mulf %62, %66 : vector<16x16xf32>
    %cst_34 = arith.constant dense<0.000000e+00> : vector<16x8xf32>
    %68 = tpu.matmul %67, %53, %cst_34 {dimension_numbers = #tpu.dot_dimension_numbers<[1], [0], [0], [1], [0, 0, 1, 1], [], []>} : vector<16x16xf32>, vector<16x8xf32>, vector<16x8xf32> -> vector<16x8xf32>
    %69 = vector.extract_strided_slice %50 {offsets = [0, 0], sizes = [8, 32], strides = [1, 1]} : vector<32x32xf32> to vector<8x32xf32>
    %cst_35 = arith.constant dense<0.000000e+00> : vector<16x32xf32>
    %70 = tpu.matmul %68, %69, %cst_35 {dimension_numbers = #tpu.dot_dimension_numbers<[1], [0], [0], [1], [0, 0, 1, 1], [], []>} : vector<16x8xf32>, vector<8x32xf32>, vector<16x32xf32> -> vector<16x32xf32>
    %71 = vector.extract_strided_slice %49 {offsets = [0, 8], sizes = [16, 8], strides = [1, 1]} : vector<32x96xf32> to vector<16x8xf32>
    %72 = vector.extract_strided_slice %49 {offsets = [0, 40], sizes = [16, 8], strides = [1, 1]} : vector<32x96xf32> to vector<16x8xf32>
    %73 = vector.extract_strided_slice %49 {offsets = [0, 72], sizes = [16, 8], strides = [1, 1]} : vector<32x96xf32> to vector<16x8xf32>
    %74 = tpu.transpose %72, [1, 0] : vector<16x8xf32> -> vector<8x16xf32>
    %cst_36 = arith.constant dense<0.000000e+00> : vector<16x16xf32>
    %75 = tpu.matmul %71, %74, %cst_36 {dimension_numbers = #tpu.dot_dimension_numbers<[1], [0], [0], [1], [0, 0, 1, 1], [], []>} : vector<16x8xf32>, vector<8x16xf32>, vector<16x16xf32> -> vector<16x16xf32>
    %cst_37 = arith.constant 0.353553385 : f32
    %76 = vector.broadcast %cst_37 : f32 to vector<16x16xf32>
    %77 = arith.mulf %75, %76 : vector<16x16xf32>
    %cst_38 = arith.constant dense<0xFF800000> : vector<16xf32>
    %78 = vector.multi_reduction <maximumf>, %77, %cst_38 [1] : vector<16x16xf32> to vector<16xf32>
    %79 = vector.shape_cast %78 : vector<16xf32> to vector<16x1xf32>
    %80 = vector.broadcast %79 : vector<16x1xf32> to vector<16x16xf32>
    %81 = arith.subf %77, %80 : vector<16x16xf32>
    %82 = math.exp %81 : vector<16x16xf32>
    %cst_39 = arith.constant dense<0.000000e+00> : vector<16xf32>
    %83 = vector.multi_reduction <add>, %82, %cst_39 [1] : vector<16x16xf32> to vector<16xf32>
    %84 = vector.shape_cast %83 : vector<16xf32> to vector<16x1xf32>
    %85 = tpu.reciprocal %84 {approx = true} : vector<16x1xf32> -> vector<16x1xf32>
    %86 = vector.broadcast %85 : vector<16x1xf32> to vector<16x16xf32>
    %87 = arith.mulf %82, %86 : vector<16x16xf32>
    %cst_40 = arith.constant dense<0.000000e+00> : vector<16x8xf32>
    %88 = tpu.matmul %87, %73, %cst_40 {dimension_numbers = #tpu.dot_dimension_numbers<[1], [0], [0], [1], [0, 0, 1, 1], [], []>} : vector<16x16xf32>, vector<16x8xf32>, vector<16x8xf32> -> vector<16x8xf32>
    %89 = vector.extract_strided_slice %50 {offsets = [8, 0], sizes = [8, 32], strides = [1, 1]} : vector<32x32xf32> to vector<8x32xf32>
    %cst_41 = arith.constant dense<0.000000e+00> : vector<16x32xf32>
    %90 = tpu.matmul %88, %89, %cst_41 {dimension_numbers = #tpu.dot_dimension_numbers<[1], [0], [0], [1], [0, 0, 1, 1], [], []>} : vector<16x8xf32>, vector<8x32xf32>, vector<16x32xf32> -> vector<16x32xf32>
    %91 = arith.addf %70, %90 : vector<16x32xf32>
    %92 = vector.extract_strided_slice %49 {offsets = [0, 16], sizes = [16, 8], strides = [1, 1]} : vector<32x96xf32> to vector<16x8xf32>
    %93 = vector.extract_strided_slice %49 {offsets = [0, 48], sizes = [16, 8], strides = [1, 1]} : vector<32x96xf32> to vector<16x8xf32>
    %94 = vector.extract_strided_slice %49 {offsets = [0, 80], sizes = [16, 8], strides = [1, 1]} : vector<32x96xf32> to vector<16x8xf32>
    %95 = tpu.transpose %93, [1, 0] : vector<16x8xf32> -> vector<8x16xf32>
    %cst_42 = arith.constant dense<0.000000e+00> : vector<16x16xf32>
    %96 = tpu.matmul %92, %95, %cst_42 {dimension_numbers = #tpu.dot_dimension_numbers<[1], [0], [0], [1], [0, 0, 1, 1], [], []>} : vector<16x8xf32>, vector<8x16xf32>, vector<16x16xf32> -> vector<16x16xf32>
    %cst_43 = arith.constant 0.353553385 : f32
    %97 = vector.broadcast %cst_43 : f32 to vector<16x16xf32>
    %98 = arith.mulf %96, %97 : vector<16x16xf32>
    %cst_44 = arith.constant dense<0xFF800000> : vector<16xf32>
    %99 = vector.multi_reduction <maximumf>, %98, %cst_44 [1] : vector<16x16xf32> to vector<16xf32>
    %100 = vector.shape_cast %99 : vector<16xf32> to vector<16x1xf32>
    %101 = vector.broadcast %100 : vector<16x1xf32> to vector<16x16xf32>
    %102 = arith.subf %98, %101 : vector<16x16xf32>
    %103 = math.exp %102 : vector<16x16xf32>
    %cst_45 = arith.constant dense<0.000000e+00> : vector<16xf32>
    %104 = vector.multi_reduction <add>, %103, %cst_45 [1] : vector<16x16xf32> to vector<16xf32>
    %105 = vector.shape_cast %104 : vector<16xf32> to vector<16x1xf32>
    %106 = tpu.reciprocal %105 {approx = true} : vector<16x1xf32> -> vector<16x1xf32>
    %107 = vector.broadcast %106 : vector<16x1xf32> to vector<16x16xf32>
    %108 = arith.mulf %103, %107 : vector<16x16xf32>
    %cst_46 = arith.constant dense<0.000000e+00> : vector<16x8xf32>
    %109 = tpu.matmul %108, %94, %cst_46 {dimension_numbers = #tpu.dot_dimension_numbers<[1], [0], [0], [1], [0, 0, 1, 1], [], []>} : vector<16x16xf32>, vector<16x8xf32>, vector<16x8xf32> -> vector<16x8xf32>
    %110 = vector.extract_strided_slice %50 {offsets = [16, 0], sizes = [8, 32], strides = [1, 1]} : vector<32x32xf32> to vector<8x32xf32>
    %cst_47 = arith.constant dense<0.000000e+00> : vector<16x32xf32>
    %111 = tpu.matmul %109, %110, %cst_47 {dimension_numbers = #tpu.dot_dimension_numbers<[1], [0], [0], [1], [0, 0, 1, 1], [], []>} : vector<16x8xf32>, vector<8x32xf32>, vector<16x32xf32> -> vector<16x32xf32>
    %112 = arith.addf %91, %111 : vector<16x32xf32>
    %113 = vector.extract_strided_slice %49 {offsets = [0, 24], sizes = [16, 8], strides = [1, 1]} : vector<32x96xf32> to vector<16x8xf32>
    %114 = vector.extract_strided_slice %49 {offsets = [0, 56], sizes = [16, 8], strides = [1, 1]} : vector<32x96xf32> to vector<16x8xf32>
    %115 = vector.extract_strided_slice %49 {offsets = [0, 88], sizes = [16, 8], strides = [1, 1]} : vector<32x96xf32> to vector<16x8xf32>
    %116 = tpu.transpose %114, [1, 0] : vector<16x8xf32> -> vector<8x16xf32>
    %cst_48 = arith.constant dense<0.000000e+00> : vector<16x16xf32>
    %117 = tpu.matmul %113, %116, %cst_48 {dimension_numbers = #tpu.dot_dimension_numbers<[1], [0], [0], [1], [0, 0, 1, 1], [], []>} : vector<16x8xf32>, vector<8x16xf32>, vector<16x16xf32> -> vector<16x16xf32>
    %cst_49 = arith.constant 0.353553385 : f32
    %118 = vector.broadcast %cst_49 : f32 to vector<16x16xf32>
    %119 = arith.mulf %117, %118 : vector<16x16xf32>
    %cst_50 = arith.constant dense<0xFF800000> : vector<16xf32>
    %120 = vector.multi_reduction <maximumf>, %119, %cst_50 [1] : vector<16x16xf32> to vector<16xf32>
    %121 = vector.shape_cast %120 : vector<16xf32> to vector<16x1xf32>
    %122 = vector.broadcast %121 : vector<16x1xf32> to vector<16x16xf32>
    %123 = arith.subf %119, %122 : vector<16x16xf32>
    %124 = math.exp %123 : vector<16x16xf32>
    %cst_51 = arith.constant dense<0.000000e+00> : vector<16xf32>
    %125 = vector.multi_reduction <add>, %124, %cst_51 [1] : vector<16x16xf32> to vector<16xf32>
    %126 = vector.shape_cast %125 : vector<16xf32> to vector<16x1xf32>
    %127 = tpu.reciprocal %126 {approx = true} : vector<16x1xf32> -> vector<16x1xf32>
    %128 = vector.broadcast %127 : vector<16x1xf32> to vector<16x16xf32>
    %129 = arith.mulf %124, %128 : vector<16x16xf32>
    %cst_52 = arith.constant dense<0.000000e+00> : vector<16x8xf32>
    %130 = tpu.matmul %129, %115, %cst_52 {dimension_numbers = #tpu.dot_dimension_numbers<[1], [0], [0], [1], [0, 0, 1, 1], [], []>} : vector<16x16xf32>, vector<16x8xf32>, vector<16x8xf32> -> vector<16x8xf32>
    %131 = vector.extract_strided_slice %50 {offsets = [24, 0], sizes = [8, 32], strides = [1, 1]} : vector<32x32xf32> to vector<8x32xf32>
    %cst_53 = arith.constant dense<0.000000e+00> : vector<16x32xf32>
    %132 = tpu.matmul %130, %131, %cst_53 {dimension_numbers = #tpu.dot_dimension_numbers<[1], [0], [0], [1], [0, 0, 1, 1], [], []>} : vector<16x8xf32>, vector<8x32xf32>, vector<16x32xf32> -> vector<16x32xf32>
    %133 = arith.addf %112, %132 : vector<16x32xf32>
    %134 = vector.extract_strided_slice %49 {offsets = [16, 0], sizes = [16, 8], strides = [1, 1]} : vector<32x96xf32> to vector<16x8xf32>
    %135 = vector.extract_strided_slice %49 {offsets = [16, 32], sizes = [16, 8], strides = [1, 1]} : vector<32x96xf32> to vector<16x8xf32>
    %136 = vector.extract_strided_slice %49 {offsets = [16, 64], sizes = [16, 8], strides = [1, 1]} : vector<32x96xf32> to vector<16x8xf32>
    %137 = tpu.transpose %135, [1, 0] : vector<16x8xf32> -> vector<8x16xf32>
    %cst_54 = arith.constant dense<0.000000e+00> : vector<16x16xf32>
    %138 = tpu.matmul %134, %137, %cst_54 {dimension_numbers = #tpu.dot_dimension_numbers<[1], [0], [0], [1], [0, 0, 1, 1], [], []>} : vector<16x8xf32>, vector<8x16xf32>, vector<16x16xf32> -> vector<16x16xf32>
    %cst_55 = arith.constant 0.353553385 : f32
    %139 = vector.broadcast %cst_55 : f32 to vector<16x16xf32>
    %140 = arith.mulf %138, %139 : vector<16x16xf32>
    %cst_56 = arith.constant dense<0xFF800000> : vector<16xf32>
    %141 = vector.multi_reduction <maximumf>, %140, %cst_56 [1] : vector<16x16xf32> to vector<16xf32>
    %142 = vector.shape_cast %141 : vector<16xf32> to vector<16x1xf32>
    %143 = vector.broadcast %142 : vector<16x1xf32> to vector<16x16xf32>
    %144 = arith.subf %140, %143 : vector<16x16xf32>
    %145 = math.exp %144 : vector<16x16xf32>
    %cst_57 = arith.constant dense<0.000000e+00> : vector<16xf32>
    %146 = vector.multi_reduction <add>, %145, %cst_57 [1] : vector<16x16xf32> to vector<16xf32>
    %147 = vector.shape_cast %146 : vector<16xf32> to vector<16x1xf32>
    %148 = tpu.reciprocal %147 {approx = true} : vector<16x1xf32> -> vector<16x1xf32>
    %149 = vector.broadcast %148 : vector<16x1xf32> to vector<16x16xf32>
    %150 = arith.mulf %145, %149 : vector<16x16xf32>
    %cst_58 = arith.constant dense<0.000000e+00> : vector<16x8xf32>
    %151 = tpu.matmul %150, %136, %cst_58 {dimension_numbers = #tpu.dot_dimension_numbers<[1], [0], [0], [1], [0, 0, 1, 1], [], []>} : vector<16x16xf32>, vector<16x8xf32>, vector<16x8xf32> -> vector<16x8xf32>
    %152 = vector.extract_strided_slice %50 {offsets = [0, 0], sizes = [8, 32], strides = [1, 1]} : vector<32x32xf32> to vector<8x32xf32>
    %cst_59 = arith.constant dense<0.000000e+00> : vector<16x32xf32>
    %153 = tpu.matmul %151, %152, %cst_59 {dimension_numbers = #tpu.dot_dimension_numbers<[1], [0], [0], [1], [0, 0, 1, 1], [], []>} : vector<16x8xf32>, vector<8x32xf32>, vector<16x32xf32> -> vector<16x32xf32>
    %154 = vector.extract_strided_slice %49 {offsets = [16, 8], sizes = [16, 8], strides = [1, 1]} : vector<32x96xf32> to vector<16x8xf32>
    %155 = vector.extract_strided_slice %49 {offsets = [16, 40], sizes = [16, 8], strides = [1, 1]} : vector<32x96xf32> to vector<16x8xf32>
    %156 = vector.extract_strided_slice %49 {offsets = [16, 72], sizes = [16, 8], strides = [1, 1]} : vector<32x96xf32> to vector<16x8xf32>
    %157 = tpu.transpose %155, [1, 0] : vector<16x8xf32> -> vector<8x16xf32>
    %cst_60 = arith.constant dense<0.000000e+00> : vector<16x16xf32>
    %158 = tpu.matmul %154, %157, %cst_60 {dimension_numbers = #tpu.dot_dimension_numbers<[1], [0], [0], [1], [0, 0, 1, 1], [], []>} : vector<16x8xf32>, vector<8x16xf32>, vector<16x16xf32> -> vector<16x16xf32>
    %cst_61 = arith.constant 0.353553385 : f32
    %159 = vector.broadcast %cst_61 : f32 to vector<16x16xf32>
    %160 = arith.mulf %158, %159 : vector<16x16xf32>
    %cst_62 = arith.constant dense<0xFF800000> : vector<16xf32>
    %161 = vector.multi_reduction <maximumf>, %160, %cst_62 [1] : vector<16x16xf32> to vector<16xf32>
    %162 = vector.shape_cast %161 : vector<16xf32> to vector<16x1xf32>
    %163 = vector.broadcast %162 : vector<16x1xf32> to vector<16x16xf32>
    %164 = arith.subf %160, %163 : vector<16x16xf32>
    %165 = math.exp %164 : vector<16x16xf32>
    %cst_63 = arith.constant dense<0.000000e+00> : vector<16xf32>
    %166 = vector.multi_reduction <add>, %165, %cst_63 [1] : vector<16x16xf32> to vector<16xf32>
    %167 = vector.shape_cast %166 : vector<16xf32> to vector<16x1xf32>
    %168 = tpu.reciprocal %167 {approx = true} : vector<16x1xf32> -> vector<16x1xf32>
    %169 = vector.broadcast %168 : vector<16x1xf32> to vector<16x16xf32>
    %170 = arith.mulf %165, %169 : vector<16x16xf32>
    %cst_64 = arith.constant dense<0.000000e+00> : vector<16x8xf32>
    %171 = tpu.matmul %170, %156, %cst_64 {dimension_numbers = #tpu.dot_dimension_numbers<[1], [0], [0], [1], [0, 0, 1, 1], [], []>} : vector<16x16xf32>, vector<16x8xf32>, vector<16x8xf32> -> vector<16x8xf32>
    %172 = vector.extract_strided_slice %50 {offsets = [8, 0], sizes = [8, 32], strides = [1, 1]} : vector<32x32xf32> to vector<8x32xf32>
    %cst_65 = arith.constant dense<0.000000e+00> : vector<16x32xf32>
    %173 = tpu.matmul %171, %172, %cst_65 {dimension_numbers = #tpu.dot_dimension_numbers<[1], [0], [0], [1], [0, 0, 1, 1], [], []>} : vector<16x8xf32>, vector<8x32xf32>, vector<16x32xf32> -> vector<16x32xf32>
    %174 = arith.addf %153, %173 : vector<16x32xf32>
    %175 = vector.extract_strided_slice %49 {offsets = [16, 16], sizes = [16, 8], strides = [1, 1]} : vector<32x96xf32> to vector<16x8xf32>
    %176 = vector.extract_strided_slice %49 {offsets = [16, 48], sizes = [16, 8], strides = [1, 1]} : vector<32x96xf32> to vector<16x8xf32>
    %177 = vector.extract_strided_slice %49 {offsets = [16, 80], sizes = [16, 8], strides = [1, 1]} : vector<32x96xf32> to vector<16x8xf32>
    %178 = tpu.transpose %176, [1, 0] : vector<16x8xf32> -> vector<8x16xf32>
    %cst_66 = arith.constant dense<0.000000e+00> : vector<16x16xf32>
    %179 = tpu.matmul %175, %178, %cst_66 {dimension_numbers = #tpu.dot_dimension_numbers<[1], [0], [0], [1], [0, 0, 1, 1], [], []>} : vector<16x8xf32>, vector<8x16xf32>, vector<16x16xf32> -> vector<16x16xf32>
    %cst_67 = arith.constant 0.353553385 : f32
    %180 = vector.broadcast %cst_67 : f32 to vector<16x16xf32>
    %181 = arith.mulf %179, %180 : vector<16x16xf32>
    %cst_68 = arith.constant dense<0xFF800000> : vector<16xf32>
    %182 = vector.multi_reduction <maximumf>, %181, %cst_68 [1] : vector<16x16xf32> to vector<16xf32>
    %183 = vector.shape_cast %182 : vector<16xf32> to vector<16x1xf32>
    %184 = vector.broadcast %183 : vector<16x1xf32> to vector<16x16xf32>
    %185 = arith.subf %181, %184 : vector<16x16xf32>
    %186 = math.exp %185 : vector<16x16xf32>
    %cst_69 = arith.constant dense<0.000000e+00> : vector<16xf32>
    %187 = vector.multi_reduction <add>, %186, %cst_69 [1] : vector<16x16xf32> to vector<16xf32>
    %188 = vector.shape_cast %187 : vector<16xf32> to vector<16x1xf32>
    %189 = tpu.reciprocal %188 {approx = true} : vector<16x1xf32> -> vector<16x1xf32>
    %190 = vector.broadcast %189 : vector<16x1xf32> to vector<16x16xf32>
    %191 = arith.mulf %186, %190 : vector<16x16xf32>
    %cst_70 = arith.constant dense<0.000000e+00> : vector<16x8xf32>
    %192 = tpu.matmul %191, %177, %cst_70 {dimension_numbers = #tpu.dot_dimension_numbers<[1], [0], [0], [1], [0, 0, 1, 1], [], []>} : vector<16x16xf32>, vector<16x8xf32>, vector<16x8xf32> -> vector<16x8xf32>
    %193 = vector.extract_strided_slice %50 {offsets = [16, 0], sizes = [8, 32], strides = [1, 1]} : vector<32x32xf32> to vector<8x32xf32>
    %cst_71 = arith.constant dense<0.000000e+00> : vector<16x32xf32>
    %194 = tpu.matmul %192, %193, %cst_71 {dimension_numbers = #tpu.dot_dimension_numbers<[1], [0], [0], [1], [0, 0, 1, 1], [], []>} : vector<16x8xf32>, vector<8x32xf32>, vector<16x32xf32> -> vector<16x32xf32>
    %195 = arith.addf %174, %194 : vector<16x32xf32>
    %196 = vector.extract_strided_slice %49 {offsets = [16, 24], sizes = [16, 8], strides = [1, 1]} : vector<32x96xf32> to vector<16x8xf32>
    %197 = vector.extract_strided_slice %49 {offsets = [16, 56], sizes = [16, 8], strides = [1, 1]} : vector<32x96xf32> to vector<16x8xf32>
    %198 = vector.extract_strided_slice %49 {offsets = [16, 88], sizes = [16, 8], strides = [1, 1]} : vector<32x96xf32> to vector<16x8xf32>
    %199 = tpu.transpose %197, [1, 0] : vector<16x8xf32> -> vector<8x16xf32>
    %cst_72 = arith.constant dense<0.000000e+00> : vector<16x16xf32>
    %200 = tpu.matmul %196, %199, %cst_72 {dimension_numbers = #tpu.dot_dimension_numbers<[1], [0], [0], [1], [0, 0, 1, 1], [], []>} : vector<16x8xf32>, vector<8x16xf32>, vector<16x16xf32> -> vector<16x16xf32>
    %cst_73 = arith.constant 0.353553385 : f32
    %201 = vector.broadcast %cst_73 : f32 to vector<16x16xf32>
    %202 = arith.mulf %200, %201 : vector<16x16xf32>
    %cst_74 = arith.constant dense<0xFF800000> : vector<16xf32>
    %203 = vector.multi_reduction <maximumf>, %202, %cst_74 [1] : vector<16x16xf32> to vector<16xf32>
    %204 = vector.shape_cast %203 : vector<16xf32> to vector<16x1xf32>
    %205 = vector.broadcast %204 : vector<16x1xf32> to vector<16x16xf32>
    %206 = arith.subf %202, %205 : vector<16x16xf32>
    %207 = math.exp %206 : vector<16x16xf32>
    %cst_75 = arith.constant dense<0.000000e+00> : vector<16xf32>
    %208 = vector.multi_reduction <add>, %207, %cst_75 [1] : vector<16x16xf32> to vector<16xf32>
    %209 = vector.shape_cast %208 : vector<16xf32> to vector<16x1xf32>
    %210 = tpu.reciprocal %209 {approx = true} : vector<16x1xf32> -> vector<16x1xf32>
    %211 = vector.broadcast %210 : vector<16x1xf32> to vector<16x16xf32>
    %212 = arith.mulf %207, %211 : vector<16x16xf32>
    %cst_76 = arith.constant dense<0.000000e+00> : vector<16x8xf32>
    %213 = tpu.matmul %212, %198, %cst_76 {dimension_numbers = #tpu.dot_dimension_numbers<[1], [0], [0], [1], [0, 0, 1, 1], [], []>} : vector<16x16xf32>, vector<16x8xf32>, vector<16x8xf32> -> vector<16x8xf32>
    %214 = vector.extract_strided_slice %50 {offsets = [24, 0], sizes = [8, 32], strides = [1, 1]} : vector<32x32xf32> to vector<8x32xf32>
    %cst_77 = arith.constant dense<0.000000e+00> : vector<16x32xf32>
    %215 = tpu.matmul %213, %214, %cst_77 {dimension_numbers = #tpu.dot_dimension_numbers<[1], [0], [0], [1], [0, 0, 1, 1], [], []>} : vector<16x8xf32>, vector<8x32xf32>, vector<16x32xf32> -> vector<16x32xf32>
    %216 = arith.addf %195, %215 : vector<16x32xf32>
    %217 = tpu.concatenate %133, %216 in 0 : vector<16x32xf32>, vector<16x32xf32> -> vector<32x32xf32>
    %218 = arith.addf %20, %217 : vector<32x32xf32>
    %c0_78 = arith.constant 0 : index
    %c0_79 = arith.constant 0 : index
    %219 = vector.load %arg12[%c0_78, %c0_79] : memref<1x32xf32, #tpu.memory_space<vmem>>, vector<1x32xf32>
    %220 = vector.broadcast %219 : vector<1x32xf32> to vector<32x32xf32>
    %221 = arith.addf %218, %220 : vector<32x32xf32>
    %cst_80 = arith.constant dense<0.000000e+00> : vector<32xf32>
    %222 = vector.multi_reduction <add>, %221, %cst_80 [1] : vector<32x32xf32> to vector<32xf32>
    %223 = vector.shape_cast %222 : vector<32xf32> to vector<32x1xf32>
    %cst_81 = arith.constant 3.200000e+01 : f32
    %224 = vector.broadcast %cst_81 : f32 to vector<32x1xf32>
    %225 = arith.divf %223, %224 : vector<32x1xf32>
    %226 = vector.broadcast %225 : vector<32x1xf32> to vector<32x32xf32>
    %227 = arith.subf %221, %226 : vector<32x32xf32>
    %228 = arith.mulf %227, %227 : vector<32x32xf32>
    %cst_82 = arith.constant dense<0.000000e+00> : vector<32xf32>
    %229 = vector.multi_reduction <add>, %228, %cst_82 [1] : vector<32x32xf32> to vector<32xf32>
    %230 = vector.shape_cast %229 : vector<32xf32> to vector<32x1xf32>
    %cst_83 = arith.constant 3.200000e+01 : f32
    %231 = vector.broadcast %cst_83 : f32 to vector<32x1xf32>
    %232 = arith.divf %230, %231 : vector<32x1xf32>
    %233 = vector.broadcast %225 : vector<32x1xf32> to vector<32x32xf32>
    %234 = arith.subf %221, %233 : vector<32x32xf32>
    %cst_84 = arith.constant 9.99999974E-6 : f32
    %235 = vector.broadcast %cst_84 : f32 to vector<32x1xf32>
    %236 = arith.addf %232, %235 : vector<32x1xf32>
    %237 = math.rsqrt %236 : vector<32x1xf32>
    %238 = vector.broadcast %237 : vector<32x1xf32> to vector<32x32xf32>
    %239 = arith.mulf %234, %238 : vector<32x32xf32>
    %c0_85 = arith.constant 0 : index
    %c0_86 = arith.constant 0 : index
    %240 = vector.load %arg13[%c0_85, %c0_86] : memref<1x32xf32, #tpu.memory_space<vmem>>, vector<1x32xf32>
    %241 = vector.broadcast %240 : vector<1x32xf32> to vector<32x32xf32>
    %242 = arith.mulf %239, %241 : vector<32x32xf32>
    %c0_87 = arith.constant 0 : index
    %c0_88 = arith.constant 0 : index
    %243 = vector.load %arg14[%c0_87, %c0_88] : memref<1x32xf32, #tpu.memory_space<vmem>>, vector<1x32xf32>
    %244 = vector.broadcast %243 : vector<1x32xf32> to vector<32x32xf32>
    %245 = arith.addf %242, %244 : vector<32x32xf32>
    %c0_89 = arith.constant 0 : index
    %c0_90 = arith.constant 0 : index
    %246 = vector.load %arg15[%c0_89, %c0_90] : memref<32x128xf32, #tpu.memory_space<vmem>>, vector<32x128xf32>
    %cst_91 = arith.constant dense<0.000000e+00> : vector<32x128xf32>
    %247 = tpu.matmul %245, %246, %cst_91 {dimension_numbers = #tpu.dot_dimension_numbers<[1], [0], [0], [1], [0, 0, 1, 1], [], []>} : vector<32x32xf32>, vector<32x128xf32>, vector<32x128xf32> -> vector<32x128xf32>
    %c0_92 = arith.constant 0 : index
    %c0_93 = arith.constant 0 : index
    %248 = vector.load %arg16[%c0_92, %c0_93] : memref<1x128xf32, #tpu.memory_space<vmem>>, vector<1x128xf32>
    %249 = vector.broadcast %248 : vector<1x128xf32> to vector<32x128xf32>
    %250 = arith.addf %247, %249 : vector<32x128xf32>
    %251 = arith.mulf %250, %250 : vector<32x128xf32>
    %252 = arith.mulf %250, %251 : vector<32x128xf32>
    %cst_94 = arith.constant 4.471500e-02 : f32
    %253 = vector.broadcast %cst_94 : f32 to vector<32x128xf32>
    %254 = arith.mulf %253, %252 : vector<32x128xf32>
    %255 = arith.addf %250, %254 : vector<32x128xf32>
    %cst_95 = arith.constant 0.797884583 : f32
    %256 = vector.broadcast %cst_95 : f32 to vector<32x128xf32>
    %257 = arith.mulf %256, %255 : vector<32x128xf32>
    %258 = math.tanh %257 : vector<32x128xf32>
    %cst_96 = arith.constant 1.000000e+00 : f32
    %259 = vector.broadcast %cst_96 : f32 to vector<32x128xf32>
    %260 = arith.addf %259, %258 : vector<32x128xf32>
    %cst_97 = arith.constant 5.000000e-01 : f32
    %261 = vector.broadcast %cst_97 : f32 to vector<32x128xf32>
    %262 = arith.mulf %261, %260 : vector<32x128xf32>
    %263 = arith.mulf %250, %262 : vector<32x128xf32>
    %c0_98 = arith.constant 0 : index
    %c0_99 = arith.constant 0 : index
    %264 = vector.load %arg17[%c0_98, %c0_99] : memref<128x32xf32, #tpu.memory_space<vmem>>, vector<128x32xf32>
    %cst_100 = arith.constant dense<0.000000e+00> : vector<32x32xf32>
    %265 = tpu.matmul %263, %264, %cst_100 {dimension_numbers = #tpu.dot_dimension_numbers<[1], [0], [0], [1], [0, 0, 1, 1], [], []>} : vector<32x128xf32>, vector<128x32xf32>, vector<32x32xf32> -> vector<32x32xf32>
    %c0_101 = arith.constant 0 : index
    %c0_102 = arith.constant 0 : index
    %266 = vector.load %arg18[%c0_101, %c0_102] : memref<1x32xf32, #tpu.memory_space<vmem>>, vector<1x32xf32>
    %267 = vector.broadcast %266 : vector<1x32xf32> to vector<32x32xf32>
    %268 = arith.addf %265, %267 : vector<32x32xf32>
    %269 = arith.addf %221, %268 : vector<32x32xf32>
    %cst_103 = arith.constant dense<0.000000e+00> : vector<32xf32>
    %270 = vector.multi_reduction <add>, %269, %cst_103 [1] : vector<32x32xf32> to vector<32xf32>
    %271 = vector.shape_cast %270 : vector<32xf32> to vector<32x1xf32>
    %cst_104 = arith.constant 3.200000e+01 : f32
    %272 = vector.broadcast %cst_104 : f32 to vector<32x1xf32>
    %273 = arith.divf %271, %272 : vector<32x1xf32>
    %274 = vector.broadcast %273 : vector<32x1xf32> to vector<32x32xf32>
    %275 = arith.subf %269, %274 : vector<32x32xf32>
    %276 = arith.mulf %275, %275 : vector<32x32xf32>
    %cst_105 = arith.constant dense<0.000000e+00> : vector<32xf32>
    %277 = vector.multi_reduction <add>, %276, %cst_105 [1] : vector<32x32xf32> to vector<32xf32>
    %278 = vector.shape_cast %277 : vector<32xf32> to vector<32x1xf32>
    %cst_106 = arith.constant 3.200000e+01 : f32
    %279 = vector.broadcast %cst_106 : f32 to vector<32x1xf32>
    %280 = arith.divf %278, %279 : vector<32x1xf32>
    %281 = vector.broadcast %273 : vector<32x1xf32> to vector<32x32xf32>
    %282 = arith.subf %269, %281 : vector<32x32xf32>
    %cst_107 = arith.constant 9.99999974E-6 : f32
    %283 = vector.broadcast %cst_107 : f32 to vector<32x1xf32>
    %284 = arith.addf %280, %283 : vector<32x1xf32>
    %285 = math.rsqrt %284 : vector<32x1xf32>
    %286 = vector.broadcast %285 : vector<32x1xf32> to vector<32x32xf32>
    %287 = arith.mulf %282, %286 : vector<32x32xf32>
    %c0_108 = arith.constant 0 : index
    %c0_109 = arith.constant 0 : index
    %288 = vector.load %arg19[%c0_108, %c0_109] : memref<1x32xf32, #tpu.memory_space<vmem>>, vector<1x32xf32>
    %289 = vector.broadcast %288 : vector<1x32xf32> to vector<32x32xf32>
    %290 = arith.mulf %287, %289 : vector<32x32xf32>
    %c0_110 = arith.constant 0 : index
    %c0_111 = arith.constant 0 : index
    %291 = vector.load %arg20[%c0_110, %c0_111] : memref<1x32xf32, #tpu.memory_space<vmem>>, vector<1x32xf32>
    %292 = vector.broadcast %291 : vector<1x32xf32> to vector<32x32xf32>
    %293 = arith.addf %290, %292 : vector<32x32xf32>
    %c0_112 = arith.constant 0 : index
    %c0_113 = arith.constant 0 : index
    %294 = vector.load %arg21[%c0_112, %c0_113] : memref<32x96xf32, #tpu.memory_space<vmem>>, vector<32x96xf32>
    %cst_114 = arith.constant dense<0.000000e+00> : vector<32x96xf32>
    %295 = tpu.matmul %293, %294, %cst_114 {dimension_numbers = #tpu.dot_dimension_numbers<[1], [0], [0], [1], [0, 0, 1, 1], [], []>} : vector<32x32xf32>, vector<32x96xf32>, vector<32x96xf32> -> vector<32x96xf32>
    %c0_115 = arith.constant 0 : index
    %c0_116 = arith.constant 0 : index
    %296 = vector.load %arg22[%c0_115, %c0_116] : memref<1x96xf32, #tpu.memory_space<vmem>>, vector<1x96xf32>
    %297 = vector.broadcast %296 : vector<1x96xf32> to vector<32x96xf32>
    %298 = arith.addf %295, %297 : vector<32x96xf32>
    %c0_117 = arith.constant 0 : index
    %c0_118 = arith.constant 0 : index
    %299 = vector.load %arg23[%c0_117, %c0_118] : memref<32x32xf32, #tpu.memory_space<vmem>>, vector<32x32xf32>
    %300 = vector.extract_strided_slice %298 {offsets = [0, 0], sizes = [16, 8], strides = [1, 1]} : vector<32x96xf32> to vector<16x8xf32>
    %301 = vector.extract_strided_slice %298 {offsets = [0, 32], sizes = [16, 8], strides = [1, 1]} : vector<32x96xf32> to vector<16x8xf32>
    %302 = vector.extract_strided_slice %298 {offsets = [0, 64], sizes = [16, 8], strides = [1, 1]} : vector<32x96xf32> to vector<16x8xf32>
    %303 = tpu.transpose %301, [1, 0] : vector<16x8xf32> -> vector<8x16xf32>
    %cst_119 = arith.constant dense<0.000000e+00> : vector<16x16xf32>
    %304 = tpu.matmul %300, %303, %cst_119 {dimension_numbers = #tpu.dot_dimension_numbers<[1], [0], [0], [1], [0, 0, 1, 1], [], []>} : vector<16x8xf32>, vector<8x16xf32>, vector<16x16xf32> -> vector<16x16xf32>
    %cst_120 = arith.constant 0.353553385 : f32
    %305 = vector.broadcast %cst_120 : f32 to vector<16x16xf32>
    %306 = arith.mulf %304, %305 : vector<16x16xf32>
    %cst_121 = arith.constant dense<0xFF800000> : vector<16xf32>
    %307 = vector.multi_reduction <maximumf>, %306, %cst_121 [1] : vector<16x16xf32> to vector<16xf32>
    %308 = vector.shape_cast %307 : vector<16xf32> to vector<16x1xf32>
    %309 = vector.broadcast %308 : vector<16x1xf32> to vector<16x16xf32>
    %310 = arith.subf %306, %309 : vector<16x16xf32>
    %311 = math.exp %310 : vector<16x16xf32>
    %cst_122 = arith.constant dense<0.000000e+00> : vector<16xf32>
    %312 = vector.multi_reduction <add>, %311, %cst_122 [1] : vector<16x16xf32> to vector<16xf32>
    %313 = vector.shape_cast %312 : vector<16xf32> to vector<16x1xf32>
    %314 = tpu.reciprocal %313 {approx = true} : vector<16x1xf32> -> vector<16x1xf32>
    %315 = vector.broadcast %314 : vector<16x1xf32> to vector<16x16xf32>
    %316 = arith.mulf %311, %315 : vector<16x16xf32>
    %cst_123 = arith.constant dense<0.000000e+00> : vector<16x8xf32>
    %317 = tpu.matmul %316, %302, %cst_123 {dimension_numbers = #tpu.dot_dimension_numbers<[1], [0], [0], [1], [0, 0, 1, 1], [], []>} : vector<16x16xf32>, vector<16x8xf32>, vector<16x8xf32> -> vector<16x8xf32>
    %318 = vector.extract_strided_slice %299 {offsets = [0, 0], sizes = [8, 32], strides = [1, 1]} : vector<32x32xf32> to vector<8x32xf32>
    %cst_124 = arith.constant dense<0.000000e+00> : vector<16x32xf32>
    %319 = tpu.matmul %317, %318, %cst_124 {dimension_numbers = #tpu.dot_dimension_numbers<[1], [0], [0], [1], [0, 0, 1, 1], [], []>} : vector<16x8xf32>, vector<8x32xf32>, vector<16x32xf32> -> vector<16x32xf32>
    %320 = vector.extract_strided_slice %298 {offsets = [0, 8], sizes = [16, 8], strides = [1, 1]} : vector<32x96xf32> to vector<16x8xf32>
    %321 = vector.extract_strided_slice %298 {offsets = [0, 40], sizes = [16, 8], strides = [1, 1]} : vector<32x96xf32> to vector<16x8xf32>
    %322 = vector.extract_strided_slice %298 {offsets = [0, 72], sizes = [16, 8], strides = [1, 1]} : vector<32x96xf32> to vector<16x8xf32>
    %323 = tpu.transpose %321, [1, 0] : vector<16x8xf32> -> vector<8x16xf32>
    %cst_125 = arith.constant dense<0.000000e+00> : vector<16x16xf32>
    %324 = tpu.matmul %320, %323, %cst_125 {dimension_numbers = #tpu.dot_dimension_numbers<[1], [0], [0], [1], [0, 0, 1, 1], [], []>} : vector<16x8xf32>, vector<8x16xf32>, vector<16x16xf32> -> vector<16x16xf32>
    %cst_126 = arith.constant 0.353553385 : f32
    %325 = vector.broadcast %cst_126 : f32 to vector<16x16xf32>
    %326 = arith.mulf %324, %325 : vector<16x16xf32>
    %cst_127 = arith.constant dense<0xFF800000> : vector<16xf32>
    %327 = vector.multi_reduction <maximumf>, %326, %cst_127 [1] : vector<16x16xf32> to vector<16xf32>
    %328 = vector.shape_cast %327 : vector<16xf32> to vector<16x1xf32>
    %329 = vector.broadcast %328 : vector<16x1xf32> to vector<16x16xf32>
    %330 = arith.subf %326, %329 : vector<16x16xf32>
    %331 = math.exp %330 : vector<16x16xf32>
    %cst_128 = arith.constant dense<0.000000e+00> : vector<16xf32>
    %332 = vector.multi_reduction <add>, %331, %cst_128 [1] : vector<16x16xf32> to vector<16xf32>
    %333 = vector.shape_cast %332 : vector<16xf32> to vector<16x1xf32>
    %334 = tpu.reciprocal %333 {approx = true} : vector<16x1xf32> -> vector<16x1xf32>
    %335 = vector.broadcast %334 : vector<16x1xf32> to vector<16x16xf32>
    %336 = arith.mulf %331, %335 : vector<16x16xf32>
    %cst_129 = arith.constant dense<0.000000e+00> : vector<16x8xf32>
    %337 = tpu.matmul %336, %322, %cst_129 {dimension_numbers = #tpu.dot_dimension_numbers<[1], [0], [0], [1], [0, 0, 1, 1], [], []>} : vector<16x16xf32>, vector<16x8xf32>, vector<16x8xf32> -> vector<16x8xf32>
    %338 = vector.extract_strided_slice %299 {offsets = [8, 0], sizes = [8, 32], strides = [1, 1]} : vector<32x32xf32> to vector<8x32xf32>
    %cst_130 = arith.constant dense<0.000000e+00> : vector<16x32xf32>
    %339 = tpu.matmul %337, %338, %cst_130 {dimension_numbers = #tpu.dot_dimension_numbers<[1], [0], [0], [1], [0, 0, 1, 1], [], []>} : vector<16x8xf32>, vector<8x32xf32>, vector<16x32xf32> -> vector<16x32xf32>
    %340 = arith.addf %319, %339 : vector<16x32xf32>
    %341 = vector.extract_strided_slice %298 {offsets = [0, 16], sizes = [16, 8], strides = [1, 1]} : vector<32x96xf32> to vector<16x8xf32>
    %342 = vector.extract_strided_slice %298 {offsets = [0, 48], sizes = [16, 8], strides = [1, 1]} : vector<32x96xf32> to vector<16x8xf32>
    %343 = vector.extract_strided_slice %298 {offsets = [0, 80], sizes = [16, 8], strides = [1, 1]} : vector<32x96xf32> to vector<16x8xf32>
    %344 = tpu.transpose %342, [1, 0] : vector<16x8xf32> -> vector<8x16xf32>
    %cst_131 = arith.constant dense<0.000000e+00> : vector<16x16xf32>
    %345 = tpu.matmul %341, %344, %cst_131 {dimension_numbers = #tpu.dot_dimension_numbers<[1], [0], [0], [1], [0, 0, 1, 1], [], []>} : vector<16x8xf32>, vector<8x16xf32>, vector<16x16xf32> -> vector<16x16xf32>
    %cst_132 = arith.constant 0.353553385 : f32
    %346 = vector.broadcast %cst_132 : f32 to vector<16x16xf32>
    %347 = arith.mulf %345, %346 : vector<16x16xf32>
    %cst_133 = arith.constant dense<0xFF800000> : vector<16xf32>
    %348 = vector.multi_reduction <maximumf>, %347, %cst_133 [1] : vector<16x16xf32> to vector<16xf32>
    %349 = vector.shape_cast %348 : vector<16xf32> to vector<16x1xf32>
    %350 = vector.broadcast %349 : vector<16x1xf32> to vector<16x16xf32>
    %351 = arith.subf %347, %350 : vector<16x16xf32>
    %352 = math.exp %351 : vector<16x16xf32>
    %cst_134 = arith.constant dense<0.000000e+00> : vector<16xf32>
    %353 = vector.multi_reduction <add>, %352, %cst_134 [1] : vector<16x16xf32> to vector<16xf32>
    %354 = vector.shape_cast %353 : vector<16xf32> to vector<16x1xf32>
    %355 = tpu.reciprocal %354 {approx = true} : vector<16x1xf32> -> vector<16x1xf32>
    %356 = vector.broadcast %355 : vector<16x1xf32> to vector<16x16xf32>
    %357 = arith.mulf %352, %356 : vector<16x16xf32>
    %cst_135 = arith.constant dense<0.000000e+00> : vector<16x8xf32>
    %358 = tpu.matmul %357, %343, %cst_135 {dimension_numbers = #tpu.dot_dimension_numbers<[1], [0], [0], [1], [0, 0, 1, 1], [], []>} : vector<16x16xf32>, vector<16x8xf32>, vector<16x8xf32> -> vector<16x8xf32>
    %359 = vector.extract_strided_slice %299 {offsets = [16, 0], sizes = [8, 32], strides = [1, 1]} : vector<32x32xf32> to vector<8x32xf32>
    %cst_136 = arith.constant dense<0.000000e+00> : vector<16x32xf32>
    %360 = tpu.matmul %358, %359, %cst_136 {dimension_numbers = #tpu.dot_dimension_numbers<[1], [0], [0], [1], [0, 0, 1, 1], [], []>} : vector<16x8xf32>, vector<8x32xf32>, vector<16x32xf32> -> vector<16x32xf32>
    %361 = arith.addf %340, %360 : vector<16x32xf32>
    %362 = vector.extract_strided_slice %298 {offsets = [0, 24], sizes = [16, 8], strides = [1, 1]} : vector<32x96xf32> to vector<16x8xf32>
    %363 = vector.extract_strided_slice %298 {offsets = [0, 56], sizes = [16, 8], strides = [1, 1]} : vector<32x96xf32> to vector<16x8xf32>
    %364 = vector.extract_strided_slice %298 {offsets = [0, 88], sizes = [16, 8], strides = [1, 1]} : vector<32x96xf32> to vector<16x8xf32>
    %365 = tpu.transpose %363, [1, 0] : vector<16x8xf32> -> vector<8x16xf32>
    %cst_137 = arith.constant dense<0.000000e+00> : vector<16x16xf32>
    %366 = tpu.matmul %362, %365, %cst_137 {dimension_numbers = #tpu.dot_dimension_numbers<[1], [0], [0], [1], [0, 0, 1, 1], [], []>} : vector<16x8xf32>, vector<8x16xf32>, vector<16x16xf32> -> vector<16x16xf32>
    %cst_138 = arith.constant 0.353553385 : f32
    %367 = vector.broadcast %cst_138 : f32 to vector<16x16xf32>
    %368 = arith.mulf %366, %367 : vector<16x16xf32>
    %cst_139 = arith.constant dense<0xFF800000> : vector<16xf32>
    %369 = vector.multi_reduction <maximumf>, %368, %cst_139 [1] : vector<16x16xf32> to vector<16xf32>
    %370 = vector.shape_cast %369 : vector<16xf32> to vector<16x1xf32>
    %371 = vector.broadcast %370 : vector<16x1xf32> to vector<16x16xf32>
    %372 = arith.subf %368, %371 : vector<16x16xf32>
    %373 = math.exp %372 : vector<16x16xf32>
    %cst_140 = arith.constant dense<0.000000e+00> : vector<16xf32>
    %374 = vector.multi_reduction <add>, %373, %cst_140 [1] : vector<16x16xf32> to vector<16xf32>
    %375 = vector.shape_cast %374 : vector<16xf32> to vector<16x1xf32>
    %376 = tpu.reciprocal %375 {approx = true} : vector<16x1xf32> -> vector<16x1xf32>
    %377 = vector.broadcast %376 : vector<16x1xf32> to vector<16x16xf32>
    %378 = arith.mulf %373, %377 : vector<16x16xf32>
    %cst_141 = arith.constant dense<0.000000e+00> : vector<16x8xf32>
    %379 = tpu.matmul %378, %364, %cst_141 {dimension_numbers = #tpu.dot_dimension_numbers<[1], [0], [0], [1], [0, 0, 1, 1], [], []>} : vector<16x16xf32>, vector<16x8xf32>, vector<16x8xf32> -> vector<16x8xf32>
    %380 = vector.extract_strided_slice %299 {offsets = [24, 0], sizes = [8, 32], strides = [1, 1]} : vector<32x32xf32> to vector<8x32xf32>
    %cst_142 = arith.constant dense<0.000000e+00> : vector<16x32xf32>
    %381 = tpu.matmul %379, %380, %cst_142 {dimension_numbers = #tpu.dot_dimension_numbers<[1], [0], [0], [1], [0, 0, 1, 1], [], []>} : vector<16x8xf32>, vector<8x32xf32>, vector<16x32xf32> -> vector<16x32xf32>
    %382 = arith.addf %361, %381 : vector<16x32xf32>
    %383 = vector.extract_strided_slice %298 {offsets = [16, 0], sizes = [16, 8], strides = [1, 1]} : vector<32x96xf32> to vector<16x8xf32>
    %384 = vector.extract_strided_slice %298 {offsets = [16, 32], sizes = [16, 8], strides = [1, 1]} : vector<32x96xf32> to vector<16x8xf32>
    %385 = vector.extract_strided_slice %298 {offsets = [16, 64], sizes = [16, 8], strides = [1, 1]} : vector<32x96xf32> to vector<16x8xf32>
    %386 = tpu.transpose %384, [1, 0] : vector<16x8xf32> -> vector<8x16xf32>
    %cst_143 = arith.constant dense<0.000000e+00> : vector<16x16xf32>
    %387 = tpu.matmul %383, %386, %cst_143 {dimension_numbers = #tpu.dot_dimension_numbers<[1], [0], [0], [1], [0, 0, 1, 1], [], []>} : vector<16x8xf32>, vector<8x16xf32>, vector<16x16xf32> -> vector<16x16xf32>
    %cst_144 = arith.constant 0.353553385 : f32
    %388 = vector.broadcast %cst_144 : f32 to vector<16x16xf32>
    %389 = arith.mulf %387, %388 : vector<16x16xf32>
    %cst_145 = arith.constant dense<0xFF800000> : vector<16xf32>
    %390 = vector.multi_reduction <maximumf>, %389, %cst_145 [1] : vector<16x16xf32> to vector<16xf32>
    %391 = vector.shape_cast %390 : vector<16xf32> to vector<16x1xf32>
    %392 = vector.broadcast %391 : vector<16x1xf32> to vector<16x16xf32>
    %393 = arith.subf %389, %392 : vector<16x16xf32>
    %394 = math.exp %393 : vector<16x16xf32>
    %cst_146 = arith.constant dense<0.000000e+00> : vector<16xf32>
    %395 = vector.multi_reduction <add>, %394, %cst_146 [1] : vector<16x16xf32> to vector<16xf32>
    %396 = vector.shape_cast %395 : vector<16xf32> to vector<16x1xf32>
    %397 = tpu.reciprocal %396 {approx = true} : vector<16x1xf32> -> vector<16x1xf32>
    %398 = vector.broadcast %397 : vector<16x1xf32> to vector<16x16xf32>
    %399 = arith.mulf %394, %398 : vector<16x16xf32>
    %cst_147 = arith.constant dense<0.000000e+00> : vector<16x8xf32>
    %400 = tpu.matmul %399, %385, %cst_147 {dimension_numbers = #tpu.dot_dimension_numbers<[1], [0], [0], [1], [0, 0, 1, 1], [], []>} : vector<16x16xf32>, vector<16x8xf32>, vector<16x8xf32> -> vector<16x8xf32>
    %401 = vector.extract_strided_slice %299 {offsets = [0, 0], sizes = [8, 32], strides = [1, 1]} : vector<32x32xf32> to vector<8x32xf32>
    %cst_148 = arith.constant dense<0.000000e+00> : vector<16x32xf32>
    %402 = tpu.matmul %400, %401, %cst_148 {dimension_numbers = #tpu.dot_dimension_numbers<[1], [0], [0], [1], [0, 0, 1, 1], [], []>} : vector<16x8xf32>, vector<8x32xf32>, vector<16x32xf32> -> vector<16x32xf32>
    %403 = vector.extract_strided_slice %298 {offsets = [16, 8], sizes = [16, 8], strides = [1, 1]} : vector<32x96xf32> to vector<16x8xf32>
    %404 = vector.extract_strided_slice %298 {offsets = [16, 40], sizes = [16, 8], strides = [1, 1]} : vector<32x96xf32> to vector<16x8xf32>
    %405 = vector.extract_strided_slice %298 {offsets = [16, 72], sizes = [16, 8], strides = [1, 1]} : vector<32x96xf32> to vector<16x8xf32>
    %406 = tpu.transpose %404, [1, 0] : vector<16x8xf32> -> vector<8x16xf32>
    %cst_149 = arith.constant dense<0.000000e+00> : vector<16x16xf32>
    %407 = tpu.matmul %403, %406, %cst_149 {dimension_numbers = #tpu.dot_dimension_numbers<[1], [0], [0], [1], [0, 0, 1, 1], [], []>} : vector<16x8xf32>, vector<8x16xf32>, vector<16x16xf32> -> vector<16x16xf32>
    %cst_150 = arith.constant 0.353553385 : f32
    %408 = vector.broadcast %cst_150 : f32 to vector<16x16xf32>
    %409 = arith.mulf %407, %408 : vector<16x16xf32>
    %cst_151 = arith.constant dense<0xFF800000> : vector<16xf32>
    %410 = vector.multi_reduction <maximumf>, %409, %cst_151 [1] : vector<16x16xf32> to vector<16xf32>
    %411 = vector.shape_cast %410 : vector<16xf32> to vector<16x1xf32>
    %412 = vector.broadcast %411 : vector<16x1xf32> to vector<16x16xf32>
    %413 = arith.subf %409, %412 : vector<16x16xf32>
    %414 = math.exp %413 : vector<16x16xf32>
    %cst_152 = arith.constant dense<0.000000e+00> : vector<16xf32>
    %415 = vector.multi_reduction <add>, %414, %cst_152 [1] : vector<16x16xf32> to vector<16xf32>
    %416 = vector.shape_cast %415 : vector<16xf32> to vector<16x1xf32>
    %417 = tpu.reciprocal %416 {approx = true} : vector<16x1xf32> -> vector<16x1xf32>
    %418 = vector.broadcast %417 : vector<16x1xf32> to vector<16x16xf32>
    %419 = arith.mulf %414, %418 : vector<16x16xf32>
    %cst_153 = arith.constant dense<0.000000e+00> : vector<16x8xf32>
    %420 = tpu.matmul %419, %405, %cst_153 {dimension_numbers = #tpu.dot_dimension_numbers<[1], [0], [0], [1], [0, 0, 1, 1], [], []>} : vector<16x16xf32>, vector<16x8xf32>, vector<16x8xf32> -> vector<16x8xf32>
    %421 = vector.extract_strided_slice %299 {offsets = [8, 0], sizes = [8, 32], strides = [1, 1]} : vector<32x32xf32> to vector<8x32xf32>
    %cst_154 = arith.constant dense<0.000000e+00> : vector<16x32xf32>
    %422 = tpu.matmul %420, %421, %cst_154 {dimension_numbers = #tpu.dot_dimension_numbers<[1], [0], [0], [1], [0, 0, 1, 1], [], []>} : vector<16x8xf32>, vector<8x32xf32>, vector<16x32xf32> -> vector<16x32xf32>
    %423 = arith.addf %402, %422 : vector<16x32xf32>
    %424 = vector.extract_strided_slice %298 {offsets = [16, 16], sizes = [16, 8], strides = [1, 1]} : vector<32x96xf32> to vector<16x8xf32>
    %425 = vector.extract_strided_slice %298 {offsets = [16, 48], sizes = [16, 8], strides = [1, 1]} : vector<32x96xf32> to vector<16x8xf32>
    %426 = vector.extract_strided_slice %298 {offsets = [16, 80], sizes = [16, 8], strides = [1, 1]} : vector<32x96xf32> to vector<16x8xf32>
    %427 = tpu.transpose %425, [1, 0] : vector<16x8xf32> -> vector<8x16xf32>
    %cst_155 = arith.constant dense<0.000000e+00> : vector<16x16xf32>
    %428 = tpu.matmul %424, %427, %cst_155 {dimension_numbers = #tpu.dot_dimension_numbers<[1], [0], [0], [1], [0, 0, 1, 1], [], []>} : vector<16x8xf32>, vector<8x16xf32>, vector<16x16xf32> -> vector<16x16xf32>
    %cst_156 = arith.constant 0.353553385 : f32
    %429 = vector.broadcast %cst_156 : f32 to vector<16x16xf32>
    %430 = arith.mulf %428, %429 : vector<16x16xf32>
    %cst_157 = arith.constant dense<0xFF800000> : vector<16xf32>
    %431 = vector.multi_reduction <maximumf>, %430, %cst_157 [1] : vector<16x16xf32> to vector<16xf32>
    %432 = vector.shape_cast %431 : vector<16xf32> to vector<16x1xf32>
    %433 = vector.broadcast %432 : vector<16x1xf32> to vector<16x16xf32>
    %434 = arith.subf %430, %433 : vector<16x16xf32>
    %435 = math.exp %434 : vector<16x16xf32>
    %cst_158 = arith.constant dense<0.000000e+00> : vector<16xf32>
    %436 = vector.multi_reduction <add>, %435, %cst_158 [1] : vector<16x16xf32> to vector<16xf32>
    %437 = vector.shape_cast %436 : vector<16xf32> to vector<16x1xf32>
    %438 = tpu.reciprocal %437 {approx = true} : vector<16x1xf32> -> vector<16x1xf32>
    %439 = vector.broadcast %438 : vector<16x1xf32> to vector<16x16xf32>
    %440 = arith.mulf %435, %439 : vector<16x16xf32>
    %cst_159 = arith.constant dense<0.000000e+00> : vector<16x8xf32>
    %441 = tpu.matmul %440, %426, %cst_159 {dimension_numbers = #tpu.dot_dimension_numbers<[1], [0], [0], [1], [0, 0, 1, 1], [], []>} : vector<16x16xf32>, vector<16x8xf32>, vector<16x8xf32> -> vector<16x8xf32>
    %442 = vector.extract_strided_slice %299 {offsets = [16, 0], sizes = [8, 32], strides = [1, 1]} : vector<32x32xf32> to vector<8x32xf32>
    %cst_160 = arith.constant dense<0.000000e+00> : vector<16x32xf32>
    %443 = tpu.matmul %441, %442, %cst_160 {dimension_numbers = #tpu.dot_dimension_numbers<[1], [0], [0], [1], [0, 0, 1, 1], [], []>} : vector<16x8xf32>, vector<8x32xf32>, vector<16x32xf32> -> vector<16x32xf32>
    %444 = arith.addf %423, %443 : vector<16x32xf32>
    %445 = vector.extract_strided_slice %298 {offsets = [16, 24], sizes = [16, 8], strides = [1, 1]} : vector<32x96xf32> to vector<16x8xf32>
    %446 = vector.extract_strided_slice %298 {offsets = [16, 56], sizes = [16, 8], strides = [1, 1]} : vector<32x96xf32> to vector<16x8xf32>
    %447 = vector.extract_strided_slice %298 {offsets = [16, 88], sizes = [16, 8], strides = [1, 1]} : vector<32x96xf32> to vector<16x8xf32>
    %448 = tpu.transpose %446, [1, 0] : vector<16x8xf32> -> vector<8x16xf32>
    %cst_161 = arith.constant dense<0.000000e+00> : vector<16x16xf32>
    %449 = tpu.matmul %445, %448, %cst_161 {dimension_numbers = #tpu.dot_dimension_numbers<[1], [0], [0], [1], [0, 0, 1, 1], [], []>} : vector<16x8xf32>, vector<8x16xf32>, vector<16x16xf32> -> vector<16x16xf32>
    %cst_162 = arith.constant 0.353553385 : f32
    %450 = vector.broadcast %cst_162 : f32 to vector<16x16xf32>
    %451 = arith.mulf %449, %450 : vector<16x16xf32>
    %cst_163 = arith.constant dense<0xFF800000> : vector<16xf32>
    %452 = vector.multi_reduction <maximumf>, %451, %cst_163 [1] : vector<16x16xf32> to vector<16xf32>
    %453 = vector.shape_cast %452 : vector<16xf32> to vector<16x1xf32>
    %454 = vector.broadcast %453 : vector<16x1xf32> to vector<16x16xf32>
    %455 = arith.subf %451, %454 : vector<16x16xf32>
    %456 = math.exp %455 : vector<16x16xf32>
    %cst_164 = arith.constant dense<0.000000e+00> : vector<16xf32>
    %457 = vector.multi_reduction <add>, %456, %cst_164 [1] : vector<16x16xf32> to vector<16xf32>
    %458 = vector.shape_cast %457 : vector<16xf32> to vector<16x1xf32>
    %459 = tpu.reciprocal %458 {approx = true} : vector<16x1xf32> -> vector<16x1xf32>
    %460 = vector.broadcast %459 : vector<16x1xf32> to vector<16x16xf32>
    %461 = arith.mulf %456, %460 : vector<16x16xf32>
    %cst_165 = arith.constant dense<0.000000e+00> : vector<16x8xf32>
    %462 = tpu.matmul %461, %447, %cst_165 {dimension_numbers = #tpu.dot_dimension_numbers<[1], [0], [0], [1], [0, 0, 1, 1], [], []>} : vector<16x16xf32>, vector<16x8xf32>, vector<16x8xf32> -> vector<16x8xf32>
    %463 = vector.extract_strided_slice %299 {offsets = [24, 0], sizes = [8, 32], strides = [1, 1]} : vector<32x32xf32> to vector<8x32xf32>
    %cst_166 = arith.constant dense<0.000000e+00> : vector<16x32xf32>
    %464 = tpu.matmul %462, %463, %cst_166 {dimension_numbers = #tpu.dot_dimension_numbers<[1], [0], [0], [1], [0, 0, 1, 1], [], []>} : vector<16x8xf32>, vector<8x32xf32>, vector<16x32xf32> -> vector<16x32xf32>
    %465 = arith.addf %444, %464 : vector<16x32xf32>
    %466 = tpu.concatenate %382, %465 in 0 : vector<16x32xf32>, vector<16x32xf32> -> vector<32x32xf32>
    %467 = arith.addf %269, %466 : vector<32x32xf32>
    %c0_167 = arith.constant 0 : index
    %c0_168 = arith.constant 0 : index
    %468 = vector.load %arg24[%c0_167, %c0_168] : memref<1x32xf32, #tpu.memory_space<vmem>>, vector<1x32xf32>
    %469 = vector.broadcast %468 : vector<1x32xf32> to vector<32x32xf32>
    %470 = arith.addf %467, %469 : vector<32x32xf32>
    %cst_169 = arith.constant dense<0.000000e+00> : vector<32xf32>
    %471 = vector.multi_reduction <add>, %470, %cst_169 [1] : vector<32x32xf32> to vector<32xf32>
    %472 = vector.shape_cast %471 : vector<32xf32> to vector<32x1xf32>
    %cst_170 = arith.constant 3.200000e+01 : f32
    %473 = vector.broadcast %cst_170 : f32 to vector<32x1xf32>
    %474 = arith.divf %472, %473 : vector<32x1xf32>
    %475 = vector.broadcast %474 : vector<32x1xf32> to vector<32x32xf32>
    %476 = arith.subf %470, %475 : vector<32x32xf32>
    %477 = arith.mulf %476, %476 : vector<32x32xf32>
    %cst_171 = arith.constant dense<0.000000e+00> : vector<32xf32>
    %478 = vector.multi_reduction <add>, %477, %cst_171 [1] : vector<32x32xf32> to vector<32xf32>
    %479 = vector.shape_cast %478 : vector<32xf32> to vector<32x1xf32>
    %cst_172 = arith.constant 3.200000e+01 : f32
    %480 = vector.broadcast %cst_172 : f32 to vector<32x1xf32>
    %481 = arith.divf %479, %480 : vector<32x1xf32>
    %482 = vector.broadcast %474 : vector<32x1xf32> to vector<32x32xf32>
    %483 = arith.subf %470, %482 : vector<32x32xf32>
    %cst_173 = arith.constant 9.99999974E-6 : f32
    %484 = vector.broadcast %cst_173 : f32 to vector<32x1xf32>
    %485 = arith.addf %481, %484 : vector<32x1xf32>
    %486 = math.rsqrt %485 : vector<32x1xf32>
    %487 = vector.broadcast %486 : vector<32x1xf32> to vector<32x32xf32>
    %488 = arith.mulf %483, %487 : vector<32x32xf32>
    %c0_174 = arith.constant 0 : index
    %c0_175 = arith.constant 0 : index
    %489 = vector.load %arg25[%c0_174, %c0_175] : memref<1x32xf32, #tpu.memory_space<vmem>>, vector<1x32xf32>
    %490 = vector.broadcast %489 : vector<1x32xf32> to vector<32x32xf32>
    %491 = arith.mulf %488, %490 : vector<32x32xf32>
    %c0_176 = arith.constant 0 : index
    %c0_177 = arith.constant 0 : index
    %492 = vector.load %arg26[%c0_176, %c0_177] : memref<1x32xf32, #tpu.memory_space<vmem>>, vector<1x32xf32>
    %493 = vector.broadcast %492 : vector<1x32xf32> to vector<32x32xf32>
    %494 = arith.addf %491, %493 : vector<32x32xf32>
    %c0_178 = arith.constant 0 : index
    %c0_179 = arith.constant 0 : index
    %495 = vector.load %arg27[%c0_178, %c0_179] : memref<32x128xf32, #tpu.memory_space<vmem>>, vector<32x128xf32>
    %cst_180 = arith.constant dense<0.000000e+00> : vector<32x128xf32>
    %496 = tpu.matmul %494, %495, %cst_180 {dimension_numbers = #tpu.dot_dimension_numbers<[1], [0], [0], [1], [0, 0, 1, 1], [], []>} : vector<32x32xf32>, vector<32x128xf32>, vector<32x128xf32> -> vector<32x128xf32>
    %c0_181 = arith.constant 0 : index
    %c0_182 = arith.constant 0 : index
    %497 = vector.load %arg28[%c0_181, %c0_182] : memref<1x128xf32, #tpu.memory_space<vmem>>, vector<1x128xf32>
    %498 = vector.broadcast %497 : vector<1x128xf32> to vector<32x128xf32>
    %499 = arith.addf %496, %498 : vector<32x128xf32>
    %500 = arith.mulf %499, %499 : vector<32x128xf32>
    %501 = arith.mulf %499, %500 : vector<32x128xf32>
    %cst_183 = arith.constant 4.471500e-02 : f32
    %502 = vector.broadcast %cst_183 : f32 to vector<32x128xf32>
    %503 = arith.mulf %502, %501 : vector<32x128xf32>
    %504 = arith.addf %499, %503 : vector<32x128xf32>
    %cst_184 = arith.constant 0.797884583 : f32
    %505 = vector.broadcast %cst_184 : f32 to vector<32x128xf32>
    %506 = arith.mulf %505, %504 : vector<32x128xf32>
    %507 = math.tanh %506 : vector<32x128xf32>
    %cst_185 = arith.constant 1.000000e+00 : f32
    %508 = vector.broadcast %cst_185 : f32 to vector<32x128xf32>
    %509 = arith.addf %508, %507 : vector<32x128xf32>
    %cst_186 = arith.constant 5.000000e-01 : f32
    %510 = vector.broadcast %cst_186 : f32 to vector<32x128xf32>
    %511 = arith.mulf %510, %509 : vector<32x128xf32>
    %512 = arith.mulf %499, %511 : vector<32x128xf32>
    %c0_187 = arith.constant 0 : index
    %c0_188 = arith.constant 0 : index
    %513 = vector.load %arg29[%c0_187, %c0_188] : memref<128x32xf32, #tpu.memory_space<vmem>>, vector<128x32xf32>
    %cst_189 = arith.constant dense<0.000000e+00> : vector<32x32xf32>
    %514 = tpu.matmul %512, %513, %cst_189 {dimension_numbers = #tpu.dot_dimension_numbers<[1], [0], [0], [1], [0, 0, 1, 1], [], []>} : vector<32x128xf32>, vector<128x32xf32>, vector<32x32xf32> -> vector<32x32xf32>
    %c0_190 = arith.constant 0 : index
    %c0_191 = arith.constant 0 : index
    %515 = vector.load %arg30[%c0_190, %c0_191] : memref<1x32xf32, #tpu.memory_space<vmem>>, vector<1x32xf32>
    %516 = vector.broadcast %515 : vector<1x32xf32> to vector<32x32xf32>
    %517 = arith.addf %514, %516 : vector<32x32xf32>
    %518 = arith.addf %470, %517 : vector<32x32xf32>
    %cst_192 = arith.constant dense<0.000000e+00> : vector<32xf32>
    %519 = vector.multi_reduction <add>, %518, %cst_192 [1] : vector<32x32xf32> to vector<32xf32>
    %520 = vector.shape_cast %519 : vector<32xf32> to vector<32x1xf32>
    %cst_193 = arith.constant 3.200000e+01 : f32
    %521 = vector.broadcast %cst_193 : f32 to vector<32x1xf32>
    %522 = arith.divf %520, %521 : vector<32x1xf32>
    %523 = vector.broadcast %522 : vector<32x1xf32> to vector<32x32xf32>
    %524 = arith.subf %518, %523 : vector<32x32xf32>
    %525 = arith.mulf %524, %524 : vector<32x32xf32>
    %cst_194 = arith.constant dense<0.000000e+00> : vector<32xf32>
    %526 = vector.multi_reduction <add>, %525, %cst_194 [1] : vector<32x32xf32> to vector<32xf32>
    %527 = vector.shape_cast %526 : vector<32xf32> to vector<32x1xf32>
    %cst_195 = arith.constant 3.200000e+01 : f32
    %528 = vector.broadcast %cst_195 : f32 to vector<32x1xf32>
    %529 = arith.divf %527, %528 : vector<32x1xf32>
    %530 = vector.broadcast %522 : vector<32x1xf32> to vector<32x32xf32>
    %531 = arith.subf %518, %530 : vector<32x32xf32>
    %cst_196 = arith.constant 9.99999974E-6 : f32
    %532 = vector.broadcast %cst_196 : f32 to vector<32x1xf32>
    %533 = arith.addf %529, %532 : vector<32x1xf32>
    %534 = math.rsqrt %533 : vector<32x1xf32>
    %535 = vector.broadcast %534 : vector<32x1xf32> to vector<32x32xf32>
    %536 = arith.mulf %531, %535 : vector<32x32xf32>
    %c0_197 = arith.constant 0 : index
    %c0_198 = arith.constant 0 : index
    %537 = vector.load %arg31[%c0_197, %c0_198] : memref<1x32xf32, #tpu.memory_space<vmem>>, vector<1x32xf32>
    %538 = vector.broadcast %537 : vector<1x32xf32> to vector<32x32xf32>
    %539 = arith.mulf %536, %538 : vector<32x32xf32>
    %c0_199 = arith.constant 0 : index
    %c0_200 = arith.constant 0 : index
    %540 = vector.load %arg32[%c0_199, %c0_200] : memref<1x32xf32, #tpu.memory_space<vmem>>, vector<1x32xf32>
    %541 = vector.broadcast %540 : vector<1x32xf32> to vector<32x32xf32>
    %542 = arith.addf %539, %541 : vector<32x32xf32>
    %c0_201 = arith.constant 0 : index
    %c0_202 = arith.constant 0 : index
    %543 = vector.load %arg33[%c0_201, %c0_202] : memref<32x128xf32, #tpu.memory_space<vmem>>, vector<32x128xf32>
    %cst_203 = arith.constant dense<0.000000e+00> : vector<32x128xf32>
    %544 = tpu.matmul %542, %543, %cst_203 {dimension_numbers = #tpu.dot_dimension_numbers<[1], [0], [0], [1], [0, 0, 1, 1], [], []>} : vector<32x32xf32>, vector<32x128xf32>, vector<32x128xf32> -> vector<32x128xf32>
    %c0_204 = arith.constant 0 : index
    %c0_205 = arith.constant 0 : index
    %545 = vector.load %arg34[%c0_204, %c0_205] : memref<1x128xf32, #tpu.memory_space<vmem>>, vector<1x128xf32>
    %546 = vector.broadcast %545 : vector<1x128xf32> to vector<32x128xf32>
    %547 = arith.addf %544, %546 : vector<32x128xf32>
    %548 = arith.mulf %547, %547 : vector<32x128xf32>
    %549 = arith.mulf %547, %548 : vector<32x128xf32>
    %cst_206 = arith.constant 4.471500e-02 : f32
    %550 = vector.broadcast %cst_206 : f32 to vector<32x128xf32>
    %551 = arith.mulf %550, %549 : vector<32x128xf32>
    %552 = arith.addf %547, %551 : vector<32x128xf32>
    %cst_207 = arith.constant 0.797884583 : f32
    %553 = vector.broadcast %cst_207 : f32 to vector<32x128xf32>
    %554 = arith.mulf %553, %552 : vector<32x128xf32>
    %555 = math.tanh %554 : vector<32x128xf32>
    %cst_208 = arith.constant 1.000000e+00 : f32
    %556 = vector.broadcast %cst_208 : f32 to vector<32x128xf32>
    %557 = arith.addf %556, %555 : vector<32x128xf32>
    %cst_209 = arith.constant 5.000000e-01 : f32
    %558 = vector.broadcast %cst_209 : f32 to vector<32x128xf32>
    %559 = arith.mulf %558, %557 : vector<32x128xf32>
    %560 = arith.mulf %547, %559 : vector<32x128xf32>
    %c0_210 = arith.constant 0 : index
    %c0_211 = arith.constant 0 : index
    %561 = vector.load %arg35[%c0_210, %c0_211] : memref<32x3xf32, #tpu.memory_space<vmem>>, vector<32x3xf32>
    %c0_212 = arith.constant 0 : index
    %c0_213 = arith.constant 0 : index
    %562 = vector.load %arg36[%c0_212, %c0_213] : memref<1x3xf32, #tpu.memory_space<vmem>>, vector<1x3xf32>
    %563 = vector.extract_strided_slice %560 {offsets = [0, 0], sizes = [32, 32], strides = [1, 1]} : vector<32x128xf32> to vector<32x32xf32>
    %cst_214 = arith.constant dense<0.000000e+00> : vector<32x3xf32>
    %564 = tpu.matmul %563, %561, %cst_214 {dimension_numbers = #tpu.dot_dimension_numbers<[1], [0], [0], [1], [0, 0, 1, 1], [], []>} : vector<32x32xf32>, vector<32x3xf32>, vector<32x3xf32> -> vector<32x3xf32>
    %565 = vector.broadcast %562 : vector<1x3xf32> to vector<32x3xf32>
    %566 = arith.addf %564, %565 : vector<32x3xf32>
    %567 = vector.extract_strided_slice %560 {offsets = [0, 32], sizes = [32, 32], strides = [1, 1]} : vector<32x128xf32> to vector<32x32xf32>
    %cst_215 = arith.constant dense<0.000000e+00> : vector<32x3xf32>
    %568 = tpu.matmul %567, %561, %cst_215 {dimension_numbers = #tpu.dot_dimension_numbers<[1], [0], [0], [1], [0, 0, 1, 1], [], []>} : vector<32x32xf32>, vector<32x3xf32>, vector<32x3xf32> -> vector<32x3xf32>
    %569 = vector.broadcast %562 : vector<1x3xf32> to vector<32x3xf32>
    %570 = arith.addf %568, %569 : vector<32x3xf32>
    %571 = vector.extract_strided_slice %560 {offsets = [0, 64], sizes = [32, 32], strides = [1, 1]} : vector<32x128xf32> to vector<32x32xf32>
    %cst_216 = arith.constant dense<0.000000e+00> : vector<32x3xf32>
    %572 = tpu.matmul %571, %561, %cst_216 {dimension_numbers = #tpu.dot_dimension_numbers<[1], [0], [0], [1], [0, 0, 1, 1], [], []>} : vector<32x32xf32>, vector<32x3xf32>, vector<32x3xf32> -> vector<32x3xf32>
    %573 = vector.broadcast %562 : vector<1x3xf32> to vector<32x3xf32>
    %574 = arith.addf %572, %573 : vector<32x3xf32>
    %575 = vector.extract_strided_slice %560 {offsets = [0, 96], sizes = [32, 32], strides = [1, 1]} : vector<32x128xf32> to vector<32x32xf32>
    %cst_217 = arith.constant dense<0.000000e+00> : vector<32x3xf32>
    %576 = tpu.matmul %575, %561, %cst_217 {dimension_numbers = #tpu.dot_dimension_numbers<[1], [0], [0], [1], [0, 0, 1, 1], [], []>} : vector<32x32xf32>, vector<32x3xf32>, vector<32x3xf32> -> vector<32x3xf32>
    %577 = vector.broadcast %562 : vector<1x3xf32> to vector<32x3xf32>
    %578 = arith.addf %576, %577 : vector<32x3xf32>
    %c0_218 = arith.constant 0 : index
    %c0_219 = arith.constant 0 : index
    %579 = vector.load %arg37[%c0_218, %c0_219] : memref<64x16xf32, #tpu.memory_space<vmem>>, vector<64x16xf32>
    %c0_220 = arith.constant 0 : index
    %c0_221 = arith.constant 0 : index
    %580 = vector.load %arg38[%c0_220, %c0_221] : memref<64x16xf32, #tpu.memory_space<vmem>>, vector<64x16xf32>
    %c0_222 = arith.constant 0 : index
    %c0_223 = arith.constant 0 : index
    %581 = vector.load %arg39[%c0_222, %c0_223] : memref<256x64xf32, #tpu.memory_space<vmem>>, vector<256x64xf32>
    %c0_224 = arith.constant 0 : index
    %c0_225 = arith.constant 0 : index
    %582 = vector.load %arg40[%c0_224, %c0_225] : memref<256x64xf32, #tpu.memory_space<vmem>>, vector<256x64xf32>
    %583 = vector.extract_strided_slice %566 {offsets = [0, 0], sizes = [16, 3], strides = [1, 1]} : vector<32x3xf32> to vector<16x3xf32>
    %cst_226 = arith.constant dense<0.000000e+00> : vector<64x3xf32>
    %584 = tpu.matmul %579, %583, %cst_226 {dimension_numbers = #tpu.dot_dimension_numbers<[1], [0], [0], [1], [0, 0, 1, 1], [], []>} : vector<64x16xf32>, vector<16x3xf32>, vector<64x3xf32> -> vector<64x3xf32>
    %585 = vector.extract_strided_slice %574 {offsets = [0, 0], sizes = [16, 3], strides = [1, 1]} : vector<32x3xf32> to vector<16x3xf32>
    %cst_227 = arith.constant dense<0.000000e+00> : vector<64x3xf32>
    %586 = tpu.matmul %580, %585, %cst_227 {dimension_numbers = #tpu.dot_dimension_numbers<[1], [0], [0], [1], [0, 0, 1, 1], [], []>} : vector<64x16xf32>, vector<16x3xf32>, vector<64x3xf32> -> vector<64x3xf32>
    %587 = arith.addf %584, %586 : vector<64x3xf32>
    %cst_228 = arith.constant dense<0.000000e+00> : vector<256x3xf32>
    %588 = tpu.matmul %581, %587, %cst_228 {dimension_numbers = #tpu.dot_dimension_numbers<[1], [0], [0], [1], [0, 0, 1, 1], [], []>} : vector<256x64xf32>, vector<64x3xf32>, vector<256x3xf32> -> vector<256x3xf32>
    %589 = vector.extract_strided_slice %570 {offsets = [0, 0], sizes = [16, 3], strides = [1, 1]} : vector<32x3xf32> to vector<16x3xf32>
    %cst_229 = arith.constant dense<0.000000e+00> : vector<64x3xf32>
    %590 = tpu.matmul %579, %589, %cst_229 {dimension_numbers = #tpu.dot_dimension_numbers<[1], [0], [0], [1], [0, 0, 1, 1], [], []>} : vector<64x16xf32>, vector<16x3xf32>, vector<64x3xf32> -> vector<64x3xf32>
    %591 = vector.extract_strided_slice %578 {offsets = [0, 0], sizes = [16, 3], strides = [1, 1]} : vector<32x3xf32> to vector<16x3xf32>
    %cst_230 = arith.constant dense<0.000000e+00> : vector<64x3xf32>
    %592 = tpu.matmul %580, %591, %cst_230 {dimension_numbers = #tpu.dot_dimension_numbers<[1], [0], [0], [1], [0, 0, 1, 1], [], []>} : vector<64x16xf32>, vector<16x3xf32>, vector<64x3xf32> -> vector<64x3xf32>
    %593 = arith.addf %590, %592 : vector<64x3xf32>
    %cst_231 = arith.constant dense<0.000000e+00> : vector<256x3xf32>
    %594 = tpu.matmul %582, %593, %cst_231 {dimension_numbers = #tpu.dot_dimension_numbers<[1], [0], [0], [1], [0, 0, 1, 1], [], []>} : vector<256x64xf32>, vector<64x3xf32>, vector<256x3xf32> -> vector<256x3xf32>
    %595 = arith.addf %588, %594 : vector<256x3xf32>
    %c0_232 = arith.constant 0 : index
    %c0_233 = arith.constant 0 : index
    %596 = vector.load %arg41[%c0_232, %c0_233] : memref<512x3xf32, #tpu.memory_space<vmem>>, vector<256x3xf32>
    tpu.vector_store %arg41[%c0_232, %c0_233], %595 {strides = array<i32>} : memref<512x3xf32, #tpu.memory_space<vmem>>, vector<256x3xf32>,
    %597 = vector.extract_strided_slice %566 {offsets = [16, 0], sizes = [16, 3], strides = [1, 1]} : vector<32x3xf32> to vector<16x3xf32>
    %cst_234 = arith.constant dense<0.000000e+00> : vector<64x3xf32>
    %598 = tpu.matmul %579, %597, %cst_234 {dimension_numbers = #tpu.dot_dimension_numbers<[1], [0], [0], [1], [0, 0, 1, 1], [], []>} : vector<64x16xf32>, vector<16x3xf32>, vector<64x3xf32> -> vector<64x3xf32>
    %599 = vector.extract_strided_slice %574 {offsets = [16, 0], sizes = [16, 3], strides = [1, 1]} : vector<32x3xf32> to vector<16x3xf32>
    %cst_235 = arith.constant dense<0.000000e+00> : vector<64x3xf32>
    %600 = tpu.matmul %580, %599, %cst_235 {dimension_numbers = #tpu.dot_dimension_numbers<[1], [0], [0], [1], [0, 0, 1, 1], [], []>} : vector<64x16xf32>, vector<16x3xf32>, vector<64x3xf32> -> vector<64x3xf32>
    %601 = arith.addf %598, %600 : vector<64x3xf32>
    %cst_236 = arith.constant dense<0.000000e+00> : vector<256x3xf32>
    %602 = tpu.matmul %581, %601, %cst_236 {dimension_numbers = #tpu.dot_dimension_numbers<[1], [0], [0], [1], [0, 0, 1, 1], [], []>} : vector<256x64xf32>, vector<64x3xf32>, vector<256x3xf32> -> vector<256x3xf32>
    %603 = vector.extract_strided_slice %570 {offsets = [16, 0], sizes = [16, 3], strides = [1, 1]} : vector<32x3xf32> to vector<16x3xf32>
    %cst_237 = arith.constant dense<0.000000e+00> : vector<64x3xf32>
    %604 = tpu.matmul %579, %603, %cst_237 {dimension_numbers = #tpu.dot_dimension_numbers<[1], [0], [0], [1], [0, 0, 1, 1], [], []>} : vector<64x16xf32>, vector<16x3xf32>, vector<64x3xf32> -> vector<64x3xf32>
    %605 = vector.extract_strided_slice %578 {offsets = [16, 0], sizes = [16, 3], strides = [1, 1]} : vector<32x3xf32> to vector<16x3xf32>
    %cst_238 = arith.constant dense<0.000000e+00> : vector<64x3xf32>
    %606 = tpu.matmul %580, %605, %cst_238 {dimension_numbers = #tpu.dot_dimension_numbers<[1], [0], [0], [1], [0, 0, 1, 1], [], []>} : vector<64x16xf32>, vector<16x3xf32>, vector<64x3xf32> -> vector<64x3xf32>
    %607 = arith.addf %604, %606 : vector<64x3xf32>
    %cst_239 = arith.constant dense<0.000000e+00> : vector<256x3xf32>
    %608 = tpu.matmul %582, %607, %cst_239 {dimension_numbers = #tpu.dot_dimension_numbers<[1], [0], [0], [1], [0, 0, 1, 1], [], []>} : vector<256x64xf32>, vector<64x3xf32>, vector<256x3xf32> -> vector<256x3xf32>
    %609 = arith.addf %602, %608 : vector<256x3xf32>
    %c256 = arith.constant 256 : index
    %c0_240 = arith.constant 0 : index
    %610 = vector.load %arg41[%c256, %c0_240] : memref<512x3xf32, #tpu.memory_space<vmem>>, vector<256x3xf32>
    tpu.vector_store %arg41[%c256, %c0_240], %609 {strides = array<i32>} : memref<512x3xf32, #tpu.memory_space<vmem>>, vector<256x3xf32>,
    return
  }
}

</mosaic_0001>

<llo_original>
// kernel: tile.9
$region0: #{tile.9}
  %s0 = inlined_call_operand.vmem [shape: f32[4,32], index: 0, kind: input, shape index: {}]
  %s1 = inlined_call_operand.vmem [shape: f32[1,128], index: 1, kind: output, shape index: {}]
  $region1: #{tile.9} parent=0
    #allocation0 [shape = 'u8[4096]{0}', space=vmem, size = 0x1000, scoped, tag = 'scoped mem for output reshape']
    #allocation1 [shape = 'u8[4096]{0}', space=vmem, size = 0x1000, scoped, tag = 'scoped mem for input reshape']
    %s3 = sshllo.u32 0, 4
    %v4 = vld [vmem:[%s0] sm:%s3]
    %5 = vst [vmem:[#allocation1] sm:%s3] %v4
    %v6 = vld [vmem:[#allocation1] sm:$0x1]
    %vm7 = vcmask 261120
    %8 = vst.msk [vmem:[#allocation0] sm:$0x1] %vm7, %v6
    %s9 = scalar_lea.vmem [#allocation1], 3
    %v10 = vld [vmem:[%s9] sm:$0x1]
    %11 = vrot.lane.b32.xlu0 %v10, 96
    %v12 = vpop.permute.xlu0 %11
    %vm13 = vcmask 1048320
    %14 = vst.msk [vmem:[#allocation0] sm:$0x1] %vm13, %v12
    %s15 = scalar_lea.vmem [#allocation1], 2
    %v16 = vld [vmem:[%s15] sm:$0x1]
    %17 = vrot.lane.b32.xlu0 %v16, 64
    %v18 = vpop.permute.xlu0 %17
    %vm19 = vcmask 785920
    %20 = vst.msk [vmem:[#allocation0] sm:$0x1] %vm19, %v18
    %s21 = scalar_lea.vmem [#allocation1], 1
    %v22 = vld [vmem:[%s21] sm:$0x1]
    %23 = vrot.lane.b32.xlu0 %v22, 32
    %v24 = vpop.permute.xlu0 %23
    %vm25 = vcmask 523520
    %26 = vst.msk [vmem:[#allocation0] sm:$0x1] %vm25, %v24
    %s28 = sshllo.u32 0, 1
    %v30 = vld [vmem:[#allocation0] sm:%s28]
    %s31 = sshllo.u32 0, 1
    %32 = vst [vmem:[%s1] sm:%s31] %v30

// kernel: tile.8
$region0: #{tile.8}
  #allocation0 [shape = 's32[1]{0}', space=sflag, size = 0x4, scoped, tag = 'scoped memory for tile.8']
  %s0 = inlined_call_operand.vmem [shape: f32[32], index: 0, kind: input, shape index: {}]
  %s1 = inlined_call_operand.vmem [shape: f32[4,32], index: 1, kind: output, shape index: {}]
  // Predicated region
  $region2: #{tile.8} parent=0 // pred_check
    _
  $region3: #{tile.8} parent=0 // pred_check_branch
    %3 = sbr.rel (0) target = $region5
  $region4: #{tile.8} parent=0 // pred_region
    _
  $region5: #{tile.8} parent=0 // pred_fallthru
    _
  %v4 = vld [vmem:[%s0] ss:$0 sm:$0xff]
  %5 = vst [vmem:[%s1] sm:$0xf] %v4

// kernel: aegis_forward.1
$region0: #{aegis_forward.1}
  #allocation0 [shape = 'u32[]', space=smem, size = 0x4, offset = 0x4, fixed_abs, tag = 'smem constant byte address 0x4 - core index']
  #allocation1 [shape = 'u32[144,128]{1,0:T(1,128)}', space=vmem, size = 0x12000, scoped, tag = 'internal scratch']
  %s0 = inlined_call_operand.smem [shape: u32[42], index: -1, kind: input, shape index: {}]
  %s1 = sld [smem:[%s0]]
  %s2 = scalar_lea.smem %s0, 1
  %s3 = sld [smem:[%s2]]
  %s4 = scalar_lea.smem %s0, 2
  %s5 = sld [smem:[%s4]]
  %s6 = scalar_lea.smem %s0, 3
  %s7 = sld [smem:[%s6]]
  %s8 = scalar_lea.smem %s0, 4
  %s9 = sld [smem:[%s8]]
  %s10 = scalar_lea.smem %s0, 5
  %s11 = sld [smem:[%s10]]
  %s12 = scalar_lea.smem %s0, 6
  %s13 = sld [smem:[%s12]]
  %s14 = scalar_lea.smem %s0, 7
  %s15 = sld [smem:[%s14]]
  %s16 = scalar_lea.smem %s0, 8
  %s17 = sld [smem:[%s16]]
  %s18 = scalar_lea.smem %s0, 9
  %s19 = sld [smem:[%s18]]
  %s20 = scalar_lea.smem %s0, 10
  %s21 = sld [smem:[%s20]]
  %s22 = scalar_lea.smem %s0, 11
  %s23 = sld [smem:[%s22]]
  %s24 = scalar_lea.smem %s0, 12
  %s25 = sld [smem:[%s24]]
  %s26 = scalar_lea.smem %s0, 13
  %s27 = sld [smem:[%s26]]
  %s28 = scalar_lea.smem %s0, 14
  %s29 = sld [smem:[%s28]]
  %s30 = scalar_lea.smem %s0, 15
  %s31 = sld [smem:[%s30]]
  %s32 = scalar_lea.smem %s0, 16
  %s33 = sld [smem:[%s32]]
  %s34 = scalar_lea.smem %s0, 17
  %s35 = sld [smem:[%s34]]
  %s36 = scalar_lea.smem %s0, 18
  %s37 = sld [smem:[%s36]]
  %s38 = scalar_lea.smem %s0, 19
  %s39 = sld [smem:[%s38]]
  %s40 = scalar_lea.smem %s0, 20
  %s41 = sld [smem:[%s40]]
  %s42 = scalar_lea.smem %s0, 21
  %s43 = sld [smem:[%s42]]
  %s44 = scalar_lea.smem %s0, 22
  %s45 = sld [smem:[%s44]]
  %s46 = scalar_lea.smem %s0, 23
  %s47 = sld [smem:[%s46]]
  %s48 = scalar_lea.smem %s0, 24
  %s49 = sld [smem:[%s48]]
  %s50 = scalar_lea.smem %s0, 25
  %s51 = sld [smem:[%s50]]
  %s52 = scalar_lea.smem %s0, 26
  %s53 = sld [smem:[%s52]]
  %s54 = scalar_lea.smem %s0, 27
  %s55 = sld [smem:[%s54]]
  %s56 = scalar_lea.smem %s0, 28
  %s57 = sld [smem:[%s56]]
  %s58 = scalar_lea.smem %s0, 29
  %s59 = sld [smem:[%s58]]
  %s60 = scalar_lea.smem %s0, 30
  %s61 = sld [smem:[%s60]]
  %s62 = scalar_lea.smem %s0, 31
  %s63 = sld [smem:[%s62]]
  %s64 = scalar_lea.smem %s0, 32
  %s65 = sld [smem:[%s64]]
  %s66 = scalar_lea.smem %s0, 33
  %s67 = sld [smem:[%s66]]
  %s68 = scalar_lea.smem %s0, 34
  %s69 = sld [smem:[%s68]]
  %s70 = scalar_lea.smem %s0, 35
  %s71 = sld [smem:[%s70]]
  %s72 = scalar_lea.smem %s0, 36
  %s73 = sld [smem:[%s72]]
  %s74 = scalar_lea.smem %s0, 37
  %s75 = sld [smem:[%s74]]
  %s76 = scalar_lea.smem %s0, 38
  %s77 = sld [smem:[%s76]]
  %s78 = scalar_lea.smem %s0, 39
  %s79 = sld [smem:[%s78]]
  %s80 = scalar_lea.smem %s0, 40
  %s81 = sld [smem:[%s80]]
  %s82 = scalar_lea.smem %s0, 41
  %s83 = sld [smem:[%s82]]
  %s84 = sld [smem:[#allocation0]]
  $region174: #{aegis_forward.1} parent=0
    _
  %s86 = ssub.s32 1, %s84
  %s87 = scalar_select 0, %s86, %s84
  // Predicated region
  $region2: #{aegis_forward.1} parent=0 // pred_check
    _
  $region3: #{aegis_forward.1} parent=0 // pred_check_branch
    %89 = sbr.rel (0) target = $region5
  $region4: #{aegis_forward.1} parent=0 // pred_region
    _
  $region5: #{aegis_forward.1} parent=0 // pred_fallthru
    _
  // Predicated region
  $region6: #{aegis_forward.1} parent=0 // pred_check
    _
  $region7: #{aegis_forward.1} parent=0 // pred_check_branch
    %91 = sbr.rel (0) target = $region9
  $region8: #{aegis_forward.1} parent=0 // pred_region
    _
  $region9: #{aegis_forward.1} parent=0 // pred_fallthru
    _
  // Predicated region
  $region10: #{aegis_forward.1} parent=0 // pred_check
    _
  $region11: #{aegis_forward.1} parent=0 // pred_check_branch
    %93 = sbr.rel (0) target = $region13
  $region12: #{aegis_forward.1} parent=0 // pred_region
    _
  $region13: #{aegis_forward.1} parent=0 // pred_fallthru
    _
  // Predicated region
  $region14: #{aegis_forward.1} parent=0 // pred_check
    _
  $region15: #{aegis_forward.1} parent=0 // pred_check_branch
    %95 = sbr.rel (0) target = $region17
  $region16: #{aegis_forward.1} parent=0 // pred_region
    _
  $region17: #{aegis_forward.1} parent=0 // pred_fallthru
    _
  // Predicated region
  $region18: #{aegis_forward.1} parent=0 // pred_check
    _
  $region19: #{aegis_forward.1} parent=0 // pred_check_branch
    %97 = sbr.rel (0) target = $region21
  $region20: #{aegis_forward.1} parent=0 // pred_region
    _
  $region21: #{aegis_forward.1} parent=0 // pred_fallthru
    _
  // Predicated region
  $region22: #{aegis_forward.1} parent=0 // pred_check
    _
  $region23: #{aegis_forward.1} parent=0 // pred_check_branch
    %99 = sbr.rel (0) target = $region25
  $region24: #{aegis_forward.1} parent=0 // pred_region
    _
  $region25: #{aegis_forward.1} parent=0 // pred_fallthru
    _
  // Predicated region
  $region26: #{aegis_forward.1} parent=0 // pred_check
    _
  $region27: #{aegis_forward.1} parent=0 // pred_check_branch
    %101 = sbr.rel (0) target = $region29
  $region28: #{aegis_forward.1} parent=0 // pred_region
    _
  $region29: #{aegis_forward.1} parent=0 // pred_fallthru
    _
  // Predicated region
  $region30: #{aegis_forward.1} parent=0 // pred_check
    _
  $region31: #{aegis_forward.1} parent=0 // pred_check_branch
    %103 = sbr.rel (0) target = $region33
  $region32: #{aegis_forward.1} parent=0 // pred_region
    _
  $region33: #{aegis_forward.1} parent=0 // pred_fallthru
    _
  // Predicated region
  $region34: #{aegis_forward.1} parent=0 // pred_check
    _
  $region35: #{aegis_forward.1} parent=0 // pred_check_branch
    %105 = sbr.rel (0) target = $region37
  $region36: #{aegis_forward.1} parent=0 // pred_region
    _
  $region37: #{aegis_forward.1} parent=0 // pred_fallthru
    _
  // Predicated region
  $region38: #{aegis_forward.1} parent=0 // pred_check
    _
  $region39: #{aegis_forward.1} parent=0 // pred_check_branch
    %107 = sbr.rel (0) target = $region41
  $region40: #{aegis_forward.1} parent=0 // pred_region
    _
  $region41: #{aegis_forward.1} parent=0 // pred_fallthru
    _
  // Predicated region
  $region42: #{aegis_forward.1} parent=0 // pred_check
    _
  $region43: #{aegis_forward.1} parent=0 // pred_check_branch
    %109 = sbr.rel (0) target = $region45
  $region44: #{aegis_forward.1} parent=0 // pred_region
    _
  $region45: #{aegis_forward.1} parent=0 // pred_fallthru
    _
  // Predicated region
  $region46: #{aegis_forward.1} parent=0 // pred_check
    _
  $region47: #{aegis_forward.1} parent=0 // pred_check_branch
    %111 = sbr.rel (0) target = $region49
  $region48: #{aegis_forward.1} parent=0 // pred_region
    _
  $region49: #{aegis_forward.1} parent=0 // pred_fallthru
    _
  // Predicated region
  $region50: #{aegis_forward.1} parent=0 // pred_check
    _
  $region51: #{aegis_forward.1} parent=0 // pred_check_branch
    %113 = sbr.rel (0) target = $region53
  $region52: #{aegis_forward.1} parent=0 // pred_region
    _
  $region53: #{aegis_forward.1} parent=0 // pred_fallthru
    _
  // Predicated region
  $region54: #{aegis_forward.1} parent=0 // pred_check
    _
  $region55: #{aegis_forward.1} parent=0 // pred_check_branch
    %115 = sbr.rel (0) target = $region57
  $region56: #{aegis_forward.1} parent=0 // pred_region
    _
  $region57: #{aegis_forward.1} parent=0 // pred_fallthru
    _
  // Predicated region
  $region58: #{aegis_forward.1} parent=0 // pred_check
    _
  $region59: #{aegis_forward.1} parent=0 // pred_check_branch
    %117 = sbr.rel (0) target = $region61
  $region60: #{aegis_forward.1} parent=0 // pred_region
    _
  $region61: #{aegis_forward.1} parent=0 // pred_fallthru
    _
  // Predicated region
  $region62: #{aegis_forward.1} parent=0 // pred_check
    _
  $region63: #{aegis_forward.1} parent=0 // pred_check_branch
    %119 = sbr.rel (0) target = $region65
  $region64: #{aegis_forward.1} parent=0 // pred_region
    _
  $region65: #{aegis_forward.1} parent=0 // pred_fallthru
    _
  // Predicated region
  $region66: #{aegis_forward.1} parent=0 // pred_check
    _
  $region67: #{aegis_forward.1} parent=0 // pred_check_branch
    %121 = sbr.rel (0) target = $region69
  $region68: #{aegis_forward.1} parent=0 // pred_region
    _
  $region69: #{aegis_forward.1} parent=0 // pred_fallthru
    _
  // Predicated region
  $region70: #{aegis_forward.1} parent=0 // pred_check
    _
  $region71: #{aegis_forward.1} parent=0 // pred_check_branch
    %123 = sbr.rel (0) target = $region73
  $region72: #{aegis_forward.1} parent=0 // pred_region
    _
  $region73: #{aegis_forward.1} parent=0 // pred_fallthru
    _
  // Predicated region
  $region74: #{aegis_forward.1} parent=0 // pred_check
    _
  $region75: #{aegis_forward.1} parent=0 // pred_check_branch
    %125 = sbr.rel (0) target = $region77
  $region76: #{aegis_forward.1} parent=0 // pred_region
    _
  $region77: #{aegis_forward.1} parent=0 // pred_fallthru
    _
  // Predicated region
  $region78: #{aegis_forward.1} parent=0 // pred_check
    _
  $region79: #{aegis_forward.1} parent=0 // pred_check_branch
    %127 = sbr.rel (0) target = $region81
  $region80: #{aegis_forward.1} parent=0 // pred_region
    _
  $region81: #{aegis_forward.1} parent=0 // pred_fallthru
    _
  // Predicated region
  $region82: #{aegis_forward.1} parent=0 // pred_check
    _
  $region83: #{aegis_forward.1} parent=0 // pred_check_branch
    %129 = sbr.rel (0) target = $region85
  $region84: #{aegis_forward.1} parent=0 // pred_region
    _
  $region85: #{aegis_forward.1} parent=0 // pred_fallthru
    _
  // Predicated region
  $region86: #{aegis_forward.1} parent=0 // pred_check
    _
  $region87: #{aegis_forward.1} parent=0 // pred_check_branch
    %131 = sbr.rel (0) target = $region89
  $region88: #{aegis_forward.1} parent=0 // pred_region
    _
  $region89: #{aegis_forward.1} parent=0 // pred_fallthru
    _
  // Predicated region
  $region90: #{aegis_forward.1} parent=0 // pred_check
    _
  $region91: #{aegis_forward.1} parent=0 // pred_check_branch
    %133 = sbr.rel (0) target = $region93
  $region92: #{aegis_forward.1} parent=0 // pred_region
    _
  $region93: #{aegis_forward.1} parent=0 // pred_fallthru
    _
  // Predicated region
  $region94: #{aegis_forward.1} parent=0 // pred_check
    _
  $region95: #{aegis_forward.1} parent=0 // pred_check_branch
    %135 = sbr.rel (0) target = $region97
  $region96: #{aegis_forward.1} parent=0 // pred_region
    _
  $region97: #{aegis_forward.1} parent=0 // pred_fallthru
    _
  // Predicated region
  $region98: #{aegis_forward.1} parent=0 // pred_check
    _
  $region99: #{aegis_forward.1} parent=0 // pred_check_branch
    %137 = sbr.rel (0) target = $region101
  $region100: #{aegis_forward.1} parent=0 // pred_region
    _
  $region101: #{aegis_forward.1} parent=0 // pred_fallthru
    _
  // Predicated region
  $region102: #{aegis_forward.1} parent=0 // pred_check
    _
  $region103: #{aegis_forward.1} parent=0 // pred_check_branch
    %139 = sbr.rel (0) target = $region105
  $region104: #{aegis_forward.1} parent=0 // pred_region
    _
  $region105: #{aegis_forward.1} parent=0 // pred_fallthru
    _
  // Predicated region
  $region106: #{aegis_forward.1} parent=0 // pred_check
    _
  $region107: #{aegis_forward.1} parent=0 // pred_check_branch
    %141 = sbr.rel (0) target = $region109
  $region108: #{aegis_forward.1} parent=0 // pred_region
    _
  $region109: #{aegis_forward.1} parent=0 // pred_fallthru
    _
  // Predicated region
  $region110: #{aegis_forward.1} parent=0 // pred_check
    _
  $region111: #{aegis_forward.1} parent=0 // pred_check_branch
    %143 = sbr.rel (0) target = $region113
  $region112: #{aegis_forward.1} parent=0 // pred_region
    _
  $region113: #{aegis_forward.1} parent=0 // pred_fallthru
    _
  // Predicated region
  $region114: #{aegis_forward.1} parent=0 // pred_check
    _
  $region115: #{aegis_forward.1} parent=0 // pred_check_branch
    %145 = sbr.rel (0) target = $region117
  $region116: #{aegis_forward.1} parent=0 // pred_region
    _
  $region117: #{aegis_forward.1} parent=0 // pred_fallthru
    _
  // Predicated region
  $region118: #{aegis_forward.1} parent=0 // pred_check
    _
  $region119: #{aegis_forward.1} parent=0 // pred_check_branch
    %147 = sbr.rel (0) target = $region121
  $region120: #{aegis_forward.1} parent=0 // pred_region
    _
  $region121: #{aegis_forward.1} parent=0 // pred_fallthru
    _
  // Predicated region
  $region122: #{aegis_forward.1} parent=0 // pred_check
    _
  $region123: #{aegis_forward.1} parent=0 // pred_check_branch
    %149 = sbr.rel (0) target = $region125
  $region124: #{aegis_forward.1} parent=0 // pred_region
    _
  $region125: #{aegis_forward.1} parent=0 // pred_fallthru
    _
  // Predicated region
  $region126: #{aegis_forward.1} parent=0 // pred_check
    _
  $region127: #{aegis_forward.1} parent=0 // pred_check_branch
    %151 = sbr.rel (0) target = $region129
  $region128: #{aegis_forward.1} parent=0 // pred_region
    _
  $region129: #{aegis_forward.1} parent=0 // pred_fallthru
    _
  // Predicated region
  $region130: #{aegis_forward.1} parent=0 // pred_check
    _
  $region131: #{aegis_forward.1} parent=0 // pred_check_branch
    %153 = sbr.rel (0) target = $region133
  $region132: #{aegis_forward.1} parent=0 // pred_region
    _
  $region133: #{aegis_forward.1} parent=0 // pred_fallthru
    _
  // Predicated region
  $region134: #{aegis_forward.1} parent=0 // pred_check
    _
  $region135: #{aegis_forward.1} parent=0 // pred_check_branch
    %155 = sbr.rel (0) target = $region137
  $region136: #{aegis_forward.1} parent=0 // pred_region
    _
  $region137: #{aegis_forward.1} parent=0 // pred_fallthru
    _
  // Predicated region
  $region138: #{aegis_forward.1} parent=0 // pred_check
    _
  $region139: #{aegis_forward.1} parent=0 // pred_check_branch
    %157 = sbr.rel (0) target = $region141
  $region140: #{aegis_forward.1} parent=0 // pred_region
    _
  $region141: #{aegis_forward.1} parent=0 // pred_fallthru
    _
  // Predicated region
  $region142: #{aegis_forward.1} parent=0 // pred_check
    _
  $region143: #{aegis_forward.1} parent=0 // pred_check_branch
    %159 = sbr.rel (0) target = $region145
  $region144: #{aegis_forward.1} parent=0 // pred_region
    _
  $region145: #{aegis_forward.1} parent=0 // pred_fallthru
    _
  // Predicated region
  $region146: #{aegis_forward.1} parent=0 // pred_check
    _
  $region147: #{aegis_forward.1} parent=0 // pred_check_branch
    %161 = sbr.rel (0) target = $region149
  $region148: #{aegis_forward.1} parent=0 // pred_region
    _
  $region149: #{aegis_forward.1} parent=0 // pred_fallthru
    _
  // Predicated region
  $region150: #{aegis_forward.1} parent=0 // pred_check
    _
  $region151: #{aegis_forward.1} parent=0 // pred_check_branch
    %163 = sbr.rel (0) target = $region153
  $region152: #{aegis_forward.1} parent=0 // pred_region
    _
  $region153: #{aegis_forward.1} parent=0 // pred_fallthru
    _
  // Predicated region
  $region154: #{aegis_forward.1} parent=0 // pred_check
    _
  $region155: #{aegis_forward.1} parent=0 // pred_check_branch
    %165 = sbr.rel (0) target = $region157
  $region156: #{aegis_forward.1} parent=0 // pred_region
    _
  $region157: #{aegis_forward.1} parent=0 // pred_fallthru
    _
  // Predicated region
  $region158: #{aegis_forward.1} parent=0 // pred_check
    _
  $region159: #{aegis_forward.1} parent=0 // pred_check_branch
    %167 = sbr.rel (0) target = $region161
  $region160: #{aegis_forward.1} parent=0 // pred_region
    _
  $region161: #{aegis_forward.1} parent=0 // pred_fallthru
    _
  // Predicated region
  $region162: #{aegis_forward.1} parent=0 // pred_check
    _
  $region163: #{aegis_forward.1} parent=0 // pred_check_branch
    %169 = sbr.rel (0) target = $region165
  $region164: #{aegis_forward.1} parent=0 // pred_region
    _
  $region165: #{aegis_forward.1} parent=0 // pred_fallthru
    _
  %v170 = vld [vmem:[%s1] sm:$0xff]
  %v171 = vld [vmem:[%s1 + $0x8] sm:$0xff]
  %v172 = vld [vmem:[%s1 + $0x10] sm:$0xff]
  %v173 = vld [vmem:[%s1 + $0x18] sm:$0xff]
  %v174 = vld [vmem:[%s7] sm:$0xff]
  %v175 = vld [vmem:[%s7 + $0x8] sm:$0xff]
  %v176 = vld [vmem:[%s7 + $0x10] sm:$0xff]
  %v177 = vld [vmem:[%s7 + $0x18] sm:$0xff]
  %v178 = vld [vmem:[%s7 + $0x20] sm:$0xff]
  %v179 = vld [vmem:[%s7 + $0x28] sm:$0xff]
  %v180 = vld [vmem:[%s7 + $0x30] sm:$0xff]
  %v181 = vld [vmem:[%s7 + $0x38] sm:$0xff]
  %v182 = vld [vmem:[%s9] sm:$0x1]
  %v184 = vlaneseq
  %v185 = vshrl.u32 %v184, 7
  %v186 = vsub.s32 0, %v185
  %v187 = vrot.slane %v182, %v186
  %vm189 = vcmask 523264
  %v191 = vsel %vm189, %v170, 0
  %v194 = vsel %vm189, %v171, 0
  %v197 = vsel %vm189, %v172, 0
  %v200 = vsel %vm189, %v173, 0
  %202 = vmatprep.subr.mxu0 0.0
  %203 = vmatpush1.msra.mxu0 %v174
  %204 = vmatprep.subr.mxu0 0.0
  %205 = vmatpush1.msra.mxu0 %v175
  %206 = vmatprep.subr.mxu0 0.0
  %207 = vmatpush1.msra.mxu0 %v176
  %208 = vmatprep.subr.mxu0 0.0
  %209 = vmatpush1.msra.mxu0 %v177
  %210 = vmatprep.subr.mxu0 0.0
  %211 = vmatpush1.msra.mxu0 %v178
  %212 = vmatprep.subr.mxu0 0.0
  %213 = vmatpush1.msra.mxu0 %v179
  %214 = vmatprep.subr.mxu0 0.0
  %215 = vmatpush1.msra.mxu0 %v180
  %216 = vmatprep.subr.mxu0 0.0
  %217 = vmatpush1.msra.mxu0 %v181
  %218 = vmatprep.subr.mxu0 0.0
  %219 = vmatpush1.msra.mxu0 0.0
  %220 = vmatprep.subr.mxu0 0.0
  %221 = vmatpush1.msra.mxu0 0.0
  %222 = vmatprep.subr.mxu0 0.0
  %223 = vmatpush1.msra.mxu0 0.0
  %224 = vmatprep.subr.mxu0 0.0
  %225 = vmatpush1.msra.mxu0 0.0
  %226 = vmatprep.subr.mxu0 0.0
  %227 = vmatpush1.msra.mxu0 0.0
  %228 = vmatprep.subr.mxu0 0.0
  %229 = vmatpush1.msra.mxu0 0.0
  %230 = vmatprep.subr.mxu0 0.0
  %231 = vmatpush1.msra.mxu0 0.0
  %232 = vmatprep.subr.mxu0 0.0
  %233 = vmatpush1.msra.mxu0 0.0
  %234 = vmatprep.subr.mxu0 0.0
  %235 = vmatpush1.msra.mxu0 0.0
  %236 = vmatprep.subr.mxu0 0.0
  %237 = vmatpush1.msra.mxu0 0.0
  %238 = vmatprep.subr.mxu0 0.0
  %239 = vmatpush1.msra.mxu0 0.0
  %240 = vmatprep.subr.mxu0 0.0
  %241 = vmatpush1.msra.mxu0 0.0
  %242 = vmatprep.subr.mxu0 0.0
  %243 = vmatpush1.msra.mxu0 0.0
  %244 = vmatprep.subr.mxu0 0.0
  %245 = vmatpush1.msra.mxu0 0.0
  %246 = vmatprep.subr.mxu0 0.0
  %247 = vmatpush1.msra.mxu0 0.0
  %248 = vmatprep.subr.mxu0 0.0
  %249 = vmatpush1.msra.mxu0 0.0
  %250 = vmatprep.subr.mxu0 0.0
  %251 = vmatpush1.msra.mxu0 0.0
  %252 = vmatprep.subr.mxu0 0.0
  %253 = vmatpush1.msra.mxu0 0.0
  %254 = vmatprep.subr.mxu0 0.0
  %255 = vmatpush1.msra.mxu0 0.0
  %256 = vmatprep.subr.mxu0 0.0
  %257 = vmatpush1.msra.mxu0 0.0
  %258 = vmatprep.subr.mxu0 0.0
  %259 = vmatpush1.msra.mxu0 0.0
  %260 = vmatprep.subr.mxu0 0.0
  %261 = vmatpush1.msra.mxu0 0.0
  %262 = vmatprep.subr.mxu0 0.0
  %263 = vmatpush1.msra.mxu0 0.0
  %264 = vmatprep.subr.mxu0 0.0
  %265 = vmatpush1.msra.mxu0 0.0
  %266 = vmatprep.mubr.f32.mxu0 0.0
  %267 = vmatmul.mubr.f32.gmra.mrb[0].mxu0 %v191
  %v268 = vpop.f32.mrb[0].mxu0
  %v269 = vadd.f32 %v187, %v268
  %v270 = vpop.f32.mrb[0].mxu0
  %271 = vmatprep.mubr.f32.mxu0 0.0
  %272 = vmatmul.mubr.f32.gmra.mrb[0].mxu0 %v194
  %v273 = vpop.f32.mrb[0].mxu0
  %v274 = vadd.f32 %v187, %v273
  %v275 = vpop.f32.mrb[0].mxu0
  %276 = vmatprep.mubr.f32.mxu0 0.0
  %277 = vmatmul.mubr.f32.gmra.mrb[0].mxu0 %v197
  %v278 = vpop.f32.mrb[0].mxu0
  %v279 = vadd.f32 %v187, %v278
  %v280 = vpop.f32.mrb[0].mxu0
  %281 = vmatprep.mubr.f32.mxu0 0.0
  %282 = vmatmul.mubr.f32.gmra.mrb[0].mxu0 %v200
  %v283 = vpop.f32.mrb[0].mxu0
  %v284 = vadd.f32 %v187, %v283
  %v285 = vpop.f32.mrb[0].mxu0
  %286 = vdwg.mxu0
  %v287 = vld [vmem:[%s3] sm:$0x3]
  %v288 = vld [vmem:[%s11] sm:$0x3f]
  %v289 = vld [vmem:[%s13] sm:$0x1]
  %v291 = vlaneseq
  %v292 = vshrl.u32 %v291, 7
  %v293 = vsub.s32 0, %v292
  %v294 = vrot.slane %v289, %v293
  %vm296 = vcmask 48128
  %v298 = vsel %vm296, %v287, 0
  %vm300 = vcmask 1045504
  %v302 = vsel %vm300, %v288, 0
  %304 = vmatprep.subr.mxu0 0.0
  %305 = vmatpush1.msra.mxu0 %v302
  %306 = vmatprep.subr.mxu0 0.0
  %307 = vmatpush1.msra.mxu0 0.0
  %308 = vmatprep.subr.mxu0 0.0
  %309 = vmatpush1.msra.mxu0 0.0
  %310 = vmatprep.subr.mxu0 0.0
  %311 = vmatpush1.msra.mxu0 0.0
  %312 = vmatprep.subr.mxu0 0.0
  %313 = vmatpush1.msra.mxu0 0.0
  %314 = vmatprep.subr.mxu0 0.0
  %315 = vmatpush1.msra.mxu0 0.0
  %316 = vmatprep.subr.mxu0 0.0
  %317 = vmatpush1.msra.mxu0 0.0
  %318 = vmatprep.subr.mxu0 0.0
  %319 = vmatpush1.msra.mxu0 0.0
  %320 = vmatprep.subr.mxu0 0.0
  %321 = vmatpush1.msra.mxu0 0.0
  %322 = vmatprep.subr.mxu0 0.0
  %323 = vmatpush1.msra.mxu0 0.0
  %324 = vmatprep.subr.mxu0 0.0
  %325 = vmatpush1.msra.mxu0 0.0
  %326 = vmatprep.subr.mxu0 0.0
  %327 = vmatpush1.msra.mxu0 0.0
  %328 = vmatprep.subr.mxu0 0.0
  %329 = vmatpush1.msra.mxu0 0.0
  %330 = vmatprep.subr.mxu0 0.0
  %331 = vmatpush1.msra.mxu0 0.0
  %332 = vmatprep.subr.mxu0 0.0
  %333 = vmatpush1.msra.mxu0 0.0
  %334 = vmatprep.subr.mxu0 0.0
  %335 = vmatpush1.msra.mxu0 0.0
  %336 = vmatprep.subr.mxu0 0.0
  %337 = vmatpush1.msra.mxu0 0.0
  %338 = vmatprep.subr.mxu0 0.0
  %339 = vmatpush1.msra.mxu0 0.0
  %340 = vmatprep.subr.mxu0 0.0
  %341 = vmatpush1.msra.mxu0 0.0
  %342 = vmatprep.subr.mxu0 0.0
  %343 = vmatpush1.msra.mxu0 0.0
  %344 = vmatprep.subr.mxu0 0.0
  %345 = vmatpush1.msra.mxu0 0.0
  %346 = vmatprep.subr.mxu0 0.0
  %347 = vmatpush1.msra.mxu0 0.0
  %348 = vmatprep.subr.mxu0 0.0
  %349 = vmatpush1.msra.mxu0 0.0
  %350 = vmatprep.subr.mxu0 0.0
  %351 = vmatpush1.msra.mxu0 0.0
  %352 = vmatprep.subr.mxu0 0.0
  %353 = vmatpush1.msra.mxu0 0.0
  %354 = vmatprep.subr.mxu0 0.0
  %355 = vmatpush1.msra.mxu0 0.0
  %356 = vmatprep.subr.mxu0 0.0
  %357 = vmatpush1.msra.mxu0 0.0
  %358 = vmatprep.subr.mxu0 0.0
  %359 = vmatpush1.msra.mxu0 0.0
  %360 = vmatprep.subr.mxu0 0.0
  %361 = vmatpush1.msra.mxu0 0.0
  %362 = vmatprep.subr.mxu0 0.0
  %363 = vmatpush1.msra.mxu0 0.0
  %364 = vmatprep.subr.mxu0 0.0
  %365 = vmatpush1.msra.mxu0 0.0
  %366 = vmatprep.subr.mxu0 0.0
  %367 = vmatpush1.msra.mxu0 0.0
  %368 = vmatprep.mubr.f32.mxu0 0.0
  %369 = vmatmul.mubr.f32.gmra.mrb[0].mxu0 %v298
  %v370 = vpop.f32.mrb[0].mxu0
  %v371 = vadd.f32 %v294, %v370
  %v372 = vpop.f32.mrb[0].mxu0
  %373 = vdwg.mxu0
  %v374 = vld [vmem:[%s5] sm:$0xff]
  %v375 = vld [vmem:[%s5 + $0x8] sm:$0xff]
  %v376 = vlaneseq
  %v377 = vshrl.u32 %v376, 7
  %v378 = vsub.s32 0, %v377
  %v379 = vrot.slane %v371, %v378
  %v380 = vadd.f32 %v374, %v379
  %v381 = vadd.f32 %v375, %v379
  %v382 = vlaneseq
  %v383 = vshrl.u32 %v382, 7
  %v384 = vsub.s32 1, %v383
  %v385 = vrot.slane %v371, %v384
  %v386 = vadd.f32 %v374, %v385
  %v387 = vadd.f32 %v375, %v385
  %v388 = vadd.f32 %v269, %v380
  %v389 = vadd.f32 %v274, %v381
  %v390 = vadd.f32 %v279, %v386
  %v391 = vadd.f32 %v284, %v387
  %vm392 = vcmask 261120
  %v393 = vsel %vm392, %v388, 0.0
  %394 = vadd.xlane.f32.xlu0 %v393
  %v395 = vpop.xlane.xlu0 %394
  %v396 = vsel %vm392, %v389, 0.0
  %397 = vadd.xlane.f32.xlu0 %v396
  %v398 = vpop.xlane.xlu0 %397
  %v399 = vsel %vm392, %v390, 0.0
  %400 = vadd.xlane.f32.xlu0 %v399
  %v401 = vpop.xlane.xlu0 %400
  %v402 = vsel %vm392, %v391, 0.0
  %403 = vadd.xlane.f32.xlu0 %v402
  %v404 = vpop.xlane.xlu0 %403
  %v405 = vrcp.pop 32.0
  %v406 = vmul.f32 %v395, %v405
  %v407 = vmul.f32 %v398, %v405
  %v408 = vmul.f32 %v401, %v405
  %v409 = vmul.f32 %v404, %v405
  %v410 = vsub.f32 %v388, %v406
  %v411 = vsub.f32 %v389, %v407
  %v412 = vsub.f32 %v390, %v408
  %v413 = vsub.f32 %v391, %v409
  %v414 = vmul.f32 %v410, %v410
  %v415 = vmul.f32 %v411, %v411
  %v416 = vmul.f32 %v412, %v412
  %v417 = vmul.f32 %v413, %v413
  %v418 = vsel %vm392, %v414, 0.0
  %419 = vadd.xlane.f32.xlu0 %v418
  %v420 = vpop.xlane.xlu0 %419
  %v421 = vsel %vm392, %v415, 0.0
  %422 = vadd.xlane.f32.xlu0 %v421
  %v423 = vpop.xlane.xlu0 %422
  %v424 = vsel %vm392, %v416, 0.0
  %425 = vadd.xlane.f32.xlu0 %v424
  %v426 = vpop.xlane.xlu0 %425
  %v427 = vsel %vm392, %v417, 0.0
  %428 = vadd.xlane.f32.xlu0 %v427
  %v429 = vpop.xlane.xlu0 %428
  %v430 = vmul.f32 %v420, %v405
  %v431 = vmul.f32 %v423, %v405
  %v432 = vmul.f32 %v426, %v405
  %v433 = vmul.f32 %v429, %v405
  %v434 = vadd.f32 %v430, 1e-05
  %v435 = vadd.f32 %v431, 1e-05
  %v436 = vadd.f32 %v432, 1e-05
  %v437 = vadd.f32 %v433, 1e-05
  %v438 = vrsqrt.pop %v434
  %v439 = vrsqrt.pop %v435
  %v440 = vrsqrt.pop %v436
  %v441 = vrsqrt.pop %v437
  %v442 = vmul.f32 %v410, %v438
  %v443 = vmul.f32 %v411, %v439
  %v444 = vmul.f32 %v412, %v440
  %v445 = vmul.f32 %v413, %v441
  %v446 = vld [vmem:[%s15] sm:$0x1]
  %v448 = vlaneseq
  %v449 = vshrl.u32 %v448, 7
  %v450 = vsub.s32 0, %v449
  %v451 = vrot.slane %v446, %v450
  %v453 = vmul.f32 %v442, %v451
  %v454 = vmul.f32 %v443, %v451
  %v455 = vmul.f32 %v444, %v451
  %v456 = vmul.f32 %v445, %v451
  %v457 = vld [vmem:[%s17] sm:$0x1]
  %v459 = vlaneseq
  %v460 = vshrl.u32 %v459, 7
  %v461 = vsub.s32 0, %v460
  %v462 = vrot.slane %v457, %v461
  %v464 = vadd.f32 %v453, %v462
  %v465 = vadd.f32 %v454, %v462
  %v466 = vadd.f32 %v455, %v462
  %v467 = vadd.f32 %v456, %v462
  %v468 = vld [vmem:[%s19] sm:$0xff]
  %v469 = vld [vmem:[%s19 + $0x8] sm:$0xff]
  %v470 = vld [vmem:[%s19 + $0x10] sm:$0xff]
  %v471 = vld [vmem:[%s19 + $0x18] sm:$0xff]
  %v472 = vld [vmem:[%s21] sm:$0x1]
  %v474 = vlaneseq
  %v475 = vshrl.u32 %v474, 7
  %v476 = vsub.s32 0, %v475
  %v477 = vrot.slane %v472, %v476
  %v480 = vsel %vm392, %v464, 0
  %v483 = vsel %vm392, %v465, 0
  %v486 = vsel %vm392, %v466, 0
  %v489 = vsel %vm392, %v467, 0
  %491 = vmatprep.subr.mxu0 0.0
  %492 = vmatpush1.msra.mxu0 %v468
  %493 = vmatprep.subr.mxu0 0.0
  %494 = vmatpush1.msra.mxu0 %v469
  %495 = vmatprep.subr.mxu0 0.0
  %496 = vmatpush1.msra.mxu0 %v470
  %497 = vmatprep.subr.mxu0 0.0
  %498 = vmatpush1.msra.mxu0 %v471
  %499 = vmatprep.subr.mxu0 0.0
  %500 = vmatpush1.msra.mxu0 0.0
  %501 = vmatprep.subr.mxu0 0.0
  %502 = vmatpush1.msra.mxu0 0.0
  %503 = vmatprep.subr.mxu0 0.0
  %504 = vmatpush1.msra.mxu0 0.0
  %505 = vmatprep.subr.mxu0 0.0
  %506 = vmatpush1.msra.mxu0 0.0
  %507 = vmatprep.subr.mxu0 0.0
  %508 = vmatpush1.msra.mxu0 0.0
  %509 = vmatprep.subr.mxu0 0.0
  %510 = vmatpush1.msra.mxu0 0.0
  %511 = vmatprep.subr.mxu0 0.0
  %512 = vmatpush1.msra.mxu0 0.0
  %513 = vmatprep.subr.mxu0 0.0
  %514 = vmatpush1.msra.mxu0 0.0
  %515 = vmatprep.subr.mxu0 0.0
  %516 = vmatpush1.msra.mxu0 0.0
  %517 = vmatprep.subr.mxu0 0.0
  %518 = vmatpush1.msra.mxu0 0.0
  %519 = vmatprep.subr.mxu0 0.0
  %520 = vmatpush1.msra.mxu0 0.0
  %521 = vmatprep.subr.mxu0 0.0
  %522 = vmatpush1.msra.mxu0 0.0
  %523 = vmatprep.subr.mxu0 0.0
  %524 = vmatpush1.msra.mxu0 0.0
  %525 = vmatprep.subr.mxu0 0.0
  %526 = vmatpush1.msra.mxu0 0.0
  %527 = vmatprep.subr.mxu0 0.0
  %528 = vmatpush1.msra.mxu0 0.0
  %529 = vmatprep.subr.mxu0 0.0
  %530 = vmatpush1.msra.mxu0 0.0
  %531 = vmatprep.subr.mxu0 0.0
  %532 = vmatpush1.msra.mxu0 0.0
  %533 = vmatprep.subr.mxu0 0.0
  %534 = vmatpush1.msra.mxu0 0.0
  %535 = vmatprep.subr.mxu0 0.0
  %536 = vmatpush1.msra.mxu0 0.0
  %537 = vmatprep.subr.mxu0 0.0
  %538 = vmatpush1.msra.mxu0 0.0
  %539 = vmatprep.subr.mxu0 0.0
  %540 = vmatpush1.msra.mxu0 0.0
  %541 = vmatprep.subr.mxu0 0.0
  %542 = vmatpush1.msra.mxu0 0.0
  %543 = vmatprep.subr.mxu0 0.0
  %544 = vmatpush1.msra.mxu0 0.0
  %545 = vmatprep.subr.mxu0 0.0
  %546 = vmatpush1.msra.mxu0 0.0
  %547 = vmatprep.subr.mxu0 0.0
  %548 = vmatpush1.msra.mxu0 0.0
  %549 = vmatprep.subr.mxu0 0.0
  %550 = vmatpush1.msra.mxu0 0.0
  %551 = vmatprep.subr.mxu0 0.0
  %552 = vmatpush1.msra.mxu0 0.0
  %553 = vmatprep.subr.mxu0 0.0
  %554 = vmatpush1.msra.mxu0 0.0
  %555 = vmatprep.mubr.f32.mxu0 0.0
  %556 = vmatmul.mubr.f32.gmra.mrb[0].mxu0 %v480
  %v557 = vpop.f32.mrb[0].mxu0
  %v558 = vadd.f32 %v477, %v557
  %v559 = vpop.f32.mrb[0].mxu0
  %560 = vmatprep.mubr.f32.mxu0 0.0
  %561 = vmatmul.mubr.f32.gmra.mrb[0].mxu0 %v483
  %v562 = vpop.f32.mrb[0].mxu0
  %v563 = vadd.f32 %v477, %v562
  %v564 = vpop.f32.mrb[0].mxu0
  %565 = vmatprep.mubr.f32.mxu0 0.0
  %566 = vmatmul.mubr.f32.gmra.mrb[0].mxu0 %v486
  %v567 = vpop.f32.mrb[0].mxu0
  %v568 = vadd.f32 %v477, %v567
  %v569 = vpop.f32.mrb[0].mxu0
  %570 = vmatprep.mubr.f32.mxu0 0.0
  %571 = vmatmul.mubr.f32.gmra.mrb[0].mxu0 %v489
  %v572 = vpop.f32.mrb[0].mxu0
  %v573 = vadd.f32 %v477, %v572
  %v574 = vpop.f32.mrb[0].mxu0
  %575 = vdwg.mxu0
  %v576 = vld [vmem:[%s23] sm:$0xff]
  %v577 = vld [vmem:[%s23 + $0x8] sm:$0xff]
  %v578 = vld [vmem:[%s23 + $0x10] sm:$0xff]
  %v579 = vld [vmem:[%s23 + $0x18] sm:$0xff]
  %582 = vrot.lane.b32.xlu0 %v558, 96
  %v583 = vpop.permute.xlu0 %582
  %584 = vrot.lane.b32.xlu0 %v563, 96
  %v585 = vpop.permute.xlu0 %584
  %vm586 = vcmask 64512
  %v587 = vsel %vm586, %v558, 0
  %v589 = vsel %vm586, %v563, 0
  %v591 = vsel %vm586, %v583, 0
  %v593 = vsel %vm586, %v585, 0
  %595 = vmatprep.subr.mxu0 0.0
  %596 = vmatpush1.xpose.msra.mxu0 %v591
  %597 = vmatprep.subr.mxu0 0.0
  %598 = vmatpush1.xpose.msra.mxu0 %v593
  %599 = vmatprep.subr.mxu0 0.0
  %600 = vmatpush1.xpose.msra.mxu0 0.0
  %601 = vmatprep.subr.mxu0 0.0
  %602 = vmatpush1.xpose.msra.mxu0 0.0
  %603 = vmatprep.subr.mxu0 0.0
  %604 = vmatpush1.xpose.msra.mxu0 0.0
  %605 = vmatprep.subr.mxu0 0.0
  %606 = vmatpush1.xpose.msra.mxu0 0.0
  %607 = vmatprep.subr.mxu0 0.0
  %608 = vmatpush1.xpose.msra.mxu0 0.0
  %609 = vmatprep.subr.mxu0 0.0
  %610 = vmatpush1.xpose.msra.mxu0 0.0
  %611 = vmatprep.subr.mxu0 0.0
  %612 = vmatpush1.xpose.msra.mxu0 0.0
  %613 = vmatprep.subr.mxu0 0.0
  %614 = vmatpush1.xpose.msra.mxu0 0.0
  %615 = vmatprep.subr.mxu0 0.0
  %616 = vmatpush1.xpose.msra.mxu0 0.0
  %617 = vmatprep.subr.mxu0 0.0
  %618 = vmatpush1.xpose.msra.mxu0 0.0
  %619 = vmatprep.subr.mxu0 0.0
  %620 = vmatpush1.xpose.msra.mxu0 0.0
  %621 = vmatprep.subr.mxu0 0.0
  %622 = vmatpush1.xpose.msra.mxu0 0.0
  %623 = vmatprep.subr.mxu0 0.0
  %624 = vmatpush1.xpose.msra.mxu0 0.0
  %625 = vmatprep.subr.mxu0 0.0
  %626 = vmatpush1.xpose.msra.mxu0 0.0
  %627 = vmatprep.subr.mxu0 0.0
  %628 = vmatpush1.xpose.msra.mxu0 0.0
  %629 = vmatprep.subr.mxu0 0.0
  %630 = vmatpush1.xpose.msra.mxu0 0.0
  %631 = vmatprep.subr.mxu0 0.0
  %632 = vmatpush1.xpose.msra.mxu0 0.0
  %633 = vmatprep.subr.mxu0 0.0
  %634 = vmatpush1.xpose.msra.mxu0 0.0
  %635 = vmatprep.subr.mxu0 0.0
  %636 = vmatpush1.xpose.msra.mxu0 0.0
  %637 = vmatprep.subr.mxu0 0.0
  %638 = vmatpush1.xpose.msra.mxu0 0.0
  %639 = vmatprep.subr.mxu0 0.0
  %640 = vmatpush1.xpose.msra.mxu0 0.0
  %641 = vmatprep.subr.mxu0 0.0
  %642 = vmatpush1.xpose.msra.mxu0 0.0
  %643 = vmatprep.subr.mxu0 0.0
  %644 = vmatpush1.xpose.msra.mxu0 0.0
  %645 = vmatprep.subr.mxu0 0.0
  %646 = vmatpush1.xpose.msra.mxu0 0.0
  %647 = vmatprep.subr.mxu0 0.0
  %648 = vmatpush1.xpose.msra.mxu0 0.0
  %649 = vmatprep.subr.mxu0 0.0
  %650 = vmatpush1.xpose.msra.mxu0 0.0
  %651 = vmatprep.subr.mxu0 0.0
  %652 = vmatpush1.xpose.msra.mxu0 0.0
  %653 = vmatprep.subr.mxu0 0.0
  %654 = vmatpush1.xpose.msra.mxu0 0.0
  %655 = vmatprep.subr.mxu0 0.0
  %656 = vmatpush1.xpose.msra.mxu0 0.0
  %657 = vmatprep.subr.mxu0 0.0
  %658 = vmatpush1.xpose.msra.mxu0 0.0
  %659 = vmatprep.mubr.f32.mxu0 0.0
  %660 = vmatmul.mubr.f32.gmra.mrb[0].mxu0 %v587
  %v661 = vpop.f32.mrb[0].mxu0
  %v662 = vadd.f32 0.0, %v661
  %v663 = vpop.f32.mrb[0].mxu0
  %664 = vmatprep.mubr.f32.mxu0 0.0
  %665 = vmatmul.mubr.f32.gmra.mrb[0].mxu0 %v589
  %v666 = vpop.f32.mrb[0].mxu0
  %v667 = vadd.f32 0.0, %v666
  %v668 = vpop.f32.mrb[0].mxu0
  %669 = vdwg.mxu0
  %v670 = vmul.f32 %v662, 0.35355338
  %v671 = vmul.f32 %v667, 0.35355338
  %vm672 = vcmask 130048
  %v673 = vsel %vm672, %v670, -inf
  %674 = vmax.xlane.f32.xlu0 %v673
  %v675 = vpop.xlane.xlu0 %674
  %v676 = vsel %vm672, %v671, -inf
  %677 = vmax.xlane.f32.xlu0 %v676
  %v678 = vpop.xlane.xlu0 %677
  %v679 = vsub.f32 %v670, %v675
  %v680 = vsub.f32 %v671, %v678
  %v681 = vmul.f32 %v679, 1.442695
  %v682 = vpow.pop %v681
  %v683 = vmul.f32 %v680, 1.442695
  %v684 = vpow.pop %v683
  %v685 = vsel %vm672, %v682, 0.0
  %686 = vadd.xlane.f32.xlu0 %v685
  %v687 = vpop.xlane.xlu0 %686
  %v688 = vsel %vm672, %v684, 0.0
  %689 = vadd.xlane.f32.xlu0 %v688
  %v690 = vpop.xlane.xlu0 %689
  %v691 = vrcp.pop %v687
  %v692 = vrcp.pop %v690
  %v693 = vmul.f32 %v682, %v691
  %v694 = vmul.f32 %v684, %v692
  %695 = vrot.lane.b32.xlu0 %v558, 64
  %v696 = vpop.permute.xlu0 %695
  %697 = vrot.lane.b32.xlu0 %v563, 64
  %v698 = vpop.permute.xlu0 %697
  %v702 = vsel %vm672, %v693, 0
  %v705 = vsel %vm672, %v694, 0
  %707 = vmatprep.subr.mxu0 0.0
  %708 = vmatpush1.msra.mxu0 %v696
  %709 = vmatprep.subr.mxu0 0.0
  %710 = vmatpush1.msra.mxu0 %v698
  %711 = vmatprep.subr.mxu0 0.0
  %712 = vmatpush1.msra.mxu0 0.0
  %713 = vmatprep.subr.mxu0 0.0
  %714 = vmatpush1.msra.mxu0 0.0
  %715 = vmatprep.subr.mxu0 0.0
  %716 = vmatpush1.msra.mxu0 0.0
  %717 = vmatprep.subr.mxu0 0.0
  %718 = vmatpush1.msra.mxu0 0.0
  %719 = vmatprep.subr.mxu0 0.0
  %720 = vmatpush1.msra.mxu0 0.0
  %721 = vmatprep.subr.mxu0 0.0
  %722 = vmatpush1.msra.mxu0 0.0
  %723 = vmatprep.subr.mxu0 0.0
  %724 = vmatpush1.msra.mxu0 0.0
  %725 = vmatprep.subr.mxu0 0.0
  %726 = vmatpush1.msra.mxu0 0.0
  %727 = vmatprep.subr.mxu0 0.0
  %728 = vmatpush1.msra.mxu0 0.0
  %729 = vmatprep.subr.mxu0 0.0
  %730 = vmatpush1.msra.mxu0 0.0
  %731 = vmatprep.subr.mxu0 0.0
  %732 = vmatpush1.msra.mxu0 0.0
  %733 = vmatprep.subr.mxu0 0.0
  %734 = vmatpush1.msra.mxu0 0.0
  %735 = vmatprep.subr.mxu0 0.0
  %736 = vmatpush1.msra.mxu0 0.0
  %737 = vmatprep.subr.mxu0 0.0
  %738 = vmatpush1.msra.mxu0 0.0
  %739 = vmatprep.subr.mxu0 0.0
  %740 = vmatpush1.msra.mxu0 0.0
  %741 = vmatprep.subr.mxu0 0.0
  %742 = vmatpush1.msra.mxu0 0.0
  %743 = vmatprep.subr.mxu0 0.0
  %744 = vmatpush1.msra.mxu0 0.0
  %745 = vmatprep.subr.mxu0 0.0
  %746 = vmatpush1.msra.mxu0 0.0
  %747 = vmatprep.subr.mxu0 0.0
  %748 = vmatpush1.msra.mxu0 0.0
  %749 = vmatprep.subr.mxu0 0.0
  %750 = vmatpush1.msra.mxu0 0.0
  %751 = vmatprep.subr.mxu0 0.0
  %752 = vmatpush1.msra.mxu0 0.0
  %753 = vmatprep.subr.mxu0 0.0
  %754 = vmatpush1.msra.mxu0 0.0
  %755 = vmatprep.subr.mxu0 0.0
  %756 = vmatpush1.msra.mxu0 0.0
  %757 = vmatprep.subr.mxu0 0.0
  %758 = vmatpush1.msra.mxu0 0.0
  %759 = vmatprep.subr.mxu0 0.0
  %760 = vmatpush1.msra.mxu0 0.0
  %761 = vmatprep.subr.mxu0 0.0
  %762 = vmatpush1.msra.mxu0 0.0
  %763 = vmatprep.subr.mxu0 0.0
  %764 = vmatpush1.msra.mxu0 0.0
  %765 = vmatprep.subr.mxu0 0.0
  %766 = vmatpush1.msra.mxu0 0.0
  %767 = vmatprep.subr.mxu0 0.0
  %768 = vmatpush1.msra.mxu0 0.0
  %769 = vmatprep.subr.mxu0 0.0
  %770 = vmatpush1.msra.mxu0 0.0
  %771 = vmatprep.mubr.f32.mxu0 0.0
  %772 = vmatmul.mubr.f32.gmra.mrb[0].mxu0 %v702
  %v773 = vpop.f32.mrb[0].mxu0
  %v774 = vadd.f32 0.0, %v773
  %v775 = vpop.f32.mrb[0].mxu0
  %776 = vmatprep.mubr.f32.mxu0 0.0
  %777 = vmatmul.mubr.f32.gmra.mrb[0].mxu0 %v705
  %v778 = vpop.f32.mrb[0].mxu0
  %v779 = vadd.f32 0.0, %v778
  %v780 = vpop.f32.mrb[0].mxu0
  %781 = vdwg.mxu0
  %782 = vrot.lane.b32.xlu0 %v558, 120
  %v783 = vpop.permute.xlu0 %782
  %784 = vrot.lane.b32.xlu0 %v563, 120
  %v785 = vpop.permute.xlu0 %784
  %786 = vrot.lane.b32.xlu0 %v558, 88
  %v787 = vpop.permute.xlu0 %786
  %788 = vrot.lane.b32.xlu0 %v563, 88
  %v789 = vpop.permute.xlu0 %788
  %v790 = vsel %vm586, %v783, 0
  %v792 = vsel %vm586, %v785, 0
  %v794 = vsel %vm586, %v787, 0
  %v796 = vsel %vm586, %v789, 0
  %798 = vmatprep.subr.mxu0 0.0
  %799 = vmatpush1.xpose.msra.mxu0 %v794
  %800 = vmatprep.subr.mxu0 0.0
  %801 = vmatpush1.xpose.msra.mxu0 %v796
  %802 = vmatprep.subr.mxu0 0.0
  %803 = vmatpush1.xpose.msra.mxu0 0.0
  %804 = vmatprep.subr.mxu0 0.0
  %805 = vmatpush1.xpose.msra.mxu0 0.0
  %806 = vmatprep.subr.mxu0 0.0
  %807 = vmatpush1.xpose.msra.mxu0 0.0
  %808 = vmatprep.subr.mxu0 0.0
  %809 = vmatpush1.xpose.msra.mxu0 0.0
  %810 = vmatprep.subr.mxu0 0.0
  %811 = vmatpush1.xpose.msra.mxu0 0.0
  %812 = vmatprep.subr.mxu0 0.0
  %813 = vmatpush1.xpose.msra.mxu0 0.0
  %814 = vmatprep.subr.mxu0 0.0
  %815 = vmatpush1.xpose.msra.mxu0 0.0
  %816 = vmatprep.subr.mxu0 0.0
  %817 = vmatpush1.xpose.msra.mxu0 0.0
  %818 = vmatprep.subr.mxu0 0.0
  %819 = vmatpush1.xpose.msra.mxu0 0.0
  %820 = vmatprep.subr.mxu0 0.0
  %821 = vmatpush1.xpose.msra.mxu0 0.0
  %822 = vmatprep.subr.mxu0 0.0
  %823 = vmatpush1.xpose.msra.mxu0 0.0
  %824 = vmatprep.subr.mxu0 0.0
  %825 = vmatpush1.xpose.msra.mxu0 0.0
  %826 = vmatprep.subr.mxu0 0.0
  %827 = vmatpush1.xpose.msra.mxu0 0.0
  %828 = vmatprep.subr.mxu0 0.0
  %829 = vmatpush1.xpose.msra.mxu0 0.0
  %830 = vmatprep.subr.mxu0 0.0
  %831 = vmatpush1.xpose.msra.mxu0 0.0
  %832 = vmatprep.subr.mxu0 0.0
  %833 = vmatpush1.xpose.msra.mxu0 0.0
  %834 = vmatprep.subr.mxu0 0.0
  %835 = vmatpush1.xpose.msra.mxu0 0.0
  %836 = vmatprep.subr.mxu0 0.0
  %837 = vmatpush1.xpose.msra.mxu0 0.0
  %838 = vmatprep.subr.mxu0 0.0
  %839 = vmatpush1.xpose.msra.mxu0 0.0
  %840 = vmatprep.subr.mxu0 0.0
  %841 = vmatpush1.xpose.msra.mxu0 0.0
  %842 = vmatprep.subr.mxu0 0.0
  %843 = vmatpush1.xpose.msra.mxu0 0.0
  %844 = vmatprep.subr.mxu0 0.0
  %845 = vmatpush1.xpose.msra.mxu0 0.0
  %846 = vmatprep.subr.mxu0 0.0
  %847 = vmatpush1.xpose.msra.mxu0 0.0
  %848 = vmatprep.subr.mxu0 0.0
  %849 = vmatpush1.xpose.msra.mxu0 0.0
  %850 = vmatprep.subr.mxu0 0.0
  %851 = vmatpush1.xpose.msra.mxu0 0.0
  %852 = vmatprep.subr.mxu0 0.0
  %853 = vmatpush1.xpose.msra.mxu0 0.0
  %854 = vmatprep.subr.mxu0 0.0
  %855 = vmatpush1.xpose.msra.mxu0 0.0
  %856 = vmatprep.subr.mxu0 0.0
  %857 = vmatpush1.xpose.msra.mxu0 0.0
  %858 = vmatprep.subr.mxu0 0.0
  %859 = vmatpush1.xpose.msra.mxu0 0.0
  %860 = vmatprep.subr.mxu0 0.0
  %861 = vmatpush1.xpose.msra.mxu0 0.0
  %862 = vmatprep.mubr.f32.mxu0 0.0
  %863 = vmatmul.mubr.f32.gmra.mrb[0].mxu0 %v790
  %v864 = vpop.f32.mrb[0].mxu0
  %v865 = vadd.f32 0.0, %v864
  %v866 = vpop.f32.mrb[0].mxu0
  %867 = vmatprep.mubr.f32.mxu0 0.0
  %868 = vmatmul.mubr.f32.gmra.mrb[0].mxu0 %v792
  %v869 = vpop.f32.mrb[0].mxu0
  %v870 = vadd.f32 0.0, %v869
  %v871 = vpop.f32.mrb[0].mxu0
  %872 = vdwg.mxu0
  %v873 = vmul.f32 %v865, 0.35355338
  %v874 = vmul.f32 %v870, 0.35355338
  %v875 = vsel %vm672, %v873, -inf
  %876 = vmax.xlane.f32.xlu0 %v875
  %v877 = vpop.xlane.xlu0 %876
  %v878 = vsel %vm672, %v874, -inf
  %879 = vmax.xlane.f32.xlu0 %v878
  %v880 = vpop.xlane.xlu0 %879
  %v881 = vsub.f32 %v873, %v877
  %v882 = vsub.f32 %v874, %v880
  %v883 = vmul.f32 %v881, 1.442695
  %v884 = vpow.pop %v883
  %v885 = vmul.f32 %v882, 1.442695
  %v886 = vpow.pop %v885
  %v887 = vsel %vm672, %v884, 0.0
  %888 = vadd.xlane.f32.xlu0 %v887
  %v889 = vpop.xlane.xlu0 %888
  %v890 = vsel %vm672, %v886, 0.0
  %891 = vadd.xlane.f32.xlu0 %v890
  %v892 = vpop.xlane.xlu0 %891
  %v893 = vrcp.pop %v889
  %v894 = vrcp.pop %v892
  %v895 = vmul.f32 %v884, %v893
  %v896 = vmul.f32 %v886, %v894
  %897 = vrot.lane.b32.xlu0 %v558, 56
  %v898 = vpop.permute.xlu0 %897
  %899 = vrot.lane.b32.xlu0 %v563, 56
  %v900 = vpop.permute.xlu0 %899
  %v904 = vsel %vm672, %v895, 0
  %v907 = vsel %vm672, %v896, 0
  %909 = vmatprep.subr.mxu0 0.0
  %910 = vmatpush1.msra.mxu0 %v898
  %911 = vmatprep.subr.mxu0 0.0
  %912 = vmatpush1.msra.mxu0 %v900
  %913 = vmatprep.subr.mxu0 0.0
  %914 = vmatpush1.msra.mxu0 0.0
  %915 = vmatprep.subr.mxu0 0.0
  %916 = vmatpush1.msra.mxu0 0.0
  %917 = vmatprep.subr.mxu0 0.0
  %918 = vmatpush1.msra.mxu0 0.0
  %919 = vmatprep.subr.mxu0 0.0
  %920 = vmatpush1.msra.mxu0 0.0
  %921 = vmatprep.subr.mxu0 0.0
  %922 = vmatpush1.msra.mxu0 0.0
  %923 = vmatprep.subr.mxu0 0.0
  %924 = vmatpush1.msra.mxu0 0.0
  %925 = vmatprep.subr.mxu0 0.0
  %926 = vmatpush1.msra.mxu0 0.0
  %927 = vmatprep.subr.mxu0 0.0
  %928 = vmatpush1.msra.mxu0 0.0
  %929 = vmatprep.subr.mxu0 0.0
  %930 = vmatpush1.msra.mxu0 0.0
  %931 = vmatprep.subr.mxu0 0.0
  %932 = vmatpush1.msra.mxu0 0.0
  %933 = vmatprep.subr.mxu0 0.0
  %934 = vmatpush1.msra.mxu0 0.0
  %935 = vmatprep.subr.mxu0 0.0
  %936 = vmatpush1.msra.mxu0 0.0
  %937 = vmatprep.subr.mxu0 0.0
  %938 = vmatpush1.msra.mxu0 0.0
  %939 = vmatprep.subr.mxu0 0.0
  %940 = vmatpush1.msra.mxu0 0.0
  %941 = vmatprep.subr.mxu0 0.0
  %942 = vmatpush1.msra.mxu0 0.0
  %943 = vmatprep.subr.mxu0 0.0
  %944 = vmatpush1.msra.mxu0 0.0
  %945 = vmatprep.subr.mxu0 0.0
  %946 = vmatpush1.msra.mxu0 0.0
  %947 = vmatprep.subr.mxu0 0.0
  %948 = vmatpush1.msra.mxu0 0.0
  %949 = vmatprep.subr.mxu0 0.0
  %950 = vmatpush1.msra.mxu0 0.0
  %951 = vmatprep.subr.mxu0 0.0
  %952 = vmatpush1.msra.mxu0 0.0
  %953 = vmatprep.subr.mxu0 0.0
  %954 = vmatpush1.msra.mxu0 0.0
  %955 = vmatprep.subr.mxu0 0.0
  %956 = vmatpush1.msra.mxu0 0.0
  %957 = vmatprep.subr.mxu0 0.0
  %958 = vmatpush1.msra.mxu0 0.0
  %959 = vmatprep.subr.mxu0 0.0
  %960 = vmatpush1.msra.mxu0 0.0
  %961 = vmatprep.subr.mxu0 0.0
  %962 = vmatpush1.msra.mxu0 0.0
  %963 = vmatprep.subr.mxu0 0.0
  %964 = vmatpush1.msra.mxu0 0.0
  %965 = vmatprep.subr.mxu0 0.0
  %966 = vmatpush1.msra.mxu0 0.0
  %967 = vmatprep.subr.mxu0 0.0
  %968 = vmatpush1.msra.mxu0 0.0
  %969 = vmatprep.subr.mxu0 0.0
  %970 = vmatpush1.msra.mxu0 0.0
  %971 = vmatprep.subr.mxu0 0.0
  %972 = vmatpush1.msra.mxu0 0.0
  %973 = vmatprep.mubr.f32.mxu0 0.0
  %974 = vmatmul.mubr.f32.gmra.mrb[0].mxu0 %v904
  %v975 = vpop.f32.mrb[0].mxu0
  %v976 = vadd.f32 0.0, %v975
  %v977 = vpop.f32.mrb[0].mxu0
  %978 = vmatprep.mubr.f32.mxu0 0.0
  %979 = vmatmul.mubr.f32.gmra.mrb[0].mxu0 %v907
  %v980 = vpop.f32.mrb[0].mxu0
  %v981 = vadd.f32 0.0, %v980
  %v982 = vpop.f32.mrb[0].mxu0
  %983 = vdwg.mxu0
  %v985 = vsel %vm586, %v976, 0
  %v988 = vsel %vm586, %v981, 0
  %990 = vmatprep.subr.mxu0 0.0
  %991 = vmatpush1.msra.mxu0 %v577
  %992 = vmatprep.subr.mxu0 0.0
  %993 = vmatpush1.msra.mxu0 0.0
  %994 = vmatprep.subr.mxu0 0.0
  %995 = vmatpush1.msra.mxu0 0.0
  %996 = vmatprep.subr.mxu0 0.0
  %997 = vmatpush1.msra.mxu0 0.0
  %998 = vmatprep.subr.mxu0 0.0
  %999 = vmatpush1.msra.mxu0 0.0
  %1000 = vmatprep.subr.mxu0 0.0
  %1001 = vmatpush1.msra.mxu0 0.0
  %1002 = vmatprep.subr.mxu0 0.0
  %1003 = vmatpush1.msra.mxu0 0.0
  %1004 = vmatprep.subr.mxu0 0.0
  %1005 = vmatpush1.msra.mxu0 0.0
  %1006 = vmatprep.subr.mxu0 0.0
  %1007 = vmatpush1.msra.mxu0 0.0
  %1008 = vmatprep.subr.mxu0 0.0
  %1009 = vmatpush1.msra.mxu0 0.0
  %1010 = vmatprep.subr.mxu0 0.0
  %1011 = vmatpush1.msra.mxu0 0.0
  %1012 = vmatprep.subr.mxu0 0.0
  %1013 = vmatpush1.msra.mxu0 0.0
  %1014 = vmatprep.subr.mxu0 0.0
  %1015 = vmatpush1.msra.mxu0 0.0
  %1016 = vmatprep.subr.mxu0 0.0
  %1017 = vmatpush1.msra.mxu0 0.0
  %1018 = vmatprep.subr.mxu0 0.0
  %1019 = vmatpush1.msra.mxu0 0.0
  %1020 = vmatprep.subr.mxu0 0.0
  %1021 = vmatpush1.msra.mxu0 0.0
  %1022 = vmatprep.subr.mxu0 0.0
  %1023 = vmatpush1.msra.mxu0 0.0
  %1024 = vmatprep.subr.mxu0 0.0
  %1025 = vmatpush1.msra.mxu0 0.0
  %1026 = vmatprep.subr.mxu0 0.0
  %1027 = vmatpush1.msra.mxu0 0.0
  %1028 = vmatprep.subr.mxu0 0.0
  %1029 = vmatpush1.msra.mxu0 0.0
  %1030 = vmatprep.subr.mxu0 0.0
  %1031 = vmatpush1.msra.mxu0 0.0
  %1032 = vmatprep.subr.mxu0 0.0
  %1033 = vmatpush1.msra.mxu0 0.0
  %1034 = vmatprep.subr.mxu0 0.0
  %1035 = vmatpush1.msra.mxu0 0.0
  %1036 = vmatprep.subr.mxu0 0.0
  %1037 = vmatpush1.msra.mxu0 0.0
  %1038 = vmatprep.subr.mxu0 0.0
  %1039 = vmatpush1.msra.mxu0 0.0
  %1040 = vmatprep.subr.mxu0 0.0
  %1041 = vmatpush1.msra.mxu0 0.0
  %1042 = vmatprep.subr.mxu0 0.0
  %1043 = vmatpush1.msra.mxu0 0.0
  %1044 = vmatprep.subr.mxu0 0.0
  %1045 = vmatpush1.msra.mxu0 0.0
  %1046 = vmatprep.subr.mxu0 0.0
  %1047 = vmatpush1.msra.mxu0 0.0
  %1048 = vmatprep.subr.mxu0 0.0
  %1049 = vmatpush1.msra.mxu0 0.0
  %1050 = vmatprep.subr.mxu0 0.0
  %1051 = vmatpush1.msra.mxu0 0.0
  %1052 = vmatprep.subr.mxu0 0.0
  %1053 = vmatpush1.msra.mxu0 0.0
  %1054 = vmatprep.mubr.f32.mxu0 0.0
  %1055 = vmatmul.mubr.f32.gmra.mrb[0].mxu0 %v985
  %v1056 = vpop.f32.mrb[0].mxu0
  %v1057 = vadd.f32 0.0, %v1056
  %v1058 = vpop.f32.mrb[0].mxu0
  %1059 = vmatprep.mubr.f32.mxu0 0.0
  %1060 = vmatmul.mubr.f32.gmra.mrb[0].mxu0 %v988
  %v1061 = vpop.f32.mrb[0].mxu0
  %v1062 = vadd.f32 0.0, %v1061
  %v1063 = vpop.f32.mrb[0].mxu0
  %1064 = vdwg.mxu0
  %v1066 = vsel %vm586, %v774, 0
  %v1069 = vsel %vm586, %v779, 0
  %1071 = vmatprep.subr.mxu0 0.0
  %1072 = vmatpush1.msra.mxu0 %v576
  %1073 = vmatprep.subr.mxu0 0.0
  %1074 = vmatpush1.msra.mxu0 0.0
  %1075 = vmatprep.subr.mxu0 0.0
  %1076 = vmatpush1.msra.mxu0 0.0
  %1077 = vmatprep.subr.mxu0 0.0
  %1078 = vmatpush1.msra.mxu0 0.0
  %1079 = vmatprep.subr.mxu0 0.0
  %1080 = vmatpush1.msra.mxu0 0.0
  %1081 = vmatprep.subr.mxu0 0.0
  %1082 = vmatpush1.msra.mxu0 0.0
  %1083 = vmatprep.subr.mxu0 0.0
  %1084 = vmatpush1.msra.mxu0 0.0
  %1085 = vmatprep.subr.mxu0 0.0
  %1086 = vmatpush1.msra.mxu0 0.0
  %1087 = vmatprep.subr.mxu0 0.0
  %1088 = vmatpush1.msra.mxu0 0.0
  %1089 = vmatprep.subr.mxu0 0.0
  %1090 = vmatpush1.msra.mxu0 0.0
  %1091 = vmatprep.subr.mxu0 0.0
  %1092 = vmatpush1.msra.mxu0 0.0
  %1093 = vmatprep.subr.mxu0 0.0
  %1094 = vmatpush1.msra.mxu0 0.0
  %1095 = vmatprep.subr.mxu0 0.0
  %1096 = vmatpush1.msra.mxu0 0.0
  %1097 = vmatprep.subr.mxu0 0.0
  %1098 = vmatpush1.msra.mxu0 0.0
  %1099 = vmatprep.subr.mxu0 0.0
  %1100 = vmatpush1.msra.mxu0 0.0
  %1101 = vmatprep.subr.mxu0 0.0
  %1102 = vmatpush1.msra.mxu0 0.0
  %1103 = vmatprep.subr.mxu0 0.0
  %1104 = vmatpush1.msra.mxu0 0.0
  %1105 = vmatprep.subr.mxu0 0.0
  %1106 = vmatpush1.msra.mxu0 0.0
  %1107 = vmatprep.subr.mxu0 0.0
  %1108 = vmatpush1.msra.mxu0 0.0
  %1109 = vmatprep.subr.mxu0 0.0
  %1110 = vmatpush1.msra.mxu0 0.0
  %1111 = vmatprep.subr.mxu0 0.0
  %1112 = vmatpush1.msra.mxu0 0.0
  %1113 = vmatprep.subr.mxu0 0.0
  %1114 = vmatpush1.msra.mxu0 0.0
  %1115 = vmatprep.subr.mxu0 0.0
  %1116 = vmatpush1.msra.mxu0 0.0
  %1117 = vmatprep.subr.mxu0 0.0
  %1118 = vmatpush1.msra.mxu0 0.0
  %1119 = vmatprep.subr.mxu0 0.0
  %1120 = vmatpush1.msra.mxu0 0.0
  %1121 = vmatprep.subr.mxu0 0.0
  %1122 = vmatpush1.msra.mxu0 0.0
  %1123 = vmatprep.subr.mxu0 0.0
  %1124 = vmatpush1.msra.mxu0 0.0
  %1125 = vmatprep.subr.mxu0 0.0
  %1126 = vmatpush1.msra.mxu0 0.0
  %1127 = vmatprep.subr.mxu0 0.0
  %1128 = vmatpush1.msra.mxu0 0.0
  %1129 = vmatprep.subr.mxu0 0.0
  %1130 = vmatpush1.msra.mxu0 0.0
  %1131 = vmatprep.subr.mxu0 0.0
  %1132 = vmatpush1.msra.mxu0 0.0
  %1133 = vmatprep.subr.mxu0 0.0
  %1134 = vmatpush1.msra.mxu0 0.0
  %1135 = vmatprep.mubr.f32.mxu0 0.0
  %1136 = vmatmul.mubr.f32.gmra.mrb[0].mxu0 %v1066
  %v1137 = vpop.f32.mrb[0].mxu0
  %v1138 = vadd.f32 %v1057, %v1137
  %v1139 = vpop.f32.mrb[0].mxu0
  %1140 = vmatprep.mubr.f32.mxu0 0.0
  %1141 = vmatmul.mubr.f32.gmra.mrb[0].mxu0 %v1069
  %v1142 = vpop.f32.mrb[0].mxu0
  %v1143 = vadd.f32 %v1062, %v1142
  %v1144 = vpop.f32.mrb[0].mxu0
  %1145 = vdwg.mxu0
  %1146 = vrot.lane.b32.xlu0 %v558, 112
  %v1147 = vpop.permute.xlu0 %1146
  %1148 = vrot.lane.b32.xlu0 %v563, 112
  %v1149 = vpop.permute.xlu0 %1148
  %1150 = vrot.lane.b32.xlu0 %v558, 80
  %v1151 = vpop.permute.xlu0 %1150
  %1152 = vrot.lane.b32.xlu0 %v563, 80
  %v1153 = vpop.permute.xlu0 %1152
  %v1154 = vsel %vm586, %v1147, 0
  %v1156 = vsel %vm586, %v1149, 0
  %v1158 = vsel %vm586, %v1151, 0
  %v1160 = vsel %vm586, %v1153, 0
  %1162 = vmatprep.subr.mxu0 0.0
  %1163 = vmatpush1.xpose.msra.mxu0 %v1158
  %1164 = vmatprep.subr.mxu0 0.0
  %1165 = vmatpush1.xpose.msra.mxu0 %v1160
  %1166 = vmatprep.subr.mxu0 0.0
  %1167 = vmatpush1.xpose.msra.mxu0 0.0
  %1168 = vmatprep.subr.mxu0 0.0
  %1169 = vmatpush1.xpose.msra.mxu0 0.0
  %1170 = vmatprep.subr.mxu0 0.0
  %1171 = vmatpush1.xpose.msra.mxu0 0.0
  %1172 = vmatprep.subr.mxu0 0.0
  %1173 = vmatpush1.xpose.msra.mxu0 0.0
  %1174 = vmatprep.subr.mxu0 0.0
  %1175 = vmatpush1.xpose.msra.mxu0 0.0
  %1176 = vmatprep.subr.mxu0 0.0
  %1177 = vmatpush1.xpose.msra.mxu0 0.0
  %1178 = vmatprep.subr.mxu0 0.0
  %1179 = vmatpush1.xpose.msra.mxu0 0.0
  %1180 = vmatprep.subr.mxu0 0.0
  %1181 = vmatpush1.xpose.msra.mxu0 0.0
  %1182 = vmatprep.subr.mxu0 0.0
  %1183 = vmatpush1.xpose.msra.mxu0 0.0
  %1184 = vmatprep.subr.mxu0 0.0
  %1185 = vmatpush1.xpose.msra.mxu0 0.0
  %1186 = vmatprep.subr.mxu0 0.0
  %1187 = vmatpush1.xpose.msra.mxu0 0.0
  %1188 = vmatprep.subr.mxu0 0.0
  %1189 = vmatpush1.xpose.msra.mxu0 0.0
  %1190 = vmatprep.subr.mxu0 0.0
  %1191 = vmatpush1.xpose.msra.mxu0 0.0
  %1192 = vmatprep.subr.mxu0 0.0
  %1193 = vmatpush1.xpose.msra.mxu0 0.0
  %1194 = vmatprep.subr.mxu0 0.0
  %1195 = vmatpush1.xpose.msra.mxu0 0.0
  %1196 = vmatprep.subr.mxu0 0.0
  %1197 = vmatpush1.xpose.msra.mxu0 0.0
  %1198 = vmatprep.subr.mxu0 0.0
  %1199 = vmatpush1.xpose.msra.mxu0 0.0
  %1200 = vmatprep.subr.mxu0 0.0
  %1201 = vmatpush1.xpose.msra.mxu0 0.0
  %1202 = vmatprep.subr.mxu0 0.0
  %1203 = vmatpush1.xpose.msra.mxu0 0.0
  %1204 = vmatprep.subr.mxu0 0.0
  %1205 = vmatpush1.xpose.msra.mxu0 0.0
  %1206 = vmatprep.subr.mxu0 0.0
  %1207 = vmatpush1.xpose.msra.mxu0 0.0
  %1208 = vmatprep.subr.mxu0 0.0
  %1209 = vmatpush1.xpose.msra.mxu0 0.0
  %1210 = vmatprep.subr.mxu0 0.0
  %1211 = vmatpush1.xpose.msra.mxu0 0.0
  %1212 = vmatprep.subr.mxu0 0.0
  %1213 = vmatpush1.xpose.msra.mxu0 0.0
  %1214 = vmatprep.subr.mxu0 0.0
  %1215 = vmatpush1.xpose.msra.mxu0 0.0
  %1216 = vmatprep.subr.mxu0 0.0
  %1217 = vmatpush1.xpose.msra.mxu0 0.0
  %1218 = vmatprep.subr.mxu0 0.0
  %1219 = vmatpush1.xpose.msra.mxu0 0.0
  %1220 = vmatprep.subr.mxu0 0.0
  %1221 = vmatpush1.xpose.msra.mxu0 0.0
  %1222 = vmatprep.subr.mxu0 0.0
  %1223 = vmatpush1.xpose.msra.mxu0 0.0
  %1224 = vmatprep.subr.mxu0 0.0
  %1225 = vmatpush1.xpose.msra.mxu0 0.0
  %1226 = vmatprep.mubr.f32.mxu0 0.0
  %1227 = vmatmul.mubr.f32.gmra.mrb[0].mxu0 %v1154
  %v1228 = vpop.f32.mrb[0].mxu0
  %v1229 = vadd.f32 0.0, %v1228
  %v1230 = vpop.f32.mrb[0].mxu0
  %1231 = vmatprep.mubr.f32.mxu0 0.0
  %1232 = vmatmul.mubr.f32.gmra.mrb[0].mxu0 %v1156
  %v1233 = vpop.f32.mrb[0].mxu0
  %v1234 = vadd.f32 0.0, %v1233
  %v1235 = vpop.f32.mrb[0].mxu0
  %1236 = vdwg.mxu0
  %v1237 = vmul.f32 %v1229, 0.35355338
  %v1238 = vmul.f32 %v1234, 0.35355338
  %v1239 = vsel %vm672, %v1237, -inf
  %1240 = vmax.xlane.f32.xlu0 %v1239
  %v1241 = vpop.xlane.xlu0 %1240
  %v1242 = vsel %vm672, %v1238, -inf
  %1243 = vmax.xlane.f32.xlu0 %v1242
  %v1244 = vpop.xlane.xlu0 %1243
  %v1245 = vsub.f32 %v1237, %v1241
  %v1246 = vsub.f32 %v1238, %v1244
  %v1247 = vmul.f32 %v1245, 1.442695
  %v1248 = vpow.pop %v1247
  %v1249 = vmul.f32 %v1246, 1.442695
  %v1250 = vpow.pop %v1249
  %v1251 = vsel %vm672, %v1248, 0.0
  %1252 = vadd.xlane.f32.xlu0 %v1251
  %v1253 = vpop.xlane.xlu0 %1252
  %v1254 = vsel %vm672, %v1250, 0.0
  %1255 = vadd.xlane.f32.xlu0 %v1254
  %v1256 = vpop.xlane.xlu0 %1255
  %v1257 = vrcp.pop %v1253
  %v1258 = vrcp.pop %v1256
  %v1259 = vmul.f32 %v1248, %v1257
  %v1260 = vmul.f32 %v1250, %v1258
  %1261 = vrot.lane.b32.xlu0 %v558, 48
  %v1262 = vpop.permute.xlu0 %1261
  %1263 = vrot.lane.b32.xlu0 %v563, 48
  %v1264 = vpop.permute.xlu0 %1263
  %v1268 = vsel %vm672, %v1259, 0
  %v1271 = vsel %vm672, %v1260, 0
  %1273 = vmatprep.subr.mxu0 0.0
  %1274 = vmatpush1.msra.mxu0 %v1262
  %1275 = vmatprep.subr.mxu0 0.0
  %1276 = vmatpush1.msra.mxu0 %v1264
  %1277 = vmatprep.subr.mxu0 0.0
  %1278 = vmatpush1.msra.mxu0 0.0
  %1279 = vmatprep.subr.mxu0 0.0
  %1280 = vmatpush1.msra.mxu0 0.0
  %1281 = vmatprep.subr.mxu0 0.0
  %1282 = vmatpush1.msra.mxu0 0.0
  %1283 = vmatprep.subr.mxu0 0.0
  %1284 = vmatpush1.msra.mxu0 0.0
  %1285 = vmatprep.subr.mxu0 0.0
  %1286 = vmatpush1.msra.mxu0 0.0
  %1287 = vmatprep.subr.mxu0 0.0
  %1288 = vmatpush1.msra.mxu0 0.0
  %1289 = vmatprep.subr.mxu0 0.0
  %1290 = vmatpush1.msra.mxu0 0.0
  %1291 = vmatprep.subr.mxu0 0.0
  %1292 = vmatpush1.msra.mxu0 0.0
  %1293 = vmatprep.subr.mxu0 0.0
  %1294 = vmatpush1.msra.mxu0 0.0
  %1295 = vmatprep.subr.mxu0 0.0
  %1296 = vmatpush1.msra.mxu0 0.0
  %1297 = vmatprep.subr.mxu0 0.0
  %1298 = vmatpush1.msra.mxu0 0.0
  %1299 = vmatprep.subr.mxu0 0.0
  %1300 = vmatpush1.msra.mxu0 0.0
  %1301 = vmatprep.subr.mxu0 0.0
  %1302 = vmatpush1.msra.mxu0 0.0
  %1303 = vmatprep.subr.mxu0 0.0
  %1304 = vmatpush1.msra.mxu0 0.0
  %1305 = vmatprep.subr.mxu0 0.0
  %1306 = vmatpush1.msra.mxu0 0.0
  %1307 = vmatprep.subr.mxu0 0.0
  %1308 = vmatpush1.msra.mxu0 0.0
  %1309 = vmatprep.subr.mxu0 0.0
  %1310 = vmatpush1.msra.mxu0 0.0
  %1311 = vmatprep.subr.mxu0 0.0
  %1312 = vmatpush1.msra.mxu0 0.0
  %1313 = vmatprep.subr.mxu0 0.0
  %1314 = vmatpush1.msra.mxu0 0.0
  %1315 = vmatprep.subr.mxu0 0.0
  %1316 = vmatpush1.msra.mxu0 0.0
  %1317 = vmatprep.subr.mxu0 0.0
  %1318 = vmatpush1.msra.mxu0 0.0
  %1319 = vmatprep.subr.mxu0 0.0
  %1320 = vmatpush1.msra.mxu0 0.0
  %1321 = vmatprep.subr.mxu0 0.0
  %1322 = vmatpush1.msra.mxu0 0.0
  %1323 = vmatprep.subr.mxu0 0.0
  %1324 = vmatpush1.msra.mxu0 0.0
  %1325 = vmatprep.subr.mxu0 0.0
  %1326 = vmatpush1.msra.mxu0 0.0
  %1327 = vmatprep.subr.mxu0 0.0
  %1328 = vmatpush1.msra.mxu0 0.0
  %1329 = vmatprep.subr.mxu0 0.0
  %1330 = vmatpush1.msra.mxu0 0.0
  %1331 = vmatprep.subr.mxu0 0.0
  %1332 = vmatpush1.msra.mxu0 0.0
  %1333 = vmatprep.subr.mxu0 0.0
  %1334 = vmatpush1.msra.mxu0 0.0
  %1335 = vmatprep.subr.mxu0 0.0
  %1336 = vmatpush1.msra.mxu0 0.0
  %1337 = vmatprep.mubr.f32.mxu0 0.0
  %1338 = vmatmul.mubr.f32.gmra.mrb[0].mxu0 %v1268
  %v1339 = vpop.f32.mrb[0].mxu0
  %v1340 = vadd.f32 0.0, %v1339
  %v1341 = vpop.f32.mrb[0].mxu0
  %1342 = vmatprep.mubr.f32.mxu0 0.0
  %1343 = vmatmul.mubr.f32.gmra.mrb[0].mxu0 %v1271
  %v1344 = vpop.f32.mrb[0].mxu0
  %v1345 = vadd.f32 0.0, %v1344
  %v1346 = vpop.f32.mrb[0].mxu0
  %1347 = vdwg.mxu0
  %v1349 = vsel %vm586, %v1340, 0
  %v1352 = vsel %vm586, %v1345, 0
  %1354 = vmatprep.subr.mxu0 0.0
  %1355 = vmatpush1.msra.mxu0 %v578
  %1356 = vmatprep.subr.mxu0 0.0
  %1357 = vmatpush1.msra.mxu0 0.0
  %1358 = vmatprep.subr.mxu0 0.0
  %1359 = vmatpush1.msra.mxu0 0.0
  %1360 = vmatprep.subr.mxu0 0.0
  %1361 = vmatpush1.msra.mxu0 0.0
  %1362 = vmatprep.subr.mxu0 0.0
  %1363 = vmatpush1.msra.mxu0 0.0
  %1364 = vmatprep.subr.mxu0 0.0
  %1365 = vmatpush1.msra.mxu0 0.0
  %1366 = vmatprep.subr.mxu0 0.0
  %1367 = vmatpush1.msra.mxu0 0.0
  %1368 = vmatprep.subr.mxu0 0.0
  %1369 = vmatpush1.msra.mxu0 0.0
  %1370 = vmatprep.subr.mxu0 0.0
  %1371 = vmatpush1.msra.mxu0 0.0
  %1372 = vmatprep.subr.mxu0 0.0
  %1373 = vmatpush1.msra.mxu0 0.0
  %1374 = vmatprep.subr.mxu0 0.0
  %1375 = vmatpush1.msra.mxu0 0.0
  %1376 = vmatprep.subr.mxu0 0.0
  %1377 = vmatpush1.msra.mxu0 0.0
  %1378 = vmatprep.subr.mxu0 0.0
  %1379 = vmatpush1.msra.mxu0 0.0
  %1380 = vmatprep.subr.mxu0 0.0
  %1381 = vmatpush1.msra.mxu0 0.0
  %1382 = vmatprep.subr.mxu0 0.0
  %1383 = vmatpush1.msra.mxu0 0.0
  %1384 = vmatprep.subr.mxu0 0.0
  %1385 = vmatpush1.msra.mxu0 0.0
  %1386 = vmatprep.subr.mxu0 0.0
  %1387 = vmatpush1.msra.mxu0 0.0
  %1388 = vmatprep.subr.mxu0 0.0
  %1389 = vmatpush1.msra.mxu0 0.0
  %1390 = vmatprep.subr.mxu0 0.0
  %1391 = vmatpush1.msra.mxu0 0.0
  %1392 = vmatprep.subr.mxu0 0.0
  %1393 = vmatpush1.msra.mxu0 0.0
  %1394 = vmatprep.subr.mxu0 0.0
  %1395 = vmatpush1.msra.mxu0 0.0
  %1396 = vmatprep.subr.mxu0 0.0
  %1397 = vmatpush1.msra.mxu0 0.0
  %1398 = vmatprep.subr.mxu0 0.0
  %1399 = vmatpush1.msra.mxu0 0.0
  %1400 = vmatprep.subr.mxu0 0.0
  %1401 = vmatpush1.msra.mxu0 0.0
  %1402 = vmatprep.subr.mxu0 0.0
  %1403 = vmatpush1.msra.mxu0 0.0
  %1404 = vmatprep.subr.mxu0 0.0
  %1405 = vmatpush1.msra.mxu0 0.0
  %1406 = vmatprep.subr.mxu0 0.0
  %1407 = vmatpush1.msra.mxu0 0.0
  %1408 = vmatprep.subr.mxu0 0.0
  %1409 = vmatpush1.msra.mxu0 0.0
  %1410 = vmatprep.subr.mxu0 0.0
  %1411 = vmatpush1.msra.mxu0 0.0
  %1412 = vmatprep.subr.mxu0 0.0
  %1413 = vmatpush1.msra.mxu0 0.0
  %1414 = vmatprep.subr.mxu0 0.0
  %1415 = vmatpush1.msra.mxu0 0.0
  %1416 = vmatprep.subr.mxu0 0.0
  %1417 = vmatpush1.msra.mxu0 0.0
  %1418 = vmatprep.mubr.f32.mxu0 0.0
  %1419 = vmatmul.mubr.f32.gmra.mrb[0].mxu0 %v1349
  %v1420 = vpop.f32.mrb[0].mxu0
  %v1421 = vadd.f32 0.0, %v1420
  %v1422 = vpop.f32.mrb[0].mxu0
  %1423 = vmatprep.mubr.f32.mxu0 0.0
  %1424 = vmatmul.mubr.f32.gmra.mrb[0].mxu0 %v1352
  %v1425 = vpop.f32.mrb[0].mxu0
  %v1426 = vadd.f32 0.0, %v1425
  %v1427 = vpop.f32.mrb[0].mxu0
  %1428 = vdwg.mxu0
  %v1429 = vadd.f32 %v1138, %v1421
  %v1430 = vadd.f32 %v1143, %v1426
  %1431 = vrot.lane.b32.xlu0 %v558, 104
  %v1432 = vpop.permute.xlu0 %1431
  %1433 = vrot.lane.b32.xlu0 %v563, 104
  %v1434 = vpop.permute.xlu0 %1433
  %1435 = vrot.lane.b32.xlu0 %v558, 72
  %v1436 = vpop.permute.xlu0 %1435
  %1437 = vrot.lane.b32.xlu0 %v563, 72
  %v1438 = vpop.permute.xlu0 %1437
  %v1439 = vsel %vm586, %v1432, 0
  %v1441 = vsel %vm586, %v1434, 0
  %v1443 = vsel %vm586, %v1436, 0
  %v1445 = vsel %vm586, %v1438, 0
  %1447 = vmatprep.subr.mxu0 0.0
  %1448 = vmatpush1.xpose.msra.mxu0 %v1443
  %1449 = vmatprep.subr.mxu0 0.0
  %1450 = vmatpush1.xpose.msra.mxu0 %v1445
  %1451 = vmatprep.subr.mxu0 0.0
  %1452 = vmatpush1.xpose.msra.mxu0 0.0
  %1453 = vmatprep.subr.mxu0 0.0
  %1454 = vmatpush1.xpose.msra.mxu0 0.0
  %1455 = vmatprep.subr.mxu0 0.0
  %1456 = vmatpush1.xpose.msra.mxu0 0.0
  %1457 = vmatprep.subr.mxu0 0.0
  %1458 = vmatpush1.xpose.msra.mxu0 0.0
  %1459 = vmatprep.subr.mxu0 0.0
  %1460 = vmatpush1.xpose.msra.mxu0 0.0
  %1461 = vmatprep.subr.mxu0 0.0
  %1462 = vmatpush1.xpose.msra.mxu0 0.0
  %1463 = vmatprep.subr.mxu0 0.0
  %1464 = vmatpush1.xpose.msra.mxu0 0.0
  %1465 = vmatprep.subr.mxu0 0.0
  %1466 = vmatpush1.xpose.msra.mxu0 0.0
  %1467 = vmatprep.subr.mxu0 0.0
  %1468 = vmatpush1.xpose.msra.mxu0 0.0
  %1469 = vmatprep.subr.mxu0 0.0
  %1470 = vmatpush1.xpose.msra.mxu0 0.0
  %1471 = vmatprep.subr.mxu0 0.0
  %1472 = vmatpush1.xpose.msra.mxu0 0.0
  %1473 = vmatprep.subr.mxu0 0.0
  %1474 = vmatpush1.xpose.msra.mxu0 0.0
  %1475 = vmatprep.subr.mxu0 0.0
  %1476 = vmatpush1.xpose.msra.mxu0 0.0
  %1477 = vmatprep.subr.mxu0 0.0
  %1478 = vmatpush1.xpose.msra.mxu0 0.0
  %1479 = vmatprep.subr.mxu0 0.0
  %1480 = vmatpush1.xpose.msra.mxu0 0.0
  %1481 = vmatprep.subr.mxu0 0.0
  %1482 = vmatpush1.xpose.msra.mxu0 0.0
  %1483 = vmatprep.subr.mxu0 0.0
  %1484 = vmatpush1.xpose.msra.mxu0 0.0
  %1485 = vmatprep.subr.mxu0 0.0
  %1486 = vmatpush1.xpose.msra.mxu0 0.0
  %1487 = vmatprep.subr.mxu0 0.0
  %1488 = vmatpush1.xpose.msra.mxu0 0.0
  %1489 = vmatprep.subr.mxu0 0.0
  %1490 = vmatpush1.xpose.msra.mxu0 0.0
  %1491 = vmatprep.subr.mxu0 0.0
  %1492 = vmatpush1.xpose.msra.mxu0 0.0
  %1493 = vmatprep.subr.mxu0 0.0
  %1494 = vmatpush1.xpose.msra.mxu0 0.0
  %1495 = vmatprep.subr.mxu0 0.0
  %1496 = vmatpush1.xpose.msra.mxu0 0.0
  %1497 = vmatprep.subr.mxu0 0.0
  %1498 = vmatpush1.xpose.msra.mxu0 0.0
  %1499 = vmatprep.subr.mxu0 0.0
  %1500 = vmatpush1.xpose.msra.mxu0 0.0
  %1501 = vmatprep.subr.mxu0 0.0
  %1502 = vmatpush1.xpose.msra.mxu0 0.0
  %1503 = vmatprep.subr.mxu0 0.0
  %1504 = vmatpush1.xpose.msra.mxu0 0.0
  %1505 = vmatprep.subr.mxu0 0.0
  %1506 = vmatpush1.xpose.msra.mxu0 0.0
  %1507 = vmatprep.subr.mxu0 0.0
  %1508 = vmatpush1.xpose.msra.mxu0 0.0
  %1509 = vmatprep.subr.mxu0 0.0
  %1510 = vmatpush1.xpose.msra.mxu0 0.0
  %1511 = vmatprep.mubr.f32.mxu0 0.0
  %1512 = vmatmul.mubr.f32.gmra.mrb[0].mxu0 %v1439
  %v1513 = vpop.f32.mrb[0].mxu0
  %v1514 = vadd.f32 0.0, %v1513
  %v1515 = vpop.f32.mrb[0].mxu0
  %1516 = vmatprep.mubr.f32.mxu0 0.0
  %1517 = vmatmul.mubr.f32.gmra.mrb[0].mxu0 %v1441
  %v1518 = vpop.f32.mrb[0].mxu0
  %v1519 = vadd.f32 0.0, %v1518
  %v1520 = vpop.f32.mrb[0].mxu0
  %1521 = vdwg.mxu0
  %v1522 = vmul.f32 %v1514, 0.35355338
  %v1523 = vmul.f32 %v1519, 0.35355338
  %v1524 = vsel %vm672, %v1522, -inf
  %1525 = vmax.xlane.f32.xlu0 %v1524
  %v1526 = vpop.xlane.xlu0 %1525
  %v1527 = vsel %vm672, %v1523, -inf
  %1528 = vmax.xlane.f32.xlu0 %v1527
  %v1529 = vpop.xlane.xlu0 %1528
  %v1530 = vsub.f32 %v1522, %v1526
  %v1531 = vsub.f32 %v1523, %v1529
  %v1532 = vmul.f32 %v1530, 1.442695
  %v1533 = vpow.pop %v1532
  %v1534 = vmul.f32 %v1531, 1.442695
  %v1535 = vpow.pop %v1534
  %v1536 = vsel %vm672, %v1533, 0.0
  %1537 = vadd.xlane.f32.xlu0 %v1536
  %v1538 = vpop.xlane.xlu0 %1537
  %v1539 = vsel %vm672, %v1535, 0.0
  %1540 = vadd.xlane.f32.xlu0 %v1539
  %v1541 = vpop.xlane.xlu0 %1540
  %v1542 = vrcp.pop %v1538
  %v1543 = vrcp.pop %v1541
  %v1544 = vmul.f32 %v1533, %v1542
  %v1545 = vmul.f32 %v1535, %v1543
  %1546 = vrot.lane.b32.xlu0 %v558, 40
  %v1547 = vpop.permute.xlu0 %1546
  %1548 = vrot.lane.b32.xlu0 %v563, 40
  %v1549 = vpop.permute.xlu0 %1548
  %v1553 = vsel %vm672, %v1544, 0
  %v1556 = vsel %vm672, %v1545, 0
  %1558 = vmatprep.subr.mxu0 0.0
  %1559 = vmatpush1.msra.mxu0 %v1547
  %1560 = vmatprep.subr.mxu0 0.0
  %1561 = vmatpush1.msra.mxu0 %v1549
  %1562 = vmatprep.subr.mxu0 0.0
  %1563 = vmatpush1.msra.mxu0 0.0
  %1564 = vmatprep.subr.mxu0 0.0
  %1565 = vmatpush1.msra.mxu0 0.0
  %1566 = vmatprep.subr.mxu0 0.0
  %1567 = vmatpush1.msra.mxu0 0.0
  %1568 = vmatprep.subr.mxu0 0.0
  %1569 = vmatpush1.msra.mxu0 0.0
  %1570 = vmatprep.subr.mxu0 0.0
  %1571 = vmatpush1.msra.mxu0 0.0
  %1572 = vmatprep.subr.mxu0 0.0
  %1573 = vmatpush1.msra.mxu0 0.0
  %1574 = vmatprep.subr.mxu0 0.0
  %1575 = vmatpush1.msra.mxu0 0.0
  %1576 = vmatprep.subr.mxu0 0.0
  %1577 = vmatpush1.msra.mxu0 0.0
  %1578 = vmatprep.subr.mxu0 0.0
  %1579 = vmatpush1.msra.mxu0 0.0
  %1580 = vmatprep.subr.mxu0 0.0
  %1581 = vmatpush1.msra.mxu0 0.0
  %1582 = vmatprep.subr.mxu0 0.0
  %1583 = vmatpush1.msra.mxu0 0.0
  %1584 = vmatprep.subr.mxu0 0.0
  %1585 = vmatpush1.msra.mxu0 0.0
  %1586 = vmatprep.subr.mxu0 0.0
  %1587 = vmatpush1.msra.mxu0 0.0
  %1588 = vmatprep.subr.mxu0 0.0
  %1589 = vmatpush1.msra.mxu0 0.0
  %1590 = vmatprep.subr.mxu0 0.0
  %1591 = vmatpush1.msra.mxu0 0.0
  %1592 = vmatprep.subr.mxu0 0.0
  %1593 = vmatpush1.msra.mxu0 0.0
  %1594 = vmatprep.subr.mxu0 0.0
  %1595 = vmatpush1.msra.mxu0 0.0
  %1596 = vmatprep.subr.mxu0 0.0
  %1597 = vmatpush1.msra.mxu0 0.0
  %1598 = vmatprep.subr.mxu0 0.0
  %1599 = vmatpush1.msra.mxu0 0.0
  %1600 = vmatprep.subr.mxu0 0.0
  %1601 = vmatpush1.msra.mxu0 0.0
  %1602 = vmatprep.subr.mxu0 0.0
  %1603 = vmatpush1.msra.mxu0 0.0
  %1604 = vmatprep.subr.mxu0 0.0
  %1605 = vmatpush1.msra.mxu0 0.0
  %1606 = vmatprep.subr.mxu0 0.0
  %1607 = vmatpush1.msra.mxu0 0.0
  %1608 = vmatprep.subr.mxu0 0.0
  %1609 = vmatpush1.msra.mxu0 0.0
  %1610 = vmatprep.subr.mxu0 0.0
  %1611 = vmatpush1.msra.mxu0 0.0
  %1612 = vmatprep.subr.mxu0 0.0
  %1613 = vmatpush1.msra.mxu0 0.0
  %1614 = vmatprep.subr.mxu0 0.0
  %1615 = vmatpush1.msra.mxu0 0.0
  %1616 = vmatprep.subr.mxu0 0.0
  %1617 = vmatpush1.msra.mxu0 0.0
  %1618 = vmatprep.subr.mxu0 0.0
  %1619 = vmatpush1.msra.mxu0 0.0
  %1620 = vmatprep.subr.mxu0 0.0
  %1621 = vmatpush1.msra.mxu0 0.0
  %1622 = vmatprep.mubr.f32.mxu0 0.0
  %1623 = vmatmul.mubr.f32.gmra.mrb[0].mxu0 %v1553
  %v1624 = vpop.f32.mrb[0].mxu0
  %v1625 = vadd.f32 0.0, %v1624
  %v1626 = vpop.f32.mrb[0].mxu0
  %1627 = vmatprep.mubr.f32.mxu0 0.0
  %1628 = vmatmul.mubr.f32.gmra.mrb[0].mxu0 %v1556
  %v1629 = vpop.f32.mrb[0].mxu0
  %v1630 = vadd.f32 0.0, %v1629
  %v1631 = vpop.f32.mrb[0].mxu0
  %1632 = vdwg.mxu0
  %v1634 = vsel %vm586, %v1625, 0
  %v1637 = vsel %vm586, %v1630, 0
  %1639 = vmatprep.subr.mxu0 0.0
  %1640 = vmatpush1.msra.mxu0 %v579
  %1641 = vmatprep.subr.mxu0 0.0
  %1642 = vmatpush1.msra.mxu0 0.0
  %1643 = vmatprep.subr.mxu0 0.0
  %1644 = vmatpush1.msra.mxu0 0.0
  %1645 = vmatprep.subr.mxu0 0.0
  %1646 = vmatpush1.msra.mxu0 0.0
  %1647 = vmatprep.subr.mxu0 0.0
  %1648 = vmatpush1.msra.mxu0 0.0
  %1649 = vmatprep.subr.mxu0 0.0
  %1650 = vmatpush1.msra.mxu0 0.0
  %1651 = vmatprep.subr.mxu0 0.0
  %1652 = vmatpush1.msra.mxu0 0.0
  %1653 = vmatprep.subr.mxu0 0.0
  %1654 = vmatpush1.msra.mxu0 0.0
  %1655 = vmatprep.subr.mxu0 0.0
  %1656 = vmatpush1.msra.mxu0 0.0
  %1657 = vmatprep.subr.mxu0 0.0
  %1658 = vmatpush1.msra.mxu0 0.0
  %1659 = vmatprep.subr.mxu0 0.0
  %1660 = vmatpush1.msra.mxu0 0.0
  %1661 = vmatprep.subr.mxu0 0.0
  %1662 = vmatpush1.msra.mxu0 0.0
  %1663 = vmatprep.subr.mxu0 0.0
  %1664 = vmatpush1.msra.mxu0 0.0
  %1665 = vmatprep.subr.mxu0 0.0
  %1666 = vmatpush1.msra.mxu0 0.0
  %1667 = vmatprep.subr.mxu0 0.0
  %1668 = vmatpush1.msra.mxu0 0.0
  %1669 = vmatprep.subr.mxu0 0.0
  %1670 = vmatpush1.msra.mxu0 0.0
  %1671 = vmatprep.subr.mxu0 0.0
  %1672 = vmatpush1.msra.mxu0 0.0
  %1673 = vmatprep.subr.mxu0 0.0
  %1674 = vmatpush1.msra.mxu0 0.0
  %1675 = vmatprep.subr.mxu0 0.0
  %1676 = vmatpush1.msra.mxu0 0.0
  %1677 = vmatprep.subr.mxu0 0.0
  %1678 = vmatpush1.msra.mxu0 0.0
  %1679 = vmatprep.subr.mxu0 0.0
  %1680 = vmatpush1.msra.mxu0 0.0
  %1681 = vmatprep.subr.mxu0 0.0
  %1682 = vmatpush1.msra.mxu0 0.0
  %1683 = vmatprep.subr.mxu0 0.0
  %1684 = vmatpush1.msra.mxu0 0.0
  %1685 = vmatprep.subr.mxu0 0.0
  %1686 = vmatpush1.msra.mxu0 0.0
  %1687 = vmatprep.subr.mxu0 0.0
  %1688 = vmatpush1.msra.mxu0 0.0
  %1689 = vmatprep.subr.mxu0 0.0
  %1690 = vmatpush1.msra.mxu0 0.0
  %1691 = vmatprep.subr.mxu0 0.0
  %1692 = vmatpush1.msra.mxu0 0.0
  %1693 = vmatprep.subr.mxu0 0.0
  %1694 = vmatpush1.msra.mxu0 0.0
  %1695 = vmatprep.subr.mxu0 0.0
  %1696 = vmatpush1.msra.mxu0 0.0
  %1697 = vmatprep.subr.mxu0 0.0
  %1698 = vmatpush1.msra.mxu0 0.0
  %1699 = vmatprep.subr.mxu0 0.0
  %1700 = vmatpush1.msra.mxu0 0.0
  %1701 = vmatprep.subr.mxu0 0.0
  %1702 = vmatpush1.msra.mxu0 0.0
  %1703 = vmatprep.mubr.f32.mxu0 0.0
  %1704 = vmatmul.mubr.f32.gmra.mrb[0].mxu0 %v1634
  %v1705 = vpop.f32.mrb[0].mxu0
  %v1706 = vadd.f32 0.0, %v1705
  %v1707 = vpop.f32.mrb[0].mxu0
  %1708 = vmatprep.mubr.f32.mxu0 0.0
  %1709 = vmatmul.mubr.f32.gmra.mrb[0].mxu0 %v1637
  %v1710 = vpop.f32.mrb[0].mxu0
  %v1711 = vadd.f32 0.0, %v1710
  %v1712 = vpop.f32.mrb[0].mxu0
  %1713 = vdwg.mxu0
  %v1714 = vadd.f32 %v1429, %v1706
  %v1715 = vadd.f32 %v1430, %v1711
  %1718 = vrot.lane.b32.xlu0 %v568, 96
  %v1719 = vpop.permute.xlu0 %1718
  %1720 = vrot.lane.b32.xlu0 %v573, 96
  %v1721 = vpop.permute.xlu0 %1720
  %v1722 = vsel %vm586, %v568, 0
  %v1724 = vsel %vm586, %v573, 0
  %v1726 = vsel %vm586, %v1719, 0
  %v1728 = vsel %vm586, %v1721, 0
  %1730 = vmatprep.subr.mxu0 0.0
  %1731 = vmatpush1.xpose.msra.mxu0 %v1726
  %1732 = vmatprep.subr.mxu0 0.0
  %1733 = vmatpush1.xpose.msra.mxu0 %v1728
  %1734 = vmatprep.subr.mxu0 0.0
  %1735 = vmatpush1.xpose.msra.mxu0 0.0
  %1736 = vmatprep.subr.mxu0 0.0
  %1737 = vmatpush1.xpose.msra.mxu0 0.0
  %1738 = vmatprep.subr.mxu0 0.0
  %1739 = vmatpush1.xpose.msra.mxu0 0.0
  %1740 = vmatprep.subr.mxu0 0.0
  %1741 = vmatpush1.xpose.msra.mxu0 0.0
  %1742 = vmatprep.subr.mxu0 0.0
  %1743 = vmatpush1.xpose.msra.mxu0 0.0
  %1744 = vmatprep.subr.mxu0 0.0
  %1745 = vmatpush1.xpose.msra.mxu0 0.0
  %1746 = vmatprep.subr.mxu0 0.0
  %1747 = vmatpush1.xpose.msra.mxu0 0.0
  %1748 = vmatprep.subr.mxu0 0.0
  %1749 = vmatpush1.xpose.msra.mxu0 0.0
  %1750 = vmatprep.subr.mxu0 0.0
  %1751 = vmatpush1.xpose.msra.mxu0 0.0
  %1752 = vmatprep.subr.mxu0 0.0
  %1753 = vmatpush1.xpose.msra.mxu0 0.0
  %1754 = vmatprep.subr.mxu0 0.0
  %1755 = vmatpush1.xpose.msra.mxu0 0.0
  %1756 = vmatprep.subr.mxu0 0.0
  %1757 = vmatpush1.xpose.msra.mxu0 0.0
  %1758 = vmatprep.subr.mxu0 0.0
  %1759 = vmatpush1.xpose.msra.mxu0 0.0
  %1760 = vmatprep.subr.mxu0 0.0
  %1761 = vmatpush1.xpose.msra.mxu0 0.0
  %1762 = vmatprep.subr.mxu0 0.0
  %1763 = vmatpush1.xpose.msra.mxu0 0.0
  %1764 = vmatprep.subr.mxu0 0.0
  %1765 = vmatpush1.xpose.msra.mxu0 0.0
  %1766 = vmatprep.subr.mxu0 0.0
  %1767 = vmatpush1.xpose.msra.mxu0 0.0
  %1768 = vmatprep.subr.mxu0 0.0
  %1769 = vmatpush1.xpose.msra.mxu0 0.0
  %1770 = vmatprep.subr.mxu0 0.0
  %1771 = vmatpush1.xpose.msra.mxu0 0.0
  %1772 = vmatprep.subr.mxu0 0.0
  %1773 = vmatpush1.xpose.msra.mxu0 0.0
  %1774 = vmatprep.subr.mxu0 0.0
  %1775 = vmatpush1.xpose.msra.mxu0 0.0
  %1776 = vmatprep.subr.mxu0 0.0
  %1777 = vmatpush1.xpose.msra.mxu0 0.0
  %1778 = vmatprep.subr.mxu0 0.0
  %1779 = vmatpush1.xpose.msra.mxu0 0.0
  %1780 = vmatprep.subr.mxu0 0.0
  %1781 = vmatpush1.xpose.msra.mxu0 0.0
  %1782 = vmatprep.subr.mxu0 0.0
  %1783 = vmatpush1.xpose.msra.mxu0 0.0
  %1784 = vmatprep.subr.mxu0 0.0
  %1785 = vmatpush1.xpose.msra.mxu0 0.0
  %1786 = vmatprep.subr.mxu0 0.0
  %1787 = vmatpush1.xpose.msra.mxu0 0.0
  %1788 = vmatprep.subr.mxu0 0.0
  %1789 = vmatpush1.xpose.msra.mxu0 0.0
  %1790 = vmatprep.subr.mxu0 0.0
  %1791 = vmatpush1.xpose.msra.mxu0 0.0
  %1792 = vmatprep.subr.mxu0 0.0
  %1793 = vmatpush1.xpose.msra.mxu0 0.0
  %1794 = vmatprep.mubr.f32.mxu0 0.0
  %1795 = vmatmul.mubr.f32.gmra.mrb[0].mxu0 %v1722
  %v1796 = vpop.f32.mrb[0].mxu0
  %v1797 = vadd.f32 0.0, %v1796
  %v1798 = vpop.f32.mrb[0].mxu0
  %1799 = vmatprep.mubr.f32.mxu0 0.0
  %1800 = vmatmul.mubr.f32.gmra.mrb[0].mxu0 %v1724
  %v1801 = vpop.f32.mrb[0].mxu0
  %v1802 = vadd.f32 0.0, %v1801
  %v1803 = vpop.f32.mrb[0].mxu0
  %1804 = vdwg.mxu0
  %v1805 = vmul.f32 %v1797, 0.35355338
  %v1806 = vmul.f32 %v1802, 0.35355338
  %v1807 = vsel %vm672, %v1805, -inf
  %1808 = vmax.xlane.f32.xlu0 %v1807
  %v1809 = vpop.xlane.xlu0 %1808
  %v1810 = vsel %vm672, %v1806, -inf
  %1811 = vmax.xlane.f32.xlu0 %v1810
  %v1812 = vpop.xlane.xlu0 %1811
  %v1813 = vsub.f32 %v1805, %v1809
  %v1814 = vsub.f32 %v1806, %v1812
  %v1815 = vmul.f32 %v1813, 1.442695
  %v1816 = vpow.pop %v1815
  %v1817 = vmul.f32 %v1814, 1.442695
  %v1818 = vpow.pop %v1817
  %v1819 = vsel %vm672, %v1816, 0.0
  %1820 = vadd.xlane.f32.xlu0 %v1819
  %v1821 = vpop.xlane.xlu0 %1820
  %v1822 = vsel %vm672, %v1818, 0.0
  %1823 = vadd.xlane.f32.xlu0 %v1822
  %v1824 = vpop.xlane.xlu0 %1823
  %v1825 = vrcp.pop %v1821
  %v1826 = vrcp.pop %v1824
  %v1827 = vmul.f32 %v1816, %v1825
  %v1828 = vmul.f32 %v1818, %v1826
  %1829 = vrot.lane.b32.xlu0 %v568, 64
  %v1830 = vpop.permute.xlu0 %1829
  %1831 = vrot.lane.b32.xlu0 %v573, 64
  %v1832 = vpop.permute.xlu0 %1831
  %v1836 = vsel %vm672, %v1827, 0
  %v1839 = vsel %vm672, %v1828, 0
  %1841 = vmatprep.subr.mxu0 0.0
  %1842 = vmatpush1.msra.mxu0 %v1830
  %1843 = vmatprep.subr.mxu0 0.0
  %1844 = vmatpush1.msra.mxu0 %v1832
  %1845 = vmatprep.subr.mxu0 0.0
  %1846 = vmatpush1.msra.mxu0 0.0
  %1847 = vmatprep.subr.mxu0 0.0
  %1848 = vmatpush1.msra.mxu0 0.0
  %1849 = vmatprep.subr.mxu0 0.0
  %1850 = vmatpush1.msra.mxu0 0.0
  %1851 = vmatprep.subr.mxu0 0.0
  %1852 = vmatpush1.msra.mxu0 0.0
  %1853 = vmatprep.subr.mxu0 0.0
  %1854 = vmatpush1.msra.mxu0 0.0
  %1855 = vmatprep.subr.mxu0 0.0
  %1856 = vmatpush1.msra.mxu0 0.0
  %1857 = vmatprep.subr.mxu0 0.0
  %1858 = vmatpush1.msra.mxu0 0.0
  %1859 = vmatprep.subr.mxu0 0.0
  %1860 = vmatpush1.msra.mxu0 0.0
  %1861 = vmatprep.subr.mxu0 0.0
  %1862 = vmatpush1.msra.mxu0 0.0
  %1863 = vmatprep.subr.mxu0 0.0
  %1864 = vmatpush1.msra.mxu0 0.0
  %1865 = vmatprep.subr.mxu0 0.0
  %1866 = vmatpush1.msra.mxu0 0.0
  %1867 = vmatprep.subr.mxu0 0.0
  %1868 = vmatpush1.msra.mxu0 0.0
  %1869 = vmatprep.subr.mxu0 0.0
  %1870 = vmatpush1.msra.mxu0 0.0
  %1871 = vmatprep.subr.mxu0 0.0
  %1872 = vmatpush1.msra.mxu0 0.0
  %1873 = vmatprep.subr.mxu0 0.0
  %1874 = vmatpush1.msra.mxu0 0.0
  %1875 = vmatprep.subr.mxu0 0.0
  %1876 = vmatpush1.msra.mxu0 0.0
  %1877 = vmatprep.subr.mxu0 0.0
  %1878 = vmatpush1.msra.mxu0 0.0
  %1879 = vmatprep.subr.mxu0 0.0
  %1880 = vmatpush1.msra.mxu0 0.0
  %1881 = vmatprep.subr.mxu0 0.0
  %1882 = vmatpush1.msra.mxu0 0.0
  %1883 = vmatprep.subr.mxu0 0.0
  %1884 = vmatpush1.msra.mxu0 0.0
  %1885 = vmatprep.subr.mxu0 0.0
  %1886 = vmatpush1.msra.mxu0 0.0
  %1887 = vmatprep.subr.mxu0 0.0
  %1888 = vmatpush1.msra.mxu0 0.0
  %1889 = vmatprep.subr.mxu0 0.0
  %1890 = vmatpush1.msra.mxu0 0.0
  %1891 = vmatprep.subr.mxu0 0.0
  %1892 = vmatpush1.msra.mxu0 0.0
  %1893 = vmatprep.subr.mxu0 0.0
  %1894 = vmatpush1.msra.mxu0 0.0
  %1895 = vmatprep.subr.mxu0 0.0
  %1896 = vmatpush1.msra.mxu0 0.0
  %1897 = vmatprep.subr.mxu0 0.0
  %1898 = vmatpush1.msra.mxu0 0.0
  %1899 = vmatprep.subr.mxu0 0.0
  %1900 = vmatpush1.msra.mxu0 0.0
  %1901 = vmatprep.subr.mxu0 0.0
  %1902 = vmatpush1.msra.mxu0 0.0
  %1903 = vmatprep.subr.mxu0 0.0
  %1904 = vmatpush1.msra.mxu0 0.0
  %1905 = vmatprep.mubr.f32.mxu0 0.0
  %1906 = vmatmul.mubr.f32.gmra.mrb[0].mxu0 %v1836
  %v1907 = vpop.f32.mrb[0].mxu0
  %v1908 = vadd.f32 0.0, %v1907
  %v1909 = vpop.f32.mrb[0].mxu0
  %1910 = vmatprep.mubr.f32.mxu0 0.0
  %1911 = vmatmul.mubr.f32.gmra.mrb[0].mxu0 %v1839
  %v1912 = vpop.f32.mrb[0].mxu0
  %v1913 = vadd.f32 0.0, %v1912
  %v1914 = vpop.f32.mrb[0].mxu0
  %1915 = vdwg.mxu0
  %1916 = vrot.lane.b32.xlu0 %v568, 120
  %v1917 = vpop.permute.xlu0 %1916
  %1918 = vrot.lane.b32.xlu0 %v573, 120
  %v1919 = vpop.permute.xlu0 %1918
  %1920 = vrot.lane.b32.xlu0 %v568, 88
  %v1921 = vpop.permute.xlu0 %1920
  %1922 = vrot.lane.b32.xlu0 %v573, 88
  %v1923 = vpop.permute.xlu0 %1922
  %v1924 = vsel %vm586, %v1917, 0
  %v1926 = vsel %vm586, %v1919, 0
  %v1928 = vsel %vm586, %v1921, 0
  %v1930 = vsel %vm586, %v1923, 0
  %1932 = vmatprep.subr.mxu0 0.0
  %1933 = vmatpush1.xpose.msra.mxu0 %v1928
  %1934 = vmatprep.subr.mxu0 0.0
  %1935 = vmatpush1.xpose.msra.mxu0 %v1930
  %1936 = vmatprep.subr.mxu0 0.0
  %1937 = vmatpush1.xpose.msra.mxu0 0.0
  %1938 = vmatprep.subr.mxu0 0.0
  %1939 = vmatpush1.xpose.msra.mxu0 0.0
  %1940 = vmatprep.subr.mxu0 0.0
  %1941 = vmatpush1.xpose.msra.mxu0 0.0
  %1942 = vmatprep.subr.mxu0 0.0
  %1943 = vmatpush1.xpose.msra.mxu0 0.0
  %1944 = vmatprep.subr.mxu0 0.0
  %1945 = vmatpush1.xpose.msra.mxu0 0.0
  %1946 = vmatprep.subr.mxu0 0.0
  %1947 = vmatpush1.xpose.msra.mxu0 0.0
  %1948 = vmatprep.subr.mxu0 0.0
  %1949 = vmatpush1.xpose.msra.mxu0 0.0
  %1950 = vmatprep.subr.mxu0 0.0
  %1951 = vmatpush1.xpose.msra.mxu0 0.0
  %1952 = vmatprep.subr.mxu0 0.0
  %1953 = vmatpush1.xpose.msra.mxu0 0.0
  %1954 = vmatprep.subr.mxu0 0.0
  %1955 = vmatpush1.xpose.msra.mxu0 0.0
  %1956 = vmatprep.subr.mxu0 0.0
  %1957 = vmatpush1.xpose.msra.mxu0 0.0
  %1958 = vmatprep.subr.mxu0 0.0
  %1959 = vmatpush1.xpose.msra.mxu0 0.0
  %1960 = vmatprep.subr.mxu0 0.0
  %1961 = vmatpush1.xpose.msra.mxu0 0.0
  %1962 = vmatprep.subr.mxu0 0.0
  %1963 = vmatpush1.xpose.msra.mxu0 0.0
  %1964 = vmatprep.subr.mxu0 0.0
  %1965 = vmatpush1.xpose.msra.mxu0 0.0
  %1966 = vmatprep.subr.mxu0 0.0
  %1967 = vmatpush1.xpose.msra.mxu0 0.0
  %1968 = vmatprep.subr.mxu0 0.0
  %1969 = vmatpush1.xpose.msra.mxu0 0.0
  %1970 = vmatprep.subr.mxu0 0.0
  %1971 = vmatpush1.xpose.msra.mxu0 0.0
  %1972 = vmatprep.subr.mxu0 0.0
  %1973 = vmatpush1.xpose.msra.mxu0 0.0
  %1974 = vmatprep.subr.mxu0 0.0
  %1975 = vmatpush1.xpose.msra.mxu0 0.0
  %1976 = vmatprep.subr.mxu0 0.0
  %1977 = vmatpush1.xpose.msra.mxu0 0.0
  %1978 = vmatprep.subr.mxu0 0.0
  %1979 = vmatpush1.xpose.msra.mxu0 0.0
  %1980 = vmatprep.subr.mxu0 0.0
  %1981 = vmatpush1.xpose.msra.mxu0 0.0
  %1982 = vmatprep.subr.mxu0 0.0
  %1983 = vmatpush1.xpose.msra.mxu0 0.0
  %1984 = vmatprep.subr.mxu0 0.0
  %1985 = vmatpush1.xpose.msra.mxu0 0.0
  %1986 = vmatprep.subr.mxu0 0.0
  %1987 = vmatpush1.xpose.msra.mxu0 0.0
  %1988 = vmatprep.subr.mxu0 0.0
  %1989 = vmatpush1.xpose.msra.mxu0 0.0
  %1990 = vmatprep.subr.mxu0 0.0
  %1991 = vmatpush1.xpose.msra.mxu0 0.0
  %1992 = vmatprep.subr.mxu0 0.0
  %1993 = vmatpush1.xpose.msra.mxu0 0.0
  %1994 = vmatprep.subr.mxu0 0.0
  %1995 = vmatpush1.xpose.msra.mxu0 0.0
  %1996 = vmatprep.mubr.f32.mxu0 0.0
  %1997 = vmatmul.mubr.f32.gmra.mrb[0].mxu0 %v1924
  %v1998 = vpop.f32.mrb[0].mxu0
  %v1999 = vadd.f32 0.0, %v1998
  %v2000 = vpop.f32.mrb[0].mxu0
  %2001 = vmatprep.mubr.f32.mxu0 0.0
  %2002 = vmatmul.mubr.f32.gmra.mrb[0].mxu0 %v1926
  %v2003 = vpop.f32.mrb[0].mxu0
  %v2004 = vadd.f32 0.0, %v2003
  %v2005 = vpop.f32.mrb[0].mxu0
  %2006 = vdwg.mxu0
  %v2007 = vmul.f32 %v1999, 0.35355338
  %v2008 = vmul.f32 %v2004, 0.35355338
  %v2009 = vsel %vm672, %v2007, -inf
  %2010 = vmax.xlane.f32.xlu0 %v2009
  %v2011 = vpop.xlane.xlu0 %2010
  %v2012 = vsel %vm672, %v2008, -inf
  %2013 = vmax.xlane.f32.xlu0 %v2012
  %v2014 = vpop.xlane.xlu0 %2013
  %v2015 = vsub.f32 %v2007, %v2011
  %v2016 = vsub.f32 %v2008, %v2014
  %v2017 = vmul.f32 %v2015, 1.442695
  %v2018 = vpow.pop %v2017
  %v2019 = vmul.f32 %v2016, 1.442695
  %v2020 = vpow.pop %v2019
  %v2021 = vsel %vm672, %v2018, 0.0
  %2022 = vadd.xlane.f32.xlu0 %v2021
  %v2023 = vpop.xlane.xlu0 %2022
  %v2024 = vsel %vm672, %v2020, 0.0
  %2025 = vadd.xlane.f32.xlu0 %v2024
  %v2026 = vpop.xlane.xlu0 %2025
  %v2027 = vrcp.pop %v2023
  %v2028 = vrcp.pop %v2026
  %v2029 = vmul.f32 %v2018, %v2027
  %v2030 = vmul.f32 %v2020, %v2028
  %2031 = vrot.lane.b32.xlu0 %v568, 56
  %v2032 = vpop.permute.xlu0 %2031
  %2033 = vrot.lane.b32.xlu0 %v573, 56
  %v2034 = vpop.permute.xlu0 %2033
  %v2038 = vsel %vm672, %v2029, 0
  %v2041 = vsel %vm672, %v2030, 0
  %2043 = vmatprep.subr.mxu0 0.0
  %2044 = vmatpush1.msra.mxu0 %v2032
  %2045 = vmatprep.subr.mxu0 0.0
  %2046 = vmatpush1.msra.mxu0 %v2034
  %2047 = vmatprep.subr.mxu0 0.0
  %2048 = vmatpush1.msra.mxu0 0.0
  %2049 = vmatprep.subr.mxu0 0.0
  %2050 = vmatpush1.msra.mxu0 0.0
  %2051 = vmatprep.subr.mxu0 0.0
  %2052 = vmatpush1.msra.mxu0 0.0
  %2053 = vmatprep.subr.mxu0 0.0
  %2054 = vmatpush1.msra.mxu0 0.0
  %2055 = vmatprep.subr.mxu0 0.0
  %2056 = vmatpush1.msra.mxu0 0.0
  %2057 = vmatprep.subr.mxu0 0.0
  %2058 = vmatpush1.msra.mxu0 0.0
  %2059 = vmatprep.subr.mxu0 0.0
  %2060 = vmatpush1.msra.mxu0 0.0
  %2061 = vmatprep.subr.mxu0 0.0
  %2062 = vmatpush1.msra.mxu0 0.0
  %2063 = vmatprep.subr.mxu0 0.0
  %2064 = vmatpush1.msra.mxu0 0.0
  %2065 = vmatprep.subr.mxu0 0.0
  %2066 = vmatpush1.msra.mxu0 0.0
  %2067 = vmatprep.subr.mxu0 0.0
  %2068 = vmatpush1.msra.mxu0 0.0
  %2069 = vmatprep.subr.mxu0 0.0
  %2070 = vmatpush1.msra.mxu0 0.0
  %2071 = vmatprep.subr.mxu0 0.0
  %2072 = vmatpush1.msra.mxu0 0.0
  %2073 = vmatprep.subr.mxu0 0.0
  %2074 = vmatpush1.msra.mxu0 0.0
  %2075 = vmatprep.subr.mxu0 0.0
  %2076 = vmatpush1.msra.mxu0 0.0
  %2077 = vmatprep.subr.mxu0 0.0
  %2078 = vmatpush1.msra.mxu0 0.0
  %2079 = vmatprep.subr.mxu0 0.0
  %2080 = vmatpush1.msra.mxu0 0.0
  %2081 = vmatprep.subr.mxu0 0.0
  %2082 = vmatpush1.msra.mxu0 0.0
  %2083 = vmatprep.subr.mxu0 0.0
  %2084 = vmatpush1.msra.mxu0 0.0
  %2085 = vmatprep.subr.mxu0 0.0
  %2086 = vmatpush1.msra.mxu0 0.0
  %2087 = vmatprep.subr.mxu0 0.0
  %2088 = vmatpush1.msra.mxu0 0.0
  %2089 = vmatprep.subr.mxu0 0.0
  %2090 = vmatpush1.msra.mxu0 0.0
  %2091 = vmatprep.subr.mxu0 0.0
  %2092 = vmatpush1.msra.mxu0 0.0
  %2093 = vmatprep.subr.mxu0 0.0
  %2094 = vmatpush1.msra.mxu0 0.0
  %2095 = vmatprep.subr.mxu0 0.0
  %2096 = vmatpush1.msra.mxu0 0.0
  %2097 = vmatprep.subr.mxu0 0.0
  %2098 = vmatpush1.msra.mxu0 0.0
  %2099 = vmatprep.subr.mxu0 0.0
  %2100 = vmatpush1.msra.mxu0 0.0
  %2101 = vmatprep.subr.mxu0 0.0
  %2102 = vmatpush1.msra.mxu0 0.0
  %2103 = vmatprep.subr.mxu0 0.0
  %2104 = vmatpush1.msra.mxu0 0.0
  %2105 = vmatprep.subr.mxu0 0.0
  %2106 = vmatpush1.msra.mxu0 0.0
  %2107 = vmatprep.mubr.f32.mxu0 0.0
  %2108 = vmatmul.mubr.f32.gmra.mrb[0].mxu0 %v2038
  %v2109 = vpop.f32.mrb[0].mxu0
  %v2110 = vadd.f32 0.0, %v2109
  %v2111 = vpop.f32.mrb[0].mxu0
  %2112 = vmatprep.mubr.f32.mxu0 0.0
  %2113 = vmatmul.mubr.f32.gmra.mrb[0].mxu0 %v2041
  %v2114 = vpop.f32.mrb[0].mxu0
  %v2115 = vadd.f32 0.0, %v2114
  %v2116 = vpop.f32.mrb[0].mxu0
  %2117 = vdwg.mxu0
  %v2119 = vsel %vm586, %v2110, 0
  %v2122 = vsel %vm586, %v2115, 0
  %2124 = vmatprep.subr.mxu0 0.0
  %2125 = vmatpush1.msra.mxu0 %v577
  %2126 = vmatprep.subr.mxu0 0.0
  %2127 = vmatpush1.msra.mxu0 0.0
  %2128 = vmatprep.subr.mxu0 0.0
  %2129 = vmatpush1.msra.mxu0 0.0
  %2130 = vmatprep.subr.mxu0 0.0
  %2131 = vmatpush1.msra.mxu0 0.0
  %2132 = vmatprep.subr.mxu0 0.0
  %2133 = vmatpush1.msra.mxu0 0.0
  %2134 = vmatprep.subr.mxu0 0.0
  %2135 = vmatpush1.msra.mxu0 0.0
  %2136 = vmatprep.subr.mxu0 0.0
  %2137 = vmatpush1.msra.mxu0 0.0
  %2138 = vmatprep.subr.mxu0 0.0
  %2139 = vmatpush1.msra.mxu0 0.0
  %2140 = vmatprep.subr.mxu0 0.0
  %2141 = vmatpush1.msra.mxu0 0.0
  %2142 = vmatprep.subr.mxu0 0.0
  %2143 = vmatpush1.msra.mxu0 0.0
  %2144 = vmatprep.subr.mxu0 0.0
  %2145 = vmatpush1.msra.mxu0 0.0
  %2146 = vmatprep.subr.mxu0 0.0
  %2147 = vmatpush1.msra.mxu0 0.0
  %2148 = vmatprep.subr.mxu0 0.0
  %2149 = vmatpush1.msra.mxu0 0.0
  %2150 = vmatprep.subr.mxu0 0.0
  %2151 = vmatpush1.msra.mxu0 0.0
  %2152 = vmatprep.subr.mxu0 0.0
  %2153 = vmatpush1.msra.mxu0 0.0
  %2154 = vmatprep.subr.mxu0 0.0
  %2155 = vmatpush1.msra.mxu0 0.0
  %2156 = vmatprep.subr.mxu0 0.0
  %2157 = vmatpush1.msra.mxu0 0.0
  %2158 = vmatprep.subr.mxu0 0.0
  %2159 = vmatpush1.msra.mxu0 0.0
  %2160 = vmatprep.subr.mxu0 0.0
  %2161 = vmatpush1.msra.mxu0 0.0
  %2162 = vmatprep.subr.mxu0 0.0
  %2163 = vmatpush1.msra.mxu0 0.0
  %2164 = vmatprep.subr.mxu0 0.0
  %2165 = vmatpush1.msra.mxu0 0.0
  %2166 = vmatprep.subr.mxu0 0.0
  %2167 = vmatpush1.msra.mxu0 0.0
  %2168 = vmatprep.subr.mxu0 0.0
  %2169 = vmatpush1.msra.mxu0 0.0
  %2170 = vmatprep.subr.mxu0 0.0
  %2171 = vmatpush1.msra.mxu0 0.0
  %2172 = vmatprep.subr.mxu0 0.0
  %2173 = vmatpush1.msra.mxu0 0.0
  %2174 = vmatprep.subr.mxu0 0.0
  %2175 = vmatpush1.msra.mxu0 0.0
  %2176 = vmatprep.subr.mxu0 0.0
  %2177 = vmatpush1.msra.mxu0 0.0
  %2178 = vmatprep.subr.mxu0 0.0
  %2179 = vmatpush1.msra.mxu0 0.0
  %2180 = vmatprep.subr.mxu0 0.0
  %2181 = vmatpush1.msra.mxu0 0.0
  %2182 = vmatprep.subr.mxu0 0.0
  %2183 = vmatpush1.msra.mxu0 0.0
  %2184 = vmatprep.subr.mxu0 0.0
  %2185 = vmatpush1.msra.mxu0 0.0
  %2186 = vmatprep.subr.mxu0 0.0
  %2187 = vmatpush1.msra.mxu0 0.0
  %2188 = vmatprep.mubr.f32.mxu0 0.0
  %2189 = vmatmul.mubr.f32.gmra.mrb[0].mxu0 %v2119
  %v2190 = vpop.f32.mrb[0].mxu0
  %v2191 = vadd.f32 0.0, %v2190
  %v2192 = vpop.f32.mrb[0].mxu0
  %2193 = vmatprep.mubr.f32.mxu0 0.0
  %2194 = vmatmul.mubr.f32.gmra.mrb[0].mxu0 %v2122
  %v2195 = vpop.f32.mrb[0].mxu0
  %v2196 = vadd.f32 0.0, %v2195
  %v2197 = vpop.f32.mrb[0].mxu0
  %2198 = vdwg.mxu0
  %v2200 = vsel %vm586, %v1908, 0
  %v2203 = vsel %vm586, %v1913, 0
  %2205 = vmatprep.subr.mxu0 0.0
  %2206 = vmatpush1.msra.mxu0 %v576
  %2207 = vmatprep.subr.mxu0 0.0
  %2208 = vmatpush1.msra.mxu0 0.0
  %2209 = vmatprep.subr.mxu0 0.0
  %2210 = vmatpush1.msra.mxu0 0.0
  %2211 = vmatprep.subr.mxu0 0.0
  %2212 = vmatpush1.msra.mxu0 0.0
  %2213 = vmatprep.subr.mxu0 0.0
  %2214 = vmatpush1.msra.mxu0 0.0
  %2215 = vmatprep.subr.mxu0 0.0
  %2216 = vmatpush1.msra.mxu0 0.0
  %2217 = vmatprep.subr.mxu0 0.0
  %2218 = vmatpush1.msra.mxu0 0.0
  %2219 = vmatprep.subr.mxu0 0.0
  %2220 = vmatpush1.msra.mxu0 0.0
  %2221 = vmatprep.subr.mxu0 0.0
  %2222 = vmatpush1.msra.mxu0 0.0
  %2223 = vmatprep.subr.mxu0 0.0
  %2224 = vmatpush1.msra.mxu0 0.0
  %2225 = vmatprep.subr.mxu0 0.0
  %2226 = vmatpush1.msra.mxu0 0.0
  %2227 = vmatprep.subr.mxu0 0.0
  %2228 = vmatpush1.msra.mxu0 0.0
  %2229 = vmatprep.subr.mxu0 0.0
  %2230 = vmatpush1.msra.mxu0 0.0
  %2231 = vmatprep.subr.mxu0 0.0
  %2232 = vmatpush1.msra.mxu0 0.0
  %2233 = vmatprep.subr.mxu0 0.0
  %2234 = vmatpush1.msra.mxu0 0.0
  %2235 = vmatprep.subr.mxu0 0.0
  %2236 = vmatpush1.msra.mxu0 0.0
  %2237 = vmatprep.subr.mxu0 0.0
  %2238 = vmatpush1.msra.mxu0 0.0
  %2239 = vmatprep.subr.mxu0 0.0
  %2240 = vmatpush1.msra.mxu0 0.0
  %2241 = vmatprep.subr.mxu0 0.0
  %2242 = vmatpush1.msra.mxu0 0.0
  %2243 = vmatprep.subr.mxu0 0.0
  %2244 = vmatpush1.msra.mxu0 0.0
  %2245 = vmatprep.subr.mxu0 0.0
  %2246 = vmatpush1.msra.mxu0 0.0
  %2247 = vmatprep.subr.mxu0 0.0
  %2248 = vmatpush1.msra.mxu0 0.0
  %2249 = vmatprep.subr.mxu0 0.0
  %2250 = vmatpush1.msra.mxu0 0.0
  %2251 = vmatprep.subr.mxu0 0.0
  %2252 = vmatpush1.msra.mxu0 0.0
  %2253 = vmatprep.subr.mxu0 0.0
  %2254 = vmatpush1.msra.mxu0 0.0
  %2255 = vmatprep.subr.mxu0 0.0
  %2256 = vmatpush1.msra.mxu0 0.0
  %2257 = vmatprep.subr.mxu0 0.0
  %2258 = vmatpush1.msra.mxu0 0.0
  %2259 = vmatprep.subr.mxu0 0.0
  %2260 = vmatpush1.msra.mxu0 0.0
  %2261 = vmatprep.subr.mxu0 0.0
  %2262 = vmatpush1.msra.mxu0 0.0
  %2263 = vmatprep.subr.mxu0 0.0
  %2264 = vmatpush1.msra.mxu0 0.0
  %2265 = vmatprep.subr.mxu0 0.0
  %2266 = vmatpush1.msra.mxu0 0.0
  %2267 = vmatprep.subr.mxu0 0.0
  %2268 = vmatpush1.msra.mxu0 0.0
  %2269 = vmatprep.mubr.f32.mxu0 0.0
  %2270 = vmatmul.mubr.f32.gmra.mrb[0].mxu0 %v2200
  %v2271 = vpop.f32.mrb[0].mxu0
  %v2272 = vadd.f32 %v2191, %v2271
  %v2273 = vpop.f32.mrb[0].mxu0
  %2274 = vmatprep.mubr.f32.mxu0 0.0
  %2275 = vmatmul.mubr.f32.gmra.mrb[0].mxu0 %v2203
  %v2276 = vpop.f32.mrb[0].mxu0
  %v2277 = vadd.f32 %v2196, %v2276
  %v2278 = vpop.f32.mrb[0].mxu0
  %2279 = vdwg.mxu0
  %2280 = vrot.lane.b32.xlu0 %v568, 112
  %v2281 = vpop.permute.xlu0 %2280
  %2282 = vrot.lane.b32.xlu0 %v573, 112
  %v2283 = vpop.permute.xlu0 %2282
  %2284 = vrot.lane.b32.xlu0 %v568, 80
  %v2285 = vpop.permute.xlu0 %2284
  %2286 = vrot.lane.b32.xlu0 %v573, 80
  %v2287 = vpop.permute.xlu0 %2286
  %v2288 = vsel %vm586, %v2281, 0
  %v2290 = vsel %vm586, %v2283, 0
  %v2292 = vsel %vm586, %v2285, 0
  %v2294 = vsel %vm586, %v2287, 0
  %2296 = vmatprep.subr.mxu0 0.0
  %2297 = vmatpush1.xpose.msra.mxu0 %v2292
  %2298 = vmatprep.subr.mxu0 0.0
  %2299 = vmatpush1.xpose.msra.mxu0 %v2294
  %2300 = vmatprep.subr.mxu0 0.0
  %2301 = vmatpush1.xpose.msra.mxu0 0.0
  %2302 = vmatprep.subr.mxu0 0.0
  %2303 = vmatpush1.xpose.msra.mxu0 0.0
  %2304 = vmatprep.subr.mxu0 0.0
  %2305 = vmatpush1.xpose.msra.mxu0 0.0
  %2306 = vmatprep.subr.mxu0 0.0
  %2307 = vmatpush1.xpose.msra.mxu0 0.0
  %2308 = vmatprep.subr.mxu0 0.0
  %2309 = vmatpush1.xpose.msra.mxu0 0.0
  %2310 = vmatprep.subr.mxu0 0.0
  %2311 = vmatpush1.xpose.msra.mxu0 0.0
  %2312 = vmatprep.subr.mxu0 0.0
  %2313 = vmatpush1.xpose.msra.mxu0 0.0
  %2314 = vmatprep.subr.mxu0 0.0
  %2315 = vmatpush1.xpose.msra.mxu0 0.0
  %2316 = vmatprep.subr.mxu0 0.0
  %2317 = vmatpush1.xpose.msra.mxu0 0.0
  %2318 = vmatprep.subr.mxu0 0.0
  %2319 = vmatpush1.xpose.msra.mxu0 0.0
  %2320 = vmatprep.subr.mxu0 0.0
  %2321 = vmatpush1.xpose.msra.mxu0 0.0
  %2322 = vmatprep.subr.mxu0 0.0
  %2323 = vmatpush1.xpose.msra.mxu0 0.0
  %2324 = vmatprep.subr.mxu0 0.0
  %2325 = vmatpush1.xpose.msra.mxu0 0.0
  %2326 = vmatprep.subr.mxu0 0.0
  %2327 = vmatpush1.xpose.msra.mxu0 0.0
  %2328 = vmatprep.subr.mxu0 0.0
  %2329 = vmatpush1.xpose.msra.mxu0 0.0
  %2330 = vmatprep.subr.mxu0 0.0
  %2331 = vmatpush1.xpose.msra.mxu0 0.0
  %2332 = vmatprep.subr.mxu0 0.0
  %2333 = vmatpush1.xpose.msra.mxu0 0.0
  %2334 = vmatprep.subr.mxu0 0.0
  %2335 = vmatpush1.xpose.msra.mxu0 0.0
  %2336 = vmatprep.subr.mxu0 0.0
  %2337 = vmatpush1.xpose.msra.mxu0 0.0
  %2338 = vmatprep.subr.mxu0 0.0
  %2339 = vmatpush1.xpose.msra.mxu0 0.0
  %2340 = vmatprep.subr.mxu0 0.0
  %2341 = vmatpush1.xpose.msra.mxu0 0.0
  %2342 = vmatprep.subr.mxu0 0.0
  %2343 = vmatpush1.xpose.msra.mxu0 0.0
  %2344 = vmatprep.subr.mxu0 0.0
  %2345 = vmatpush1.xpose.msra.mxu0 0.0
  %2346 = vmatprep.subr.mxu0 0.0
  %2347 = vmatpush1.xpose.msra.mxu0 0.0
  %2348 = vmatprep.subr.mxu0 0.0
  %2349 = vmatpush1.xpose.msra.mxu0 0.0
  %2350 = vmatprep.subr.mxu0 0.0
  %2351 = vmatpush1.xpose.msra.mxu0 0.0
  %2352 = vmatprep.subr.mxu0 0.0
  %2353 = vmatpush1.xpose.msra.mxu0 0.0
  %2354 = vmatprep.subr.mxu0 0.0
  %2355 = vmatpush1.xpose.msra.mxu0 0.0
  %2356 = vmatprep.subr.mxu0 0.0
  %2357 = vmatpush1.xpose.msra.mxu0 0.0
  %2358 = vmatprep.subr.mxu0 0.0
  %2359 = vmatpush1.xpose.msra.mxu0 0.0
  %2360 = vmatprep.mubr.f32.mxu0 0.0
  %2361 = vmatmul.mubr.f32.gmra.mrb[0].mxu0 %v2288
  %v2362 = vpop.f32.mrb[0].mxu0
  %v2363 = vadd.f32 0.0, %v2362
  %v2364 = vpop.f32.mrb[0].mxu0
  %2365 = vmatprep.mubr.f32.mxu0 0.0
  %2366 = vmatmul.mubr.f32.gmra.mrb[0].mxu0 %v2290
  %v2367 = vpop.f32.mrb[0].mxu0
  %v2368 = vadd.f32 0.0, %v2367
  %v2369 = vpop.f32.mrb[0].mxu0
  %2370 = vdwg.mxu0
  %v2371 = vmul.f32 %v2363, 0.35355338
  %v2372 = vmul.f32 %v2368, 0.35355338
  %v2373 = vsel %vm672, %v2371, -inf
  %2374 = vmax.xlane.f32.xlu0 %v2373
  %v2375 = vpop.xlane.xlu0 %2374
  %v2376 = vsel %vm672, %v2372, -inf
  %2377 = vmax.xlane.f32.xlu0 %v2376
  %v2378 = vpop.xlane.xlu0 %2377
  %v2379 = vsub.f32 %v2371, %v2375
  %v2380 = vsub.f32 %v2372, %v2378
  %v2381 = vmul.f32 %v2379, 1.442695
  %v2382 = vpow.pop %v2381
  %v2383 = vmul.f32 %v2380, 1.442695
  %v2384 = vpow.pop %v2383
  %v2385 = vsel %vm672, %v2382, 0.0
  %2386 = vadd.xlane.f32.xlu0 %v2385
  %v2387 = vpop.xlane.xlu0 %2386
  %v2388 = vsel %vm672, %v2384, 0.0
  %2389 = vadd.xlane.f32.xlu0 %v2388
  %v2390 = vpop.xlane.xlu0 %2389
  %v2391 = vrcp.pop %v2387
  %v2392 = vrcp.pop %v2390
  %v2393 = vmul.f32 %v2382, %v2391
  %v2394 = vmul.f32 %v2384, %v2392
  %2395 = vrot.lane.b32.xlu0 %v568, 48
  %v2396 = vpop.permute.xlu0 %2395
  %2397 = vrot.lane.b32.xlu0 %v573, 48
  %v2398 = vpop.permute.xlu0 %2397
  %v2402 = vsel %vm672, %v2393, 0
  %v2405 = vsel %vm672, %v2394, 0
  %2407 = vmatprep.subr.mxu0 0.0
  %2408 = vmatpush1.msra.mxu0 %v2396
  %2409 = vmatprep.subr.mxu0 0.0
  %2410 = vmatpush1.msra.mxu0 %v2398
  %2411 = vmatprep.subr.mxu0 0.0
  %2412 = vmatpush1.msra.mxu0 0.0
  %2413 = vmatprep.subr.mxu0 0.0
  %2414 = vmatpush1.msra.mxu0 0.0
  %2415 = vmatprep.subr.mxu0 0.0
  %2416 = vmatpush1.msra.mxu0 0.0
  %2417 = vmatprep.subr.mxu0 0.0
  %2418 = vmatpush1.msra.mxu0 0.0
  %2419 = vmatprep.subr.mxu0 0.0
  %2420 = vmatpush1.msra.mxu0 0.0
  %2421 = vmatprep.subr.mxu0 0.0
  %2422 = vmatpush1.msra.mxu0 0.0
  %2423 = vmatprep.subr.mxu0 0.0
  %2424 = vmatpush1.msra.mxu0 0.0
  %2425 = vmatprep.subr.mxu0 0.0
  %2426 = vmatpush1.msra.mxu0 0.0
  %2427 = vmatprep.subr.mxu0 0.0
  %2428 = vmatpush1.msra.mxu0 0.0
  %2429 = vmatprep.subr.mxu0 0.0
  %2430 = vmatpush1.msra.mxu0 0.0
  %2431 = vmatprep.subr.mxu0 0.0
  %2432 = vmatpush1.msra.mxu0 0.0
  %2433 = vmatprep.subr.mxu0 0.0
  %2434 = vmatpush1.msra.mxu0 0.0
  %2435 = vmatprep.subr.mxu0 0.0
  %2436 = vmatpush1.msra.mxu0 0.0
  %2437 = vmatprep.subr.mxu0 0.0
  %2438 = vmatpush1.msra.mxu0 0.0
  %2439 = vmatprep.subr.mxu0 0.0
  %2440 = vmatpush1.msra.mxu0 0.0
  %2441 = vmatprep.subr.mxu0 0.0
  %2442 = vmatpush1.msra.mxu0 0.0
  %2443 = vmatprep.subr.mxu0 0.0
  %2444 = vmatpush1.msra.mxu0 0.0
  %2445 = vmatprep.subr.mxu0 0.0
  %2446 = vmatpush1.msra.mxu0 0.0
  %2447 = vmatprep.subr.mxu0 0.0
  %2448 = vmatpush1.msra.mxu0 0.0
  %2449 = vmatprep.subr.mxu0 0.0
  %2450 = vmatpush1.msra.mxu0 0.0
  %2451 = vmatprep.subr.mxu0 0.0
  %2452 = vmatpush1.msra.mxu0 0.0
  %2453 = vmatprep.subr.mxu0 0.0
  %2454 = vmatpush1.msra.mxu0 0.0
  %2455 = vmatprep.subr.mxu0 0.0
  %2456 = vmatpush1.msra.mxu0 0.0
  %2457 = vmatprep.subr.mxu0 0.0
  %2458 = vmatpush1.msra.mxu0 0.0
  %2459 = vmatprep.subr.mxu0 0.0
  %2460 = vmatpush1.msra.mxu0 0.0
  %2461 = vmatprep.subr.mxu0 0.0
  %2462 = vmatpush1.msra.mxu0 0.0
  %2463 = vmatprep.subr.mxu0 0.0
  %2464 = vmatpush1.msra.mxu0 0.0
  %2465 = vmatprep.subr.mxu0 0.0
  %2466 = vmatpush1.msra.mxu0 0.0
  %2467 = vmatprep.subr.mxu0 0.0
  %2468 = vmatpush1.msra.mxu0 0.0
  %2469 = vmatprep.subr.mxu0 0.0
  %2470 = vmatpush1.msra.mxu0 0.0
  %2471 = vmatprep.mubr.f32.mxu0 0.0
  %2472 = vmatmul.mubr.f32.gmra.mrb[0].mxu0 %v2402
  %v2473 = vpop.f32.mrb[0].mxu0
  %v2474 = vadd.f32 0.0, %v2473
  %v2475 = vpop.f32.mrb[0].mxu0
  %2476 = vmatprep.mubr.f32.mxu0 0.0
  %2477 = vmatmul.mubr.f32.gmra.mrb[0].mxu0 %v2405
  %v2478 = vpop.f32.mrb[0].mxu0
  %v2479 = vadd.f32 0.0, %v2478
  %v2480 = vpop.f32.mrb[0].mxu0
  %2481 = vdwg.mxu0
  %v2483 = vsel %vm586, %v2474, 0
  %v2486 = vsel %vm586, %v2479, 0
  %2488 = vmatprep.subr.mxu0 0.0
  %2489 = vmatpush1.msra.mxu0 %v578
  %2490 = vmatprep.subr.mxu0 0.0
  %2491 = vmatpush1.msra.mxu0 0.0
  %2492 = vmatprep.subr.mxu0 0.0
  %2493 = vmatpush1.msra.mxu0 0.0
  %2494 = vmatprep.subr.mxu0 0.0
  %2495 = vmatpush1.msra.mxu0 0.0
  %2496 = vmatprep.subr.mxu0 0.0
  %2497 = vmatpush1.msra.mxu0 0.0
  %2498 = vmatprep.subr.mxu0 0.0
  %2499 = vmatpush1.msra.mxu0 0.0
  %2500 = vmatprep.subr.mxu0 0.0
  %2501 = vmatpush1.msra.mxu0 0.0
  %2502 = vmatprep.subr.mxu0 0.0
  %2503 = vmatpush1.msra.mxu0 0.0
  %2504 = vmatprep.subr.mxu0 0.0
  %2505 = vmatpush1.msra.mxu0 0.0
  %2506 = vmatprep.subr.mxu0 0.0
  %2507 = vmatpush1.msra.mxu0 0.0
  %2508 = vmatprep.subr.mxu0 0.0
  %2509 = vmatpush1.msra.mxu0 0.0
  %2510 = vmatprep.subr.mxu0 0.0
  %2511 = vmatpush1.msra.mxu0 0.0
  %2512 = vmatprep.subr.mxu0 0.0
  %2513 = vmatpush1.msra.mxu0 0.0
  %2514 = vmatprep.subr.mxu0 0.0
  %2515 = vmatpush1.msra.mxu0 0.0
  %2516 = vmatprep.subr.mxu0 0.0
  %2517 = vmatpush1.msra.mxu0 0.0
  %2518 = vmatprep.subr.mxu0 0.0
  %2519 = vmatpush1.msra.mxu0 0.0
  %2520 = vmatprep.subr.mxu0 0.0
  %2521 = vmatpush1.msra.mxu0 0.0
  %2522 = vmatprep.subr.mxu0 0.0
  %2523 = vmatpush1.msra.mxu0 0.0
  %2524 = vmatprep.subr.mxu0 0.0
  %2525 = vmatpush1.msra.mxu0 0.0
  %2526 = vmatprep.subr.mxu0 0.0
  %2527 = vmatpush1.msra.mxu0 0.0
  %2528 = vmatprep.subr.mxu0 0.0
  %2529 = vmatpush1.msra.mxu0 0.0
  %2530 = vmatprep.subr.mxu0 0.0
  %2531 = vmatpush1.msra.mxu0 0.0
  %2532 = vmatprep.subr.mxu0 0.0
  %2533 = vmatpush1.msra.mxu0 0.0
  %2534 = vmatprep.subr.mxu0 0.0
  %2535 = vmatpush1.msra.mxu0 0.0
  %2536 = vmatprep.subr.mxu0 0.0
  %2537 = vmatpush1.msra.mxu0 0.0
  %2538 = vmatprep.subr.mxu0 0.0
  %2539 = vmatpush1.msra.mxu0 0.0
  %2540 = vmatprep.subr.mxu0 0.0
  %2541 = vmatpush1.msra.mxu0 0.0
  %2542 = vmatprep.subr.mxu0 0.0
  %2543 = vmatpush1.msra.mxu0 0.0
  %2544 = vmatprep.subr.mxu0 0.0
  %2545 = vmatpush1.msra.mxu0 0.0
  %2546 = vmatprep.subr.mxu0 0.0
  %2547 = vmatpush1.msra.mxu0 0.0
  %2548 = vmatprep.subr.mxu0 0.0
  %2549 = vmatpush1.msra.mxu0 0.0
  %2550 = vmatprep.subr.mxu0 0.0
  %2551 = vmatpush1.msra.mxu0 0.0
  %2552 = vmatprep.mubr.f32.mxu0 0.0
  %2553 = vmatmul.mubr.f32.gmra.mrb[0].mxu0 %v2483
  %v2554 = vpop.f32.mrb[0].mxu0
  %v2555 = vadd.f32 0.0, %v2554
  %v2556 = vpop.f32.mrb[0].mxu0
  %2557 = vmatprep.mubr.f32.mxu0 0.0
  %2558 = vmatmul.mubr.f32.gmra.mrb[0].mxu0 %v2486
  %v2559 = vpop.f32.mrb[0].mxu0
  %v2560 = vadd.f32 0.0, %v2559
  %v2561 = vpop.f32.mrb[0].mxu0
  %2562 = vdwg.mxu0
  %v2563 = vadd.f32 %v2272, %v2555
  %v2564 = vadd.f32 %v2277, %v2560
  %2565 = vrot.lane.b32.xlu0 %v568, 104
  %v2566 = vpop.permute.xlu0 %2565
  %2567 = vrot.lane.b32.xlu0 %v573, 104
  %v2568 = vpop.permute.xlu0 %2567
  %2569 = vrot.lane.b32.xlu0 %v568, 72
  %v2570 = vpop.permute.xlu0 %2569
  %2571 = vrot.lane.b32.xlu0 %v573, 72
  %v2572 = vpop.permute.xlu0 %2571
  %v2573 = vsel %vm586, %v2566, 0
  %v2575 = vsel %vm586, %v2568, 0
  %v2577 = vsel %vm586, %v2570, 0
  %v2579 = vsel %vm586, %v2572, 0
  %2581 = vmatprep.subr.mxu0 0.0
  %2582 = vmatpush1.xpose.msra.mxu0 %v2577
  %2583 = vmatprep.subr.mxu0 0.0
  %2584 = vmatpush1.xpose.msra.mxu0 %v2579
  %2585 = vmatprep.subr.mxu0 0.0
  %2586 = vmatpush1.xpose.msra.mxu0 0.0
  %2587 = vmatprep.subr.mxu0 0.0
  %2588 = vmatpush1.xpose.msra.mxu0 0.0
  %2589 = vmatprep.subr.mxu0 0.0
  %2590 = vmatpush1.xpose.msra.mxu0 0.0
  %2591 = vmatprep.subr.mxu0 0.0
  %2592 = vmatpush1.xpose.msra.mxu0 0.0
  %2593 = vmatprep.subr.mxu0 0.0
  %2594 = vmatpush1.xpose.msra.mxu0 0.0
  %2595 = vmatprep.subr.mxu0 0.0
  %2596 = vmatpush1.xpose.msra.mxu0 0.0
  %2597 = vmatprep.subr.mxu0 0.0
  %2598 = vmatpush1.xpose.msra.mxu0 0.0
  %2599 = vmatprep.subr.mxu0 0.0
  %2600 = vmatpush1.xpose.msra.mxu0 0.0
  %2601 = vmatprep.subr.mxu0 0.0
  %2602 = vmatpush1.xpose.msra.mxu0 0.0
  %2603 = vmatprep.subr.mxu0 0.0
  %2604 = vmatpush1.xpose.msra.mxu0 0.0
  %2605 = vmatprep.subr.mxu0 0.0
  %2606 = vmatpush1.xpose.msra.mxu0 0.0
  %2607 = vmatprep.subr.mxu0 0.0
  %2608 = vmatpush1.xpose.msra.mxu0 0.0
  %2609 = vmatprep.subr.mxu0 0.0
  %2610 = vmatpush1.xpose.msra.mxu0 0.0
  %2611 = vmatprep.subr.mxu0 0.0
  %2612 = vmatpush1.xpose.msra.mxu0 0.0
  %2613 = vmatprep.subr.mxu0 0.0
  %2614 = vmatpush1.xpose.msra.mxu0 0.0
  %2615 = vmatprep.subr.mxu0 0.0
  %2616 = vmatpush1.xpose.msra.mxu0 0.0
  %2617 = vmatprep.subr.mxu0 0.0
  %2618 = vmatpush1.xpose.msra.mxu0 0.0
  %2619 = vmatprep.subr.mxu0 0.0
  %2620 = vmatpush1.xpose.msra.mxu0 0.0
  %2621 = vmatprep.subr.mxu0 0.0
  %2622 = vmatpush1.xpose.msra.mxu0 0.0
  %2623 = vmatprep.subr.mxu0 0.0
  %2624 = vmatpush1.xpose.msra.mxu0 0.0
  %2625 = vmatprep.subr.mxu0 0.0
  %2626 = vmatpush1.xpose.msra.mxu0 0.0
  %2627 = vmatprep.subr.mxu0 0.0
  %2628 = vmatpush1.xpose.msra.mxu0 0.0
  %2629 = vmatprep.subr.mxu0 0.0
  %2630 = vmatpush1.xpose.msra.mxu0 0.0
  %2631 = vmatprep.subr.mxu0 0.0
  %2632 = vmatpush1.xpose.msra.mxu0 0.0
  %2633 = vmatprep.subr.mxu0 0.0
  %2634 = vmatpush1.xpose.msra.mxu0 0.0
  %2635 = vmatprep.subr.mxu0 0.0
  %2636 = vmatpush1.xpose.msra.mxu0 0.0
  %2637 = vmatprep.subr.mxu0 0.0
  %2638 = vmatpush1.xpose.msra.mxu0 0.0
  %2639 = vmatprep.subr.mxu0 0.0
  %2640 = vmatpush1.xpose.msra.mxu0 0.0
  %2641 = vmatprep.subr.mxu0 0.0
  %2642 = vmatpush1.xpose.msra.mxu0 0.0
  %2643 = vmatprep.subr.mxu0 0.0
  %2644 = vmatpush1.xpose.msra.mxu0 0.0
  %2645 = vmatprep.mubr.f32.mxu0 0.0
  %2646 = vmatmul.mubr.f32.gmra.mrb[0].mxu0 %v2573
  %v2647 = vpop.f32.mrb[0].mxu0
  %v2648 = vadd.f32 0.0, %v2647
  %v2649 = vpop.f32.mrb[0].mxu0
  %2650 = vmatprep.mubr.f32.mxu0 0.0
  %2651 = vmatmul.mubr.f32.gmra.mrb[0].mxu0 %v2575
  %v2652 = vpop.f32.mrb[0].mxu0
  %v2653 = vadd.f32 0.0, %v2652
  %v2654 = vpop.f32.mrb[0].mxu0
  %2655 = vdwg.mxu0
  %v2656 = vmul.f32 %v2648, 0.35355338
  %v2657 = vmul.f32 %v2653, 0.35355338
  %v2658 = vsel %vm672, %v2656, -inf
  %2659 = vmax.xlane.f32.xlu0 %v2658
  %v2660 = vpop.xlane.xlu0 %2659
  %v2661 = vsel %vm672, %v2657, -inf
  %2662 = vmax.xlane.f32.xlu0 %v2661
  %v2663 = vpop.xlane.xlu0 %2662
  %v2664 = vsub.f32 %v2656, %v2660
  %v2665 = vsub.f32 %v2657, %v2663
  %v2666 = vmul.f32 %v2664, 1.442695
  %v2667 = vpow.pop %v2666
  %v2668 = vmul.f32 %v2665, 1.442695
  %v2669 = vpow.pop %v2668
  %v2670 = vsel %vm672, %v2667, 0.0
  %2671 = vadd.xlane.f32.xlu0 %v2670
  %v2672 = vpop.xlane.xlu0 %2671
  %v2673 = vsel %vm672, %v2669, 0.0
  %2674 = vadd.xlane.f32.xlu0 %v2673
  %v2675 = vpop.xlane.xlu0 %2674
  %v2676 = vrcp.pop %v2672
  %v2677 = vrcp.pop %v2675
  %v2678 = vmul.f32 %v2667, %v2676
  %v2679 = vmul.f32 %v2669, %v2677
  %2680 = vrot.lane.b32.xlu0 %v568, 40
  %v2681 = vpop.permute.xlu0 %2680
  %2682 = vrot.lane.b32.xlu0 %v573, 40
  %v2683 = vpop.permute.xlu0 %2682
  %v2687 = vsel %vm672, %v2678, 0
  %v2690 = vsel %vm672, %v2679, 0
  %2692 = vmatprep.subr.mxu0 0.0
  %2693 = vmatpush1.msra.mxu0 %v2681
  %2694 = vmatprep.subr.mxu0 0.0
  %2695 = vmatpush1.msra.mxu0 %v2683
  %2696 = vmatprep.subr.mxu0 0.0
  %2697 = vmatpush1.msra.mxu0 0.0
  %2698 = vmatprep.subr.mxu0 0.0
  %2699 = vmatpush1.msra.mxu0 0.0
  %2700 = vmatprep.subr.mxu0 0.0
  %2701 = vmatpush1.msra.mxu0 0.0
  %2702 = vmatprep.subr.mxu0 0.0
  %2703 = vmatpush1.msra.mxu0 0.0
  %2704 = vmatprep.subr.mxu0 0.0
  %2705 = vmatpush1.msra.mxu0 0.0
  %2706 = vmatprep.subr.mxu0 0.0
  %2707 = vmatpush1.msra.mxu0 0.0
  %2708 = vmatprep.subr.mxu0 0.0
  %2709 = vmatpush1.msra.mxu0 0.0
  %2710 = vmatprep.subr.mxu0 0.0
  %2711 = vmatpush1.msra.mxu0 0.0
  %2712 = vmatprep.subr.mxu0 0.0
  %2713 = vmatpush1.msra.mxu0 0.0
  %2714 = vmatprep.subr.mxu0 0.0
  %2715 = vmatpush1.msra.mxu0 0.0
  %2716 = vmatprep.subr.mxu0 0.0
  %2717 = vmatpush1.msra.mxu0 0.0
  %2718 = vmatprep.subr.mxu0 0.0
  %2719 = vmatpush1.msra.mxu0 0.0
  %2720 = vmatprep.subr.mxu0 0.0
  %2721 = vmatpush1.msra.mxu0 0.0
  %2722 = vmatprep.subr.mxu0 0.0
  %2723 = vmatpush1.msra.mxu0 0.0
  %2724 = vmatprep.subr.mxu0 0.0
  %2725 = vmatpush1.msra.mxu0 0.0
  %2726 = vmatprep.subr.mxu0 0.0
  %2727 = vmatpush1.msra.mxu0 0.0
  %2728 = vmatprep.subr.mxu0 0.0
  %2729 = vmatpush1.msra.mxu0 0.0
  %2730 = vmatprep.subr.mxu0 0.0
  %2731 = vmatpush1.msra.mxu0 0.0
  %2732 = vmatprep.subr.mxu0 0.0
  %2733 = vmatpush1.msra.mxu0 0.0
  %2734 = vmatprep.subr.mxu0 0.0
  %2735 = vmatpush1.msra.mxu0 0.0
  %2736 = vmatprep.subr.mxu0 0.0
  %2737 = vmatpush1.msra.mxu0 0.0
  %2738 = vmatprep.subr.mxu0 0.0
  %2739 = vmatpush1.msra.mxu0 0.0
  %2740 = vmatprep.subr.mxu0 0.0
  %2741 = vmatpush1.msra.mxu0 0.0
  %2742 = vmatprep.subr.mxu0 0.0
  %2743 = vmatpush1.msra.mxu0 0.0
  %2744 = vmatprep.subr.mxu0 0.0
  %2745 = vmatpush1.msra.mxu0 0.0
  %2746 = vmatprep.subr.mxu0 0.0
  %2747 = vmatpush1.msra.mxu0 0.0
  %2748 = vmatprep.subr.mxu0 0.0
  %2749 = vmatpush1.msra.mxu0 0.0
  %2750 = vmatprep.subr.mxu0 0.0
  %2751 = vmatpush1.msra.mxu0 0.0
  %2752 = vmatprep.subr.mxu0 0.0
  %2753 = vmatpush1.msra.mxu0 0.0
  %2754 = vmatprep.subr.mxu0 0.0
  %2755 = vmatpush1.msra.mxu0 0.0
  %2756 = vmatprep.mubr.f32.mxu0 0.0
  %2757 = vmatmul.mubr.f32.gmra.mrb[0].mxu0 %v2687
  %v2758 = vpop.f32.mrb[0].mxu0
  %v2759 = vadd.f32 0.0, %v2758
  %v2760 = vpop.f32.mrb[0].mxu0
  %2761 = vmatprep.mubr.f32.mxu0 0.0
  %2762 = vmatmul.mubr.f32.gmra.mrb[0].mxu0 %v2690
  %v2763 = vpop.f32.mrb[0].mxu0
  %v2764 = vadd.f32 0.0, %v2763
  %v2765 = vpop.f32.mrb[0].mxu0
  %2766 = vdwg.mxu0
  %v2768 = vsel %vm586, %v2759, 0
  %v2771 = vsel %vm586, %v2764, 0
  %2773 = vmatprep.subr.mxu0 0.0
  %2774 = vmatpush1.msra.mxu0 %v579
  %2775 = vmatprep.subr.mxu0 0.0
  %2776 = vmatpush1.msra.mxu0 0.0
  %2777 = vmatprep.subr.mxu0 0.0
  %2778 = vmatpush1.msra.mxu0 0.0
  %2779 = vmatprep.subr.mxu0 0.0
  %2780 = vmatpush1.msra.mxu0 0.0
  %2781 = vmatprep.subr.mxu0 0.0
  %2782 = vmatpush1.msra.mxu0 0.0
  %2783 = vmatprep.subr.mxu0 0.0
  %2784 = vmatpush1.msra.mxu0 0.0
  %2785 = vmatprep.subr.mxu0 0.0
  %2786 = vmatpush1.msra.mxu0 0.0
  %2787 = vmatprep.subr.mxu0 0.0
  %2788 = vmatpush1.msra.mxu0 0.0
  %2789 = vmatprep.subr.mxu0 0.0
  %2790 = vmatpush1.msra.mxu0 0.0
  %2791 = vmatprep.subr.mxu0 0.0
  %2792 = vmatpush1.msra.mxu0 0.0
  %2793 = vmatprep.subr.mxu0 0.0
  %2794 = vmatpush1.msra.mxu0 0.0
  %2795 = vmatprep.subr.mxu0 0.0
  %2796 = vmatpush1.msra.mxu0 0.0
  %2797 = vmatprep.subr.mxu0 0.0
  %2798 = vmatpush1.msra.mxu0 0.0
  %2799 = vmatprep.subr.mxu0 0.0
  %2800 = vmatpush1.msra.mxu0 0.0
  %2801 = vmatprep.subr.mxu0 0.0
  %2802 = vmatpush1.msra.mxu0 0.0
  %2803 = vmatprep.subr.mxu0 0.0
  %2804 = vmatpush1.msra.mxu0 0.0
  %2805 = vmatprep.subr.mxu0 0.0
  %2806 = vmatpush1.msra.mxu0 0.0
  %2807 = vmatprep.subr.mxu0 0.0
  %2808 = vmatpush1.msra.mxu0 0.0
  %2809 = vmatprep.subr.mxu0 0.0
  %2810 = vmatpush1.msra.mxu0 0.0
  %2811 = vmatprep.subr.mxu0 0.0
  %2812 = vmatpush1.msra.mxu0 0.0
  %2813 = vmatprep.subr.mxu0 0.0
  %2814 = vmatpush1.msra.mxu0 0.0
  %2815 = vmatprep.subr.mxu0 0.0
  %2816 = vmatpush1.msra.mxu0 0.0
  %2817 = vmatprep.subr.mxu0 0.0
  %2818 = vmatpush1.msra.mxu0 0.0
  %2819 = vmatprep.subr.mxu0 0.0
  %2820 = vmatpush1.msra.mxu0 0.0
  %2821 = vmatprep.subr.mxu0 0.0
  %2822 = vmatpush1.msra.mxu0 0.0
  %2823 = vmatprep.subr.mxu0 0.0
  %2824 = vmatpush1.msra.mxu0 0.0
  %2825 = vmatprep.subr.mxu0 0.0
  %2826 = vmatpush1.msra.mxu0 0.0
  %2827 = vmatprep.subr.mxu0 0.0
  %2828 = vmatpush1.msra.mxu0 0.0
  %2829 = vmatprep.subr.mxu0 0.0
  %2830 = vmatpush1.msra.mxu0 0.0
  %2831 = vmatprep.subr.mxu0 0.0
  %2832 = vmatpush1.msra.mxu0 0.0
  %2833 = vmatprep.subr.mxu0 0.0
  %2834 = vmatpush1.msra.mxu0 0.0
  %2835 = vmatprep.subr.mxu0 0.0
  %2836 = vmatpush1.msra.mxu0 0.0
  %2837 = vmatprep.mubr.f32.mxu0 0.0
  %2838 = vmatmul.mubr.f32.gmra.mrb[0].mxu0 %v2768
  %v2839 = vpop.f32.mrb[0].mxu0
  %v2840 = vadd.f32 0.0, %v2839
  %v2841 = vpop.f32.mrb[0].mxu0
  %2842 = vmatprep.mubr.f32.mxu0 0.0
  %2843 = vmatmul.mubr.f32.gmra.mrb[0].mxu0 %v2771
  %v2844 = vpop.f32.mrb[0].mxu0
  %v2845 = vadd.f32 0.0, %v2844
  %v2846 = vpop.f32.mrb[0].mxu0
  %2847 = vdwg.mxu0
  %v2848 = vadd.f32 %v2563, %v2840
  %v2849 = vadd.f32 %v2564, %v2845
  %v2850 = vadd.f32 %v388, %v1714
  %v2851 = vadd.f32 %v389, %v1715
  %v2852 = vadd.f32 %v390, %v2848
  %v2853 = vadd.f32 %v391, %v2849
  %v2854 = vld [vmem:[%s25] sm:$0x1]
  %v2856 = vlaneseq
  %v2857 = vshrl.u32 %v2856, 7
  %v2858 = vsub.s32 0, %v2857
  %v2859 = vrot.slane %v2854, %v2858
  %v2861 = vadd.f32 %v2850, %v2859
  %v2862 = vadd.f32 %v2851, %v2859
  %v2863 = vadd.f32 %v2852, %v2859
  %v2864 = vadd.f32 %v2853, %v2859
  %v2865 = vsel %vm392, %v2861, 0.0
  %2866 = vadd.xlane.f32.xlu0 %v2865
  %v2867 = vpop.xlane.xlu0 %2866
  %v2868 = vsel %vm392, %v2862, 0.0
  %2869 = vadd.xlane.f32.xlu0 %v2868
  %v2870 = vpop.xlane.xlu0 %2869
  %v2871 = vsel %vm392, %v2863, 0.0
  %2872 = vadd.xlane.f32.xlu0 %v2871
  %v2873 = vpop.xlane.xlu0 %2872
  %v2874 = vsel %vm392, %v2864, 0.0
  %2875 = vadd.xlane.f32.xlu0 %v2874
  %v2876 = vpop.xlane.xlu0 %2875
  %v2877 = vmul.f32 %v2867, %v405
  %v2878 = vmul.f32 %v2870, %v405
  %v2879 = vmul.f32 %v2873, %v405
  %v2880 = vmul.f32 %v2876, %v405
  %v2881 = vsub.f32 %v2861, %v2877
  %v2882 = vsub.f32 %v2862, %v2878
  %v2883 = vsub.f32 %v2863, %v2879
  %v2884 = vsub.f32 %v2864, %v2880
  %v2885 = vmul.f32 %v2881, %v2881
  %v2886 = vmul.f32 %v2882, %v2882
  %v2887 = vmul.f32 %v2883, %v2883
  %v2888 = vmul.f32 %v2884, %v2884
  %v2889 = vsel %vm392, %v2885, 0.0
  %2890 = vadd.xlane.f32.xlu0 %v2889
  %v2891 = vpop.xlane.xlu0 %2890
  %v2892 = vsel %vm392, %v2886, 0.0
  %2893 = vadd.xlane.f32.xlu0 %v2892
  %v2894 = vpop.xlane.xlu0 %2893
  %v2895 = vsel %vm392, %v2887, 0.0
  %2896 = vadd.xlane.f32.xlu0 %v2895
  %v2897 = vpop.xlane.xlu0 %2896
  %v2898 = vsel %vm392, %v2888, 0.0
  %2899 = vadd.xlane.f32.xlu0 %v2898
  %v2900 = vpop.xlane.xlu0 %2899
  %v2901 = vmul.f32 %v2891, %v405
  %v2902 = vmul.f32 %v2894, %v405
  %v2903 = vmul.f32 %v2897, %v405
  %v2904 = vmul.f32 %v2900, %v405
  %v2905 = vadd.f32 %v2901, 1e-05
  %v2906 = vadd.f32 %v2902, 1e-05
  %v2907 = vadd.f32 %v2903, 1e-05
  %v2908 = vadd.f32 %v2904, 1e-05
  %v2909 = vrsqrt.pop %v2905
  %v2910 = vrsqrt.pop %v2906
  %v2911 = vrsqrt.pop %v2907
  %v2912 = vrsqrt.pop %v2908
  %v2913 = vmul.f32 %v2881, %v2909
  %v2914 = vmul.f32 %v2882, %v2910
  %v2915 = vmul.f32 %v2883, %v2911
  %v2916 = vmul.f32 %v2884, %v2912
  %v2917 = vld [vmem:[%s27] sm:$0x1]
  %v2919 = vlaneseq
  %v2920 = vshrl.u32 %v2919, 7
  %v2921 = vsub.s32 0, %v2920
  %v2922 = vrot.slane %v2917, %v2921
  %v2924 = vmul.f32 %v2913, %v2922
  %v2925 = vmul.f32 %v2914, %v2922
  %v2926 = vmul.f32 %v2915, %v2922
  %v2927 = vmul.f32 %v2916, %v2922
  %v2928 = vld [vmem:[%s29] sm:$0x1]
  %v2930 = vlaneseq
  %v2931 = vshrl.u32 %v2930, 7
  %v2932 = vsub.s32 0, %v2931
  %v2933 = vrot.slane %v2928, %v2932
  %v2935 = vadd.f32 %v2924, %v2933
  %v2936 = vadd.f32 %v2925, %v2933
  %v2937 = vadd.f32 %v2926, %v2933
  %v2938 = vadd.f32 %v2927, %v2933
  %v2939 = vld [vmem:[%s31] sm:$0xff]
  %v2940 = vld [vmem:[%s31 + $0x8] sm:$0xff]
  %v2941 = vld [vmem:[%s31 + $0x10] sm:$0xff]
  %v2942 = vld [vmem:[%s31 + $0x18] sm:$0xff]
  %v2943 = vld [vmem:[%s33] sm:$0x1]
  %v2945 = vlaneseq
  %v2946 = vshrl.u32 %v2945, 7
  %v2947 = vsub.s32 0, %v2946
  %v2948 = vrot.slane %v2943, %v2947
  %v2951 = vsel %vm392, %v2935, 0
  %v2954 = vsel %vm392, %v2936, 0
  %v2957 = vsel %vm392, %v2937, 0
  %v2960 = vsel %vm392, %v2938, 0
  %2962 = vmatprep.subr.mxu0 0.0
  %2963 = vmatpush1.msra.mxu0 %v2939
  %2964 = vmatprep.subr.mxu0 0.0
  %2965 = vmatpush1.msra.mxu0 %v2940
  %2966 = vmatprep.subr.mxu0 0.0
  %2967 = vmatpush1.msra.mxu0 %v2941
  %2968 = vmatprep.subr.mxu0 0.0
  %2969 = vmatpush1.msra.mxu0 %v2942
  %2970 = vmatprep.subr.mxu0 0.0
  %2971 = vmatpush1.msra.mxu0 0.0
  %2972 = vmatprep.subr.mxu0 0.0
  %2973 = vmatpush1.msra.mxu0 0.0
  %2974 = vmatprep.subr.mxu0 0.0
  %2975 = vmatpush1.msra.mxu0 0.0
  %2976 = vmatprep.subr.mxu0 0.0
  %2977 = vmatpush1.msra.mxu0 0.0
  %2978 = vmatprep.subr.mxu0 0.0
  %2979 = vmatpush1.msra.mxu0 0.0
  %2980 = vmatprep.subr.mxu0 0.0
  %2981 = vmatpush1.msra.mxu0 0.0
  %2982 = vmatprep.subr.mxu0 0.0
  %2983 = vmatpush1.msra.mxu0 0.0
  %2984 = vmatprep.subr.mxu0 0.0
  %2985 = vmatpush1.msra.mxu0 0.0
  %2986 = vmatprep.subr.mxu0 0.0
  %2987 = vmatpush1.msra.mxu0 0.0
  %2988 = vmatprep.subr.mxu0 0.0
  %2989 = vmatpush1.msra.mxu0 0.0
  %2990 = vmatprep.subr.mxu0 0.0
  %2991 = vmatpush1.msra.mxu0 0.0
  %2992 = vmatprep.subr.mxu0 0.0
  %2993 = vmatpush1.msra.mxu0 0.0
  %2994 = vmatprep.subr.mxu0 0.0
  %2995 = vmatpush1.msra.mxu0 0.0
  %2996 = vmatprep.subr.mxu0 0.0
  %2997 = vmatpush1.msra.mxu0 0.0
  %2998 = vmatprep.subr.mxu0 0.0
  %2999 = vmatpush1.msra.mxu0 0.0
  %3000 = vmatprep.subr.mxu0 0.0
  %3001 = vmatpush1.msra.mxu0 0.0
  %3002 = vmatprep.subr.mxu0 0.0
  %3003 = vmatpush1.msra.mxu0 0.0
  %3004 = vmatprep.subr.mxu0 0.0
  %3005 = vmatpush1.msra.mxu0 0.0
  %3006 = vmatprep.subr.mxu0 0.0
  %3007 = vmatpush1.msra.mxu0 0.0
  %3008 = vmatprep.subr.mxu0 0.0
  %3009 = vmatpush1.msra.mxu0 0.0
  %3010 = vmatprep.subr.mxu0 0.0
  %3011 = vmatpush1.msra.mxu0 0.0
  %3012 = vmatprep.subr.mxu0 0.0
  %3013 = vmatpush1.msra.mxu0 0.0
  %3014 = vmatprep.subr.mxu0 0.0
  %3015 = vmatpush1.msra.mxu0 0.0
  %3016 = vmatprep.subr.mxu0 0.0
  %3017 = vmatpush1.msra.mxu0 0.0
  %3018 = vmatprep.subr.mxu0 0.0
  %3019 = vmatpush1.msra.mxu0 0.0
  %3020 = vmatprep.subr.mxu0 0.0
  %3021 = vmatpush1.msra.mxu0 0.0
  %3022 = vmatprep.subr.mxu0 0.0
  %3023 = vmatpush1.msra.mxu0 0.0
  %3024 = vmatprep.subr.mxu0 0.0
  %3025 = vmatpush1.msra.mxu0 0.0
  %3026 = vmatprep.mubr.f32.mxu0 0.0
  %3027 = vmatmul.mubr.f32.gmra.mrb[0].mxu0 %v2951
  %v3028 = vpop.f32.mrb[0].mxu0
  %v3029 = vadd.f32 %v2948, %v3028
  %v3030 = vpop.f32.mrb[0].mxu0
  %3031 = vmatprep.mubr.f32.mxu0 0.0
  %3032 = vmatmul.mubr.f32.gmra.mrb[0].mxu0 %v2954
  %v3033 = vpop.f32.mrb[0].mxu0
  %v3034 = vadd.f32 %v2948, %v3033
  %v3035 = vpop.f32.mrb[0].mxu0
  %3036 = vmatprep.mubr.f32.mxu0 0.0
  %3037 = vmatmul.mubr.f32.gmra.mrb[0].mxu0 %v2957
  %v3038 = vpop.f32.mrb[0].mxu0
  %v3039 = vadd.f32 %v2948, %v3038
  %v3040 = vpop.f32.mrb[0].mxu0
  %3041 = vmatprep.mubr.f32.mxu0 0.0
  %3042 = vmatmul.mubr.f32.gmra.mrb[0].mxu0 %v2960
  %v3043 = vpop.f32.mrb[0].mxu0
  %v3044 = vadd.f32 %v2948, %v3043
  %v3045 = vpop.f32.mrb[0].mxu0
  %3046 = vdwg.mxu0
  %v3047 = vmul.f32 %v3029, %v3029
  %v3048 = vmul.f32 %v3034, %v3034
  %v3049 = vmul.f32 %v3039, %v3039
  %v3050 = vmul.f32 %v3044, %v3044
  %v3051 = vmul.f32 %v3029, %v3047
  %v3052 = vmul.f32 %v3034, %v3048
  %v3053 = vmul.f32 %v3039, %v3049
  %v3054 = vmul.f32 %v3044, %v3050
  %v3055 = vmul.f32 %v3051, 0.044715
  %v3056 = vmul.f32 %v3052, 0.044715
  %v3057 = vmul.f32 %v3053, 0.044715
  %v3058 = vmul.f32 %v3054, 0.044715
  %v3059 = vadd.f32 %v3029, %v3055
  %v3060 = vadd.f32 %v3034, %v3056
  %v3061 = vadd.f32 %v3039, %v3057
  %v3062 = vadd.f32 %v3044, %v3058
  %v3063 = vmul.f32 %v3059, 0.7978846
  %v3064 = vmul.f32 %v3060, 0.7978846
  %v3065 = vmul.f32 %v3061, 0.7978846
  %v3066 = vmul.f32 %v3062, 0.7978846
  %v3067 = vtanh.pop %v3063
  %v3068 = vtanh.pop %v3064
  %v3069 = vtanh.pop %v3065
  %v3070 = vtanh.pop %v3066
  %v3071 = vadd.f32 %v3067, 1.0
  %v3072 = vadd.f32 %v3068, 1.0
  %v3073 = vadd.f32 %v3069, 1.0
  %v3074 = vadd.f32 %v3070, 1.0
  %v3075 = vmul.f32 %v3071, 0.5
  %v3076 = vmul.f32 %v3072, 0.5
  %v3077 = vmul.f32 %v3073, 0.5
  %v3078 = vmul.f32 %v3074, 0.5
  %v3079 = vmul.f32 %v3029, %v3075
  %v3080 = vmul.f32 %v3034, %v3076
  %v3081 = vmul.f32 %v3039, %v3077
  %v3082 = vmul.f32 %v3044, %v3078
  %v3083 = vld [vmem:[%s35] sm:$0xff]
  %v3084 = vld [vmem:[%s35 + $0x8] sm:$0xff]
  %v3085 = vld [vmem:[%s35 + $0x10] sm:$0xff]
  %v3086 = vld [vmem:[%s35 + $0x18] sm:$0xff]
  %v3087 = vld [vmem:[%s35 + $0x20] sm:$0xff]
  %v3088 = vld [vmem:[%s35 + $0x28] sm:$0xff]
  %v3089 = vld [vmem:[%s35 + $0x30] sm:$0xff]
  %v3090 = vld [vmem:[%s35 + $0x38] sm:$0xff]
  %v3091 = vld [vmem:[%s35 + $0x40] sm:$0xff]
  %v3092 = vld [vmem:[%s35 + $0x48] sm:$0xff]
  %v3093 = vld [vmem:[%s35 + $0x50] sm:$0xff]
  %v3094 = vld [vmem:[%s35 + $0x58] sm:$0xff]
  %v3095 = vld [vmem:[%s35 + $0x60] sm:$0xff]
  %v3096 = vld [vmem:[%s35 + $0x68] sm:$0xff]
  %v3097 = vld [vmem:[%s35 + $0x70] sm:$0xff]
  %v3098 = vld [vmem:[%s35 + $0x78] sm:$0xff]
  %v3099 = vld [vmem:[%s37] sm:$0x1]
  %v3101 = vlaneseq
  %v3102 = vshrl.u32 %v3101, 7
  %v3103 = vsub.s32 0, %v3102
  %v3104 = vrot.slane %v3099, %v3103
  %3106 = vmatprep.subr.mxu0 0.0
  %3107 = vmatpush1.msra.mxu0 %v3083
  %3108 = vmatprep.subr.mxu0 0.0
  %3109 = vmatpush1.msra.mxu0 %v3084
  %3110 = vmatprep.subr.mxu0 0.0
  %3111 = vmatpush1.msra.mxu0 %v3085
  %3112 = vmatprep.subr.mxu0 0.0
  %3113 = vmatpush1.msra.mxu0 %v3086
  %3114 = vmatprep.subr.mxu0 0.0
  %3115 = vmatpush1.msra.mxu0 %v3087
  %3116 = vmatprep.subr.mxu0 0.0
  %3117 = vmatpush1.msra.mxu0 %v3088
  %3118 = vmatprep.subr.mxu0 0.0
  %3119 = vmatpush1.msra.mxu0 %v3089
  %3120 = vmatprep.subr.mxu0 0.0
  %3121 = vmatpush1.msra.mxu0 %v3090
  %3122 = vmatprep.subr.mxu0 0.0
  %3123 = vmatpush1.msra.mxu0 %v3091
  %3124 = vmatprep.subr.mxu0 0.0
  %3125 = vmatpush1.msra.mxu0 %v3092
  %3126 = vmatprep.subr.mxu0 0.0
  %3127 = vmatpush1.msra.mxu0 %v3093
  %3128 = vmatprep.subr.mxu0 0.0
  %3129 = vmatpush1.msra.mxu0 %v3094
  %3130 = vmatprep.subr.mxu0 0.0
  %3131 = vmatpush1.msra.mxu0 %v3095
  %3132 = vmatprep.subr.mxu0 0.0
  %3133 = vmatpush1.msra.mxu0 %v3096
  %3134 = vmatprep.subr.mxu0 0.0
  %3135 = vmatpush1.msra.mxu0 %v3097
  %3136 = vmatprep.subr.mxu0 0.0
  %3137 = vmatpush1.msra.mxu0 %v3098
  %3138 = vmatprep.subr.mxu0 0.0
  %3139 = vmatpush1.msra.mxu0 0.0
  %3140 = vmatprep.subr.mxu0 0.0
  %3141 = vmatpush1.msra.mxu0 0.0
  %3142 = vmatprep.subr.mxu0 0.0
  %3143 = vmatpush1.msra.mxu0 0.0
  %3144 = vmatprep.subr.mxu0 0.0
  %3145 = vmatpush1.msra.mxu0 0.0
  %3146 = vmatprep.subr.mxu0 0.0
  %3147 = vmatpush1.msra.mxu0 0.0
  %3148 = vmatprep.subr.mxu0 0.0
  %3149 = vmatpush1.msra.mxu0 0.0
  %3150 = vmatprep.subr.mxu0 0.0
  %3151 = vmatpush1.msra.mxu0 0.0
  %3152 = vmatprep.subr.mxu0 0.0
  %3153 = vmatpush1.msra.mxu0 0.0
  %3154 = vmatprep.subr.mxu0 0.0
  %3155 = vmatpush1.msra.mxu0 0.0
  %3156 = vmatprep.subr.mxu0 0.0
  %3157 = vmatpush1.msra.mxu0 0.0
  %3158 = vmatprep.subr.mxu0 0.0
  %3159 = vmatpush1.msra.mxu0 0.0
  %3160 = vmatprep.subr.mxu0 0.0
  %3161 = vmatpush1.msra.mxu0 0.0
  %3162 = vmatprep.subr.mxu0 0.0
  %3163 = vmatpush1.msra.mxu0 0.0
  %3164 = vmatprep.subr.mxu0 0.0
  %3165 = vmatpush1.msra.mxu0 0.0
  %3166 = vmatprep.subr.mxu0 0.0
  %3167 = vmatpush1.msra.mxu0 0.0
  %3168 = vmatprep.subr.mxu0 0.0
  %3169 = vmatpush1.msra.mxu0 0.0
  %3170 = vmatprep.mubr.f32.mxu0 0.0
  %3171 = vmatmul.mubr.f32.gmra.mrb[0].mxu0 %v3079
  %v3172 = vpop.f32.mrb[0].mxu0
  %v3173 = vadd.f32 %v3104, %v3172
  %v3174 = vpop.f32.mrb[0].mxu0
  %3175 = vmatprep.mubr.f32.mxu0 0.0
  %3176 = vmatmul.mubr.f32.gmra.mrb[0].mxu0 %v3080
  %v3177 = vpop.f32.mrb[0].mxu0
  %v3178 = vadd.f32 %v3104, %v3177
  %v3179 = vpop.f32.mrb[0].mxu0
  %3180 = vmatprep.mubr.f32.mxu0 0.0
  %3181 = vmatmul.mubr.f32.gmra.mrb[0].mxu0 %v3081
  %v3182 = vpop.f32.mrb[0].mxu0
  %v3183 = vadd.f32 %v3104, %v3182
  %v3184 = vpop.f32.mrb[0].mxu0
  %3185 = vmatprep.mubr.f32.mxu0 0.0
  %3186 = vmatmul.mubr.f32.gmra.mrb[0].mxu0 %v3082
  %v3187 = vpop.f32.mrb[0].mxu0
  %v3188 = vadd.f32 %v3104, %v3187
  %v3189 = vpop.f32.mrb[0].mxu0
  %3190 = vdwg.mxu0
  %v3191 = vadd.f32 %v2861, %v3173
  %v3192 = vadd.f32 %v2862, %v3178
  %v3193 = vadd.f32 %v2863, %v3183
  %v3194 = vadd.f32 %v2864, %v3188
  %v3195 = vsel %vm392, %v3191, 0.0
  %3196 = vadd.xlane.f32.xlu0 %v3195
  %v3197 = vpop.xlane.xlu0 %3196
  %v3198 = vsel %vm392, %v3192, 0.0
  %3199 = vadd.xlane.f32.xlu0 %v3198
  %v3200 = vpop.xlane.xlu0 %3199
  %v3201 = vsel %vm392, %v3193, 0.0
  %3202 = vadd.xlane.f32.xlu0 %v3201
  %v3203 = vpop.xlane.xlu0 %3202
  %v3204 = vsel %vm392, %v3194, 0.0
  %3205 = vadd.xlane.f32.xlu0 %v3204
  %v3206 = vpop.xlane.xlu0 %3205
  %v3207 = vmul.f32 %v3197, %v405
  %v3208 = vmul.f32 %v3200, %v405
  %v3209 = vmul.f32 %v3203, %v405
  %v3210 = vmul.f32 %v3206, %v405
  %v3211 = vsub.f32 %v3191, %v3207
  %v3212 = vsub.f32 %v3192, %v3208
  %v3213 = vsub.f32 %v3193, %v3209
  %v3214 = vsub.f32 %v3194, %v3210
  %v3215 = vmul.f32 %v3211, %v3211
  %v3216 = vmul.f32 %v3212, %v3212
  %v3217 = vmul.f32 %v3213, %v3213
  %v3218 = vmul.f32 %v3214, %v3214
  %v3219 = vsel %vm392, %v3215, 0.0
  %3220 = vadd.xlane.f32.xlu0 %v3219
  %v3221 = vpop.xlane.xlu0 %3220
  %v3222 = vsel %vm392, %v3216, 0.0
  %3223 = vadd.xlane.f32.xlu0 %v3222
  %v3224 = vpop.xlane.xlu0 %3223
  %v3225 = vsel %vm392, %v3217, 0.0
  %3226 = vadd.xlane.f32.xlu0 %v3225
  %v3227 = vpop.xlane.xlu0 %3226
  %v3228 = vsel %vm392, %v3218, 0.0
  %3229 = vadd.xlane.f32.xlu0 %v3228
  %v3230 = vpop.xlane.xlu0 %3229
  %v3231 = vmul.f32 %v3221, %v405
  %v3232 = vmul.f32 %v3224, %v405
  %v3233 = vmul.f32 %v3227, %v405
  %v3234 = vmul.f32 %v3230, %v405
  %v3235 = vadd.f32 %v3231, 1e-05
  %v3236 = vadd.f32 %v3232, 1e-05
  %v3237 = vadd.f32 %v3233, 1e-05
  %v3238 = vadd.f32 %v3234, 1e-05
  %v3239 = vrsqrt.pop %v3235
  %v3240 = vrsqrt.pop %v3236
  %v3241 = vrsqrt.pop %v3237
  %v3242 = vrsqrt.pop %v3238
  %v3243 = vmul.f32 %v3211, %v3239
  %v3244 = vmul.f32 %v3212, %v3240
  %v3245 = vmul.f32 %v3213, %v3241
  %v3246 = vmul.f32 %v3214, %v3242
  %v3247 = vld [vmem:[%s39] sm:$0x1]
  %v3249 = vlaneseq
  %v3250 = vshrl.u32 %v3249, 7
  %v3251 = vsub.s32 0, %v3250
  %v3252 = vrot.slane %v3247, %v3251
  %v3254 = vmul.f32 %v3243, %v3252
  %v3255 = vmul.f32 %v3244, %v3252
  %v3256 = vmul.f32 %v3245, %v3252
  %v3257 = vmul.f32 %v3246, %v3252
  %v3258 = vld [vmem:[%s41] sm:$0x1]
  %v3260 = vlaneseq
  %v3261 = vshrl.u32 %v3260, 7
  %v3262 = vsub.s32 0, %v3261
  %v3263 = vrot.slane %v3258, %v3262
  %v3265 = vadd.f32 %v3254, %v3263
  %v3266 = vadd.f32 %v3255, %v3263
  %v3267 = vadd.f32 %v3256, %v3263
  %v3268 = vadd.f32 %v3257, %v3263
  %v3269 = vld [vmem:[%s43] sm:$0xff]
  %v3270 = vld [vmem:[%s43 + $0x8] sm:$0xff]
  %v3271 = vld [vmem:[%s43 + $0x10] sm:$0xff]
  %v3272 = vld [vmem:[%s43 + $0x18] sm:$0xff]
  %v3273 = vld [vmem:[%s45] sm:$0x1]
  %v3275 = vlaneseq
  %v3276 = vshrl.u32 %v3275, 7
  %v3277 = vsub.s32 0, %v3276
  %v3278 = vrot.slane %v3273, %v3277
  %v3281 = vsel %vm392, %v3265, 0
  %v3284 = vsel %vm392, %v3266, 0
  %v3287 = vsel %vm392, %v3267, 0
  %v3290 = vsel %vm392, %v3268, 0
  %3292 = vmatprep.subr.mxu0 0.0
  %3293 = vmatpush1.msra.mxu0 %v3269
  %3294 = vmatprep.subr.mxu0 0.0
  %3295 = vmatpush1.msra.mxu0 %v3270
  %3296 = vmatprep.subr.mxu0 0.0
  %3297 = vmatpush1.msra.mxu0 %v3271
  %3298 = vmatprep.subr.mxu0 0.0
  %3299 = vmatpush1.msra.mxu0 %v3272
  %3300 = vmatprep.subr.mxu0 0.0
  %3301 = vmatpush1.msra.mxu0 0.0
  %3302 = vmatprep.subr.mxu0 0.0
  %3303 = vmatpush1.msra.mxu0 0.0
  %3304 = vmatprep.subr.mxu0 0.0
  %3305 = vmatpush1.msra.mxu0 0.0
  %3306 = vmatprep.subr.mxu0 0.0
  %3307 = vmatpush1.msra.mxu0 0.0
  %3308 = vmatprep.subr.mxu0 0.0
  %3309 = vmatpush1.msra.mxu0 0.0
  %3310 = vmatprep.subr.mxu0 0.0
  %3311 = vmatpush1.msra.mxu0 0.0
  %3312 = vmatprep.subr.mxu0 0.0
  %3313 = vmatpush1.msra.mxu0 0.0
  %3314 = vmatprep.subr.mxu0 0.0
  %3315 = vmatpush1.msra.mxu0 0.0
  %3316 = vmatprep.subr.mxu0 0.0
  %3317 = vmatpush1.msra.mxu0 0.0
  %3318 = vmatprep.subr.mxu0 0.0
  %3319 = vmatpush1.msra.mxu0 0.0
  %3320 = vmatprep.subr.mxu0 0.0
  %3321 = vmatpush1.msra.mxu0 0.0
  %3322 = vmatprep.subr.mxu0 0.0
  %3323 = vmatpush1.msra.mxu0 0.0
  %3324 = vmatprep.subr.mxu0 0.0
  %3325 = vmatpush1.msra.mxu0 0.0
  %3326 = vmatprep.subr.mxu0 0.0
  %3327 = vmatpush1.msra.mxu0 0.0
  %3328 = vmatprep.subr.mxu0 0.0
  %3329 = vmatpush1.msra.mxu0 0.0
  %3330 = vmatprep.subr.mxu0 0.0
  %3331 = vmatpush1.msra.mxu0 0.0
  %3332 = vmatprep.subr.mxu0 0.0
  %3333 = vmatpush1.msra.mxu0 0.0
  %3334 = vmatprep.subr.mxu0 0.0
  %3335 = vmatpush1.msra.mxu0 0.0
  %3336 = vmatprep.subr.mxu0 0.0
  %3337 = vmatpush1.msra.mxu0 0.0
  %3338 = vmatprep.subr.mxu0 0.0
  %3339 = vmatpush1.msra.mxu0 0.0
  %3340 = vmatprep.subr.mxu0 0.0
  %3341 = vmatpush1.msra.mxu0 0.0
  %3342 = vmatprep.subr.mxu0 0.0
  %3343 = vmatpush1.msra.mxu0 0.0
  %3344 = vmatprep.subr.mxu0 0.0
  %3345 = vmatpush1.msra.mxu0 0.0
  %3346 = vmatprep.subr.mxu0 0.0
  %3347 = vmatpush1.msra.mxu0 0.0
  %3348 = vmatprep.subr.mxu0 0.0
  %3349 = vmatpush1.msra.mxu0 0.0
  %3350 = vmatprep.subr.mxu0 0.0
  %3351 = vmatpush1.msra.mxu0 0.0
  %3352 = vmatprep.subr.mxu0 0.0
  %3353 = vmatpush1.msra.mxu0 0.0
  %3354 = vmatprep.subr.mxu0 0.0
  %3355 = vmatpush1.msra.mxu0 0.0
  %3356 = vmatprep.mubr.f32.mxu0 0.0
  %3357 = vmatmul.mubr.f32.gmra.mrb[0].mxu0 %v3281
  %v3358 = vpop.f32.mrb[0].mxu0
  %v3359 = vadd.f32 %v3278, %v3358
  %v3360 = vpop.f32.mrb[0].mxu0
  %3361 = vmatprep.mubr.f32.mxu0 0.0
  %3362 = vmatmul.mubr.f32.gmra.mrb[0].mxu0 %v3284
  %v3363 = vpop.f32.mrb[0].mxu0
  %v3364 = vadd.f32 %v3278, %v3363
  %v3365 = vpop.f32.mrb[0].mxu0
  %3366 = vmatprep.mubr.f32.mxu0 0.0
  %3367 = vmatmul.mubr.f32.gmra.mrb[0].mxu0 %v3287
  %v3368 = vpop.f32.mrb[0].mxu0
  %v3369 = vadd.f32 %v3278, %v3368
  %v3370 = vpop.f32.mrb[0].mxu0
  %3371 = vmatprep.mubr.f32.mxu0 0.0
  %3372 = vmatmul.mubr.f32.gmra.mrb[0].mxu0 %v3290
  %v3373 = vpop.f32.mrb[0].mxu0
  %v3374 = vadd.f32 %v3278, %v3373
  %v3375 = vpop.f32.mrb[0].mxu0
  %3376 = vdwg.mxu0
  %v3377 = vld [vmem:[%s47] sm:$0xff]
  %v3378 = vld [vmem:[%s47 + $0x8] sm:$0xff]
  %v3379 = vld [vmem:[%s47 + $0x10] sm:$0xff]
  %v3380 = vld [vmem:[%s47 + $0x18] sm:$0xff]
  %3383 = vrot.lane.b32.xlu0 %v3359, 96
  %v3384 = vpop.permute.xlu0 %3383
  %3385 = vrot.lane.b32.xlu0 %v3364, 96
  %v3386 = vpop.permute.xlu0 %3385
  %v3387 = vsel %vm586, %v3359, 0
  %v3389 = vsel %vm586, %v3364, 0
  %v3391 = vsel %vm586, %v3384, 0
  %v3393 = vsel %vm586, %v3386, 0
  %3395 = vmatprep.subr.mxu0 0.0
  %3396 = vmatpush1.xpose.msra.mxu0 %v3391
  %3397 = vmatprep.subr.mxu0 0.0
  %3398 = vmatpush1.xpose.msra.mxu0 %v3393
  %3399 = vmatprep.subr.mxu0 0.0
  %3400 = vmatpush1.xpose.msra.mxu0 0.0
  %3401 = vmatprep.subr.mxu0 0.0
  %3402 = vmatpush1.xpose.msra.mxu0 0.0
  %3403 = vmatprep.subr.mxu0 0.0
  %3404 = vmatpush1.xpose.msra.mxu0 0.0
  %3405 = vmatprep.subr.mxu0 0.0
  %3406 = vmatpush1.xpose.msra.mxu0 0.0
  %3407 = vmatprep.subr.mxu0 0.0
  %3408 = vmatpush1.xpose.msra.mxu0 0.0
  %3409 = vmatprep.subr.mxu0 0.0
  %3410 = vmatpush1.xpose.msra.mxu0 0.0
  %3411 = vmatprep.subr.mxu0 0.0
  %3412 = vmatpush1.xpose.msra.mxu0 0.0
  %3413 = vmatprep.subr.mxu0 0.0
  %3414 = vmatpush1.xpose.msra.mxu0 0.0
  %3415 = vmatprep.subr.mxu0 0.0
  %3416 = vmatpush1.xpose.msra.mxu0 0.0
  %3417 = vmatprep.subr.mxu0 0.0
  %3418 = vmatpush1.xpose.msra.mxu0 0.0
  %3419 = vmatprep.subr.mxu0 0.0
  %3420 = vmatpush1.xpose.msra.mxu0 0.0
  %3421 = vmatprep.subr.mxu0 0.0
  %3422 = vmatpush1.xpose.msra.mxu0 0.0
  %3423 = vmatprep.subr.mxu0 0.0
  %3424 = vmatpush1.xpose.msra.mxu0 0.0
  %3425 = vmatprep.subr.mxu0 0.0
  %3426 = vmatpush1.xpose.msra.mxu0 0.0
  %3427 = vmatprep.subr.mxu0 0.0
  %3428 = vmatpush1.xpose.msra.mxu0 0.0
  %3429 = vmatprep.subr.mxu0 0.0
  %3430 = vmatpush1.xpose.msra.mxu0 0.0
  %3431 = vmatprep.subr.mxu0 0.0
  %3432 = vmatpush1.xpose.msra.mxu0 0.0
  %3433 = vmatprep.subr.mxu0 0.0
  %3434 = vmatpush1.xpose.msra.mxu0 0.0
  %3435 = vmatprep.subr.mxu0 0.0
  %3436 = vmatpush1.xpose.msra.mxu0 0.0
  %3437 = vmatprep.subr.mxu0 0.0
  %3438 = vmatpush1.xpose.msra.mxu0 0.0
  %3439 = vmatprep.subr.mxu0 0.0
  %3440 = vmatpush1.xpose.msra.mxu0 0.0
  %3441 = vmatprep.subr.mxu0 0.0
  %3442 = vmatpush1.xpose.msra.mxu0 0.0
  %3443 = vmatprep.subr.mxu0 0.0
  %3444 = vmatpush1.xpose.msra.mxu0 0.0
  %3445 = vmatprep.subr.mxu0 0.0
  %3446 = vmatpush1.xpose.msra.mxu0 0.0
  %3447 = vmatprep.subr.mxu0 0.0
  %3448 = vmatpush1.xpose.msra.mxu0 0.0
  %3449 = vmatprep.subr.mxu0 0.0
  %3450 = vmatpush1.xpose.msra.mxu0 0.0
  %3451 = vmatprep.subr.mxu0 0.0
  %3452 = vmatpush1.xpose.msra.mxu0 0.0
  %3453 = vmatprep.subr.mxu0 0.0
  %3454 = vmatpush1.xpose.msra.mxu0 0.0
  %3455 = vmatprep.subr.mxu0 0.0
  %3456 = vmatpush1.xpose.msra.mxu0 0.0
  %3457 = vmatprep.subr.mxu0 0.0
  %3458 = vmatpush1.xpose.msra.mxu0 0.0
  %3459 = vmatprep.mubr.f32.mxu0 0.0
  %3460 = vmatmul.mubr.f32.gmra.mrb[0].mxu0 %v3387
  %v3461 = vpop.f32.mrb[0].mxu0
  %v3462 = vadd.f32 0.0, %v3461
  %v3463 = vpop.f32.mrb[0].mxu0
  %3464 = vmatprep.mubr.f32.mxu0 0.0
  %3465 = vmatmul.mubr.f32.gmra.mrb[0].mxu0 %v3389
  %v3466 = vpop.f32.mrb[0].mxu0
  %v3467 = vadd.f32 0.0, %v3466
  %v3468 = vpop.f32.mrb[0].mxu0
  %3469 = vdwg.mxu0
  %v3470 = vmul.f32 %v3462, 0.35355338
  %v3471 = vmul.f32 %v3467, 0.35355338
  %v3472 = vsel %vm672, %v3470, -inf
  %3473 = vmax.xlane.f32.xlu0 %v3472
  %v3474 = vpop.xlane.xlu0 %3473
  %v3475 = vsel %vm672, %v3471, -inf
  %3476 = vmax.xlane.f32.xlu0 %v3475
  %v3477 = vpop.xlane.xlu0 %3476
  %v3478 = vsub.f32 %v3470, %v3474
  %v3479 = vsub.f32 %v3471, %v3477
  %v3480 = vmul.f32 %v3478, 1.442695
  %v3481 = vpow.pop %v3480
  %v3482 = vmul.f32 %v3479, 1.442695
  %v3483 = vpow.pop %v3482
  %v3484 = vsel %vm672, %v3481, 0.0
  %3485 = vadd.xlane.f32.xlu0 %v3484
  %v3486 = vpop.xlane.xlu0 %3485
  %v3487 = vsel %vm672, %v3483, 0.0
  %3488 = vadd.xlane.f32.xlu0 %v3487
  %v3489 = vpop.xlane.xlu0 %3488
  %v3490 = vrcp.pop %v3486
  %v3491 = vrcp.pop %v3489
  %v3492 = vmul.f32 %v3481, %v3490
  %v3493 = vmul.f32 %v3483, %v3491
  %3494 = vrot.lane.b32.xlu0 %v3359, 64
  %v3495 = vpop.permute.xlu0 %3494
  %3496 = vrot.lane.b32.xlu0 %v3364, 64
  %v3497 = vpop.permute.xlu0 %3496
  %v3501 = vsel %vm672, %v3492, 0
  %v3504 = vsel %vm672, %v3493, 0
  %3506 = vmatprep.subr.mxu0 0.0
  %3507 = vmatpush1.msra.mxu0 %v3495
  %3508 = vmatprep.subr.mxu0 0.0
  %3509 = vmatpush1.msra.mxu0 %v3497
  %3510 = vmatprep.subr.mxu0 0.0
  %3511 = vmatpush1.msra.mxu0 0.0
  %3512 = vmatprep.subr.mxu0 0.0
  %3513 = vmatpush1.msra.mxu0 0.0
  %3514 = vmatprep.subr.mxu0 0.0
  %3515 = vmatpush1.msra.mxu0 0.0
  %3516 = vmatprep.subr.mxu0 0.0
  %3517 = vmatpush1.msra.mxu0 0.0
  %3518 = vmatprep.subr.mxu0 0.0
  %3519 = vmatpush1.msra.mxu0 0.0
  %3520 = vmatprep.subr.mxu0 0.0
  %3521 = vmatpush1.msra.mxu0 0.0
  %3522 = vmatprep.subr.mxu0 0.0
  %3523 = vmatpush1.msra.mxu0 0.0
  %3524 = vmatprep.subr.mxu0 0.0
  %3525 = vmatpush1.msra.mxu0 0.0
  %3526 = vmatprep.subr.mxu0 0.0
  %3527 = vmatpush1.msra.mxu0 0.0
  %3528 = vmatprep.subr.mxu0 0.0
  %3529 = vmatpush1.msra.mxu0 0.0
  %3530 = vmatprep.subr.mxu0 0.0
  %3531 = vmatpush1.msra.mxu0 0.0
  %3532 = vmatprep.subr.mxu0 0.0
  %3533 = vmatpush1.msra.mxu0 0.0
  %3534 = vmatprep.subr.mxu0 0.0
  %3535 = vmatpush1.msra.mxu0 0.0
  %3536 = vmatprep.subr.mxu0 0.0
  %3537 = vmatpush1.msra.mxu0 0.0
  %3538 = vmatprep.subr.mxu0 0.0
  %3539 = vmatpush1.msra.mxu0 0.0
  %3540 = vmatprep.subr.mxu0 0.0
  %3541 = vmatpush1.msra.mxu0 0.0
  %3542 = vmatprep.subr.mxu0 0.0
  %3543 = vmatpush1.msra.mxu0 0.0
  %3544 = vmatprep.subr.mxu0 0.0
  %3545 = vmatpush1.msra.mxu0 0.0
  %3546 = vmatprep.subr.mxu0 0.0
  %3547 = vmatpush1.msra.mxu0 0.0
  %3548 = vmatprep.subr.mxu0 0.0
  %3549 = vmatpush1.msra.mxu0 0.0
  %3550 = vmatprep.subr.mxu0 0.0
  %3551 = vmatpush1.msra.mxu0 0.0
  %3552 = vmatprep.subr.mxu0 0.0
  %3553 = vmatpush1.msra.mxu0 0.0
  %3554 = vmatprep.subr.mxu0 0.0
  %3555 = vmatpush1.msra.mxu0 0.0
  %3556 = vmatprep.subr.mxu0 0.0
  %3557 = vmatpush1.msra.mxu0 0.0
  %3558 = vmatprep.subr.mxu0 0.0
  %3559 = vmatpush1.msra.mxu0 0.0
  %3560 = vmatprep.subr.mxu0 0.0
  %3561 = vmatpush1.msra.mxu0 0.0
  %3562 = vmatprep.subr.mxu0 0.0
  %3563 = vmatpush1.msra.mxu0 0.0
  %3564 = vmatprep.subr.mxu0 0.0
  %3565 = vmatpush1.msra.mxu0 0.0
  %3566 = vmatprep.subr.mxu0 0.0
  %3567 = vmatpush1.msra.mxu0 0.0
  %3568 = vmatprep.subr.mxu0 0.0
  %3569 = vmatpush1.msra.mxu0 0.0
  %3570 = vmatprep.mubr.f32.mxu0 0.0
  %3571 = vmatmul.mubr.f32.gmra.mrb[0].mxu0 %v3501
  %v3572 = vpop.f32.mrb[0].mxu0
  %v3573 = vadd.f32 0.0, %v3572
  %v3574 = vpop.f32.mrb[0].mxu0
  %3575 = vmatprep.mubr.f32.mxu0 0.0
  %3576 = vmatmul.mubr.f32.gmra.mrb[0].mxu0 %v3504
  %v3577 = vpop.f32.mrb[0].mxu0
  %v3578 = vadd.f32 0.0, %v3577
  %v3579 = vpop.f32.mrb[0].mxu0
  %3580 = vdwg.mxu0
  %3581 = vrot.lane.b32.xlu0 %v3359, 120
  %v3582 = vpop.permute.xlu0 %3581
  %3583 = vrot.lane.b32.xlu0 %v3364, 120
  %v3584 = vpop.permute.xlu0 %3583
  %3585 = vrot.lane.b32.xlu0 %v3359, 88
  %v3586 = vpop.permute.xlu0 %3585
  %3587 = vrot.lane.b32.xlu0 %v3364, 88
  %v3588 = vpop.permute.xlu0 %3587
  %v3589 = vsel %vm586, %v3582, 0
  %v3591 = vsel %vm586, %v3584, 0
  %v3593 = vsel %vm586, %v3586, 0
  %v3595 = vsel %vm586, %v3588, 0
  %3597 = vmatprep.subr.mxu0 0.0
  %3598 = vmatpush1.xpose.msra.mxu0 %v3593
  %3599 = vmatprep.subr.mxu0 0.0
  %3600 = vmatpush1.xpose.msra.mxu0 %v3595
  %3601 = vmatprep.subr.mxu0 0.0
  %3602 = vmatpush1.xpose.msra.mxu0 0.0
  %3603 = vmatprep.subr.mxu0 0.0
  %3604 = vmatpush1.xpose.msra.mxu0 0.0
  %3605 = vmatprep.subr.mxu0 0.0
  %3606 = vmatpush1.xpose.msra.mxu0 0.0
  %3607 = vmatprep.subr.mxu0 0.0
  %3608 = vmatpush1.xpose.msra.mxu0 0.0
  %3609 = vmatprep.subr.mxu0 0.0
  %3610 = vmatpush1.xpose.msra.mxu0 0.0
  %3611 = vmatprep.subr.mxu0 0.0
  %3612 = vmatpush1.xpose.msra.mxu0 0.0
  %3613 = vmatprep.subr.mxu0 0.0
  %3614 = vmatpush1.xpose.msra.mxu0 0.0
  %3615 = vmatprep.subr.mxu0 0.0
  %3616 = vmatpush1.xpose.msra.mxu0 0.0
  %3617 = vmatprep.subr.mxu0 0.0
  %3618 = vmatpush1.xpose.msra.mxu0 0.0
  %3619 = vmatprep.subr.mxu0 0.0
  %3620 = vmatpush1.xpose.msra.mxu0 0.0
  %3621 = vmatprep.subr.mxu0 0.0
  %3622 = vmatpush1.xpose.msra.mxu0 0.0
  %3623 = vmatprep.subr.mxu0 0.0
  %3624 = vmatpush1.xpose.msra.mxu0 0.0
  %3625 = vmatprep.subr.mxu0 0.0
  %3626 = vmatpush1.xpose.msra.mxu0 0.0
  %3627 = vmatprep.subr.mxu0 0.0
  %3628 = vmatpush1.xpose.msra.mxu0 0.0
  %3629 = vmatprep.subr.mxu0 0.0
  %3630 = vmatpush1.xpose.msra.mxu0 0.0
  %3631 = vmatprep.subr.mxu0 0.0
  %3632 = vmatpush1.xpose.msra.mxu0 0.0
  %3633 = vmatprep.subr.mxu0 0.0
  %3634 = vmatpush1.xpose.msra.mxu0 0.0
  %3635 = vmatprep.subr.mxu0 0.0
  %3636 = vmatpush1.xpose.msra.mxu0 0.0
  %3637 = vmatprep.subr.mxu0 0.0
  %3638 = vmatpush1.xpose.msra.mxu0 0.0
  %3639 = vmatprep.subr.mxu0 0.0
  %3640 = vmatpush1.xpose.msra.mxu0 0.0
  %3641 = vmatprep.subr.mxu0 0.0
  %3642 = vmatpush1.xpose.msra.mxu0 0.0
  %3643 = vmatprep.subr.mxu0 0.0
  %3644 = vmatpush1.xpose.msra.mxu0 0.0
  %3645 = vmatprep.subr.mxu0 0.0
  %3646 = vmatpush1.xpose.msra.mxu0 0.0
  %3647 = vmatprep.subr.mxu0 0.0
  %3648 = vmatpush1.xpose.msra.mxu0 0.0
  %3649 = vmatprep.subr.mxu0 0.0
  %3650 = vmatpush1.xpose.msra.mxu0 0.0
  %3651 = vmatprep.subr.mxu0 0.0
  %3652 = vmatpush1.xpose.msra.mxu0 0.0
  %3653 = vmatprep.subr.mxu0 0.0
  %3654 = vmatpush1.xpose.msra.mxu0 0.0
  %3655 = vmatprep.subr.mxu0 0.0
  %3656 = vmatpush1.xpose.msra.mxu0 0.0
  %3657 = vmatprep.subr.mxu0 0.0
  %3658 = vmatpush1.xpose.msra.mxu0 0.0
  %3659 = vmatprep.subr.mxu0 0.0
  %3660 = vmatpush1.xpose.msra.mxu0 0.0
  %3661 = vmatprep.mubr.f32.mxu0 0.0
  %3662 = vmatmul.mubr.f32.gmra.mrb[0].mxu0 %v3589
  %v3663 = vpop.f32.mrb[0].mxu0
  %v3664 = vadd.f32 0.0, %v3663
  %v3665 = vpop.f32.mrb[0].mxu0
  %3666 = vmatprep.mubr.f32.mxu0 0.0
  %3667 = vmatmul.mubr.f32.gmra.mrb[0].mxu0 %v3591
  %v3668 = vpop.f32.mrb[0].mxu0
  %v3669 = vadd.f32 0.0, %v3668
  %v3670 = vpop.f32.mrb[0].mxu0
  %3671 = vdwg.mxu0
  %v3672 = vmul.f32 %v3664, 0.35355338
  %v3673 = vmul.f32 %v3669, 0.35355338
  %v3674 = vsel %vm672, %v3672, -inf
  %3675 = vmax.xlane.f32.xlu0 %v3674
  %v3676 = vpop.xlane.xlu0 %3675
  %v3677 = vsel %vm672, %v3673, -inf
  %3678 = vmax.xlane.f32.xlu0 %v3677
  %v3679 = vpop.xlane.xlu0 %3678
  %v3680 = vsub.f32 %v3672, %v3676
  %v3681 = vsub.f32 %v3673, %v3679
  %v3682 = vmul.f32 %v3680, 1.442695
  %v3683 = vpow.pop %v3682
  %v3684 = vmul.f32 %v3681, 1.442695
  %v3685 = vpow.pop %v3684
  %v3686 = vsel %vm672, %v3683, 0.0
  %3687 = vadd.xlane.f32.xlu0 %v3686
  %v3688 = vpop.xlane.xlu0 %3687
  %v3689 = vsel %vm672, %v3685, 0.0
  %3690 = vadd.xlane.f32.xlu0 %v3689
  %v3691 = vpop.xlane.xlu0 %3690
  %v3692 = vrcp.pop %v3688
  %v3693 = vrcp.pop %v3691
  %v3694 = vmul.f32 %v3683, %v3692
  %v3695 = vmul.f32 %v3685, %v3693
  %3696 = vrot.lane.b32.xlu0 %v3359, 56
  %v3697 = vpop.permute.xlu0 %3696
  %3698 = vrot.lane.b32.xlu0 %v3364, 56
  %v3699 = vpop.permute.xlu0 %3698
  %v3703 = vsel %vm672, %v3694, 0
  %v3706 = vsel %vm672, %v3695, 0
  %3708 = vmatprep.subr.mxu0 0.0
  %3709 = vmatpush1.msra.mxu0 %v3697
  %3710 = vmatprep.subr.mxu0 0.0
  %3711 = vmatpush1.msra.mxu0 %v3699
  %3712 = vmatprep.subr.mxu0 0.0
  %3713 = vmatpush1.msra.mxu0 0.0
  %3714 = vmatprep.subr.mxu0 0.0
  %3715 = vmatpush1.msra.mxu0 0.0
  %3716 = vmatprep.subr.mxu0 0.0
  %3717 = vmatpush1.msra.mxu0 0.0
  %3718 = vmatprep.subr.mxu0 0.0
  %3719 = vmatpush1.msra.mxu0 0.0
  %3720 = vmatprep.subr.mxu0 0.0
  %3721 = vmatpush1.msra.mxu0 0.0
  %3722 = vmatprep.subr.mxu0 0.0
  %3723 = vmatpush1.msra.mxu0 0.0
  %3724 = vmatprep.subr.mxu0 0.0
  %3725 = vmatpush1.msra.mxu0 0.0
  %3726 = vmatprep.subr.mxu0 0.0
  %3727 = vmatpush1.msra.mxu0 0.0
  %3728 = vmatprep.subr.mxu0 0.0
  %3729 = vmatpush1.msra.mxu0 0.0
  %3730 = vmatprep.subr.mxu0 0.0
  %3731 = vmatpush1.msra.mxu0 0.0
  %3732 = vmatprep.subr.mxu0 0.0
  %3733 = vmatpush1.msra.mxu0 0.0
  %3734 = vmatprep.subr.mxu0 0.0
  %3735 = vmatpush1.msra.mxu0 0.0
  %3736 = vmatprep.subr.mxu0 0.0
  %3737 = vmatpush1.msra.mxu0 0.0
  %3738 = vmatprep.subr.mxu0 0.0
  %3739 = vmatpush1.msra.mxu0 0.0
  %3740 = vmatprep.subr.mxu0 0.0
  %3741 = vmatpush1.msra.mxu0 0.0
  %3742 = vmatprep.subr.mxu0 0.0
  %3743 = vmatpush1.msra.mxu0 0.0
  %3744 = vmatprep.subr.mxu0 0.0
  %3745 = vmatpush1.msra.mxu0 0.0
  %3746 = vmatprep.subr.mxu0 0.0
  %3747 = vmatpush1.msra.mxu0 0.0
  %3748 = vmatprep.subr.mxu0 0.0
  %3749 = vmatpush1.msra.mxu0 0.0
  %3750 = vmatprep.subr.mxu0 0.0
  %3751 = vmatpush1.msra.mxu0 0.0
  %3752 = vmatprep.subr.mxu0 0.0
  %3753 = vmatpush1.msra.mxu0 0.0
  %3754 = vmatprep.subr.mxu0 0.0
  %3755 = vmatpush1.msra.mxu0 0.0
  %3756 = vmatprep.subr.mxu0 0.0
  %3757 = vmatpush1.msra.mxu0 0.0
  %3758 = vmatprep.subr.mxu0 0.0
  %3759 = vmatpush1.msra.mxu0 0.0
  %3760 = vmatprep.subr.mxu0 0.0
  %3761 = vmatpush1.msra.mxu0 0.0
  %3762 = vmatprep.subr.mxu0 0.0
  %3763 = vmatpush1.msra.mxu0 0.0
  %3764 = vmatprep.subr.mxu0 0.0
  %3765 = vmatpush1.msra.mxu0 0.0
  %3766 = vmatprep.subr.mxu0 0.0
  %3767 = vmatpush1.msra.mxu0 0.0
  %3768 = vmatprep.subr.mxu0 0.0
  %3769 = vmatpush1.msra.mxu0 0.0
  %3770 = vmatprep.subr.mxu0 0.0
  %3771 = vmatpush1.msra.mxu0 0.0
  %3772 = vmatprep.mubr.f32.mxu0 0.0
  %3773 = vmatmul.mubr.f32.gmra.mrb[0].mxu0 %v3703
  %v3774 = vpop.f32.mrb[0].mxu0
  %v3775 = vadd.f32 0.0, %v3774
  %v3776 = vpop.f32.mrb[0].mxu0
  %3777 = vmatprep.mubr.f32.mxu0 0.0
  %3778 = vmatmul.mubr.f32.gmra.mrb[0].mxu0 %v3706
  %v3779 = vpop.f32.mrb[0].mxu0
  %v3780 = vadd.f32 0.0, %v3779
  %v3781 = vpop.f32.mrb[0].mxu0
  %3782 = vdwg.mxu0
  %v3784 = vsel %vm586, %v3775, 0
  %v3787 = vsel %vm586, %v3780, 0
  %3789 = vmatprep.subr.mxu0 0.0
  %3790 = vmatpush1.msra.mxu0 %v3378
  %3791 = vmatprep.subr.mxu0 0.0
  %3792 = vmatpush1.msra.mxu0 0.0
  %3793 = vmatprep.subr.mxu0 0.0
  %3794 = vmatpush1.msra.mxu0 0.0
  %3795 = vmatprep.subr.mxu0 0.0
  %3796 = vmatpush1.msra.mxu0 0.0
  %3797 = vmatprep.subr.mxu0 0.0
  %3798 = vmatpush1.msra.mxu0 0.0
  %3799 = vmatprep.subr.mxu0 0.0
  %3800 = vmatpush1.msra.mxu0 0.0
  %3801 = vmatprep.subr.mxu0 0.0
  %3802 = vmatpush1.msra.mxu0 0.0
  %3803 = vmatprep.subr.mxu0 0.0
  %3804 = vmatpush1.msra.mxu0 0.0
  %3805 = vmatprep.subr.mxu0 0.0
  %3806 = vmatpush1.msra.mxu0 0.0
  %3807 = vmatprep.subr.mxu0 0.0
  %3808 = vmatpush1.msra.mxu0 0.0
  %3809 = vmatprep.subr.mxu0 0.0
  %3810 = vmatpush1.msra.mxu0 0.0
  %3811 = vmatprep.subr.mxu0 0.0
  %3812 = vmatpush1.msra.mxu0 0.0
  %3813 = vmatprep.subr.mxu0 0.0
  %3814 = vmatpush1.msra.mxu0 0.0
  %3815 = vmatprep.subr.mxu0 0.0
  %3816 = vmatpush1.msra.mxu0 0.0
  %3817 = vmatprep.subr.mxu0 0.0
  %3818 = vmatpush1.msra.mxu0 0.0
  %3819 = vmatprep.subr.mxu0 0.0
  %3820 = vmatpush1.msra.mxu0 0.0
  %3821 = vmatprep.subr.mxu0 0.0
  %3822 = vmatpush1.msra.mxu0 0.0
  %3823 = vmatprep.subr.mxu0 0.0
  %3824 = vmatpush1.msra.mxu0 0.0
  %3825 = vmatprep.subr.mxu0 0.0
  %3826 = vmatpush1.msra.mxu0 0.0
  %3827 = vmatprep.subr.mxu0 0.0
  %3828 = vmatpush1.msra.mxu0 0.0
  %3829 = vmatprep.subr.mxu0 0.0
  %3830 = vmatpush1.msra.mxu0 0.0
  %3831 = vmatprep.subr.mxu0 0.0
  %3832 = vmatpush1.msra.mxu0 0.0
  %3833 = vmatprep.subr.mxu0 0.0
  %3834 = vmatpush1.msra.mxu0 0.0
  %3835 = vmatprep.subr.mxu0 0.0
  %3836 = vmatpush1.msra.mxu0 0.0
  %3837 = vmatprep.subr.mxu0 0.0
  %3838 = vmatpush1.msra.mxu0 0.0
  %3839 = vmatprep.subr.mxu0 0.0
  %3840 = vmatpush1.msra.mxu0 0.0
  %3841 = vmatprep.subr.mxu0 0.0
  %3842 = vmatpush1.msra.mxu0 0.0
  %3843 = vmatprep.subr.mxu0 0.0
  %3844 = vmatpush1.msra.mxu0 0.0
  %3845 = vmatprep.subr.mxu0 0.0
  %3846 = vmatpush1.msra.mxu0 0.0
  %3847 = vmatprep.subr.mxu0 0.0
  %3848 = vmatpush1.msra.mxu0 0.0
  %3849 = vmatprep.subr.mxu0 0.0
  %3850 = vmatpush1.msra.mxu0 0.0
  %3851 = vmatprep.subr.mxu0 0.0
  %3852 = vmatpush1.msra.mxu0 0.0
  %3853 = vmatprep.mubr.f32.mxu0 0.0
  %3854 = vmatmul.mubr.f32.gmra.mrb[0].mxu0 %v3784
  %v3855 = vpop.f32.mrb[0].mxu0
  %v3856 = vadd.f32 0.0, %v3855
  %v3857 = vpop.f32.mrb[0].mxu0
  %3858 = vmatprep.mubr.f32.mxu0 0.0
  %3859 = vmatmul.mubr.f32.gmra.mrb[0].mxu0 %v3787
  %v3860 = vpop.f32.mrb[0].mxu0
  %v3861 = vadd.f32 0.0, %v3860
  %v3862 = vpop.f32.mrb[0].mxu0
  %3863 = vdwg.mxu0
  %v3865 = vsel %vm586, %v3573, 0
  %v3868 = vsel %vm586, %v3578, 0
  %3870 = vmatprep.subr.mxu0 0.0
  %3871 = vmatpush1.msra.mxu0 %v3377
  %3872 = vmatprep.subr.mxu0 0.0
  %3873 = vmatpush1.msra.mxu0 0.0
  %3874 = vmatprep.subr.mxu0 0.0
  %3875 = vmatpush1.msra.mxu0 0.0
  %3876 = vmatprep.subr.mxu0 0.0
  %3877 = vmatpush1.msra.mxu0 0.0
  %3878 = vmatprep.subr.mxu0 0.0
  %3879 = vmatpush1.msra.mxu0 0.0
  %3880 = vmatprep.subr.mxu0 0.0
  %3881 = vmatpush1.msra.mxu0 0.0
  %3882 = vmatprep.subr.mxu0 0.0
  %3883 = vmatpush1.msra.mxu0 0.0
  %3884 = vmatprep.subr.mxu0 0.0
  %3885 = vmatpush1.msra.mxu0 0.0
  %3886 = vmatprep.subr.mxu0 0.0
  %3887 = vmatpush1.msra.mxu0 0.0
  %3888 = vmatprep.subr.mxu0 0.0
  %3889 = vmatpush1.msra.mxu0 0.0
  %3890 = vmatprep.subr.mxu0 0.0
  %3891 = vmatpush1.msra.mxu0 0.0
  %3892 = vmatprep.subr.mxu0 0.0
  %3893 = vmatpush1.msra.mxu0 0.0
  %3894 = vmatprep.subr.mxu0 0.0
  %3895 = vmatpush1.msra.mxu0 0.0
  %3896 = vmatprep.subr.mxu0 0.0
  %3897 = vmatpush1.msra.mxu0 0.0
  %3898 = vmatprep.subr.mxu0 0.0
  %3899 = vmatpush1.msra.mxu0 0.0
  %3900 = vmatprep.subr.mxu0 0.0
  %3901 = vmatpush1.msra.mxu0 0.0
  %3902 = vmatprep.subr.mxu0 0.0
  %3903 = vmatpush1.msra.mxu0 0.0
  %3904 = vmatprep.subr.mxu0 0.0
  %3905 = vmatpush1.msra.mxu0 0.0
  %3906 = vmatprep.subr.mxu0 0.0
  %3907 = vmatpush1.msra.mxu0 0.0
  %3908 = vmatprep.subr.mxu0 0.0
  %3909 = vmatpush1.msra.mxu0 0.0
  %3910 = vmatprep.subr.mxu0 0.0
  %3911 = vmatpush1.msra.mxu0 0.0
  %3912 = vmatprep.subr.mxu0 0.0
  %3913 = vmatpush1.msra.mxu0 0.0
  %3914 = vmatprep.subr.mxu0 0.0
  %3915 = vmatpush1.msra.mxu0 0.0
  %3916 = vmatprep.subr.mxu0 0.0
  %3917 = vmatpush1.msra.mxu0 0.0
  %3918 = vmatprep.subr.mxu0 0.0
  %3919 = vmatpush1.msra.mxu0 0.0
  %3920 = vmatprep.subr.mxu0 0.0
  %3921 = vmatpush1.msra.mxu0 0.0
  %3922 = vmatprep.subr.mxu0 0.0
  %3923 = vmatpush1.msra.mxu0 0.0
  %3924 = vmatprep.subr.mxu0 0.0
  %3925 = vmatpush1.msra.mxu0 0.0
  %3926 = vmatprep.subr.mxu0 0.0
  %3927 = vmatpush1.msra.mxu0 0.0
  %3928 = vmatprep.subr.mxu0 0.0
  %3929 = vmatpush1.msra.mxu0 0.0
  %3930 = vmatprep.subr.mxu0 0.0
  %3931 = vmatpush1.msra.mxu0 0.0
  %3932 = vmatprep.subr.mxu0 0.0
  %3933 = vmatpush1.msra.mxu0 0.0
  %3934 = vmatprep.mubr.f32.mxu0 0.0
  %3935 = vmatmul.mubr.f32.gmra.mrb[0].mxu0 %v3865
  %v3936 = vpop.f32.mrb[0].mxu0
  %v3937 = vadd.f32 %v3856, %v3936
  %v3938 = vpop.f32.mrb[0].mxu0
  %3939 = vmatprep.mubr.f32.mxu0 0.0
  %3940 = vmatmul.mubr.f32.gmra.mrb[0].mxu0 %v3868
  %v3941 = vpop.f32.mrb[0].mxu0
  %v3942 = vadd.f32 %v3861, %v3941
  %v3943 = vpop.f32.mrb[0].mxu0
  %3944 = vdwg.mxu0
  %3945 = vrot.lane.b32.xlu0 %v3359, 112
  %v3946 = vpop.permute.xlu0 %3945
  %3947 = vrot.lane.b32.xlu0 %v3364, 112
  %v3948 = vpop.permute.xlu0 %3947
  %3949 = vrot.lane.b32.xlu0 %v3359, 80
  %v3950 = vpop.permute.xlu0 %3949
  %3951 = vrot.lane.b32.xlu0 %v3364, 80
  %v3952 = vpop.permute.xlu0 %3951
  %v3953 = vsel %vm586, %v3946, 0
  %v3955 = vsel %vm586, %v3948, 0
  %v3957 = vsel %vm586, %v3950, 0
  %v3959 = vsel %vm586, %v3952, 0
  %3961 = vmatprep.subr.mxu0 0.0
  %3962 = vmatpush1.xpose.msra.mxu0 %v3957
  %3963 = vmatprep.subr.mxu0 0.0
  %3964 = vmatpush1.xpose.msra.mxu0 %v3959
  %3965 = vmatprep.subr.mxu0 0.0
  %3966 = vmatpush1.xpose.msra.mxu0 0.0
  %3967 = vmatprep.subr.mxu0 0.0
  %3968 = vmatpush1.xpose.msra.mxu0 0.0
  %3969 = vmatprep.subr.mxu0 0.0
  %3970 = vmatpush1.xpose.msra.mxu0 0.0
  %3971 = vmatprep.subr.mxu0 0.0
  %3972 = vmatpush1.xpose.msra.mxu0 0.0
  %3973 = vmatprep.subr.mxu0 0.0
  %3974 = vmatpush1.xpose.msra.mxu0 0.0
  %3975 = vmatprep.subr.mxu0 0.0
  %3976 = vmatpush1.xpose.msra.mxu0 0.0
  %3977 = vmatprep.subr.mxu0 0.0
  %3978 = vmatpush1.xpose.msra.mxu0 0.0
  %3979 = vmatprep.subr.mxu0 0.0
  %3980 = vmatpush1.xpose.msra.mxu0 0.0
  %3981 = vmatprep.subr.mxu0 0.0
  %3982 = vmatpush1.xpose.msra.mxu0 0.0
  %3983 = vmatprep.subr.mxu0 0.0
  %3984 = vmatpush1.xpose.msra.mxu0 0.0
  %3985 = vmatprep.subr.mxu0 0.0
  %3986 = vmatpush1.xpose.msra.mxu0 0.0
  %3987 = vmatprep.subr.mxu0 0.0
  %3988 = vmatpush1.xpose.msra.mxu0 0.0
  %3989 = vmatprep.subr.mxu0 0.0
  %3990 = vmatpush1.xpose.msra.mxu0 0.0
  %3991 = vmatprep.subr.mxu0 0.0
  %3992 = vmatpush1.xpose.msra.mxu0 0.0
  %3993 = vmatprep.subr.mxu0 0.0
  %3994 = vmatpush1.xpose.msra.mxu0 0.0
  %3995 = vmatprep.subr.mxu0 0.0
  %3996 = vmatpush1.xpose.msra.mxu0 0.0
  %3997 = vmatprep.subr.mxu0 0.0
  %3998 = vmatpush1.xpose.msra.mxu0 0.0
  %3999 = vmatprep.subr.mxu0 0.0
  %4000 = vmatpush1.xpose.msra.mxu0 0.0
  %4001 = vmatprep.subr.mxu0 0.0
  %4002 = vmatpush1.xpose.msra.mxu0 0.0
  %4003 = vmatprep.subr.mxu0 0.0
  %4004 = vmatpush1.xpose.msra.mxu0 0.0
  %4005 = vmatprep.subr.mxu0 0.0
  %4006 = vmatpush1.xpose.msra.mxu0 0.0
  %4007 = vmatprep.subr.mxu0 0.0
  %4008 = vmatpush1.xpose.msra.mxu0 0.0
  %4009 = vmatprep.subr.mxu0 0.0
  %4010 = vmatpush1.xpose.msra.mxu0 0.0
  %4011 = vmatprep.subr.mxu0 0.0
  %4012 = vmatpush1.xpose.msra.mxu0 0.0
  %4013 = vmatprep.subr.mxu0 0.0
  %4014 = vmatpush1.xpose.msra.mxu0 0.0
  %4015 = vmatprep.subr.mxu0 0.0
  %4016 = vmatpush1.xpose.msra.mxu0 0.0
  %4017 = vmatprep.subr.mxu0 0.0
  %4018 = vmatpush1.xpose.msra.mxu0 0.0
  %4019 = vmatprep.subr.mxu0 0.0
  %4020 = vmatpush1.xpose.msra.mxu0 0.0
  %4021 = vmatprep.subr.mxu0 0.0
  %4022 = vmatpush1.xpose.msra.mxu0 0.0
  %4023 = vmatprep.subr.mxu0 0.0
  %4024 = vmatpush1.xpose.msra.mxu0 0.0
  %4025 = vmatprep.mubr.f32.mxu0 0.0
  %4026 = vmatmul.mubr.f32.gmra.mrb[0].mxu0 %v3953
  %v4027 = vpop.f32.mrb[0].mxu0
  %v4028 = vadd.f32 0.0, %v4027
  %v4029 = vpop.f32.mrb[0].mxu0
  %4030 = vmatprep.mubr.f32.mxu0 0.0
  %4031 = vmatmul.mubr.f32.gmra.mrb[0].mxu0 %v3955
  %v4032 = vpop.f32.mrb[0].mxu0
  %v4033 = vadd.f32 0.0, %v4032
  %v4034 = vpop.f32.mrb[0].mxu0
  %4035 = vdwg.mxu0
  %v4036 = vmul.f32 %v4028, 0.35355338
  %v4037 = vmul.f32 %v4033, 0.35355338
  %v4038 = vsel %vm672, %v4036, -inf
  %4039 = vmax.xlane.f32.xlu0 %v4038
  %v4040 = vpop.xlane.xlu0 %4039
  %v4041 = vsel %vm672, %v4037, -inf
  %4042 = vmax.xlane.f32.xlu0 %v4041
  %v4043 = vpop.xlane.xlu0 %4042
  %v4044 = vsub.f32 %v4036, %v4040
  %v4045 = vsub.f32 %v4037, %v4043
  %v4046 = vmul.f32 %v4044, 1.442695
  %v4047 = vpow.pop %v4046
  %v4048 = vmul.f32 %v4045, 1.442695
  %v4049 = vpow.pop %v4048
  %v4050 = vsel %vm672, %v4047, 0.0
  %4051 = vadd.xlane.f32.xlu0 %v4050
  %v4052 = vpop.xlane.xlu0 %4051
  %v4053 = vsel %vm672, %v4049, 0.0
  %4054 = vadd.xlane.f32.xlu0 %v4053
  %v4055 = vpop.xlane.xlu0 %4054
  %v4056 = vrcp.pop %v4052
  %v4057 = vrcp.pop %v4055
  %v4058 = vmul.f32 %v4047, %v4056
  %v4059 = vmul.f32 %v4049, %v4057
  %4060 = vrot.lane.b32.xlu0 %v3359, 48
  %v4061 = vpop.permute.xlu0 %4060
  %4062 = vrot.lane.b32.xlu0 %v3364, 48
  %v4063 = vpop.permute.xlu0 %4062
  %v4067 = vsel %vm672, %v4058, 0
  %v4070 = vsel %vm672, %v4059, 0
  %4072 = vmatprep.subr.mxu0 0.0
  %4073 = vmatpush1.msra.mxu0 %v4061
  %4074 = vmatprep.subr.mxu0 0.0
  %4075 = vmatpush1.msra.mxu0 %v4063
  %4076 = vmatprep.subr.mxu0 0.0
  %4077 = vmatpush1.msra.mxu0 0.0
  %4078 = vmatprep.subr.mxu0 0.0
  %4079 = vmatpush1.msra.mxu0 0.0
  %4080 = vmatprep.subr.mxu0 0.0
  %4081 = vmatpush1.msra.mxu0 0.0
  %4082 = vmatprep.subr.mxu0 0.0
  %4083 = vmatpush1.msra.mxu0 0.0
  %4084 = vmatprep.subr.mxu0 0.0
  %4085 = vmatpush1.msra.mxu0 0.0
  %4086 = vmatprep.subr.mxu0 0.0
  %4087 = vmatpush1.msra.mxu0 0.0
  %4088 = vmatprep.subr.mxu0 0.0
  %4089 = vmatpush1.msra.mxu0 0.0
  %4090 = vmatprep.subr.mxu0 0.0
  %4091 = vmatpush1.msra.mxu0 0.0
  %4092 = vmatprep.subr.mxu0 0.0
  %4093 = vmatpush1.msra.mxu0 0.0
  %4094 = vmatprep.subr.mxu0 0.0
  %4095 = vmatpush1.msra.mxu0 0.0
  %4096 = vmatprep.subr.mxu0 0.0
  %4097 = vmatpush1.msra.mxu0 0.0
  %4098 = vmatprep.subr.mxu0 0.0
  %4099 = vmatpush1.msra.mxu0 0.0
  %4100 = vmatprep.subr.mxu0 0.0
  %4101 = vmatpush1.msra.mxu0 0.0
  %4102 = vmatprep.subr.mxu0 0.0
  %4103 = vmatpush1.msra.mxu0 0.0
  %4104 = vmatprep.subr.mxu0 0.0
  %4105 = vmatpush1.msra.mxu0 0.0
  %4106 = vmatprep.subr.mxu0 0.0
  %4107 = vmatpush1.msra.mxu0 0.0
  %4108 = vmatprep.subr.mxu0 0.0
  %4109 = vmatpush1.msra.mxu0 0.0
  %4110 = vmatprep.subr.mxu0 0.0
  %4111 = vmatpush1.msra.mxu0 0.0
  %4112 = vmatprep.subr.mxu0 0.0
  %4113 = vmatpush1.msra.mxu0 0.0
  %4114 = vmatprep.subr.mxu0 0.0
  %4115 = vmatpush1.msra.mxu0 0.0
  %4116 = vmatprep.subr.mxu0 0.0
  %4117 = vmatpush1.msra.mxu0 0.0
  %4118 = vmatprep.subr.mxu0 0.0
  %4119 = vmatpush1.msra.mxu0 0.0
  %4120 = vmatprep.subr.mxu0 0.0
  %4121 = vmatpush1.msra.mxu0 0.0
  %4122 = vmatprep.subr.mxu0 0.0
  %4123 = vmatpush1.msra.mxu0 0.0
  %4124 = vmatprep.subr.mxu0 0.0
  %4125 = vmatpush1.msra.mxu0 0.0
  %4126 = vmatprep.subr.mxu0 0.0
  %4127 = vmatpush1.msra.mxu0 0.0
  %4128 = vmatprep.subr.mxu0 0.0
  %4129 = vmatpush1.msra.mxu0 0.0
  %4130 = vmatprep.subr.mxu0 0.0
  %4131 = vmatpush1.msra.mxu0 0.0
  %4132 = vmatprep.subr.mxu0 0.0
  %4133 = vmatpush1.msra.mxu0 0.0
  %4134 = vmatprep.subr.mxu0 0.0
  %4135 = vmatpush1.msra.mxu0 0.0
  %4136 = vmatprep.mubr.f32.mxu0 0.0
  %4137 = vmatmul.mubr.f32.gmra.mrb[0].mxu0 %v4067
  %v4138 = vpop.f32.mrb[0].mxu0
  %v4139 = vadd.f32 0.0, %v4138
  %v4140 = vpop.f32.mrb[0].mxu0
  %4141 = vmatprep.mubr.f32.mxu0 0.0
  %4142 = vmatmul.mubr.f32.gmra.mrb[0].mxu0 %v4070
  %v4143 = vpop.f32.mrb[0].mxu0
  %v4144 = vadd.f32 0.0, %v4143
  %v4145 = vpop.f32.mrb[0].mxu0
  %4146 = vdwg.mxu0
  %v4148 = vsel %vm586, %v4139, 0
  %v4151 = vsel %vm586, %v4144, 0
  %4153 = vmatprep.subr.mxu0 0.0
  %4154 = vmatpush1.msra.mxu0 %v3379
  %4155 = vmatprep.subr.mxu0 0.0
  %4156 = vmatpush1.msra.mxu0 0.0
  %4157 = vmatprep.subr.mxu0 0.0
  %4158 = vmatpush1.msra.mxu0 0.0
  %4159 = vmatprep.subr.mxu0 0.0
  %4160 = vmatpush1.msra.mxu0 0.0
  %4161 = vmatprep.subr.mxu0 0.0
  %4162 = vmatpush1.msra.mxu0 0.0
  %4163 = vmatprep.subr.mxu0 0.0
  %4164 = vmatpush1.msra.mxu0 0.0
  %4165 = vmatprep.subr.mxu0 0.0
  %4166 = vmatpush1.msra.mxu0 0.0
  %4167 = vmatprep.subr.mxu0 0.0
  %4168 = vmatpush1.msra.mxu0 0.0
  %4169 = vmatprep.subr.mxu0 0.0
  %4170 = vmatpush1.msra.mxu0 0.0
  %4171 = vmatprep.subr.mxu0 0.0
  %4172 = vmatpush1.msra.mxu0 0.0
  %4173 = vmatprep.subr.mxu0 0.0
  %4174 = vmatpush1.msra.mxu0 0.0
  %4175 = vmatprep.subr.mxu0 0.0
  %4176 = vmatpush1.msra.mxu0 0.0
  %4177 = vmatprep.subr.mxu0 0.0
  %4178 = vmatpush1.msra.mxu0 0.0
  %4179 = vmatprep.subr.mxu0 0.0
  %4180 = vmatpush1.msra.mxu0 0.0
  %4181 = vmatprep.subr.mxu0 0.0
  %4182 = vmatpush1.msra.mxu0 0.0
  %4183 = vmatprep.subr.mxu0 0.0
  %4184 = vmatpush1.msra.mxu0 0.0
  %4185 = vmatprep.subr.mxu0 0.0
  %4186 = vmatpush1.msra.mxu0 0.0
  %4187 = vmatprep.subr.mxu0 0.0
  %4188 = vmatpush1.msra.mxu0 0.0
  %4189 = vmatprep.subr.mxu0 0.0
  %4190 = vmatpush1.msra.mxu0 0.0
  %4191 = vmatprep.subr.mxu0 0.0
  %4192 = vmatpush1.msra.mxu0 0.0
  %4193 = vmatprep.subr.mxu0 0.0
  %4194 = vmatpush1.msra.mxu0 0.0
  %4195 = vmatprep.subr.mxu0 0.0
  %4196 = vmatpush1.msra.mxu0 0.0
  %4197 = vmatprep.subr.mxu0 0.0
  %4198 = vmatpush1.msra.mxu0 0.0
  %4199 = vmatprep.subr.mxu0 0.0
  %4200 = vmatpush1.msra.mxu0 0.0
  %4201 = vmatprep.subr.mxu0 0.0
  %4202 = vmatpush1.msra.mxu0 0.0
  %4203 = vmatprep.subr.mxu0 0.0
  %4204 = vmatpush1.msra.mxu0 0.0
  %4205 = vmatprep.subr.mxu0 0.0
  %4206 = vmatpush1.msra.mxu0 0.0
  %4207 = vmatprep.subr.mxu0 0.0
  %4208 = vmatpush1.msra.mxu0 0.0
  %4209 = vmatprep.subr.mxu0 0.0
  %4210 = vmatpush1.msra.mxu0 0.0
  %4211 = vmatprep.subr.mxu0 0.0
  %4212 = vmatpush1.msra.mxu0 0.0
  %4213 = vmatprep.subr.mxu0 0.0
  %4214 = vmatpush1.msra.mxu0 0.0
  %4215 = vmatprep.subr.mxu0 0.0
  %4216 = vmatpush1.msra.mxu0 0.0
  %4217 = vmatprep.mubr.f32.mxu0 0.0
  %4218 = vmatmul.mubr.f32.gmra.mrb[0].mxu0 %v4148
  %v4219 = vpop.f32.mrb[0].mxu0
  %v4220 = vadd.f32 0.0, %v4219
  %v4221 = vpop.f32.mrb[0].mxu0
  %4222 = vmatprep.mubr.f32.mxu0 0.0
  %4223 = vmatmul.mubr.f32.gmra.mrb[0].mxu0 %v4151
  %v4224 = vpop.f32.mrb[0].mxu0
  %v4225 = vadd.f32 0.0, %v4224
  %v4226 = vpop.f32.mrb[0].mxu0
  %4227 = vdwg.mxu0
  %v4228 = vadd.f32 %v3937, %v4220
  %v4229 = vadd.f32 %v3942, %v4225
  %4230 = vrot.lane.b32.xlu0 %v3359, 104
  %v4231 = vpop.permute.xlu0 %4230
  %4232 = vrot.lane.b32.xlu0 %v3364, 104
  %v4233 = vpop.permute.xlu0 %4232
  %4234 = vrot.lane.b32.xlu0 %v3359, 72
  %v4235 = vpop.permute.xlu0 %4234
  %4236 = vrot.lane.b32.xlu0 %v3364, 72
  %v4237 = vpop.permute.xlu0 %4236
  %v4238 = vsel %vm586, %v4231, 0
  %v4240 = vsel %vm586, %v4233, 0
  %v4242 = vsel %vm586, %v4235, 0
  %v4244 = vsel %vm586, %v4237, 0
  %4246 = vmatprep.subr.mxu0 0.0
  %4247 = vmatpush1.xpose.msra.mxu0 %v4242
  %4248 = vmatprep.subr.mxu0 0.0
  %4249 = vmatpush1.xpose.msra.mxu0 %v4244
  %4250 = vmatprep.subr.mxu0 0.0
  %4251 = vmatpush1.xpose.msra.mxu0 0.0
  %4252 = vmatprep.subr.mxu0 0.0
  %4253 = vmatpush1.xpose.msra.mxu0 0.0
  %4254 = vmatprep.subr.mxu0 0.0
  %4255 = vmatpush1.xpose.msra.mxu0 0.0
  %4256 = vmatprep.subr.mxu0 0.0
  %4257 = vmatpush1.xpose.msra.mxu0 0.0
  %4258 = vmatprep.subr.mxu0 0.0
  %4259 = vmatpush1.xpose.msra.mxu0 0.0
  %4260 = vmatprep.subr.mxu0 0.0
  %4261 = vmatpush1.xpose.msra.mxu0 0.0
  %4262 = vmatprep.subr.mxu0 0.0
  %4263 = vmatpush1.xpose.msra.mxu0 0.0
  %4264 = vmatprep.subr.mxu0 0.0
  %4265 = vmatpush1.xpose.msra.mxu0 0.0
  %4266 = vmatprep.subr.mxu0 0.0
  %4267 = vmatpush1.xpose.msra.mxu0 0.0
  %4268 = vmatprep.subr.mxu0 0.0
  %4269 = vmatpush1.xpose.msra.mxu0 0.0
  %4270 = vmatprep.subr.mxu0 0.0
  %4271 = vmatpush1.xpose.msra.mxu0 0.0
  %4272 = vmatprep.subr.mxu0 0.0
  %4273 = vmatpush1.xpose.msra.mxu0 0.0
  %4274 = vmatprep.subr.mxu0 0.0
  %4275 = vmatpush1.xpose.msra.mxu0 0.0
  %4276 = vmatprep.subr.mxu0 0.0
  %4277 = vmatpush1.xpose.msra.mxu0 0.0
  %4278 = vmatprep.subr.mxu0 0.0
  %4279 = vmatpush1.xpose.msra.mxu0 0.0
  %4280 = vmatprep.subr.mxu0 0.0
  %4281 = vmatpush1.xpose.msra.mxu0 0.0
  %4282 = vmatprep.subr.mxu0 0.0
  %4283 = vmatpush1.xpose.msra.mxu0 0.0
  %4284 = vmatprep.subr.mxu0 0.0
  %4285 = vmatpush1.xpose.msra.mxu0 0.0
  %4286 = vmatprep.subr.mxu0 0.0
  %4287 = vmatpush1.xpose.msra.mxu0 0.0
  %4288 = vmatprep.subr.mxu0 0.0
  %4289 = vmatpush1.xpose.msra.mxu0 0.0
  %4290 = vmatprep.subr.mxu0 0.0
  %4291 = vmatpush1.xpose.msra.mxu0 0.0
  %4292 = vmatprep.subr.mxu0 0.0
  %4293 = vmatpush1.xpose.msra.mxu0 0.0
  %4294 = vmatprep.subr.mxu0 0.0
  %4295 = vmatpush1.xpose.msra.mxu0 0.0
  %4296 = vmatprep.subr.mxu0 0.0
  %4297 = vmatpush1.xpose.msra.mxu0 0.0
  %4298 = vmatprep.subr.mxu0 0.0
  %4299 = vmatpush1.xpose.msra.mxu0 0.0
  %4300 = vmatprep.subr.mxu0 0.0
  %4301 = vmatpush1.xpose.msra.mxu0 0.0
  %4302 = vmatprep.subr.mxu0 0.0
  %4303 = vmatpush1.xpose.msra.mxu0 0.0
  %4304 = vmatprep.subr.mxu0 0.0
  %4305 = vmatpush1.xpose.msra.mxu0 0.0
  %4306 = vmatprep.subr.mxu0 0.0
  %4307 = vmatpush1.xpose.msra.mxu0 0.0
  %4308 = vmatprep.subr.mxu0 0.0
  %4309 = vmatpush1.xpose.msra.mxu0 0.0
  %4310 = vmatprep.mubr.f32.mxu0 0.0
  %4311 = vmatmul.mubr.f32.gmra.mrb[0].mxu0 %v4238
  %v4312 = vpop.f32.mrb[0].mxu0
  %v4313 = vadd.f32 0.0, %v4312
  %v4314 = vpop.f32.mrb[0].mxu0
  %4315 = vmatprep.mubr.f32.mxu0 0.0
  %4316 = vmatmul.mubr.f32.gmra.mrb[0].mxu0 %v4240
  %v4317 = vpop.f32.mrb[0].mxu0
  %v4318 = vadd.f32 0.0, %v4317
  %v4319 = vpop.f32.mrb[0].mxu0
  %4320 = vdwg.mxu0
  %v4321 = vmul.f32 %v4313, 0.35355338
  %v4322 = vmul.f32 %v4318, 0.35355338
  %v4323 = vsel %vm672, %v4321, -inf
  %4324 = vmax.xlane.f32.xlu0 %v4323
  %v4325 = vpop.xlane.xlu0 %4324
  %v4326 = vsel %vm672, %v4322, -inf
  %4327 = vmax.xlane.f32.xlu0 %v4326
  %v4328 = vpop.xlane.xlu0 %4327
  %v4329 = vsub.f32 %v4321, %v4325
  %v4330 = vsub.f32 %v4322, %v4328
  %v4331 = vmul.f32 %v4329, 1.442695
  %v4332 = vpow.pop %v4331
  %v4333 = vmul.f32 %v4330, 1.442695
  %v4334 = vpow.pop %v4333
  %v4335 = vsel %vm672, %v4332, 0.0
  %4336 = vadd.xlane.f32.xlu0 %v4335
  %v4337 = vpop.xlane.xlu0 %4336
  %v4338 = vsel %vm672, %v4334, 0.0
  %4339 = vadd.xlane.f32.xlu0 %v4338
  %v4340 = vpop.xlane.xlu0 %4339
  %v4341 = vrcp.pop %v4337
  %v4342 = vrcp.pop %v4340
  %v4343 = vmul.f32 %v4332, %v4341
  %v4344 = vmul.f32 %v4334, %v4342
  %4345 = vrot.lane.b32.xlu0 %v3359, 40
  %v4346 = vpop.permute.xlu0 %4345
  %4347 = vrot.lane.b32.xlu0 %v3364, 40
  %v4348 = vpop.permute.xlu0 %4347
  %v4352 = vsel %vm672, %v4343, 0
  %v4355 = vsel %vm672, %v4344, 0
  %4357 = vmatprep.subr.mxu0 0.0
  %4358 = vmatpush1.msra.mxu0 %v4346
  %4359 = vmatprep.subr.mxu0 0.0
  %4360 = vmatpush1.msra.mxu0 %v4348
  %4361 = vmatprep.subr.mxu0 0.0
  %4362 = vmatpush1.msra.mxu0 0.0
  %4363 = vmatprep.subr.mxu0 0.0
  %4364 = vmatpush1.msra.mxu0 0.0
  %4365 = vmatprep.subr.mxu0 0.0
  %4366 = vmatpush1.msra.mxu0 0.0
  %4367 = vmatprep.subr.mxu0 0.0
  %4368 = vmatpush1.msra.mxu0 0.0
  %4369 = vmatprep.subr.mxu0 0.0
  %4370 = vmatpush1.msra.mxu0 0.0
  %4371 = vmatprep.subr.mxu0 0.0
  %4372 = vmatpush1.msra.mxu0 0.0
  %4373 = vmatprep.subr.mxu0 0.0
  %4374 = vmatpush1.msra.mxu0 0.0
  %4375 = vmatprep.subr.mxu0 0.0
  %4376 = vmatpush1.msra.mxu0 0.0
  %4377 = vmatprep.subr.mxu0 0.0
  %4378 = vmatpush1.msra.mxu0 0.0
  %4379 = vmatprep.subr.mxu0 0.0
  %4380 = vmatpush1.msra.mxu0 0.0
  %4381 = vmatprep.subr.mxu0 0.0
  %4382 = vmatpush1.msra.mxu0 0.0
  %4383 = vmatprep.subr.mxu0 0.0
  %4384 = vmatpush1.msra.mxu0 0.0
  %4385 = vmatprep.subr.mxu0 0.0
  %4386 = vmatpush1.msra.mxu0 0.0
  %4387 = vmatprep.subr.mxu0 0.0
  %4388 = vmatpush1.msra.mxu0 0.0
  %4389 = vmatprep.subr.mxu0 0.0
  %4390 = vmatpush1.msra.mxu0 0.0
  %4391 = vmatprep.subr.mxu0 0.0
  %4392 = vmatpush1.msra.mxu0 0.0
  %4393 = vmatprep.subr.mxu0 0.0
  %4394 = vmatpush1.msra.mxu0 0.0
  %4395 = vmatprep.subr.mxu0 0.0
  %4396 = vmatpush1.msra.mxu0 0.0
  %4397 = vmatprep.subr.mxu0 0.0
  %4398 = vmatpush1.msra.mxu0 0.0
  %4399 = vmatprep.subr.mxu0 0.0
  %4400 = vmatpush1.msra.mxu0 0.0
  %4401 = vmatprep.subr.mxu0 0.0
  %4402 = vmatpush1.msra.mxu0 0.0
  %4403 = vmatprep.subr.mxu0 0.0
  %4404 = vmatpush1.msra.mxu0 0.0
  %4405 = vmatprep.subr.mxu0 0.0
  %4406 = vmatpush1.msra.mxu0 0.0
  %4407 = vmatprep.subr.mxu0 0.0
  %4408 = vmatpush1.msra.mxu0 0.0
  %4409 = vmatprep.subr.mxu0 0.0
  %4410 = vmatpush1.msra.mxu0 0.0
  %4411 = vmatprep.subr.mxu0 0.0
  %4412 = vmatpush1.msra.mxu0 0.0
  %4413 = vmatprep.subr.mxu0 0.0
  %4414 = vmatpush1.msra.mxu0 0.0
  %4415 = vmatprep.subr.mxu0 0.0
  %4416 = vmatpush1.msra.mxu0 0.0
  %4417 = vmatprep.subr.mxu0 0.0
  %4418 = vmatpush1.msra.mxu0 0.0
  %4419 = vmatprep.subr.mxu0 0.0
  %4420 = vmatpush1.msra.mxu0 0.0
  %4421 = vmatprep.mubr.f32.mxu0 0.0
  %4422 = vmatmul.mubr.f32.gmra.mrb[0].mxu0 %v4352
  %v4423 = vpop.f32.mrb[0].mxu0
  %v4424 = vadd.f32 0.0, %v4423
  %v4425 = vpop.f32.mrb[0].mxu0
  %4426 = vmatprep.mubr.f32.mxu0 0.0
  %4427 = vmatmul.mubr.f32.gmra.mrb[0].mxu0 %v4355
  %v4428 = vpop.f32.mrb[0].mxu0
  %v4429 = vadd.f32 0.0, %v4428
  %v4430 = vpop.f32.mrb[0].mxu0
  %4431 = vdwg.mxu0
  %v4433 = vsel %vm586, %v4424, 0
  %v4436 = vsel %vm586, %v4429, 0
  %4438 = vmatprep.subr.mxu0 0.0
  %4439 = vmatpush1.msra.mxu0 %v3380
  %4440 = vmatprep.subr.mxu0 0.0
  %4441 = vmatpush1.msra.mxu0 0.0
  %4442 = vmatprep.subr.mxu0 0.0
  %4443 = vmatpush1.msra.mxu0 0.0
  %4444 = vmatprep.subr.mxu0 0.0
  %4445 = vmatpush1.msra.mxu0 0.0
  %4446 = vmatprep.subr.mxu0 0.0
  %4447 = vmatpush1.msra.mxu0 0.0
  %4448 = vmatprep.subr.mxu0 0.0
  %4449 = vmatpush1.msra.mxu0 0.0
  %4450 = vmatprep.subr.mxu0 0.0
  %4451 = vmatpush1.msra.mxu0 0.0
  %4452 = vmatprep.subr.mxu0 0.0
  %4453 = vmatpush1.msra.mxu0 0.0
  %4454 = vmatprep.subr.mxu0 0.0
  %4455 = vmatpush1.msra.mxu0 0.0
  %4456 = vmatprep.subr.mxu0 0.0
  %4457 = vmatpush1.msra.mxu0 0.0
  %4458 = vmatprep.subr.mxu0 0.0
  %4459 = vmatpush1.msra.mxu0 0.0
  %4460 = vmatprep.subr.mxu0 0.0
  %4461 = vmatpush1.msra.mxu0 0.0
  %4462 = vmatprep.subr.mxu0 0.0
  %4463 = vmatpush1.msra.mxu0 0.0
  %4464 = vmatprep.subr.mxu0 0.0
  %4465 = vmatpush1.msra.mxu0 0.0
  %4466 = vmatprep.subr.mxu0 0.0
  %4467 = vmatpush1.msra.mxu0 0.0
  %4468 = vmatprep.subr.mxu0 0.0
  %4469 = vmatpush1.msra.mxu0 0.0
  %4470 = vmatprep.subr.mxu0 0.0
  %4471 = vmatpush1.msra.mxu0 0.0
  %4472 = vmatprep.subr.mxu0 0.0
  %4473 = vmatpush1.msra.mxu0 0.0
  %4474 = vmatprep.subr.mxu0 0.0
  %4475 = vmatpush1.msra.mxu0 0.0
  %4476 = vmatprep.subr.mxu0 0.0
  %4477 = vmatpush1.msra.mxu0 0.0
  %4478 = vmatprep.subr.mxu0 0.0
  %4479 = vmatpush1.msra.mxu0 0.0
  %4480 = vmatprep.subr.mxu0 0.0
  %4481 = vmatpush1.msra.mxu0 0.0
  %4482 = vmatprep.subr.mxu0 0.0
  %4483 = vmatpush1.msra.mxu0 0.0
  %4484 = vmatprep.subr.mxu0 0.0
  %4485 = vmatpush1.msra.mxu0 0.0
  %4486 = vmatprep.subr.mxu0 0.0
  %4487 = vmatpush1.msra.mxu0 0.0
  %4488 = vmatprep.subr.mxu0 0.0
  %4489 = vmatpush1.msra.mxu0 0.0
  %4490 = vmatprep.subr.mxu0 0.0
  %4491 = vmatpush1.msra.mxu0 0.0
  %4492 = vmatprep.subr.mxu0 0.0
  %4493 = vmatpush1.msra.mxu0 0.0
  %4494 = vmatprep.subr.mxu0 0.0
  %4495 = vmatpush1.msra.mxu0 0.0
  %4496 = vmatprep.subr.mxu0 0.0
  %4497 = vmatpush1.msra.mxu0 0.0
  %4498 = vmatprep.subr.mxu0 0.0
  %4499 = vmatpush1.msra.mxu0 0.0
  %4500 = vmatprep.subr.mxu0 0.0
  %4501 = vmatpush1.msra.mxu0 0.0
  %4502 = vmatprep.mubr.f32.mxu0 0.0
  %4503 = vmatmul.mubr.f32.gmra.mrb[0].mxu0 %v4433
  %v4504 = vpop.f32.mrb[0].mxu0
  %v4505 = vadd.f32 0.0, %v4504
  %v4506 = vpop.f32.mrb[0].mxu0
  %4507 = vmatprep.mubr.f32.mxu0 0.0
  %4508 = vmatmul.mubr.f32.gmra.mrb[0].mxu0 %v4436
  %v4509 = vpop.f32.mrb[0].mxu0
  %v4510 = vadd.f32 0.0, %v4509
  %v4511 = vpop.f32.mrb[0].mxu0
  %4512 = vdwg.mxu0
  %v4513 = vadd.f32 %v4228, %v4505
  %v4514 = vadd.f32 %v4229, %v4510
  %4517 = vrot.lane.b32.xlu0 %v3369, 96
  %v4518 = vpop.permute.xlu0 %4517
  %4519 = vrot.lane.b32.xlu0 %v3374, 96
  %v4520 = vpop.permute.xlu0 %4519
  %v4521 = vsel %vm586, %v3369, 0
  %v4523 = vsel %vm586, %v3374, 0
  %v4525 = vsel %vm586, %v4518, 0
  %v4527 = vsel %vm586, %v4520, 0
  %4529 = vmatprep.subr.mxu0 0.0
  %4530 = vmatpush1.xpose.msra.mxu0 %v4525
  %4531 = vmatprep.subr.mxu0 0.0
  %4532 = vmatpush1.xpose.msra.mxu0 %v4527
  %4533 = vmatprep.subr.mxu0 0.0
  %4534 = vmatpush1.xpose.msra.mxu0 0.0
  %4535 = vmatprep.subr.mxu0 0.0
  %4536 = vmatpush1.xpose.msra.mxu0 0.0
  %4537 = vmatprep.subr.mxu0 0.0
  %4538 = vmatpush1.xpose.msra.mxu0 0.0
  %4539 = vmatprep.subr.mxu0 0.0
  %4540 = vmatpush1.xpose.msra.mxu0 0.0
  %4541 = vmatprep.subr.mxu0 0.0
  %4542 = vmatpush1.xpose.msra.mxu0 0.0
  %4543 = vmatprep.subr.mxu0 0.0
  %4544 = vmatpush1.xpose.msra.mxu0 0.0
  %4545 = vmatprep.subr.mxu0 0.0
  %4546 = vmatpush1.xpose.msra.mxu0 0.0
  %4547 = vmatprep.subr.mxu0 0.0
  %4548 = vmatpush1.xpose.msra.mxu0 0.0
  %4549 = vmatprep.subr.mxu0 0.0
  %4550 = vmatpush1.xpose.msra.mxu0 0.0
  %4551 = vmatprep.subr.mxu0 0.0
  %4552 = vmatpush1.xpose.msra.mxu0 0.0
  %4553 = vmatprep.subr.mxu0 0.0
  %4554 = vmatpush1.xpose.msra.mxu0 0.0
  %4555 = vmatprep.subr.mxu0 0.0
  %4556 = vmatpush1.xpose.msra.mxu0 0.0
  %4557 = vmatprep.subr.mxu0 0.0
  %4558 = vmatpush1.xpose.msra.mxu0 0.0
  %4559 = vmatprep.subr.mxu0 0.0
  %4560 = vmatpush1.xpose.msra.mxu0 0.0
  %4561 = vmatprep.subr.mxu0 0.0
  %4562 = vmatpush1.xpose.msra.mxu0 0.0
  %4563 = vmatprep.subr.mxu0 0.0
  %4564 = vmatpush1.xpose.msra.mxu0 0.0
  %4565 = vmatprep.subr.mxu0 0.0
  %4566 = vmatpush1.xpose.msra.mxu0 0.0
  %4567 = vmatprep.subr.mxu0 0.0
  %4568 = vmatpush1.xpose.msra.mxu0 0.0
  %4569 = vmatprep.subr.mxu0 0.0
  %4570 = vmatpush1.xpose.msra.mxu0 0.0
  %4571 = vmatprep.subr.mxu0 0.0
  %4572 = vmatpush1.xpose.msra.mxu0 0.0
  %4573 = vmatprep.subr.mxu0 0.0
  %4574 = vmatpush1.xpose.msra.mxu0 0.0
  %4575 = vmatprep.subr.mxu0 0.0
  %4576 = vmatpush1.xpose.msra.mxu0 0.0
  %4577 = vmatprep.subr.mxu0 0.0
  %4578 = vmatpush1.xpose.msra.mxu0 0.0
  %4579 = vmatprep.subr.mxu0 0.0
  %4580 = vmatpush1.xpose.msra.mxu0 0.0
  %4581 = vmatprep.subr.mxu0 0.0
  %4582 = vmatpush1.xpose.msra.mxu0 0.0
  %4583 = vmatprep.subr.mxu0 0.0
  %4584 = vmatpush1.xpose.msra.mxu0 0.0
  %4585 = vmatprep.subr.mxu0 0.0
  %4586 = vmatpush1.xpose.msra.mxu0 0.0
  %4587 = vmatprep.subr.mxu0 0.0
  %4588 = vmatpush1.xpose.msra.mxu0 0.0
  %4589 = vmatprep.subr.mxu0 0.0
  %4590 = vmatpush1.xpose.msra.mxu0 0.0
  %4591 = vmatprep.subr.mxu0 0.0
  %4592 = vmatpush1.xpose.msra.mxu0 0.0
  %4593 = vmatprep.mubr.f32.mxu0 0.0
  %4594 = vmatmul.mubr.f32.gmra.mrb[0].mxu0 %v4521
  %v4595 = vpop.f32.mrb[0].mxu0
  %v4596 = vadd.f32 0.0, %v4595
  %v4597 = vpop.f32.mrb[0].mxu0
  %4598 = vmatprep.mubr.f32.mxu0 0.0
  %4599 = vmatmul.mubr.f32.gmra.mrb[0].mxu0 %v4523
  %v4600 = vpop.f32.mrb[0].mxu0
  %v4601 = vadd.f32 0.0, %v4600
  %v4602 = vpop.f32.mrb[0].mxu0
  %4603 = vdwg.mxu0
  %v4604 = vmul.f32 %v4596, 0.35355338
  %v4605 = vmul.f32 %v4601, 0.35355338
  %v4606 = vsel %vm672, %v4604, -inf
  %4607 = vmax.xlane.f32.xlu0 %v4606
  %v4608 = vpop.xlane.xlu0 %4607
  %v4609 = vsel %vm672, %v4605, -inf
  %4610 = vmax.xlane.f32.xlu0 %v4609
  %v4611 = vpop.xlane.xlu0 %4610
  %v4612 = vsub.f32 %v4604, %v4608
  %v4613 = vsub.f32 %v4605, %v4611
  %v4614 = vmul.f32 %v4612, 1.442695
  %v4615 = vpow.pop %v4614
  %v4616 = vmul.f32 %v4613, 1.442695
  %v4617 = vpow.pop %v4616
  %v4618 = vsel %vm672, %v4615, 0.0
  %4619 = vadd.xlane.f32.xlu0 %v4618
  %v4620 = vpop.xlane.xlu0 %4619
  %v4621 = vsel %vm672, %v4617, 0.0
  %4622 = vadd.xlane.f32.xlu0 %v4621
  %v4623 = vpop.xlane.xlu0 %4622
  %v4624 = vrcp.pop %v4620
  %v4625 = vrcp.pop %v4623
  %v4626 = vmul.f32 %v4615, %v4624
  %v4627 = vmul.f32 %v4617, %v4625
  %4628 = vrot.lane.b32.xlu0 %v3369, 64
  %v4629 = vpop.permute.xlu0 %4628
  %4630 = vrot.lane.b32.xlu0 %v3374, 64
  %v4631 = vpop.permute.xlu0 %4630
  %v4635 = vsel %vm672, %v4626, 0
  %v4638 = vsel %vm672, %v4627, 0
  %4640 = vmatprep.subr.mxu0 0.0
  %4641 = vmatpush1.msra.mxu0 %v4629
  %4642 = vmatprep.subr.mxu0 0.0
  %4643 = vmatpush1.msra.mxu0 %v4631
  %4644 = vmatprep.subr.mxu0 0.0
  %4645 = vmatpush1.msra.mxu0 0.0
  %4646 = vmatprep.subr.mxu0 0.0
  %4647 = vmatpush1.msra.mxu0 0.0
  %4648 = vmatprep.subr.mxu0 0.0
  %4649 = vmatpush1.msra.mxu0 0.0
  %4650 = vmatprep.subr.mxu0 0.0
  %4651 = vmatpush1.msra.mxu0 0.0
  %4652 = vmatprep.subr.mxu0 0.0
  %4653 = vmatpush1.msra.mxu0 0.0
  %4654 = vmatprep.subr.mxu0 0.0
  %4655 = vmatpush1.msra.mxu0 0.0
  %4656 = vmatprep.subr.mxu0 0.0
  %4657 = vmatpush1.msra.mxu0 0.0
  %4658 = vmatprep.subr.mxu0 0.0
  %4659 = vmatpush1.msra.mxu0 0.0
  %4660 = vmatprep.subr.mxu0 0.0
  %4661 = vmatpush1.msra.mxu0 0.0
  %4662 = vmatprep.subr.mxu0 0.0
  %4663 = vmatpush1.msra.mxu0 0.0
  %4664 = vmatprep.subr.mxu0 0.0
  %4665 = vmatpush1.msra.mxu0 0.0
  %4666 = vmatprep.subr.mxu0 0.0
  %4667 = vmatpush1.msra.mxu0 0.0
  %4668 = vmatprep.subr.mxu0 0.0
  %4669 = vmatpush1.msra.mxu0 0.0
  %4670 = vmatprep.subr.mxu0 0.0
  %4671 = vmatpush1.msra.mxu0 0.0
  %4672 = vmatprep.subr.mxu0 0.0
  %4673 = vmatpush1.msra.mxu0 0.0
  %4674 = vmatprep.subr.mxu0 0.0
  %4675 = vmatpush1.msra.mxu0 0.0
  %4676 = vmatprep.subr.mxu0 0.0
  %4677 = vmatpush1.msra.mxu0 0.0
  %4678 = vmatprep.subr.mxu0 0.0
  %4679 = vmatpush1.msra.mxu0 0.0
  %4680 = vmatprep.subr.mxu0 0.0
  %4681 = vmatpush1.msra.mxu0 0.0
  %4682 = vmatprep.subr.mxu0 0.0
  %4683 = vmatpush1.msra.mxu0 0.0
  %4684 = vmatprep.subr.mxu0 0.0
  %4685 = vmatpush1.msra.mxu0 0.0
  %4686 = vmatprep.subr.mxu0 0.0
  %4687 = vmatpush1.msra.mxu0 0.0
  %4688 = vmatprep.subr.mxu0 0.0
  %4689 = vmatpush1.msra.mxu0 0.0
  %4690 = vmatprep.subr.mxu0 0.0
  %4691 = vmatpush1.msra.mxu0 0.0
  %4692 = vmatprep.subr.mxu0 0.0
  %4693 = vmatpush1.msra.mxu0 0.0
  %4694 = vmatprep.subr.mxu0 0.0
  %4695 = vmatpush1.msra.mxu0 0.0
  %4696 = vmatprep.subr.mxu0 0.0
  %4697 = vmatpush1.msra.mxu0 0.0
  %4698 = vmatprep.subr.mxu0 0.0
  %4699 = vmatpush1.msra.mxu0 0.0
  %4700 = vmatprep.subr.mxu0 0.0
  %4701 = vmatpush1.msra.mxu0 0.0
  %4702 = vmatprep.subr.mxu0 0.0
  %4703 = vmatpush1.msra.mxu0 0.0
  %4704 = vmatprep.mubr.f32.mxu0 0.0
  %4705 = vmatmul.mubr.f32.gmra.mrb[0].mxu0 %v4635
  %v4706 = vpop.f32.mrb[0].mxu0
  %v4707 = vadd.f32 0.0, %v4706
  %v4708 = vpop.f32.mrb[0].mxu0
  %4709 = vmatprep.mubr.f32.mxu0 0.0
  %4710 = vmatmul.mubr.f32.gmra.mrb[0].mxu0 %v4638
  %v4711 = vpop.f32.mrb[0].mxu0
  %v4712 = vadd.f32 0.0, %v4711
  %v4713 = vpop.f32.mrb[0].mxu0
  %4714 = vdwg.mxu0
  %4715 = vrot.lane.b32.xlu0 %v3369, 120
  %v4716 = vpop.permute.xlu0 %4715
  %4717 = vrot.lane.b32.xlu0 %v3374, 120
  %v4718 = vpop.permute.xlu0 %4717
  %4719 = vrot.lane.b32.xlu0 %v3369, 88
  %v4720 = vpop.permute.xlu0 %4719
  %4721 = vrot.lane.b32.xlu0 %v3374, 88
  %v4722 = vpop.permute.xlu0 %4721
  %v4723 = vsel %vm586, %v4716, 0
  %v4725 = vsel %vm586, %v4718, 0
  %v4727 = vsel %vm586, %v4720, 0
  %v4729 = vsel %vm586, %v4722, 0
  %4731 = vmatprep.subr.mxu0 0.0
  %4732 = vmatpush1.xpose.msra.mxu0 %v4727
  %4733 = vmatprep.subr.mxu0 0.0
  %4734 = vmatpush1.xpose.msra.mxu0 %v4729
  %4735 = vmatprep.subr.mxu0 0.0
  %4736 = vmatpush1.xpose.msra.mxu0 0.0
  %4737 = vmatprep.subr.mxu0 0.0
  %4738 = vmatpush1.xpose.msra.mxu0 0.0
  %4739 = vmatprep.subr.mxu0 0.0
  %4740 = vmatpush1.xpose.msra.mxu0 0.0
  %4741 = vmatprep.subr.mxu0 0.0
  %4742 = vmatpush1.xpose.msra.mxu0 0.0
  %4743 = vmatprep.subr.mxu0 0.0
  %4744 = vmatpush1.xpose.msra.mxu0 0.0
  %4745 = vmatprep.subr.mxu0 0.0
  %4746 = vmatpush1.xpose.msra.mxu0 0.0
  %4747 = vmatprep.subr.mxu0 0.0
  %4748 = vmatpush1.xpose.msra.mxu0 0.0
  %4749 = vmatprep.subr.mxu0 0.0
  %4750 = vmatpush1.xpose.msra.mxu0 0.0
  %4751 = vmatprep.subr.mxu0 0.0
  %4752 = vmatpush1.xpose.msra.mxu0 0.0
  %4753 = vmatprep.subr.mxu0 0.0
  %4754 = vmatpush1.xpose.msra.mxu0 0.0
  %4755 = vmatprep.subr.mxu0 0.0
  %4756 = vmatpush1.xpose.msra.mxu0 0.0
  %4757 = vmatprep.subr.mxu0 0.0
  %4758 = vmatpush1.xpose.msra.mxu0 0.0
  %4759 = vmatprep.subr.mxu0 0.0
  %4760 = vmatpush1.xpose.msra.mxu0 0.0
  %4761 = vmatprep.subr.mxu0 0.0
  %4762 = vmatpush1.xpose.msra.mxu0 0.0
  %4763 = vmatprep.subr.mxu0 0.0
  %4764 = vmatpush1.xpose.msra.mxu0 0.0
  %4765 = vmatprep.subr.mxu0 0.0
  %4766 = vmatpush1.xpose.msra.mxu0 0.0
  %4767 = vmatprep.subr.mxu0 0.0
  %4768 = vmatpush1.xpose.msra.mxu0 0.0
  %4769 = vmatprep.subr.mxu0 0.0
  %4770 = vmatpush1.xpose.msra.mxu0 0.0
  %4771 = vmatprep.subr.mxu0 0.0
  %4772 = vmatpush1.xpose.msra.mxu0 0.0
  %4773 = vmatprep.subr.mxu0 0.0
  %4774 = vmatpush1.xpose.msra.mxu0 0.0
  %4775 = vmatprep.subr.mxu0 0.0
  %4776 = vmatpush1.xpose.msra.mxu0 0.0
  %4777 = vmatprep.subr.mxu0 0.0
  %4778 = vmatpush1.xpose.msra.mxu0 0.0
  %4779 = vmatprep.subr.mxu0 0.0
  %4780 = vmatpush1.xpose.msra.mxu0 0.0
  %4781 = vmatprep.subr.mxu0 0.0
  %4782 = vmatpush1.xpose.msra.mxu0 0.0
  %4783 = vmatprep.subr.mxu0 0.0
  %4784 = vmatpush1.xpose.msra.mxu0 0.0
  %4785 = vmatprep.subr.mxu0 0.0
  %4786 = vmatpush1.xpose.msra.mxu0 0.0
  %4787 = vmatprep.subr.mxu0 0.0
  %4788 = vmatpush1.xpose.msra.mxu0 0.0
  %4789 = vmatprep.subr.mxu0 0.0
  %4790 = vmatpush1.xpose.msra.mxu0 0.0
  %4791 = vmatprep.subr.mxu0 0.0
  %4792 = vmatpush1.xpose.msra.mxu0 0.0
  %4793 = vmatprep.subr.mxu0 0.0
  %4794 = vmatpush1.xpose.msra.mxu0 0.0
  %4795 = vmatprep.mubr.f32.mxu0 0.0
  %4796 = vmatmul.mubr.f32.gmra.mrb[0].mxu0 %v4723
  %v4797 = vpop.f32.mrb[0].mxu0
  %v4798 = vadd.f32 0.0, %v4797
  %v4799 = vpop.f32.mrb[0].mxu0
  %4800 = vmatprep.mubr.f32.mxu0 0.0
  %4801 = vmatmul.mubr.f32.gmra.mrb[0].mxu0 %v4725
  %v4802 = vpop.f32.mrb[0].mxu0
  %v4803 = vadd.f32 0.0, %v4802
  %v4804 = vpop.f32.mrb[0].mxu0
  %4805 = vdwg.mxu0
  %v4806 = vmul.f32 %v4798, 0.35355338
  %v4807 = vmul.f32 %v4803, 0.35355338
  %v4808 = vsel %vm672, %v4806, -inf
  %4809 = vmax.xlane.f32.xlu0 %v4808
  %v4810 = vpop.xlane.xlu0 %4809
  %v4811 = vsel %vm672, %v4807, -inf
  %4812 = vmax.xlane.f32.xlu0 %v4811
  %v4813 = vpop.xlane.xlu0 %4812
  %v4814 = vsub.f32 %v4806, %v4810
  %v4815 = vsub.f32 %v4807, %v4813
  %v4816 = vmul.f32 %v4814, 1.442695
  %v4817 = vpow.pop %v4816
  %v4818 = vmul.f32 %v4815, 1.442695
  %v4819 = vpow.pop %v4818
  %v4820 = vsel %vm672, %v4817, 0.0
  %4821 = vadd.xlane.f32.xlu0 %v4820
  %v4822 = vpop.xlane.xlu0 %4821
  %v4823 = vsel %vm672, %v4819, 0.0
  %4824 = vadd.xlane.f32.xlu0 %v4823
  %v4825 = vpop.xlane.xlu0 %4824
  %v4826 = vrcp.pop %v4822
  %v4827 = vrcp.pop %v4825
  %v4828 = vmul.f32 %v4817, %v4826
  %v4829 = vmul.f32 %v4819, %v4827
  %4830 = vrot.lane.b32.xlu0 %v3369, 56
  %v4831 = vpop.permute.xlu0 %4830
  %4832 = vrot.lane.b32.xlu0 %v3374, 56
  %v4833 = vpop.permute.xlu0 %4832
  %v4837 = vsel %vm672, %v4828, 0
  %v4840 = vsel %vm672, %v4829, 0
  %4842 = vmatprep.subr.mxu0 0.0
  %4843 = vmatpush1.msra.mxu0 %v4831
  %4844 = vmatprep.subr.mxu0 0.0
  %4845 = vmatpush1.msra.mxu0 %v4833
  %4846 = vmatprep.subr.mxu0 0.0
  %4847 = vmatpush1.msra.mxu0 0.0
  %4848 = vmatprep.subr.mxu0 0.0
  %4849 = vmatpush1.msra.mxu0 0.0
  %4850 = vmatprep.subr.mxu0 0.0
  %4851 = vmatpush1.msra.mxu0 0.0
  %4852 = vmatprep.subr.mxu0 0.0
  %4853 = vmatpush1.msra.mxu0 0.0
  %4854 = vmatprep.subr.mxu0 0.0
  %4855 = vmatpush1.msra.mxu0 0.0
  %4856 = vmatprep.subr.mxu0 0.0
  %4857 = vmatpush1.msra.mxu0 0.0
  %4858 = vmatprep.subr.mxu0 0.0
  %4859 = vmatpush1.msra.mxu0 0.0
  %4860 = vmatprep.subr.mxu0 0.0
  %4861 = vmatpush1.msra.mxu0 0.0
  %4862 = vmatprep.subr.mxu0 0.0
  %4863 = vmatpush1.msra.mxu0 0.0
  %4864 = vmatprep.subr.mxu0 0.0
  %4865 = vmatpush1.msra.mxu0 0.0
  %4866 = vmatprep.subr.mxu0 0.0
  %4867 = vmatpush1.msra.mxu0 0.0
  %4868 = vmatprep.subr.mxu0 0.0
  %4869 = vmatpush1.msra.mxu0 0.0
  %4870 = vmatprep.subr.mxu0 0.0
  %4871 = vmatpush1.msra.mxu0 0.0
  %4872 = vmatprep.subr.mxu0 0.0
  %4873 = vmatpush1.msra.mxu0 0.0
  %4874 = vmatprep.subr.mxu0 0.0
  %4875 = vmatpush1.msra.mxu0 0.0
  %4876 = vmatprep.subr.mxu0 0.0
  %4877 = vmatpush1.msra.mxu0 0.0
  %4878 = vmatprep.subr.mxu0 0.0
  %4879 = vmatpush1.msra.mxu0 0.0
  %4880 = vmatprep.subr.mxu0 0.0
  %4881 = vmatpush1.msra.mxu0 0.0
  %4882 = vmatprep.subr.mxu0 0.0
  %4883 = vmatpush1.msra.mxu0 0.0
  %4884 = vmatprep.subr.mxu0 0.0
  %4885 = vmatpush1.msra.mxu0 0.0
  %4886 = vmatprep.subr.mxu0 0.0
  %4887 = vmatpush1.msra.mxu0 0.0
  %4888 = vmatprep.subr.mxu0 0.0
  %4889 = vmatpush1.msra.mxu0 0.0
  %4890 = vmatprep.subr.mxu0 0.0
  %4891 = vmatpush1.msra.mxu0 0.0
  %4892 = vmatprep.subr.mxu0 0.0
  %4893 = vmatpush1.msra.mxu0 0.0
  %4894 = vmatprep.subr.mxu0 0.0
  %4895 = vmatpush1.msra.mxu0 0.0
  %4896 = vmatprep.subr.mxu0 0.0
  %4897 = vmatpush1.msra.mxu0 0.0
  %4898 = vmatprep.subr.mxu0 0.0
  %4899 = vmatpush1.msra.mxu0 0.0
  %4900 = vmatprep.subr.mxu0 0.0
  %4901 = vmatpush1.msra.mxu0 0.0
  %4902 = vmatprep.subr.mxu0 0.0
  %4903 = vmatpush1.msra.mxu0 0.0
  %4904 = vmatprep.subr.mxu0 0.0
  %4905 = vmatpush1.msra.mxu0 0.0
  %4906 = vmatprep.mubr.f32.mxu0 0.0
  %4907 = vmatmul.mubr.f32.gmra.mrb[0].mxu0 %v4837
  %v4908 = vpop.f32.mrb[0].mxu0
  %v4909 = vadd.f32 0.0, %v4908
  %v4910 = vpop.f32.mrb[0].mxu0
  %4911 = vmatprep.mubr.f32.mxu0 0.0
  %4912 = vmatmul.mubr.f32.gmra.mrb[0].mxu0 %v4840
  %v4913 = vpop.f32.mrb[0].mxu0
  %v4914 = vadd.f32 0.0, %v4913
  %v4915 = vpop.f32.mrb[0].mxu0
  %4916 = vdwg.mxu0
  %v4918 = vsel %vm586, %v4909, 0
  %v4921 = vsel %vm586, %v4914, 0
  %4923 = vmatprep.subr.mxu0 0.0
  %4924 = vmatpush1.msra.mxu0 %v3378
  %4925 = vmatprep.subr.mxu0 0.0
  %4926 = vmatpush1.msra.mxu0 0.0
  %4927 = vmatprep.subr.mxu0 0.0
  %4928 = vmatpush1.msra.mxu0 0.0
  %4929 = vmatprep.subr.mxu0 0.0
  %4930 = vmatpush1.msra.mxu0 0.0
  %4931 = vmatprep.subr.mxu0 0.0
  %4932 = vmatpush1.msra.mxu0 0.0
  %4933 = vmatprep.subr.mxu0 0.0
  %4934 = vmatpush1.msra.mxu0 0.0
  %4935 = vmatprep.subr.mxu0 0.0
  %4936 = vmatpush1.msra.mxu0 0.0
  %4937 = vmatprep.subr.mxu0 0.0
  %4938 = vmatpush1.msra.mxu0 0.0
  %4939 = vmatprep.subr.mxu0 0.0
  %4940 = vmatpush1.msra.mxu0 0.0
  %4941 = vmatprep.subr.mxu0 0.0
  %4942 = vmatpush1.msra.mxu0 0.0
  %4943 = vmatprep.subr.mxu0 0.0
  %4944 = vmatpush1.msra.mxu0 0.0
  %4945 = vmatprep.subr.mxu0 0.0
  %4946 = vmatpush1.msra.mxu0 0.0
  %4947 = vmatprep.subr.mxu0 0.0
  %4948 = vmatpush1.msra.mxu0 0.0
  %4949 = vmatprep.subr.mxu0 0.0
  %4950 = vmatpush1.msra.mxu0 0.0
  %4951 = vmatprep.subr.mxu0 0.0
  %4952 = vmatpush1.msra.mxu0 0.0
  %4953 = vmatprep.subr.mxu0 0.0
  %4954 = vmatpush1.msra.mxu0 0.0
  %4955 = vmatprep.subr.mxu0 0.0
  %4956 = vmatpush1.msra.mxu0 0.0
  %4957 = vmatprep.subr.mxu0 0.0
  %4958 = vmatpush1.msra.mxu0 0.0
  %4959 = vmatprep.subr.mxu0 0.0
  %4960 = vmatpush1.msra.mxu0 0.0
  %4961 = vmatprep.subr.mxu0 0.0
  %4962 = vmatpush1.msra.mxu0 0.0
  %4963 = vmatprep.subr.mxu0 0.0
  %4964 = vmatpush1.msra.mxu0 0.0
  %4965 = vmatprep.subr.mxu0 0.0
  %4966 = vmatpush1.msra.mxu0 0.0
  %4967 = vmatprep.subr.mxu0 0.0
  %4968 = vmatpush1.msra.mxu0 0.0
  %4969 = vmatprep.subr.mxu0 0.0
  %4970 = vmatpush1.msra.mxu0 0.0
  %4971 = vmatprep.subr.mxu0 0.0
  %4972 = vmatpush1.msra.mxu0 0.0
  %4973 = vmatprep.subr.mxu0 0.0
  %4974 = vmatpush1.msra.mxu0 0.0
  %4975 = vmatprep.subr.mxu0 0.0
  %4976 = vmatpush1.msra.mxu0 0.0
  %4977 = vmatprep.subr.mxu0 0.0
  %4978 = vmatpush1.msra.mxu0 0.0
  %4979 = vmatprep.subr.mxu0 0.0
  %4980 = vmatpush1.msra.mxu0 0.0
  %4981 = vmatprep.subr.mxu0 0.0
  %4982 = vmatpush1.msra.mxu0 0.0
  %4983 = vmatprep.subr.mxu0 0.0
  %4984 = vmatpush1.msra.mxu0 0.0
  %4985 = vmatprep.subr.mxu0 0.0
  %4986 = vmatpush1.msra.mxu0 0.0
  %4987 = vmatprep.mubr.f32.mxu0 0.0
  %4988 = vmatmul.mubr.f32.gmra.mrb[0].mxu0 %v4918
  %v4989 = vpop.f32.mrb[0].mxu0
  %v4990 = vadd.f32 0.0, %v4989
  %v4991 = vpop.f32.mrb[0].mxu0
  %4992 = vmatprep.mubr.f32.mxu0 0.0
  %4993 = vmatmul.mubr.f32.gmra.mrb[0].mxu0 %v4921
  %v4994 = vpop.f32.mrb[0].mxu0
  %v4995 = vadd.f32 0.0, %v4994
  %v4996 = vpop.f32.mrb[0].mxu0
  %4997 = vdwg.mxu0
  %v4999 = vsel %vm586, %v4707, 0
  %v5002 = vsel %vm586, %v4712, 0
  %5004 = vmatprep.subr.mxu0 0.0
  %5005 = vmatpush1.msra.mxu0 %v3377
  %5006 = vmatprep.subr.mxu0 0.0
  %5007 = vmatpush1.msra.mxu0 0.0
  %5008 = vmatprep.subr.mxu0 0.0
  %5009 = vmatpush1.msra.mxu0 0.0
  %5010 = vmatprep.subr.mxu0 0.0
  %5011 = vmatpush1.msra.mxu0 0.0
  %5012 = vmatprep.subr.mxu0 0.0
  %5013 = vmatpush1.msra.mxu0 0.0
  %5014 = vmatprep.subr.mxu0 0.0
  %5015 = vmatpush1.msra.mxu0 0.0
  %5016 = vmatprep.subr.mxu0 0.0
  %5017 = vmatpush1.msra.mxu0 0.0
  %5018 = vmatprep.subr.mxu0 0.0
  %5019 = vmatpush1.msra.mxu0 0.0
  %5020 = vmatprep.subr.mxu0 0.0
  %5021 = vmatpush1.msra.mxu0 0.0
  %5022 = vmatprep.subr.mxu0 0.0
  %5023 = vmatpush1.msra.mxu0 0.0
  %5024 = vmatprep.subr.mxu0 0.0
  %5025 = vmatpush1.msra.mxu0 0.0
  %5026 = vmatprep.subr.mxu0 0.0
  %5027 = vmatpush1.msra.mxu0 0.0
  %5028 = vmatprep.subr.mxu0 0.0
  %5029 = vmatpush1.msra.mxu0 0.0
  %5030 = vmatprep.subr.mxu0 0.0
  %5031 = vmatpush1.msra.mxu0 0.0
  %5032 = vmatprep.subr.mxu0 0.0
  %5033 = vmatpush1.msra.mxu0 0.0
  %5034 = vmatprep.subr.mxu0 0.0
  %5035 = vmatpush1.msra.mxu0 0.0
  %5036 = vmatprep.subr.mxu0 0.0
  %5037 = vmatpush1.msra.mxu0 0.0
  %5038 = vmatprep.subr.mxu0 0.0
  %5039 = vmatpush1.msra.mxu0 0.0
  %5040 = vmatprep.subr.mxu0 0.0
  %5041 = vmatpush1.msra.mxu0 0.0
  %5042 = vmatprep.subr.mxu0 0.0
  %5043 = vmatpush1.msra.mxu0 0.0
  %5044 = vmatprep.subr.mxu0 0.0
  %5045 = vmatpush1.msra.mxu0 0.0
  %5046 = vmatprep.subr.mxu0 0.0
  %5047 = vmatpush1.msra.mxu0 0.0
  %5048 = vmatprep.subr.mxu0 0.0
  %5049 = vmatpush1.msra.mxu0 0.0
  %5050 = vmatprep.subr.mxu0 0.0
  %5051 = vmatpush1.msra.mxu0 0.0
  %5052 = vmatprep.subr.mxu0 0.0
  %5053 = vmatpush1.msra.mxu0 0.0
  %5054 = vmatprep.subr.mxu0 0.0
  %5055 = vmatpush1.msra.mxu0 0.0
  %5056 = vmatprep.subr.mxu0 0.0
  %5057 = vmatpush1.msra.mxu0 0.0
  %5058 = vmatprep.subr.mxu0 0.0
  %5059 = vmatpush1.msra.mxu0 0.0
  %5060 = vmatprep.subr.mxu0 0.0
  %5061 = vmatpush1.msra.mxu0 0.0
  %5062 = vmatprep.subr.mxu0 0.0
  %5063 = vmatpush1.msra.mxu0 0.0
  %5064 = vmatprep.subr.mxu0 0.0
  %5065 = vmatpush1.msra.mxu0 0.0
  %5066 = vmatprep.subr.mxu0 0.0
  %5067 = vmatpush1.msra.mxu0 0.0
  %5068 = vmatprep.mubr.f32.mxu0 0.0
  %5069 = vmatmul.mubr.f32.gmra.mrb[0].mxu0 %v4999
  %v5070 = vpop.f32.mrb[0].mxu0
  %v5071 = vadd.f32 %v4990, %v5070
  %v5072 = vpop.f32.mrb[0].mxu0
  %5073 = vmatprep.mubr.f32.mxu0 0.0
  %5074 = vmatmul.mubr.f32.gmra.mrb[0].mxu0 %v5002
  %v5075 = vpop.f32.mrb[0].mxu0
  %v5076 = vadd.f32 %v4995, %v5075
  %v5077 = vpop.f32.mrb[0].mxu0
  %5078 = vdwg.mxu0
  %5079 = vrot.lane.b32.xlu0 %v3369, 112
  %v5080 = vpop.permute.xlu0 %5079
  %5081 = vrot.lane.b32.xlu0 %v3374, 112
  %v5082 = vpop.permute.xlu0 %5081
  %5083 = vrot.lane.b32.xlu0 %v3369, 80
  %v5084 = vpop.permute.xlu0 %5083
  %5085 = vrot.lane.b32.xlu0 %v3374, 80
  %v5086 = vpop.permute.xlu0 %5085
  %v5087 = vsel %vm586, %v5080, 0
  %v5089 = vsel %vm586, %v5082, 0
  %v5091 = vsel %vm586, %v5084, 0
  %v5093 = vsel %vm586, %v5086, 0
  %5095 = vmatprep.subr.mxu0 0.0
  %5096 = vmatpush1.xpose.msra.mxu0 %v5091
  %5097 = vmatprep.subr.mxu0 0.0
  %5098 = vmatpush1.xpose.msra.mxu0 %v5093
  %5099 = vmatprep.subr.mxu0 0.0
  %5100 = vmatpush1.xpose.msra.mxu0 0.0
  %5101 = vmatprep.subr.mxu0 0.0
  %5102 = vmatpush1.xpose.msra.mxu0 0.0
  %5103 = vmatprep.subr.mxu0 0.0
  %5104 = vmatpush1.xpose.msra.mxu0 0.0
  %5105 = vmatprep.subr.mxu0 0.0
  %5106 = vmatpush1.xpose.msra.mxu0 0.0
  %5107 = vmatprep.subr.mxu0 0.0
  %5108 = vmatpush1.xpose.msra.mxu0 0.0
  %5109 = vmatprep.subr.mxu0 0.0
  %5110 = vmatpush1.xpose.msra.mxu0 0.0
  %5111 = vmatprep.subr.mxu0 0.0
  %5112 = vmatpush1.xpose.msra.mxu0 0.0
  %5113 = vmatprep.subr.mxu0 0.0
  %5114 = vmatpush1.xpose.msra.mxu0 0.0
  %5115 = vmatprep.subr.mxu0 0.0
  %5116 = vmatpush1.xpose.msra.mxu0 0.0
  %5117 = vmatprep.subr.mxu0 0.0
  %5118 = vmatpush1.xpose.msra.mxu0 0.0
  %5119 = vmatprep.subr.mxu0 0.0
  %5120 = vmatpush1.xpose.msra.mxu0 0.0
  %5121 = vmatprep.subr.mxu0 0.0
  %5122 = vmatpush1.xpose.msra.mxu0 0.0
  %5123 = vmatprep.subr.mxu0 0.0
  %5124 = vmatpush1.xpose.msra.mxu0 0.0
  %5125 = vmatprep.subr.mxu0 0.0
  %5126 = vmatpush1.xpose.msra.mxu0 0.0
  %5127 = vmatprep.subr.mxu0 0.0
  %5128 = vmatpush1.xpose.msra.mxu0 0.0
  %5129 = vmatprep.subr.mxu0 0.0
  %5130 = vmatpush1.xpose.msra.mxu0 0.0
  %5131 = vmatprep.subr.mxu0 0.0
  %5132 = vmatpush1.xpose.msra.mxu0 0.0
  %5133 = vmatprep.subr.mxu0 0.0
  %5134 = vmatpush1.xpose.msra.mxu0 0.0
  %5135 = vmatprep.subr.mxu0 0.0
  %5136 = vmatpush1.xpose.msra.mxu0 0.0
  %5137 = vmatprep.subr.mxu0 0.0
  %5138 = vmatpush1.xpose.msra.mxu0 0.0
  %5139 = vmatprep.subr.mxu0 0.0
  %5140 = vmatpush1.xpose.msra.mxu0 0.0
  %5141 = vmatprep.subr.mxu0 0.0
  %5142 = vmatpush1.xpose.msra.mxu0 0.0
  %5143 = vmatprep.subr.mxu0 0.0
  %5144 = vmatpush1.xpose.msra.mxu0 0.0
  %5145 = vmatprep.subr.mxu0 0.0
  %5146 = vmatpush1.xpose.msra.mxu0 0.0
  %5147 = vmatprep.subr.mxu0 0.0
  %5148 = vmatpush1.xpose.msra.mxu0 0.0
  %5149 = vmatprep.subr.mxu0 0.0
  %5150 = vmatpush1.xpose.msra.mxu0 0.0
  %5151 = vmatprep.subr.mxu0 0.0
  %5152 = vmatpush1.xpose.msra.mxu0 0.0
  %5153 = vmatprep.subr.mxu0 0.0
  %5154 = vmatpush1.xpose.msra.mxu0 0.0
  %5155 = vmatprep.subr.mxu0 0.0
  %5156 = vmatpush1.xpose.msra.mxu0 0.0
  %5157 = vmatprep.subr.mxu0 0.0
  %5158 = vmatpush1.xpose.msra.mxu0 0.0
  %5159 = vmatprep.mubr.f32.mxu0 0.0
  %5160 = vmatmul.mubr.f32.gmra.mrb[0].mxu0 %v5087
  %v5161 = vpop.f32.mrb[0].mxu0
  %v5162 = vadd.f32 0.0, %v5161
  %v5163 = vpop.f32.mrb[0].mxu0
  %5164 = vmatprep.mubr.f32.mxu0 0.0
  %5165 = vmatmul.mubr.f32.gmra.mrb[0].mxu0 %v5089
  %v5166 = vpop.f32.mrb[0].mxu0
  %v5167 = vadd.f32 0.0, %v5166
  %v5168 = vpop.f32.mrb[0].mxu0
  %5169 = vdwg.mxu0
  %v5170 = vmul.f32 %v5162, 0.35355338
  %v5171 = vmul.f32 %v5167, 0.35355338
  %v5172 = vsel %vm672, %v5170, -inf
  %5173 = vmax.xlane.f32.xlu0 %v5172
  %v5174 = vpop.xlane.xlu0 %5173
  %v5175 = vsel %vm672, %v5171, -inf
  %5176 = vmax.xlane.f32.xlu0 %v5175
  %v5177 = vpop.xlane.xlu0 %5176
  %v5178 = vsub.f32 %v5170, %v5174
  %v5179 = vsub.f32 %v5171, %v5177
  %v5180 = vmul.f32 %v5178, 1.442695
  %v5181 = vpow.pop %v5180
  %v5182 = vmul.f32 %v5179, 1.442695
  %v5183 = vpow.pop %v5182
  %v5184 = vsel %vm672, %v5181, 0.0
  %5185 = vadd.xlane.f32.xlu0 %v5184
  %v5186 = vpop.xlane.xlu0 %5185
  %v5187 = vsel %vm672, %v5183, 0.0
  %5188 = vadd.xlane.f32.xlu0 %v5187
  %v5189 = vpop.xlane.xlu0 %5188
  %v5190 = vrcp.pop %v5186
  %v5191 = vrcp.pop %v5189
  %v5192 = vmul.f32 %v5181, %v5190
  %v5193 = vmul.f32 %v5183, %v5191
  %5194 = vrot.lane.b32.xlu0 %v3369, 48
  %v5195 = vpop.permute.xlu0 %5194
  %5196 = vrot.lane.b32.xlu0 %v3374, 48
  %v5197 = vpop.permute.xlu0 %5196
  %v5201 = vsel %vm672, %v5192, 0
  %v5204 = vsel %vm672, %v5193, 0
  %5206 = vmatprep.subr.mxu0 0.0
  %5207 = vmatpush1.msra.mxu0 %v5195
  %5208 = vmatprep.subr.mxu0 0.0
  %5209 = vmatpush1.msra.mxu0 %v5197
  %5210 = vmatprep.subr.mxu0 0.0
  %5211 = vmatpush1.msra.mxu0 0.0
  %5212 = vmatprep.subr.mxu0 0.0
  %5213 = vmatpush1.msra.mxu0 0.0
  %5214 = vmatprep.subr.mxu0 0.0
  %5215 = vmatpush1.msra.mxu0 0.0
  %5216 = vmatprep.subr.mxu0 0.0
  %5217 = vmatpush1.msra.mxu0 0.0
  %5218 = vmatprep.subr.mxu0 0.0
  %5219 = vmatpush1.msra.mxu0 0.0
  %5220 = vmatprep.subr.mxu0 0.0
  %5221 = vmatpush1.msra.mxu0 0.0
  %5222 = vmatprep.subr.mxu0 0.0
  %5223 = vmatpush1.msra.mxu0 0.0
  %5224 = vmatprep.subr.mxu0 0.0
  %5225 = vmatpush1.msra.mxu0 0.0
  %5226 = vmatprep.subr.mxu0 0.0
  %5227 = vmatpush1.msra.mxu0 0.0
  %5228 = vmatprep.subr.mxu0 0.0
  %5229 = vmatpush1.msra.mxu0 0.0
  %5230 = vmatprep.subr.mxu0 0.0
  %5231 = vmatpush1.msra.mxu0 0.0
  %5232 = vmatprep.subr.mxu0 0.0
  %5233 = vmatpush1.msra.mxu0 0.0
  %5234 = vmatprep.subr.mxu0 0.0
  %5235 = vmatpush1.msra.mxu0 0.0
  %5236 = vmatprep.subr.mxu0 0.0
  %5237 = vmatpush1.msra.mxu0 0.0
  %5238 = vmatprep.subr.mxu0 0.0
  %5239 = vmatpush1.msra.mxu0 0.0
  %5240 = vmatprep.subr.mxu0 0.0
  %5241 = vmatpush1.msra.mxu0 0.0
  %5242 = vmatprep.subr.mxu0 0.0
  %5243 = vmatpush1.msra.mxu0 0.0
  %5244 = vmatprep.subr.mxu0 0.0
  %5245 = vmatpush1.msra.mxu0 0.0
  %5246 = vmatprep.subr.mxu0 0.0
  %5247 = vmatpush1.msra.mxu0 0.0
  %5248 = vmatprep.subr.mxu0 0.0
  %5249 = vmatpush1.msra.mxu0 0.0
  %5250 = vmatprep.subr.mxu0 0.0
  %5251 = vmatpush1.msra.mxu0 0.0
  %5252 = vmatprep.subr.mxu0 0.0
  %5253 = vmatpush1.msra.mxu0 0.0
  %5254 = vmatprep.subr.mxu0 0.0
  %5255 = vmatpush1.msra.mxu0 0.0
  %5256 = vmatprep.subr.mxu0 0.0
  %5257 = vmatpush1.msra.mxu0 0.0
  %5258 = vmatprep.subr.mxu0 0.0
  %5259 = vmatpush1.msra.mxu0 0.0
  %5260 = vmatprep.subr.mxu0 0.0
  %5261 = vmatpush1.msra.mxu0 0.0
  %5262 = vmatprep.subr.mxu0 0.0
  %5263 = vmatpush1.msra.mxu0 0.0
  %5264 = vmatprep.subr.mxu0 0.0
  %5265 = vmatpush1.msra.mxu0 0.0
  %5266 = vmatprep.subr.mxu0 0.0
  %5267 = vmatpush1.msra.mxu0 0.0
  %5268 = vmatprep.subr.mxu0 0.0
  %5269 = vmatpush1.msra.mxu0 0.0
  %5270 = vmatprep.mubr.f32.mxu0 0.0
  %5271 = vmatmul.mubr.f32.gmra.mrb[0].mxu0 %v5201
  %v5272 = vpop.f32.mrb[0].mxu0
  %v5273 = vadd.f32 0.0, %v5272
  %v5274 = vpop.f32.mrb[0].mxu0
  %5275 = vmatprep.mubr.f32.mxu0 0.0
  %5276 = vmatmul.mubr.f32.gmra.mrb[0].mxu0 %v5204
  %v5277 = vpop.f32.mrb[0].mxu0
  %v5278 = vadd.f32 0.0, %v5277
  %v5279 = vpop.f32.mrb[0].mxu0
  %5280 = vdwg.mxu0
  %v5282 = vsel %vm586, %v5273, 0
  %v5285 = vsel %vm586, %v5278, 0
  %5287 = vmatprep.subr.mxu0 0.0
  %5288 = vmatpush1.msra.mxu0 %v3379
  %5289 = vmatprep.subr.mxu0 0.0
  %5290 = vmatpush1.msra.mxu0 0.0
  %5291 = vmatprep.subr.mxu0 0.0
  %5292 = vmatpush1.msra.mxu0 0.0
  %5293 = vmatprep.subr.mxu0 0.0
  %5294 = vmatpush1.msra.mxu0 0.0
  %5295 = vmatprep.subr.mxu0 0.0
  %5296 = vmatpush1.msra.mxu0 0.0
  %5297 = vmatprep.subr.mxu0 0.0
  %5298 = vmatpush1.msra.mxu0 0.0
  %5299 = vmatprep.subr.mxu0 0.0
  %5300 = vmatpush1.msra.mxu0 0.0
  %5301 = vmatprep.subr.mxu0 0.0
  %5302 = vmatpush1.msra.mxu0 0.0
  %5303 = vmatprep.subr.mxu0 0.0
  %5304 = vmatpush1.msra.mxu0 0.0
  %5305 = vmatprep.subr.mxu0 0.0
  %5306 = vmatpush1.msra.mxu0 0.0
  %5307 = vmatprep.subr.mxu0 0.0
  %5308 = vmatpush1.msra.mxu0 0.0
  %5309 = vmatprep.subr.mxu0 0.0
  %5310 = vmatpush1.msra.mxu0 0.0
  %5311 = vmatprep.subr.mxu0 0.0
  %5312 = vmatpush1.msra.mxu0 0.0
  %5313 = vmatprep.subr.mxu0 0.0
  %5314 = vmatpush1.msra.mxu0 0.0
  %5315 = vmatprep.subr.mxu0 0.0
  %5316 = vmatpush1.msra.mxu0 0.0
  %5317 = vmatprep.subr.mxu0 0.0
  %5318 = vmatpush1.msra.mxu0 0.0
  %5319 = vmatprep.subr.mxu0 0.0
  %5320 = vmatpush1.msra.mxu0 0.0
  %5321 = vmatprep.subr.mxu0 0.0
  %5322 = vmatpush1.msra.mxu0 0.0
  %5323 = vmatprep.subr.mxu0 0.0
  %5324 = vmatpush1.msra.mxu0 0.0
  %5325 = vmatprep.subr.mxu0 0.0
  %5326 = vmatpush1.msra.mxu0 0.0
  %5327 = vmatprep.subr.mxu0 0.0
  %5328 = vmatpush1.msra.mxu0 0.0
  %5329 = vmatprep.subr.mxu0 0.0
  %5330 = vmatpush1.msra.mxu0 0.0
  %5331 = vmatprep.subr.mxu0 0.0
  %5332 = vmatpush1.msra.mxu0 0.0
  %5333 = vmatprep.subr.mxu0 0.0
  %5334 = vmatpush1.msra.mxu0 0.0
  %5335 = vmatprep.subr.mxu0 0.0
  %5336 = vmatpush1.msra.mxu0 0.0
  %5337 = vmatprep.subr.mxu0 0.0
  %5338 = vmatpush1.msra.mxu0 0.0
  %5339 = vmatprep.subr.mxu0 0.0
  %5340 = vmatpush1.msra.mxu0 0.0
  %5341 = vmatprep.subr.mxu0 0.0
  %5342 = vmatpush1.msra.mxu0 0.0
  %5343 = vmatprep.subr.mxu0 0.0
  %5344 = vmatpush1.msra.mxu0 0.0
  %5345 = vmatprep.subr.mxu0 0.0
  %5346 = vmatpush1.msra.mxu0 0.0
  %5347 = vmatprep.subr.mxu0 0.0
  %5348 = vmatpush1.msra.mxu0 0.0
  %5349 = vmatprep.subr.mxu0 0.0
  %5350 = vmatpush1.msra.mxu0 0.0
  %5351 = vmatprep.mubr.f32.mxu0 0.0
  %5352 = vmatmul.mubr.f32.gmra.mrb[0].mxu0 %v5282
  %v5353 = vpop.f32.mrb[0].mxu0
  %v5354 = vadd.f32 0.0, %v5353
  %v5355 = vpop.f32.mrb[0].mxu0
  %5356 = vmatprep.mubr.f32.mxu0 0.0
  %5357 = vmatmul.mubr.f32.gmra.mrb[0].mxu0 %v5285
  %v5358 = vpop.f32.mrb[0].mxu0
  %v5359 = vadd.f32 0.0, %v5358
  %v5360 = vpop.f32.mrb[0].mxu0
  %5361 = vdwg.mxu0
  %v5362 = vadd.f32 %v5071, %v5354
  %v5363 = vadd.f32 %v5076, %v5359
  %5364 = vrot.lane.b32.xlu0 %v3369, 104
  %v5365 = vpop.permute.xlu0 %5364
  %5366 = vrot.lane.b32.xlu0 %v3374, 104
  %v5367 = vpop.permute.xlu0 %5366
  %5368 = vrot.lane.b32.xlu0 %v3369, 72
  %v5369 = vpop.permute.xlu0 %5368
  %5370 = vrot.lane.b32.xlu0 %v3374, 72
  %v5371 = vpop.permute.xlu0 %5370
  %v5372 = vsel %vm586, %v5365, 0
  %v5374 = vsel %vm586, %v5367, 0
  %v5376 = vsel %vm586, %v5369, 0
  %v5378 = vsel %vm586, %v5371, 0
  %5380 = vmatprep.subr.mxu0 0.0
  %5381 = vmatpush1.xpose.msra.mxu0 %v5376
  %5382 = vmatprep.subr.mxu0 0.0
  %5383 = vmatpush1.xpose.msra.mxu0 %v5378
  %5384 = vmatprep.subr.mxu0 0.0
  %5385 = vmatpush1.xpose.msra.mxu0 0.0
  %5386 = vmatprep.subr.mxu0 0.0
  %5387 = vmatpush1.xpose.msra.mxu0 0.0
  %5388 = vmatprep.subr.mxu0 0.0
  %5389 = vmatpush1.xpose.msra.mxu0 0.0
  %5390 = vmatprep.subr.mxu0 0.0
  %5391 = vmatpush1.xpose.msra.mxu0 0.0
  %5392 = vmatprep.subr.mxu0 0.0
  %5393 = vmatpush1.xpose.msra.mxu0 0.0
  %5394 = vmatprep.subr.mxu0 0.0
  %5395 = vmatpush1.xpose.msra.mxu0 0.0
  %5396 = vmatprep.subr.mxu0 0.0
  %5397 = vmatpush1.xpose.msra.mxu0 0.0
  %5398 = vmatprep.subr.mxu0 0.0
  %5399 = vmatpush1.xpose.msra.mxu0 0.0
  %5400 = vmatprep.subr.mxu0 0.0
  %5401 = vmatpush1.xpose.msra.mxu0 0.0
  %5402 = vmatprep.subr.mxu0 0.0
  %5403 = vmatpush1.xpose.msra.mxu0 0.0
  %5404 = vmatprep.subr.mxu0 0.0
  %5405 = vmatpush1.xpose.msra.mxu0 0.0
  %5406 = vmatprep.subr.mxu0 0.0
  %5407 = vmatpush1.xpose.msra.mxu0 0.0
  %5408 = vmatprep.subr.mxu0 0.0
  %5409 = vmatpush1.xpose.msra.mxu0 0.0
  %5410 = vmatprep.subr.mxu0 0.0
  %5411 = vmatpush1.xpose.msra.mxu0 0.0
  %5412 = vmatprep.subr.mxu0 0.0
  %5413 = vmatpush1.xpose.msra.mxu0 0.0
  %5414 = vmatprep.subr.mxu0 0.0
  %5415 = vmatpush1.xpose.msra.mxu0 0.0
  %5416 = vmatprep.subr.mxu0 0.0
  %5417 = vmatpush1.xpose.msra.mxu0 0.0
  %5418 = vmatprep.subr.mxu0 0.0
  %5419 = vmatpush1.xpose.msra.mxu0 0.0
  %5420 = vmatprep.subr.mxu0 0.0
  %5421 = vmatpush1.xpose.msra.mxu0 0.0
  %5422 = vmatprep.subr.mxu0 0.0
  %5423 = vmatpush1.xpose.msra.mxu0 0.0
  %5424 = vmatprep.subr.mxu0 0.0
  %5425 = vmatpush1.xpose.msra.mxu0 0.0
  %5426 = vmatprep.subr.mxu0 0.0
  %5427 = vmatpush1.xpose.msra.mxu0 0.0
  %5428 = vmatprep.subr.mxu0 0.0
  %5429 = vmatpush1.xpose.msra.mxu0 0.0
  %5430 = vmatprep.subr.mxu0 0.0
  %5431 = vmatpush1.xpose.msra.mxu0 0.0
  %5432 = vmatprep.subr.mxu0 0.0
  %5433 = vmatpush1.xpose.msra.mxu0 0.0
  %5434 = vmatprep.subr.mxu0 0.0
  %5435 = vmatpush1.xpose.msra.mxu0 0.0
  %5436 = vmatprep.subr.mxu0 0.0
  %5437 = vmatpush1.xpose.msra.mxu0 0.0
  %5438 = vmatprep.subr.mxu0 0.0
  %5439 = vmatpush1.xpose.msra.mxu0 0.0
  %5440 = vmatprep.subr.mxu0 0.0
  %5441 = vmatpush1.xpose.msra.mxu0 0.0
  %5442 = vmatprep.subr.mxu0 0.0
  %5443 = vmatpush1.xpose.msra.mxu0 0.0
  %5444 = vmatprep.mubr.f32.mxu0 0.0
  %5445 = vmatmul.mubr.f32.gmra.mrb[0].mxu0 %v5372
  %v5446 = vpop.f32.mrb[0].mxu0
  %v5447 = vadd.f32 0.0, %v5446
  %v5448 = vpop.f32.mrb[0].mxu0
  %5449 = vmatprep.mubr.f32.mxu0 0.0
  %5450 = vmatmul.mubr.f32.gmra.mrb[0].mxu0 %v5374
  %v5451 = vpop.f32.mrb[0].mxu0
  %v5452 = vadd.f32 0.0, %v5451
  %v5453 = vpop.f32.mrb[0].mxu0
  %5454 = vdwg.mxu0
  %v5455 = vmul.f32 %v5447, 0.35355338
  %v5456 = vmul.f32 %v5452, 0.35355338
  %v5457 = vsel %vm672, %v5455, -inf
  %5458 = vmax.xlane.f32.xlu0 %v5457
  %v5459 = vpop.xlane.xlu0 %5458
  %v5460 = vsel %vm672, %v5456, -inf
  %5461 = vmax.xlane.f32.xlu0 %v5460
  %v5462 = vpop.xlane.xlu0 %5461
  %v5463 = vsub.f32 %v5455, %v5459
  %v5464 = vsub.f32 %v5456, %v5462
  %v5465 = vmul.f32 %v5463, 1.442695
  %v5466 = vpow.pop %v5465
  %v5467 = vmul.f32 %v5464, 1.442695
  %v5468 = vpow.pop %v5467
  %v5469 = vsel %vm672, %v5466, 0.0
  %5470 = vadd.xlane.f32.xlu0 %v5469
  %v5471 = vpop.xlane.xlu0 %5470
  %v5472 = vsel %vm672, %v5468, 0.0
  %5473 = vadd.xlane.f32.xlu0 %v5472
  %v5474 = vpop.xlane.xlu0 %5473
  %v5475 = vrcp.pop %v5471
  %v5476 = vrcp.pop %v5474
  %v5477 = vmul.f32 %v5466, %v5475
  %v5478 = vmul.f32 %v5468, %v5476
  %5479 = vrot.lane.b32.xlu0 %v3369, 40
  %v5480 = vpop.permute.xlu0 %5479
  %5481 = vrot.lane.b32.xlu0 %v3374, 40
  %v5482 = vpop.permute.xlu0 %5481
  %v5486 = vsel %vm672, %v5477, 0
  %v5489 = vsel %vm672, %v5478, 0
  %5491 = vmatprep.subr.mxu0 0.0
  %5492 = vmatpush1.msra.mxu0 %v5480
  %5493 = vmatprep.subr.mxu0 0.0
  %5494 = vmatpush1.msra.mxu0 %v5482
  %5495 = vmatprep.subr.mxu0 0.0
  %5496 = vmatpush1.msra.mxu0 0.0
  %5497 = vmatprep.subr.mxu0 0.0
  %5498 = vmatpush1.msra.mxu0 0.0
  %5499 = vmatprep.subr.mxu0 0.0
  %5500 = vmatpush1.msra.mxu0 0.0
  %5501 = vmatprep.subr.mxu0 0.0
  %5502 = vmatpush1.msra.mxu0 0.0
  %5503 = vmatprep.subr.mxu0 0.0
  %5504 = vmatpush1.msra.mxu0 0.0
  %5505 = vmatprep.subr.mxu0 0.0
  %5506 = vmatpush1.msra.mxu0 0.0
  %5507 = vmatprep.subr.mxu0 0.0
  %5508 = vmatpush1.msra.mxu0 0.0
  %5509 = vmatprep.subr.mxu0 0.0
  %5510 = vmatpush1.msra.mxu0 0.0
  %5511 = vmatprep.subr.mxu0 0.0
  %5512 = vmatpush1.msra.mxu0 0.0
  %5513 = vmatprep.subr.mxu0 0.0
  %5514 = vmatpush1.msra.mxu0 0.0
  %5515 = vmatprep.subr.mxu0 0.0
  %5516 = vmatpush1.msra.mxu0 0.0
  %5517 = vmatprep.subr.mxu0 0.0
  %5518 = vmatpush1.msra.mxu0 0.0
  %5519 = vmatprep.subr.mxu0 0.0
  %5520 = vmatpush1.msra.mxu0 0.0
  %5521 = vmatprep.subr.mxu0 0.0
  %5522 = vmatpush1.msra.mxu0 0.0
  %5523 = vmatprep.subr.mxu0 0.0
  %5524 = vmatpush1.msra.mxu0 0.0
  %5525 = vmatprep.subr.mxu0 0.0
  %5526 = vmatpush1.msra.mxu0 0.0
  %5527 = vmatprep.subr.mxu0 0.0
  %5528 = vmatpush1.msra.mxu0 0.0
  %5529 = vmatprep.subr.mxu0 0.0
  %5530 = vmatpush1.msra.mxu0 0.0
  %5531 = vmatprep.subr.mxu0 0.0
  %5532 = vmatpush1.msra.mxu0 0.0
  %5533 = vmatprep.subr.mxu0 0.0
  %5534 = vmatpush1.msra.mxu0 0.0
  %5535 = vmatprep.subr.mxu0 0.0
  %5536 = vmatpush1.msra.mxu0 0.0
  %5537 = vmatprep.subr.mxu0 0.0
  %5538 = vmatpush1.msra.mxu0 0.0
  %5539 = vmatprep.subr.mxu0 0.0
  %5540 = vmatpush1.msra.mxu0 0.0
  %5541 = vmatprep.subr.mxu0 0.0
  %5542 = vmatpush1.msra.mxu0 0.0
  %5543 = vmatprep.subr.mxu0 0.0
  %5544 = vmatpush1.msra.mxu0 0.0
  %5545 = vmatprep.subr.mxu0 0.0
  %5546 = vmatpush1.msra.mxu0 0.0
  %5547 = vmatprep.subr.mxu0 0.0
  %5548 = vmatpush1.msra.mxu0 0.0
  %5549 = vmatprep.subr.mxu0 0.0
  %5550 = vmatpush1.msra.mxu0 0.0
  %5551 = vmatprep.subr.mxu0 0.0
  %5552 = vmatpush1.msra.mxu0 0.0
  %5553 = vmatprep.subr.mxu0 0.0
  %5554 = vmatpush1.msra.mxu0 0.0
  %5555 = vmatprep.mubr.f32.mxu0 0.0
  %5556 = vmatmul.mubr.f32.gmra.mrb[0].mxu0 %v5486
  %v5557 = vpop.f32.mrb[0].mxu0
  %v5558 = vadd.f32 0.0, %v5557
  %v5559 = vpop.f32.mrb[0].mxu0
  %5560 = vmatprep.mubr.f32.mxu0 0.0
  %5561 = vmatmul.mubr.f32.gmra.mrb[0].mxu0 %v5489
  %v5562 = vpop.f32.mrb[0].mxu0
  %v5563 = vadd.f32 0.0, %v5562
  %v5564 = vpop.f32.mrb[0].mxu0
  %5565 = vdwg.mxu0
  %v5567 = vsel %vm586, %v5558, 0
  %v5570 = vsel %vm586, %v5563, 0
  %5572 = vmatprep.subr.mxu0 0.0
  %5573 = vmatpush1.msra.mxu0 %v3380
  %5574 = vmatprep.subr.mxu0 0.0
  %5575 = vmatpush1.msra.mxu0 0.0
  %5576 = vmatprep.subr.mxu0 0.0
  %5577 = vmatpush1.msra.mxu0 0.0
  %5578 = vmatprep.subr.mxu0 0.0
  %5579 = vmatpush1.msra.mxu0 0.0
  %5580 = vmatprep.subr.mxu0 0.0
  %5581 = vmatpush1.msra.mxu0 0.0
  %5582 = vmatprep.subr.mxu0 0.0
  %5583 = vmatpush1.msra.mxu0 0.0
  %5584 = vmatprep.subr.mxu0 0.0
  %5585 = vmatpush1.msra.mxu0 0.0
  %5586 = vmatprep.subr.mxu0 0.0
  %5587 = vmatpush1.msra.mxu0 0.0
  %5588 = vmatprep.subr.mxu0 0.0
  %5589 = vmatpush1.msra.mxu0 0.0
  %5590 = vmatprep.subr.mxu0 0.0
  %5591 = vmatpush1.msra.mxu0 0.0
  %5592 = vmatprep.subr.mxu0 0.0
  %5593 = vmatpush1.msra.mxu0 0.0
  %5594 = vmatprep.subr.mxu0 0.0
  %5595 = vmatpush1.msra.mxu0 0.0
  %5596 = vmatprep.subr.mxu0 0.0
  %5597 = vmatpush1.msra.mxu0 0.0
  %5598 = vmatprep.subr.mxu0 0.0
  %5599 = vmatpush1.msra.mxu0 0.0
  %5600 = vmatprep.subr.mxu0 0.0
  %5601 = vmatpush1.msra.mxu0 0.0
  %5602 = vmatprep.subr.mxu0 0.0
  %5603 = vmatpush1.msra.mxu0 0.0
  %5604 = vmatprep.subr.mxu0 0.0
  %5605 = vmatpush1.msra.mxu0 0.0
  %5606 = vmatprep.subr.mxu0 0.0
  %5607 = vmatpush1.msra.mxu0 0.0
  %5608 = vmatprep.subr.mxu0 0.0
  %5609 = vmatpush1.msra.mxu0 0.0
  %5610 = vmatprep.subr.mxu0 0.0
  %5611 = vmatpush1.msra.mxu0 0.0
  %5612 = vmatprep.subr.mxu0 0.0
  %5613 = vmatpush1.msra.mxu0 0.0
  %5614 = vmatprep.subr.mxu0 0.0
  %5615 = vmatpush1.msra.mxu0 0.0
  %5616 = vmatprep.subr.mxu0 0.0
  %5617 = vmatpush1.msra.mxu0 0.0
  %5618 = vmatprep.subr.mxu0 0.0
  %5619 = vmatpush1.msra.mxu0 0.0
  %5620 = vmatprep.subr.mxu0 0.0
  %5621 = vmatpush1.msra.mxu0 0.0
  %5622 = vmatprep.subr.mxu0 0.0
  %5623 = vmatpush1.msra.mxu0 0.0
  %5624 = vmatprep.subr.mxu0 0.0
  %5625 = vmatpush1.msra.mxu0 0.0
  %5626 = vmatprep.subr.mxu0 0.0
  %5627 = vmatpush1.msra.mxu0 0.0
  %5628 = vmatprep.subr.mxu0 0.0
  %5629 = vmatpush1.msra.mxu0 0.0
  %5630 = vmatprep.subr.mxu0 0.0
  %5631 = vmatpush1.msra.mxu0 0.0
  %5632 = vmatprep.subr.mxu0 0.0
  %5633 = vmatpush1.msra.mxu0 0.0
  %5634 = vmatprep.subr.mxu0 0.0
  %5635 = vmatpush1.msra.mxu0 0.0
  %5636 = vmatprep.mubr.f32.mxu0 0.0
  %5637 = vmatmul.mubr.f32.gmra.mrb[0].mxu0 %v5567
  %v5638 = vpop.f32.mrb[0].mxu0
  %v5639 = vadd.f32 0.0, %v5638
  %v5640 = vpop.f32.mrb[0].mxu0
  %5641 = vmatprep.mubr.f32.mxu0 0.0
  %5642 = vmatmul.mubr.f32.gmra.mrb[0].mxu0 %v5570
  %v5643 = vpop.f32.mrb[0].mxu0
  %v5644 = vadd.f32 0.0, %v5643
  %v5645 = vpop.f32.mrb[0].mxu0
  %5646 = vdwg.mxu0
  %v5647 = vadd.f32 %v5362, %v5639
  %v5648 = vadd.f32 %v5363, %v5644
  %v5649 = vadd.f32 %v3191, %v4513
  %v5650 = vadd.f32 %v3192, %v4514
  %v5651 = vadd.f32 %v3193, %v5647
  %v5652 = vadd.f32 %v3194, %v5648
  %v5653 = vld [vmem:[%s49] sm:$0x1]
  %v5655 = vlaneseq
  %v5656 = vshrl.u32 %v5655, 7
  %v5657 = vsub.s32 0, %v5656
  %v5658 = vrot.slane %v5653, %v5657
  %v5660 = vadd.f32 %v5649, %v5658
  %v5661 = vadd.f32 %v5650, %v5658
  %v5662 = vadd.f32 %v5651, %v5658
  %v5663 = vadd.f32 %v5652, %v5658
  %v5664 = vsel %vm392, %v5660, 0.0
  %5665 = vadd.xlane.f32.xlu0 %v5664
  %v5666 = vpop.xlane.xlu0 %5665
  %v5667 = vsel %vm392, %v5661, 0.0
  %5668 = vadd.xlane.f32.xlu0 %v5667
  %v5669 = vpop.xlane.xlu0 %5668
  %v5670 = vsel %vm392, %v5662, 0.0
  %5671 = vadd.xlane.f32.xlu0 %v5670
  %v5672 = vpop.xlane.xlu0 %5671
  %v5673 = vsel %vm392, %v5663, 0.0
  %5674 = vadd.xlane.f32.xlu0 %v5673
  %v5675 = vpop.xlane.xlu0 %5674
  %v5676 = vmul.f32 %v5666, %v405
  %v5677 = vmul.f32 %v5669, %v405
  %v5678 = vmul.f32 %v5672, %v405
  %v5679 = vmul.f32 %v5675, %v405
  %v5680 = vsub.f32 %v5660, %v5676
  %v5681 = vsub.f32 %v5661, %v5677
  %v5682 = vsub.f32 %v5662, %v5678
  %v5683 = vsub.f32 %v5663, %v5679
  %v5684 = vmul.f32 %v5680, %v5680
  %v5685 = vmul.f32 %v5681, %v5681
  %v5686 = vmul.f32 %v5682, %v5682
  %v5687 = vmul.f32 %v5683, %v5683
  %v5688 = vsel %vm392, %v5684, 0.0
  %5689 = vadd.xlane.f32.xlu0 %v5688
  %v5690 = vpop.xlane.xlu0 %5689
  %v5691 = vsel %vm392, %v5685, 0.0
  %5692 = vadd.xlane.f32.xlu0 %v5691
  %v5693 = vpop.xlane.xlu0 %5692
  %v5694 = vsel %vm392, %v5686, 0.0
  %5695 = vadd.xlane.f32.xlu0 %v5694
  %v5696 = vpop.xlane.xlu0 %5695
  %v5697 = vsel %vm392, %v5687, 0.0
  %5698 = vadd.xlane.f32.xlu0 %v5697
  %v5699 = vpop.xlane.xlu0 %5698
  %v5700 = vmul.f32 %v5690, %v405
  %v5701 = vmul.f32 %v5693, %v405
  %v5702 = vmul.f32 %v5696, %v405
  %v5703 = vmul.f32 %v5699, %v405
  %v5704 = vadd.f32 %v5700, 1e-05
  %v5705 = vadd.f32 %v5701, 1e-05
  %v5706 = vadd.f32 %v5702, 1e-05
  %v5707 = vadd.f32 %v5703, 1e-05
  %v5708 = vrsqrt.pop %v5704
  %v5709 = vrsqrt.pop %v5705
  %v5710 = vrsqrt.pop %v5706
  %v5711 = vrsqrt.pop %v5707
  %v5712 = vmul.f32 %v5680, %v5708
  %v5713 = vmul.f32 %v5681, %v5709
  %v5714 = vmul.f32 %v5682, %v5710
  %v5715 = vmul.f32 %v5683, %v5711
  %v5716 = vld [vmem:[%s51] sm:$0x1]
  %v5718 = vlaneseq
  %v5719 = vshrl.u32 %v5718, 7
  %v5720 = vsub.s32 0, %v5719
  %v5721 = vrot.slane %v5716, %v5720
  %v5723 = vmul.f32 %v5712, %v5721
  %v5724 = vmul.f32 %v5713, %v5721
  %v5725 = vmul.f32 %v5714, %v5721
  %v5726 = vmul.f32 %v5715, %v5721
  %v5727 = vld [vmem:[%s53] sm:$0x1]
  %v5729 = vlaneseq
  %v5730 = vshrl.u32 %v5729, 7
  %v5731 = vsub.s32 0, %v5730
  %v5732 = vrot.slane %v5727, %v5731
  %v5734 = vadd.f32 %v5723, %v5732
  %v5735 = vadd.f32 %v5724, %v5732
  %v5736 = vadd.f32 %v5725, %v5732
  %v5737 = vadd.f32 %v5726, %v5732
  %v5738 = vld [vmem:[%s55] sm:$0xff]
  %v5739 = vld [vmem:[%s55 + $0x8] sm:$0xff]
  %v5740 = vld [vmem:[%s55 + $0x10] sm:$0xff]
  %v5741 = vld [vmem:[%s55 + $0x18] sm:$0xff]
  %v5742 = vld [vmem:[%s57] sm:$0x1]
  %v5744 = vlaneseq
  %v5745 = vshrl.u32 %v5744, 7
  %v5746 = vsub.s32 0, %v5745
  %v5747 = vrot.slane %v5742, %v5746
  %v5750 = vsel %vm392, %v5734, 0
  %v5753 = vsel %vm392, %v5735, 0
  %v5756 = vsel %vm392, %v5736, 0
  %v5759 = vsel %vm392, %v5737, 0
  %5761 = vmatprep.subr.mxu0 0.0
  %5762 = vmatpush1.msra.mxu0 %v5738
  %5763 = vmatprep.subr.mxu0 0.0
  %5764 = vmatpush1.msra.mxu0 %v5739
  %5765 = vmatprep.subr.mxu0 0.0
  %5766 = vmatpush1.msra.mxu0 %v5740
  %5767 = vmatprep.subr.mxu0 0.0
  %5768 = vmatpush1.msra.mxu0 %v5741
  %5769 = vmatprep.subr.mxu0 0.0
  %5770 = vmatpush1.msra.mxu0 0.0
  %5771 = vmatprep.subr.mxu0 0.0
  %5772 = vmatpush1.msra.mxu0 0.0
  %5773 = vmatprep.subr.mxu0 0.0
  %5774 = vmatpush1.msra.mxu0 0.0
  %5775 = vmatprep.subr.mxu0 0.0
  %5776 = vmatpush1.msra.mxu0 0.0
  %5777 = vmatprep.subr.mxu0 0.0
  %5778 = vmatpush1.msra.mxu0 0.0
  %5779 = vmatprep.subr.mxu0 0.0
  %5780 = vmatpush1.msra.mxu0 0.0
  %5781 = vmatprep.subr.mxu0 0.0
  %5782 = vmatpush1.msra.mxu0 0.0
  %5783 = vmatprep.subr.mxu0 0.0
  %5784 = vmatpush1.msra.mxu0 0.0
  %5785 = vmatprep.subr.mxu0 0.0
  %5786 = vmatpush1.msra.mxu0 0.0
  %5787 = vmatprep.subr.mxu0 0.0
  %5788 = vmatpush1.msra.mxu0 0.0
  %5789 = vmatprep.subr.mxu0 0.0
  %5790 = vmatpush1.msra.mxu0 0.0
  %5791 = vmatprep.subr.mxu0 0.0
  %5792 = vmatpush1.msra.mxu0 0.0
  %5793 = vmatprep.subr.mxu0 0.0
  %5794 = vmatpush1.msra.mxu0 0.0
  %5795 = vmatprep.subr.mxu0 0.0
  %5796 = vmatpush1.msra.mxu0 0.0
  %5797 = vmatprep.subr.mxu0 0.0
  %5798 = vmatpush1.msra.mxu0 0.0
  %5799 = vmatprep.subr.mxu0 0.0
  %5800 = vmatpush1.msra.mxu0 0.0
  %5801 = vmatprep.subr.mxu0 0.0
  %5802 = vmatpush1.msra.mxu0 0.0
  %5803 = vmatprep.subr.mxu0 0.0
  %5804 = vmatpush1.msra.mxu0 0.0
  %5805 = vmatprep.subr.mxu0 0.0
  %5806 = vmatpush1.msra.mxu0 0.0
  %5807 = vmatprep.subr.mxu0 0.0
  %5808 = vmatpush1.msra.mxu0 0.0
  %5809 = vmatprep.subr.mxu0 0.0
  %5810 = vmatpush1.msra.mxu0 0.0
  %5811 = vmatprep.subr.mxu0 0.0
  %5812 = vmatpush1.msra.mxu0 0.0
  %5813 = vmatprep.subr.mxu0 0.0
  %5814 = vmatpush1.msra.mxu0 0.0
  %5815 = vmatprep.subr.mxu0 0.0
  %5816 = vmatpush1.msra.mxu0 0.0
  %5817 = vmatprep.subr.mxu0 0.0
  %5818 = vmatpush1.msra.mxu0 0.0
  %5819 = vmatprep.subr.mxu0 0.0
  %5820 = vmatpush1.msra.mxu0 0.0
  %5821 = vmatprep.subr.mxu0 0.0
  %5822 = vmatpush1.msra.mxu0 0.0
  %5823 = vmatprep.subr.mxu0 0.0
  %5824 = vmatpush1.msra.mxu0 0.0
  %5825 = vmatprep.mubr.f32.mxu0 0.0
  %5826 = vmatmul.mubr.f32.gmra.mrb[0].mxu0 %v5750
  %v5827 = vpop.f32.mrb[0].mxu0
  %v5828 = vadd.f32 %v5747, %v5827
  %v5829 = vpop.f32.mrb[0].mxu0
  %5830 = vmatprep.mubr.f32.mxu0 0.0
  %5831 = vmatmul.mubr.f32.gmra.mrb[0].mxu0 %v5753
  %v5832 = vpop.f32.mrb[0].mxu0
  %v5833 = vadd.f32 %v5747, %v5832
  %v5834 = vpop.f32.mrb[0].mxu0
  %5835 = vmatprep.mubr.f32.mxu0 0.0
  %5836 = vmatmul.mubr.f32.gmra.mrb[0].mxu0 %v5756
  %v5837 = vpop.f32.mrb[0].mxu0
  %v5838 = vadd.f32 %v5747, %v5837
  %v5839 = vpop.f32.mrb[0].mxu0
  %5840 = vmatprep.mubr.f32.mxu0 0.0
  %5841 = vmatmul.mubr.f32.gmra.mrb[0].mxu0 %v5759
  %v5842 = vpop.f32.mrb[0].mxu0
  %v5843 = vadd.f32 %v5747, %v5842
  %v5844 = vpop.f32.mrb[0].mxu0
  %5845 = vdwg.mxu0
  %v5846 = vmul.f32 %v5828, %v5828
  %v5847 = vmul.f32 %v5833, %v5833
  %v5848 = vmul.f32 %v5838, %v5838
  %v5849 = vmul.f32 %v5843, %v5843
  %v5850 = vmul.f32 %v5828, %v5846
  %v5851 = vmul.f32 %v5833, %v5847
  %v5852 = vmul.f32 %v5838, %v5848
  %v5853 = vmul.f32 %v5843, %v5849
  %v5854 = vmul.f32 %v5850, 0.044715
  %v5855 = vmul.f32 %v5851, 0.044715
  %v5856 = vmul.f32 %v5852, 0.044715
  %v5857 = vmul.f32 %v5853, 0.044715
  %v5858 = vadd.f32 %v5828, %v5854
  %v5859 = vadd.f32 %v5833, %v5855
  %v5860 = vadd.f32 %v5838, %v5856
  %v5861 = vadd.f32 %v5843, %v5857
  %v5862 = vmul.f32 %v5858, 0.7978846
  %v5863 = vmul.f32 %v5859, 0.7978846
  %v5864 = vmul.f32 %v5860, 0.7978846
  %v5865 = vmul.f32 %v5861, 0.7978846
  %v5866 = vtanh.pop %v5862
  %v5867 = vtanh.pop %v5863
  %v5868 = vtanh.pop %v5864
  %v5869 = vtanh.pop %v5865
  %v5870 = vadd.f32 %v5866, 1.0
  %v5871 = vadd.f32 %v5867, 1.0
  %v5872 = vadd.f32 %v5868, 1.0
  %v5873 = vadd.f32 %v5869, 1.0
  %v5874 = vmul.f32 %v5870, 0.5
  %v5875 = vmul.f32 %v5871, 0.5
  %v5876 = vmul.f32 %v5872, 0.5
  %v5877 = vmul.f32 %v5873, 0.5
  %v5878 = vmul.f32 %v5828, %v5874
  %v5879 = vmul.f32 %v5833, %v5875
  %v5880 = vmul.f32 %v5838, %v5876
  %v5881 = vmul.f32 %v5843, %v5877
  %v5882 = vld [vmem:[%s59] sm:$0xff]
  %v5883 = vld [vmem:[%s59 + $0x8] sm:$0xff]
  %v5884 = vld [vmem:[%s59 + $0x10] sm:$0xff]
  %v5885 = vld [vmem:[%s59 + $0x18] sm:$0xff]
  %v5886 = vld [vmem:[%s59 + $0x20] sm:$0xff]
  %v5887 = vld [vmem:[%s59 + $0x28] sm:$0xff]
  %v5888 = vld [vmem:[%s59 + $0x30] sm:$0xff]
  %v5889 = vld [vmem:[%s59 + $0x38] sm:$0xff]
  %v5890 = vld [vmem:[%s59 + $0x40] sm:$0xff]
  %v5891 = vld [vmem:[%s59 + $0x48] sm:$0xff]
  %v5892 = vld [vmem:[%s59 + $0x50] sm:$0xff]
  %v5893 = vld [vmem:[%s59 + $0x58] sm:$0xff]
  %v5894 = vld [vmem:[%s59 + $0x60] sm:$0xff]
  %v5895 = vld [vmem:[%s59 + $0x68] sm:$0xff]
  %v5896 = vld [vmem:[%s59 + $0x70] sm:$0xff]
  %v5897 = vld [vmem:[%s59 + $0x78] sm:$0xff]
  %v5898 = vld [vmem:[%s61] sm:$0x1]
  %v5900 = vlaneseq
  %v5901 = vshrl.u32 %v5900, 7
  %v5902 = vsub.s32 0, %v5901
  %v5903 = vrot.slane %v5898, %v5902
  %5905 = vmatprep.subr.mxu0 0.0
  %5906 = vmatpush1.msra.mxu0 %v5882
  %5907 = vmatprep.subr.mxu0 0.0
  %5908 = vmatpush1.msra.mxu0 %v5883
  %5909 = vmatprep.subr.mxu0 0.0
  %5910 = vmatpush1.msra.mxu0 %v5884
  %5911 = vmatprep.subr.mxu0 0.0
  %5912 = vmatpush1.msra.mxu0 %v5885
  %5913 = vmatprep.subr.mxu0 0.0
  %5914 = vmatpush1.msra.mxu0 %v5886
  %5915 = vmatprep.subr.mxu0 0.0
  %5916 = vmatpush1.msra.mxu0 %v5887
  %5917 = vmatprep.subr.mxu0 0.0
  %5918 = vmatpush1.msra.mxu0 %v5888
  %5919 = vmatprep.subr.mxu0 0.0
  %5920 = vmatpush1.msra.mxu0 %v5889
  %5921 = vmatprep.subr.mxu0 0.0
  %5922 = vmatpush1.msra.mxu0 %v5890
  %5923 = vmatprep.subr.mxu0 0.0
  %5924 = vmatpush1.msra.mxu0 %v5891
  %5925 = vmatprep.subr.mxu0 0.0
  %5926 = vmatpush1.msra.mxu0 %v5892
  %5927 = vmatprep.subr.mxu0 0.0
  %5928 = vmatpush1.msra.mxu0 %v5893
  %5929 = vmatprep.subr.mxu0 0.0
  %5930 = vmatpush1.msra.mxu0 %v5894
  %5931 = vmatprep.subr.mxu0 0.0
  %5932 = vmatpush1.msra.mxu0 %v5895
  %5933 = vmatprep.subr.mxu0 0.0
  %5934 = vmatpush1.msra.mxu0 %v5896
  %5935 = vmatprep.subr.mxu0 0.0
  %5936 = vmatpush1.msra.mxu0 %v5897
  %5937 = vmatprep.subr.mxu0 0.0
  %5938 = vmatpush1.msra.mxu0 0.0
  %5939 = vmatprep.subr.mxu0 0.0
  %5940 = vmatpush1.msra.mxu0 0.0
  %5941 = vmatprep.subr.mxu0 0.0
  %5942 = vmatpush1.msra.mxu0 0.0
  %5943 = vmatprep.subr.mxu0 0.0
  %5944 = vmatpush1.msra.mxu0 0.0
  %5945 = vmatprep.subr.mxu0 0.0
  %5946 = vmatpush1.msra.mxu0 0.0
  %5947 = vmatprep.subr.mxu0 0.0
  %5948 = vmatpush1.msra.mxu0 0.0
  %5949 = vmatprep.subr.mxu0 0.0
  %5950 = vmatpush1.msra.mxu0 0.0
  %5951 = vmatprep.subr.mxu0 0.0
  %5952 = vmatpush1.msra.mxu0 0.0
  %5953 = vmatprep.subr.mxu0 0.0
  %5954 = vmatpush1.msra.mxu0 0.0
  %5955 = vmatprep.subr.mxu0 0.0
  %5956 = vmatpush1.msra.mxu0 0.0
  %5957 = vmatprep.subr.mxu0 0.0
  %5958 = vmatpush1.msra.mxu0 0.0
  %5959 = vmatprep.subr.mxu0 0.0
  %5960 = vmatpush1.msra.mxu0 0.0
  %5961 = vmatprep.subr.mxu0 0.0
  %5962 = vmatpush1.msra.mxu0 0.0
  %5963 = vmatprep.subr.mxu0 0.0
  %5964 = vmatpush1.msra.mxu0 0.0
  %5965 = vmatprep.subr.mxu0 0.0
  %5966 = vmatpush1.msra.mxu0 0.0
  %5967 = vmatprep.subr.mxu0 0.0
  %5968 = vmatpush1.msra.mxu0 0.0
  %5969 = vmatprep.mubr.f32.mxu0 0.0
  %5970 = vmatmul.mubr.f32.gmra.mrb[0].mxu0 %v5878
  %v5971 = vpop.f32.mrb[0].mxu0
  %v5972 = vadd.f32 %v5903, %v5971
  %v5973 = vpop.f32.mrb[0].mxu0
  %5974 = vmatprep.mubr.f32.mxu0 0.0
  %5975 = vmatmul.mubr.f32.gmra.mrb[0].mxu0 %v5879
  %v5976 = vpop.f32.mrb[0].mxu0
  %v5977 = vadd.f32 %v5903, %v5976
  %v5978 = vpop.f32.mrb[0].mxu0
  %5979 = vmatprep.mubr.f32.mxu0 0.0
  %5980 = vmatmul.mubr.f32.gmra.mrb[0].mxu0 %v5880
  %v5981 = vpop.f32.mrb[0].mxu0
  %v5982 = vadd.f32 %v5903, %v5981
  %v5983 = vpop.f32.mrb[0].mxu0
  %5984 = vmatprep.mubr.f32.mxu0 0.0
  %5985 = vmatmul.mubr.f32.gmra.mrb[0].mxu0 %v5881
  %v5986 = vpop.f32.mrb[0].mxu0
  %v5987 = vadd.f32 %v5903, %v5986
  %v5988 = vpop.f32.mrb[0].mxu0
  %5989 = vdwg.mxu0
  %v5990 = vadd.f32 %v5660, %v5972
  %v5991 = vadd.f32 %v5661, %v5977
  %v5992 = vadd.f32 %v5662, %v5982
  %v5993 = vadd.f32 %v5663, %v5987
  %v5994 = vsel %vm392, %v5990, 0.0
  %5995 = vadd.xlane.f32.xlu0 %v5994
  %v5996 = vpop.xlane.xlu0 %5995
  %v5997 = vsel %vm392, %v5991, 0.0
  %5998 = vadd.xlane.f32.xlu0 %v5997
  %v5999 = vpop.xlane.xlu0 %5998
  %v6000 = vsel %vm392, %v5992, 0.0
  %6001 = vadd.xlane.f32.xlu0 %v6000
  %v6002 = vpop.xlane.xlu0 %6001
  %v6003 = vsel %vm392, %v5993, 0.0
  %6004 = vadd.xlane.f32.xlu0 %v6003
  %v6005 = vpop.xlane.xlu0 %6004
  %v6006 = vmul.f32 %v5996, %v405
  %v6007 = vmul.f32 %v5999, %v405
  %v6008 = vmul.f32 %v6002, %v405
  %v6009 = vmul.f32 %v6005, %v405
  %v6010 = vsub.f32 %v5990, %v6006
  %v6011 = vsub.f32 %v5991, %v6007
  %v6012 = vsub.f32 %v5992, %v6008
  %v6013 = vsub.f32 %v5993, %v6009
  %v6014 = vmul.f32 %v6010, %v6010
  %v6015 = vmul.f32 %v6011, %v6011
  %v6016 = vmul.f32 %v6012, %v6012
  %v6017 = vmul.f32 %v6013, %v6013
  %v6018 = vsel %vm392, %v6014, 0.0
  %6019 = vadd.xlane.f32.xlu0 %v6018
  %v6020 = vpop.xlane.xlu0 %6019
  %v6021 = vsel %vm392, %v6015, 0.0
  %6022 = vadd.xlane.f32.xlu0 %v6021
  %v6023 = vpop.xlane.xlu0 %6022
  %v6024 = vsel %vm392, %v6016, 0.0
  %6025 = vadd.xlane.f32.xlu0 %v6024
  %v6026 = vpop.xlane.xlu0 %6025
  %v6027 = vsel %vm392, %v6017, 0.0
  %6028 = vadd.xlane.f32.xlu0 %v6027
  %v6029 = vpop.xlane.xlu0 %6028
  %v6030 = vmul.f32 %v6020, %v405
  %v6031 = vmul.f32 %v6023, %v405
  %v6032 = vmul.f32 %v6026, %v405
  %v6033 = vmul.f32 %v6029, %v405
  %v6034 = vadd.f32 %v6030, 1e-05
  %v6035 = vadd.f32 %v6031, 1e-05
  %v6036 = vadd.f32 %v6032, 1e-05
  %v6037 = vadd.f32 %v6033, 1e-05
  %v6038 = vrsqrt.pop %v6034
  %v6039 = vrsqrt.pop %v6035
  %v6040 = vrsqrt.pop %v6036
  %v6041 = vrsqrt.pop %v6037
  %v6042 = vmul.f32 %v6010, %v6038
  %v6043 = vmul.f32 %v6011, %v6039
  %v6044 = vmul.f32 %v6012, %v6040
  %v6045 = vmul.f32 %v6013, %v6041
  %v6046 = vld [vmem:[%s63] sm:$0x1]
  %v6048 = vlaneseq
  %v6049 = vshrl.u32 %v6048, 7
  %v6050 = vsub.s32 0, %v6049
  %v6051 = vrot.slane %v6046, %v6050
  %v6053 = vmul.f32 %v6042, %v6051
  %v6054 = vmul.f32 %v6043, %v6051
  %v6055 = vmul.f32 %v6044, %v6051
  %v6056 = vmul.f32 %v6045, %v6051
  %v6057 = vld [vmem:[%s65] sm:$0x1]
  %v6059 = vlaneseq
  %v6060 = vshrl.u32 %v6059, 7
  %v6061 = vsub.s32 0, %v6060
  %v6062 = vrot.slane %v6057, %v6061
  %v6064 = vadd.f32 %v6053, %v6062
  %v6065 = vadd.f32 %v6054, %v6062
  %v6066 = vadd.f32 %v6055, %v6062
  %v6067 = vadd.f32 %v6056, %v6062
  %v6068 = vld [vmem:[%s67] sm:$0xff]
  %v6069 = vld [vmem:[%s67 + $0x8] sm:$0xff]
  %v6070 = vld [vmem:[%s67 + $0x10] sm:$0xff]
  %v6071 = vld [vmem:[%s67 + $0x18] sm:$0xff]
  %v6072 = vld [vmem:[%s69] sm:$0x1]
  %v6074 = vlaneseq
  %v6075 = vshrl.u32 %v6074, 7
  %v6076 = vsub.s32 0, %v6075
  %v6077 = vrot.slane %v6072, %v6076
  %v6080 = vsel %vm392, %v6064, 0
  %v6083 = vsel %vm392, %v6065, 0
  %v6086 = vsel %vm392, %v6066, 0
  %v6089 = vsel %vm392, %v6067, 0
  %6091 = vmatprep.subr.mxu0 0.0
  %6092 = vmatpush1.msra.mxu0 %v6068
  %6093 = vmatprep.subr.mxu0 0.0
  %6094 = vmatpush1.msra.mxu0 %v6069
  %6095 = vmatprep.subr.mxu0 0.0
  %6096 = vmatpush1.msra.mxu0 %v6070
  %6097 = vmatprep.subr.mxu0 0.0
  %6098 = vmatpush1.msra.mxu0 %v6071
  %6099 = vmatprep.subr.mxu0 0.0
  %6100 = vmatpush1.msra.mxu0 0.0
  %6101 = vmatprep.subr.mxu0 0.0
  %6102 = vmatpush1.msra.mxu0 0.0
  %6103 = vmatprep.subr.mxu0 0.0
  %6104 = vmatpush1.msra.mxu0 0.0
  %6105 = vmatprep.subr.mxu0 0.0
  %6106 = vmatpush1.msra.mxu0 0.0
  %6107 = vmatprep.subr.mxu0 0.0
  %6108 = vmatpush1.msra.mxu0 0.0
  %6109 = vmatprep.subr.mxu0 0.0
  %6110 = vmatpush1.msra.mxu0 0.0
  %6111 = vmatprep.subr.mxu0 0.0
  %6112 = vmatpush1.msra.mxu0 0.0
  %6113 = vmatprep.subr.mxu0 0.0
  %6114 = vmatpush1.msra.mxu0 0.0
  %6115 = vmatprep.subr.mxu0 0.0
  %6116 = vmatpush1.msra.mxu0 0.0
  %6117 = vmatprep.subr.mxu0 0.0
  %6118 = vmatpush1.msra.mxu0 0.0
  %6119 = vmatprep.subr.mxu0 0.0
  %6120 = vmatpush1.msra.mxu0 0.0
  %6121 = vmatprep.subr.mxu0 0.0
  %6122 = vmatpush1.msra.mxu0 0.0
  %6123 = vmatprep.subr.mxu0 0.0
  %6124 = vmatpush1.msra.mxu0 0.0
  %6125 = vmatprep.subr.mxu0 0.0
  %6126 = vmatpush1.msra.mxu0 0.0
  %6127 = vmatprep.subr.mxu0 0.0
  %6128 = vmatpush1.msra.mxu0 0.0
  %6129 = vmatprep.subr.mxu0 0.0
  %6130 = vmatpush1.msra.mxu0 0.0
  %6131 = vmatprep.subr.mxu0 0.0
  %6132 = vmatpush1.msra.mxu0 0.0
  %6133 = vmatprep.subr.mxu0 0.0
  %6134 = vmatpush1.msra.mxu0 0.0
  %6135 = vmatprep.subr.mxu0 0.0
  %6136 = vmatpush1.msra.mxu0 0.0
  %6137 = vmatprep.subr.mxu0 0.0
  %6138 = vmatpush1.msra.mxu0 0.0
  %6139 = vmatprep.subr.mxu0 0.0
  %6140 = vmatpush1.msra.mxu0 0.0
  %6141 = vmatprep.subr.mxu0 0.0
  %6142 = vmatpush1.msra.mxu0 0.0
  %6143 = vmatprep.subr.mxu0 0.0
  %6144 = vmatpush1.msra.mxu0 0.0
  %6145 = vmatprep.subr.mxu0 0.0
  %6146 = vmatpush1.msra.mxu0 0.0
  %6147 = vmatprep.subr.mxu0 0.0
  %6148 = vmatpush1.msra.mxu0 0.0
  %6149 = vmatprep.subr.mxu0 0.0
  %6150 = vmatpush1.msra.mxu0 0.0
  %6151 = vmatprep.subr.mxu0 0.0
  %6152 = vmatpush1.msra.mxu0 0.0
  %6153 = vmatprep.subr.mxu0 0.0
  %6154 = vmatpush1.msra.mxu0 0.0
  %6155 = vmatprep.mubr.f32.mxu0 0.0
  %6156 = vmatmul.mubr.f32.gmra.mrb[0].mxu0 %v6080
  %v6157 = vpop.f32.mrb[0].mxu0
  %v6158 = vadd.f32 %v6077, %v6157
  %v6159 = vpop.f32.mrb[0].mxu0
  %6160 = vmatprep.mubr.f32.mxu0 0.0
  %6161 = vmatmul.mubr.f32.gmra.mrb[0].mxu0 %v6083
  %v6162 = vpop.f32.mrb[0].mxu0
  %v6163 = vadd.f32 %v6077, %v6162
  %v6164 = vpop.f32.mrb[0].mxu0
  %6165 = vmatprep.mubr.f32.mxu0 0.0
  %6166 = vmatmul.mubr.f32.gmra.mrb[0].mxu0 %v6086
  %v6167 = vpop.f32.mrb[0].mxu0
  %v6168 = vadd.f32 %v6077, %v6167
  %v6169 = vpop.f32.mrb[0].mxu0
  %6170 = vmatprep.mubr.f32.mxu0 0.0
  %6171 = vmatmul.mubr.f32.gmra.mrb[0].mxu0 %v6089
  %v6172 = vpop.f32.mrb[0].mxu0
  %v6173 = vadd.f32 %v6077, %v6172
  %v6174 = vpop.f32.mrb[0].mxu0
  %6175 = vdwg.mxu0
  %v6176 = vmul.f32 %v6158, %v6158
  %v6177 = vmul.f32 %v6163, %v6163
  %v6178 = vmul.f32 %v6168, %v6168
  %v6179 = vmul.f32 %v6173, %v6173
  %v6180 = vmul.f32 %v6158, %v6176
  %v6181 = vmul.f32 %v6163, %v6177
  %v6182 = vmul.f32 %v6168, %v6178
  %v6183 = vmul.f32 %v6173, %v6179
  %v6184 = vmul.f32 %v6180, 0.044715
  %v6185 = vmul.f32 %v6181, 0.044715
  %v6186 = vmul.f32 %v6182, 0.044715
  %v6187 = vmul.f32 %v6183, 0.044715
  %v6188 = vadd.f32 %v6158, %v6184
  %v6189 = vadd.f32 %v6163, %v6185
  %v6190 = vadd.f32 %v6168, %v6186
  %v6191 = vadd.f32 %v6173, %v6187
  %v6192 = vmul.f32 %v6188, 0.7978846
  %v6193 = vmul.f32 %v6189, 0.7978846
  %v6194 = vmul.f32 %v6190, 0.7978846
  %v6195 = vmul.f32 %v6191, 0.7978846
  %v6196 = vtanh.pop %v6192
  %v6197 = vtanh.pop %v6193
  %v6198 = vtanh.pop %v6194
  %v6199 = vtanh.pop %v6195
  %v6200 = vadd.f32 %v6196, 1.0
  %v6201 = vadd.f32 %v6197, 1.0
  %v6202 = vadd.f32 %v6198, 1.0
  %v6203 = vadd.f32 %v6199, 1.0
  %v6204 = vmul.f32 %v6200, 0.5
  %v6205 = vmul.f32 %v6201, 0.5
  %v6206 = vmul.f32 %v6202, 0.5
  %v6207 = vmul.f32 %v6203, 0.5
  %v6208 = vmul.f32 %v6158, %v6204
  %v6209 = vmul.f32 %v6163, %v6205
  %v6210 = vmul.f32 %v6168, %v6206
  %v6211 = vmul.f32 %v6173, %v6207
  %v6212 = vld [vmem:[%s71] sm:$0xff]
  %v6213 = vld [vmem:[%s71 + $0x8] sm:$0xff]
  %v6214 = vld [vmem:[%s71 + $0x10] sm:$0xff]
  %v6215 = vld [vmem:[%s71 + $0x18] sm:$0xff]
  %v6216 = vld [vmem:[%s73] sm:$0x1]
  %v6218 = vlaneseq
  %v6219 = vshrl.u32 %v6218, 7
  %v6220 = vsub.s32 0, %v6219
  %v6221 = vrot.slane %v6216, %v6220
  %v6224 = vsel %vm392, %v6208, 0
  %v6227 = vsel %vm392, %v6209, 0
  %v6230 = vsel %vm392, %v6210, 0
  %v6233 = vsel %vm392, %v6211, 0
  %6235 = vmatprep.subr.mxu0 0.0
  %6236 = vmatpush1.msra.mxu0 %v6212
  %6237 = vmatprep.subr.mxu0 0.0
  %6238 = vmatpush1.msra.mxu0 %v6213
  %6239 = vmatprep.subr.mxu0 0.0
  %6240 = vmatpush1.msra.mxu0 %v6214
  %6241 = vmatprep.subr.mxu0 0.0
  %6242 = vmatpush1.msra.mxu0 %v6215
  %6243 = vmatprep.subr.mxu0 0.0
  %6244 = vmatpush1.msra.mxu0 0.0
  %6245 = vmatprep.subr.mxu0 0.0
  %6246 = vmatpush1.msra.mxu0 0.0
  %6247 = vmatprep.subr.mxu0 0.0
  %6248 = vmatpush1.msra.mxu0 0.0
  %6249 = vmatprep.subr.mxu0 0.0
  %6250 = vmatpush1.msra.mxu0 0.0
  %6251 = vmatprep.subr.mxu0 0.0
  %6252 = vmatpush1.msra.mxu0 0.0
  %6253 = vmatprep.subr.mxu0 0.0
  %6254 = vmatpush1.msra.mxu0 0.0
  %6255 = vmatprep.subr.mxu0 0.0
  %6256 = vmatpush1.msra.mxu0 0.0
  %6257 = vmatprep.subr.mxu0 0.0
  %6258 = vmatpush1.msra.mxu0 0.0
  %6259 = vmatprep.subr.mxu0 0.0
  %6260 = vmatpush1.msra.mxu0 0.0
  %6261 = vmatprep.subr.mxu0 0.0
  %6262 = vmatpush1.msra.mxu0 0.0
  %6263 = vmatprep.subr.mxu0 0.0
  %6264 = vmatpush1.msra.mxu0 0.0
  %6265 = vmatprep.subr.mxu0 0.0
  %6266 = vmatpush1.msra.mxu0 0.0
  %6267 = vmatprep.subr.mxu0 0.0
  %6268 = vmatpush1.msra.mxu0 0.0
  %6269 = vmatprep.subr.mxu0 0.0
  %6270 = vmatpush1.msra.mxu0 0.0
  %6271 = vmatprep.subr.mxu0 0.0
  %6272 = vmatpush1.msra.mxu0 0.0
  %6273 = vmatprep.subr.mxu0 0.0
  %6274 = vmatpush1.msra.mxu0 0.0
  %6275 = vmatprep.subr.mxu0 0.0
  %6276 = vmatpush1.msra.mxu0 0.0
  %6277 = vmatprep.subr.mxu0 0.0
  %6278 = vmatpush1.msra.mxu0 0.0
  %6279 = vmatprep.subr.mxu0 0.0
  %6280 = vmatpush1.msra.mxu0 0.0
  %6281 = vmatprep.subr.mxu0 0.0
  %6282 = vmatpush1.msra.mxu0 0.0
  %6283 = vmatprep.subr.mxu0 0.0
  %6284 = vmatpush1.msra.mxu0 0.0
  %6285 = vmatprep.subr.mxu0 0.0
  %6286 = vmatpush1.msra.mxu0 0.0
  %6287 = vmatprep.subr.mxu0 0.0
  %6288 = vmatpush1.msra.mxu0 0.0
  %6289 = vmatprep.subr.mxu0 0.0
  %6290 = vmatpush1.msra.mxu0 0.0
  %6291 = vmatprep.subr.mxu0 0.0
  %6292 = vmatpush1.msra.mxu0 0.0
  %6293 = vmatprep.subr.mxu0 0.0
  %6294 = vmatpush1.msra.mxu0 0.0
  %6295 = vmatprep.subr.mxu0 0.0
  %6296 = vmatpush1.msra.mxu0 0.0
  %6297 = vmatprep.subr.mxu0 0.0
  %6298 = vmatpush1.msra.mxu0 0.0
  %6299 = vmatprep.mubr.f32.mxu0 0.0
  %6300 = vmatmul.mubr.f32.gmra.mrb[0].mxu0 %v6224
  %v6301 = vpop.f32.mrb[0].mxu0
  %v6302 = vadd.f32 %v6221, %v6301
  %v6303 = vpop.f32.mrb[0].mxu0
  %6304 = vmatprep.mubr.f32.mxu0 0.0
  %6305 = vmatmul.mubr.f32.gmra.mrb[0].mxu0 %v6227
  %v6306 = vpop.f32.mrb[0].mxu0
  %v6307 = vadd.f32 %v6221, %v6306
  %v6308 = vpop.f32.mrb[0].mxu0
  %6309 = vmatprep.mubr.f32.mxu0 0.0
  %6310 = vmatmul.mubr.f32.gmra.mrb[0].mxu0 %v6230
  %v6311 = vpop.f32.mrb[0].mxu0
  %v6312 = vadd.f32 %v6221, %v6311
  %v6313 = vpop.f32.mrb[0].mxu0
  %6314 = vmatprep.mubr.f32.mxu0 0.0
  %6315 = vmatmul.mubr.f32.gmra.mrb[0].mxu0 %v6233
  %v6316 = vpop.f32.mrb[0].mxu0
  %v6317 = vadd.f32 %v6221, %v6316
  %v6318 = vpop.f32.mrb[0].mxu0
  %6319 = vdwg.mxu0
  %6320 = vrot.lane.b32.xlu0 %v6208, 96
  %v6321 = vpop.permute.xlu0 %6320
  %6322 = vrot.lane.b32.xlu0 %v6209, 96
  %v6323 = vpop.permute.xlu0 %6322
  %6324 = vrot.lane.b32.xlu0 %v6210, 96
  %v6325 = vpop.permute.xlu0 %6324
  %6326 = vrot.lane.b32.xlu0 %v6211, 96
  %v6327 = vpop.permute.xlu0 %6326
  %v6328 = vsel %vm392, %v6321, 0
  %v6330 = vsel %vm392, %v6323, 0
  %v6332 = vsel %vm392, %v6325, 0
  %v6334 = vsel %vm392, %v6327, 0
  %6336 = vmatprep.subr.mxu0 0.0
  %6337 = vmatpush1.msra.mxu0 %v6212
  %6338 = vmatprep.subr.mxu0 0.0
  %6339 = vmatpush1.msra.mxu0 %v6213
  %6340 = vmatprep.subr.mxu0 0.0
  %6341 = vmatpush1.msra.mxu0 %v6214
  %6342 = vmatprep.subr.mxu0 0.0
  %6343 = vmatpush1.msra.mxu0 %v6215
  %6344 = vmatprep.subr.mxu0 0.0
  %6345 = vmatpush1.msra.mxu0 0.0
  %6346 = vmatprep.subr.mxu0 0.0
  %6347 = vmatpush1.msra.mxu0 0.0
  %6348 = vmatprep.subr.mxu0 0.0
  %6349 = vmatpush1.msra.mxu0 0.0
  %6350 = vmatprep.subr.mxu0 0.0
  %6351 = vmatpush1.msra.mxu0 0.0
  %6352 = vmatprep.subr.mxu0 0.0
  %6353 = vmatpush1.msra.mxu0 0.0
  %6354 = vmatprep.subr.mxu0 0.0
  %6355 = vmatpush1.msra.mxu0 0.0
  %6356 = vmatprep.subr.mxu0 0.0
  %6357 = vmatpush1.msra.mxu0 0.0
  %6358 = vmatprep.subr.mxu0 0.0
  %6359 = vmatpush1.msra.mxu0 0.0
  %6360 = vmatprep.subr.mxu0 0.0
  %6361 = vmatpush1.msra.mxu0 0.0
  %6362 = vmatprep.subr.mxu0 0.0
  %6363 = vmatpush1.msra.mxu0 0.0
  %6364 = vmatprep.subr.mxu0 0.0
  %6365 = vmatpush1.msra.mxu0 0.0
  %6366 = vmatprep.subr.mxu0 0.0
  %6367 = vmatpush1.msra.mxu0 0.0
  %6368 = vmatprep.subr.mxu0 0.0
  %6369 = vmatpush1.msra.mxu0 0.0
  %6370 = vmatprep.subr.mxu0 0.0
  %6371 = vmatpush1.msra.mxu0 0.0
  %6372 = vmatprep.subr.mxu0 0.0
  %6373 = vmatpush1.msra.mxu0 0.0
  %6374 = vmatprep.subr.mxu0 0.0
  %6375 = vmatpush1.msra.mxu0 0.0
  %6376 = vmatprep.subr.mxu0 0.0
  %6377 = vmatpush1.msra.mxu0 0.0
  %6378 = vmatprep.subr.mxu0 0.0
  %6379 = vmatpush1.msra.mxu0 0.0
  %6380 = vmatprep.subr.mxu0 0.0
  %6381 = vmatpush1.msra.mxu0 0.0
  %6382 = vmatprep.subr.mxu0 0.0
  %6383 = vmatpush1.msra.mxu0 0.0
  %6384 = vmatprep.subr.mxu0 0.0
  %6385 = vmatpush1.msra.mxu0 0.0
  %6386 = vmatprep.subr.mxu0 0.0
  %6387 = vmatpush1.msra.mxu0 0.0
  %6388 = vmatprep.subr.mxu0 0.0
  %6389 = vmatpush1.msra.mxu0 0.0
  %6390 = vmatprep.subr.mxu0 0.0
  %6391 = vmatpush1.msra.mxu0 0.0
  %6392 = vmatprep.subr.mxu0 0.0
  %6393 = vmatpush1.msra.mxu0 0.0
  %6394 = vmatprep.subr.mxu0 0.0
  %6395 = vmatpush1.msra.mxu0 0.0
  %6396 = vmatprep.subr.mxu0 0.0
  %6397 = vmatpush1.msra.mxu0 0.0
  %6398 = vmatprep.subr.mxu0 0.0
  %6399 = vmatpush1.msra.mxu0 0.0
  %6400 = vmatprep.mubr.f32.mxu0 0.0
  %6401 = vmatmul.mubr.f32.gmra.mrb[0].mxu0 %v6328
  %v6402 = vpop.f32.mrb[0].mxu0
  %v6403 = vadd.f32 %v6221, %v6402
  %v6404 = vpop.f32.mrb[0].mxu0
  %6405 = vmatprep.mubr.f32.mxu0 0.0
  %6406 = vmatmul.mubr.f32.gmra.mrb[0].mxu0 %v6330
  %v6407 = vpop.f32.mrb[0].mxu0
  %v6408 = vadd.f32 %v6221, %v6407
  %v6409 = vpop.f32.mrb[0].mxu0
  %6410 = vmatprep.mubr.f32.mxu0 0.0
  %6411 = vmatmul.mubr.f32.gmra.mrb[0].mxu0 %v6332
  %v6412 = vpop.f32.mrb[0].mxu0
  %v6413 = vadd.f32 %v6221, %v6412
  %v6414 = vpop.f32.mrb[0].mxu0
  %6415 = vmatprep.mubr.f32.mxu0 0.0
  %6416 = vmatmul.mubr.f32.gmra.mrb[0].mxu0 %v6334
  %v6417 = vpop.f32.mrb[0].mxu0
  %v6418 = vadd.f32 %v6221, %v6417
  %v6419 = vpop.f32.mrb[0].mxu0
  %6420 = vdwg.mxu0
  %6421 = vrot.lane.b32.xlu0 %v6208, 64
  %v6422 = vpop.permute.xlu0 %6421
  %6423 = vrot.lane.b32.xlu0 %v6209, 64
  %v6424 = vpop.permute.xlu0 %6423
  %6425 = vrot.lane.b32.xlu0 %v6210, 64
  %v6426 = vpop.permute.xlu0 %6425
  %6427 = vrot.lane.b32.xlu0 %v6211, 64
  %v6428 = vpop.permute.xlu0 %6427
  %v6429 = vsel %vm392, %v6422, 0
  %v6431 = vsel %vm392, %v6424, 0
  %v6433 = vsel %vm392, %v6426, 0
  %v6435 = vsel %vm392, %v6428, 0
  %6437 = vmatprep.subr.mxu0 0.0
  %6438 = vmatpush1.msra.mxu0 %v6212
  %6439 = vmatprep.subr.mxu0 0.0
  %6440 = vmatpush1.msra.mxu0 %v6213
  %6441 = vmatprep.subr.mxu0 0.0
  %6442 = vmatpush1.msra.mxu0 %v6214
  %6443 = vmatprep.subr.mxu0 0.0
  %6444 = vmatpush1.msra.mxu0 %v6215
  %6445 = vmatprep.subr.mxu0 0.0
  %6446 = vmatpush1.msra.mxu0 0.0
  %6447 = vmatprep.subr.mxu0 0.0
  %6448 = vmatpush1.msra.mxu0 0.0
  %6449 = vmatprep.subr.mxu0 0.0
  %6450 = vmatpush1.msra.mxu0 0.0
  %6451 = vmatprep.subr.mxu0 0.0
  %6452 = vmatpush1.msra.mxu0 0.0
  %6453 = vmatprep.subr.mxu0 0.0
  %6454 = vmatpush1.msra.mxu0 0.0
  %6455 = vmatprep.subr.mxu0 0.0
  %6456 = vmatpush1.msra.mxu0 0.0
  %6457 = vmatprep.subr.mxu0 0.0
  %6458 = vmatpush1.msra.mxu0 0.0
  %6459 = vmatprep.subr.mxu0 0.0
  %6460 = vmatpush1.msra.mxu0 0.0
  %6461 = vmatprep.subr.mxu0 0.0
  %6462 = vmatpush1.msra.mxu0 0.0
  %6463 = vmatprep.subr.mxu0 0.0
  %6464 = vmatpush1.msra.mxu0 0.0
  %6465 = vmatprep.subr.mxu0 0.0
  %6466 = vmatpush1.msra.mxu0 0.0
  %6467 = vmatprep.subr.mxu0 0.0
  %6468 = vmatpush1.msra.mxu0 0.0
  %6469 = vmatprep.subr.mxu0 0.0
  %6470 = vmatpush1.msra.mxu0 0.0
  %6471 = vmatprep.subr.mxu0 0.0
  %6472 = vmatpush1.msra.mxu0 0.0
  %6473 = vmatprep.subr.mxu0 0.0
  %6474 = vmatpush1.msra.mxu0 0.0
  %6475 = vmatprep.subr.mxu0 0.0
  %6476 = vmatpush1.msra.mxu0 0.0
  %6477 = vmatprep.subr.mxu0 0.0
  %6478 = vmatpush1.msra.mxu0 0.0
  %6479 = vmatprep.subr.mxu0 0.0
  %6480 = vmatpush1.msra.mxu0 0.0
  %6481 = vmatprep.subr.mxu0 0.0
  %6482 = vmatpush1.msra.mxu0 0.0
  %6483 = vmatprep.subr.mxu0 0.0
  %6484 = vmatpush1.msra.mxu0 0.0
  %6485 = vmatprep.subr.mxu0 0.0
  %6486 = vmatpush1.msra.mxu0 0.0
  %6487 = vmatprep.subr.mxu0 0.0
  %6488 = vmatpush1.msra.mxu0 0.0
  %6489 = vmatprep.subr.mxu0 0.0
  %6490 = vmatpush1.msra.mxu0 0.0
  %6491 = vmatprep.subr.mxu0 0.0
  %6492 = vmatpush1.msra.mxu0 0.0
  %6493 = vmatprep.subr.mxu0 0.0
  %6494 = vmatpush1.msra.mxu0 0.0
  %6495 = vmatprep.subr.mxu0 0.0
  %6496 = vmatpush1.msra.mxu0 0.0
  %6497 = vmatprep.subr.mxu0 0.0
  %6498 = vmatpush1.msra.mxu0 0.0
  %6499 = vmatprep.subr.mxu0 0.0
  %6500 = vmatpush1.msra.mxu0 0.0
  %6501 = vmatprep.mubr.f32.mxu0 0.0
  %6502 = vmatmul.mubr.f32.gmra.mrb[0].mxu0 %v6429
  %v6503 = vpop.f32.mrb[0].mxu0
  %v6504 = vadd.f32 %v6221, %v6503
  %v6505 = vpop.f32.mrb[0].mxu0
  %6506 = vmatprep.mubr.f32.mxu0 0.0
  %6507 = vmatmul.mubr.f32.gmra.mrb[0].mxu0 %v6431
  %v6508 = vpop.f32.mrb[0].mxu0
  %v6509 = vadd.f32 %v6221, %v6508
  %v6510 = vpop.f32.mrb[0].mxu0
  %6511 = vmatprep.mubr.f32.mxu0 0.0
  %6512 = vmatmul.mubr.f32.gmra.mrb[0].mxu0 %v6433
  %v6513 = vpop.f32.mrb[0].mxu0
  %v6514 = vadd.f32 %v6221, %v6513
  %v6515 = vpop.f32.mrb[0].mxu0
  %6516 = vmatprep.mubr.f32.mxu0 0.0
  %6517 = vmatmul.mubr.f32.gmra.mrb[0].mxu0 %v6435
  %v6518 = vpop.f32.mrb[0].mxu0
  %v6519 = vadd.f32 %v6221, %v6518
  %v6520 = vpop.f32.mrb[0].mxu0
  %6521 = vdwg.mxu0
  %6522 = vrot.lane.b32.xlu0 %v6208, 32
  %v6523 = vpop.permute.xlu0 %6522
  %6524 = vrot.lane.b32.xlu0 %v6209, 32
  %v6525 = vpop.permute.xlu0 %6524
  %6526 = vrot.lane.b32.xlu0 %v6210, 32
  %v6527 = vpop.permute.xlu0 %6526
  %6528 = vrot.lane.b32.xlu0 %v6211, 32
  %v6529 = vpop.permute.xlu0 %6528
  %v6530 = vsel %vm392, %v6523, 0
  %v6532 = vsel %vm392, %v6525, 0
  %v6534 = vsel %vm392, %v6527, 0
  %v6536 = vsel %vm392, %v6529, 0
  %6538 = vmatprep.subr.mxu0 0.0
  %6539 = vmatpush1.msra.mxu0 %v6212
  %6540 = vmatprep.subr.mxu0 0.0
  %6541 = vmatpush1.msra.mxu0 %v6213
  %6542 = vmatprep.subr.mxu0 0.0
  %6543 = vmatpush1.msra.mxu0 %v6214
  %6544 = vmatprep.subr.mxu0 0.0
  %6545 = vmatpush1.msra.mxu0 %v6215
  %6546 = vmatprep.subr.mxu0 0.0
  %6547 = vmatpush1.msra.mxu0 0.0
  %6548 = vmatprep.subr.mxu0 0.0
  %6549 = vmatpush1.msra.mxu0 0.0
  %6550 = vmatprep.subr.mxu0 0.0
  %6551 = vmatpush1.msra.mxu0 0.0
  %6552 = vmatprep.subr.mxu0 0.0
  %6553 = vmatpush1.msra.mxu0 0.0
  %6554 = vmatprep.subr.mxu0 0.0
  %6555 = vmatpush1.msra.mxu0 0.0
  %6556 = vmatprep.subr.mxu0 0.0
  %6557 = vmatpush1.msra.mxu0 0.0
  %6558 = vmatprep.subr.mxu0 0.0
  %6559 = vmatpush1.msra.mxu0 0.0
  %6560 = vmatprep.subr.mxu0 0.0
  %6561 = vmatpush1.msra.mxu0 0.0
  %6562 = vmatprep.subr.mxu0 0.0
  %6563 = vmatpush1.msra.mxu0 0.0
  %6564 = vmatprep.subr.mxu0 0.0
  %6565 = vmatpush1.msra.mxu0 0.0
  %6566 = vmatprep.subr.mxu0 0.0
  %6567 = vmatpush1.msra.mxu0 0.0
  %6568 = vmatprep.subr.mxu0 0.0
  %6569 = vmatpush1.msra.mxu0 0.0
  %6570 = vmatprep.subr.mxu0 0.0
  %6571 = vmatpush1.msra.mxu0 0.0
  %6572 = vmatprep.subr.mxu0 0.0
  %6573 = vmatpush1.msra.mxu0 0.0
  %6574 = vmatprep.subr.mxu0 0.0
  %6575 = vmatpush1.msra.mxu0 0.0
  %6576 = vmatprep.subr.mxu0 0.0
  %6577 = vmatpush1.msra.mxu0 0.0
  %6578 = vmatprep.subr.mxu0 0.0
  %6579 = vmatpush1.msra.mxu0 0.0
  %6580 = vmatprep.subr.mxu0 0.0
  %6581 = vmatpush1.msra.mxu0 0.0
  %6582 = vmatprep.subr.mxu0 0.0
  %6583 = vmatpush1.msra.mxu0 0.0
  %6584 = vmatprep.subr.mxu0 0.0
  %6585 = vmatpush1.msra.mxu0 0.0
  %6586 = vmatprep.subr.mxu0 0.0
  %6587 = vmatpush1.msra.mxu0 0.0
  %6588 = vmatprep.subr.mxu0 0.0
  %6589 = vmatpush1.msra.mxu0 0.0
  %6590 = vmatprep.subr.mxu0 0.0
  %6591 = vmatpush1.msra.mxu0 0.0
  %6592 = vmatprep.subr.mxu0 0.0
  %6593 = vmatpush1.msra.mxu0 0.0
  %6594 = vmatprep.subr.mxu0 0.0
  %6595 = vmatpush1.msra.mxu0 0.0
  %6596 = vmatprep.subr.mxu0 0.0
  %6597 = vmatpush1.msra.mxu0 0.0
  %6598 = vmatprep.subr.mxu0 0.0
  %6599 = vmatpush1.msra.mxu0 0.0
  %6600 = vmatprep.subr.mxu0 0.0
  %6601 = vmatpush1.msra.mxu0 0.0
  %6602 = vmatprep.mubr.f32.mxu0 0.0
  %6603 = vmatmul.mubr.f32.gmra.mrb[0].mxu0 %v6530
  %v6604 = vpop.f32.mrb[0].mxu0
  %v6605 = vadd.f32 %v6221, %v6604
  %v6606 = vpop.f32.mrb[0].mxu0
  %6607 = vmatprep.mubr.f32.mxu0 0.0
  %6608 = vmatmul.mubr.f32.gmra.mrb[0].mxu0 %v6532
  %v6609 = vpop.f32.mrb[0].mxu0
  %v6610 = vadd.f32 %v6221, %v6609
  %v6611 = vpop.f32.mrb[0].mxu0
  %6612 = vmatprep.mubr.f32.mxu0 0.0
  %6613 = vmatmul.mubr.f32.gmra.mrb[0].mxu0 %v6534
  %v6614 = vpop.f32.mrb[0].mxu0
  %v6615 = vadd.f32 %v6221, %v6614
  %v6616 = vpop.f32.mrb[0].mxu0
  %6617 = vmatprep.mubr.f32.mxu0 0.0
  %6618 = vmatmul.mubr.f32.gmra.mrb[0].mxu0 %v6536
  %v6619 = vpop.f32.mrb[0].mxu0
  %v6620 = vadd.f32 %v6221, %v6619
  %v6621 = vpop.f32.mrb[0].mxu0
  %6622 = vdwg.mxu0
  %v6623 = vld [vmem:[%s75] sm:$0xff]
  %v6624 = vld [vmem:[%s75 + $0x8] sm:$0xff]
  %v6625 = vld [vmem:[%s75 + $0x10] sm:$0xff]
  %v6626 = vld [vmem:[%s75 + $0x18] sm:$0xff]
  %v6627 = vld [vmem:[%s75 + $0x20] sm:$0xff]
  %v6628 = vld [vmem:[%s75 + $0x28] sm:$0xff]
  %v6629 = vld [vmem:[%s75 + $0x30] sm:$0xff]
  %v6630 = vld [vmem:[%s75 + $0x38] sm:$0xff]
  %v6631 = vld [vmem:[%s77] sm:$0xff]
  %v6632 = vld [vmem:[%s77 + $0x8] sm:$0xff]
  %v6633 = vld [vmem:[%s77 + $0x10] sm:$0xff]
  %v6634 = vld [vmem:[%s77 + $0x18] sm:$0xff]
  %v6635 = vld [vmem:[%s77 + $0x20] sm:$0xff]
  %v6636 = vld [vmem:[%s77 + $0x28] sm:$0xff]
  %v6637 = vld [vmem:[%s77 + $0x30] sm:$0xff]
  %v6638 = vld [vmem:[%s77 + $0x38] sm:$0xff]
  %v6639 = vld [vmem:[%s79] sm:$0xff]
  %v6640 = vld [vmem:[%s79 + $0x8] sm:$0xff]
  %v6641 = vld [vmem:[%s79 + $0x10] sm:$0xff]
  %v6642 = vld [vmem:[%s79 + $0x18] sm:$0xff]
  %v6643 = vld [vmem:[%s79 + $0x20] sm:$0xff]
  %v6644 = vld [vmem:[%s79 + $0x28] sm:$0xff]
  %v6645 = vld [vmem:[%s79 + $0x30] sm:$0xff]
  %v6646 = vld [vmem:[%s79 + $0x38] sm:$0xff]
  %v6647 = vld [vmem:[%s79 + $0x40] sm:$0xff]
  %v6648 = vld [vmem:[%s79 + $0x48] sm:$0xff]
  %v6649 = vld [vmem:[%s79 + $0x50] sm:$0xff]
  %v6650 = vld [vmem:[%s79 + $0x58] sm:$0xff]
  %v6651 = vld [vmem:[%s79 + $0x60] sm:$0xff]
  %v6652 = vld [vmem:[%s79 + $0x68] sm:$0xff]
  %v6653 = vld [vmem:[%s79 + $0x70] sm:$0xff]
  %v6654 = vld [vmem:[%s79 + $0x78] sm:$0xff]
  %v6655 = vld [vmem:[%s79 + $0x80] sm:$0xff]
  %v6656 = vld [vmem:[%s79 + $0x88] sm:$0xff]
  %v6657 = vld [vmem:[%s79 + $0x90] sm:$0xff]
  %v6658 = vld [vmem:[%s79 + $0x98] sm:$0xff]
  %v6659 = vld [vmem:[%s79 + $0xa0] sm:$0xff]
  %v6660 = vld [vmem:[%s79 + $0xa8] sm:$0xff]
  %v6661 = vld [vmem:[%s79 + $0xb0] sm:$0xff]
  %v6662 = vld [vmem:[%s79 + $0xb8] sm:$0xff]
  %v6663 = vld [vmem:[%s79 + $0xc0] sm:$0xff]
  %v6664 = vld [vmem:[%s79 + $0xc8] sm:$0xff]
  %v6665 = vld [vmem:[%s79 + $0xd0] sm:$0xff]
  %v6666 = vld [vmem:[%s79 + $0xd8] sm:$0xff]
  %v6667 = vld [vmem:[%s79 + $0xe0] sm:$0xff]
  %v6668 = vld [vmem:[%s79 + $0xe8] sm:$0xff]
  %v6669 = vld [vmem:[%s79 + $0xf0] sm:$0xff]
  %v6670 = vld [vmem:[%s79 + $0xf8] sm:$0xff]
  %v6671 = vld [vmem:[%s81] sm:$0xff]
  %v6672 = vld [vmem:[%s81 + $0x8] sm:$0xff]
  %v6673 = vld [vmem:[%s81 + $0x10] sm:$0xff]
  %v6674 = vld [vmem:[%s81 + $0x18] sm:$0xff]
  %v6675 = vld [vmem:[%s81 + $0x20] sm:$0xff]
  %v6676 = vld [vmem:[%s81 + $0x28] sm:$0xff]
  %v6677 = vld [vmem:[%s81 + $0x30] sm:$0xff]
  %v6678 = vld [vmem:[%s81 + $0x38] sm:$0xff]
  %v6679 = vld [vmem:[%s81 + $0x40] sm:$0xff]
  %v6680 = vld [vmem:[%s81 + $0x48] sm:$0xff]
  %v6681 = vld [vmem:[%s81 + $0x50] sm:$0xff]
  %v6682 = vld [vmem:[%s81 + $0x58] sm:$0xff]
  %v6683 = vld [vmem:[%s81 + $0x60] sm:$0xff]
  %v6684 = vld [vmem:[%s81 + $0x68] sm:$0xff]
  %v6685 = vld [vmem:[%s81 + $0x70] sm:$0xff]
  %v6686 = vld [vmem:[%s81 + $0x78] sm:$0xff]
  %v6687 = vld [vmem:[%s81 + $0x80] sm:$0xff]
  %v6688 = vld [vmem:[%s81 + $0x88] sm:$0xff]
  %v6689 = vld [vmem:[%s81 + $0x90] sm:$0xff]
  %v6690 = vld [vmem:[%s81 + $0x98] sm:$0xff]
  %v6691 = vld [vmem:[%s81 + $0xa0] sm:$0xff]
  %v6692 = vld [vmem:[%s81 + $0xa8] sm:$0xff]
  %v6693 = vld [vmem:[%s81 + $0xb0] sm:$0xff]
  %v6694 = vld [vmem:[%s81 + $0xb8] sm:$0xff]
  %v6695 = vld [vmem:[%s81 + $0xc0] sm:$0xff]
  %v6696 = vld [vmem:[%s81 + $0xc8] sm:$0xff]
  %v6697 = vld [vmem:[%s81 + $0xd0] sm:$0xff]
  %v6698 = vld [vmem:[%s81 + $0xd8] sm:$0xff]
  %v6699 = vld [vmem:[%s81 + $0xe0] sm:$0xff]
  %v6700 = vld [vmem:[%s81 + $0xe8] sm:$0xff]
  %v6701 = vld [vmem:[%s81 + $0xf0] sm:$0xff]
  %v6702 = vld [vmem:[%s81 + $0xf8] sm:$0xff]
  %v6704 = vsel %vm672, %v6631, 0
  %v6707 = vsel %vm672, %v6632, 0
  %v6710 = vsel %vm672, %v6633, 0
  %v6713 = vsel %vm672, %v6634, 0
  %v6716 = vsel %vm672, %v6635, 0
  %v6719 = vsel %vm672, %v6636, 0
  %v6722 = vsel %vm672, %v6637, 0
  %v6725 = vsel %vm672, %v6638, 0
  %6727 = vmatprep.subr.mxu0 0.0
  %6728 = vmatpush1.msra.mxu0 %v6504
  %6729 = vmatprep.subr.mxu0 0.0
  %6730 = vmatpush1.msra.mxu0 %v6509
  %6731 = vmatprep.subr.mxu0 0.0
  %6732 = vmatpush1.msra.mxu0 0.0
  %6733 = vmatprep.subr.mxu0 0.0
  %6734 = vmatpush1.msra.mxu0 0.0
  %6735 = vmatprep.subr.mxu0 0.0
  %6736 = vmatpush1.msra.mxu0 0.0
  %6737 = vmatprep.subr.mxu0 0.0
  %6738 = vmatpush1.msra.mxu0 0.0
  %6739 = vmatprep.subr.mxu0 0.0
  %6740 = vmatpush1.msra.mxu0 0.0
  %6741 = vmatprep.subr.mxu0 0.0
  %6742 = vmatpush1.msra.mxu0 0.0
  %6743 = vmatprep.subr.mxu0 0.0
  %6744 = vmatpush1.msra.mxu0 0.0
  %6745 = vmatprep.subr.mxu0 0.0
  %6746 = vmatpush1.msra.mxu0 0.0
  %6747 = vmatprep.subr.mxu0 0.0
  %6748 = vmatpush1.msra.mxu0 0.0
  %6749 = vmatprep.subr.mxu0 0.0
  %6750 = vmatpush1.msra.mxu0 0.0
  %6751 = vmatprep.subr.mxu0 0.0
  %6752 = vmatpush1.msra.mxu0 0.0
  %6753 = vmatprep.subr.mxu0 0.0
  %6754 = vmatpush1.msra.mxu0 0.0
  %6755 = vmatprep.subr.mxu0 0.0
  %6756 = vmatpush1.msra.mxu0 0.0
  %6757 = vmatprep.subr.mxu0 0.0
  %6758 = vmatpush1.msra.mxu0 0.0
  %6759 = vmatprep.subr.mxu0 0.0
  %6760 = vmatpush1.msra.mxu0 0.0
  %6761 = vmatprep.subr.mxu0 0.0
  %6762 = vmatpush1.msra.mxu0 0.0
  %6763 = vmatprep.subr.mxu0 0.0
  %6764 = vmatpush1.msra.mxu0 0.0
  %6765 = vmatprep.subr.mxu0 0.0
  %6766 = vmatpush1.msra.mxu0 0.0
  %6767 = vmatprep.subr.mxu0 0.0
  %6768 = vmatpush1.msra.mxu0 0.0
  %6769 = vmatprep.subr.mxu0 0.0
  %6770 = vmatpush1.msra.mxu0 0.0
  %6771 = vmatprep.subr.mxu0 0.0
  %6772 = vmatpush1.msra.mxu0 0.0
  %6773 = vmatprep.subr.mxu0 0.0
  %6774 = vmatpush1.msra.mxu0 0.0
  %6775 = vmatprep.subr.mxu0 0.0
  %6776 = vmatpush1.msra.mxu0 0.0
  %6777 = vmatprep.subr.mxu0 0.0
  %6778 = vmatpush1.msra.mxu0 0.0
  %6779 = vmatprep.subr.mxu0 0.0
  %6780 = vmatpush1.msra.mxu0 0.0
  %6781 = vmatprep.subr.mxu0 0.0
  %6782 = vmatpush1.msra.mxu0 0.0
  %6783 = vmatprep.subr.mxu0 0.0
  %6784 = vmatpush1.msra.mxu0 0.0
  %6785 = vmatprep.subr.mxu0 0.0
  %6786 = vmatpush1.msra.mxu0 0.0
  %6787 = vmatprep.subr.mxu0 0.0
  %6788 = vmatpush1.msra.mxu0 0.0
  %6789 = vmatprep.subr.mxu0 0.0
  %6790 = vmatpush1.msra.mxu0 0.0
  %6791 = vmatprep.mubr.f32.mxu0 0.0
  %6792 = vmatmul.mubr.f32.gmra.mrb[0].mxu0 %v6704
  %v6793 = vpop.f32.mrb[0].mxu0
  %v6794 = vadd.f32 0.0, %v6793
  %v6795 = vpop.f32.mrb[0].mxu0
  %6796 = vmatprep.mubr.f32.mxu0 0.0
  %6797 = vmatmul.mubr.f32.gmra.mrb[0].mxu0 %v6707
  %v6798 = vpop.f32.mrb[0].mxu0
  %v6799 = vadd.f32 0.0, %v6798
  %v6800 = vpop.f32.mrb[0].mxu0
  %6801 = vmatprep.mubr.f32.mxu0 0.0
  %6802 = vmatmul.mubr.f32.gmra.mrb[0].mxu0 %v6710
  %v6803 = vpop.f32.mrb[0].mxu0
  %v6804 = vadd.f32 0.0, %v6803
  %v6805 = vpop.f32.mrb[0].mxu0
  %6806 = vmatprep.mubr.f32.mxu0 0.0
  %6807 = vmatmul.mubr.f32.gmra.mrb[0].mxu0 %v6713
  %v6808 = vpop.f32.mrb[0].mxu0
  %v6809 = vadd.f32 0.0, %v6808
  %v6810 = vpop.f32.mrb[0].mxu0
  %6811 = vmatprep.mubr.f32.mxu0 0.0
  %6812 = vmatmul.mubr.f32.gmra.mrb[0].mxu0 %v6716
  %v6813 = vpop.f32.mrb[0].mxu0
  %v6814 = vadd.f32 0.0, %v6813
  %v6815 = vpop.f32.mrb[0].mxu0
  %6816 = vmatprep.mubr.f32.mxu0 0.0
  %6817 = vmatmul.mubr.f32.gmra.mrb[0].mxu0 %v6719
  %v6818 = vpop.f32.mrb[0].mxu0
  %v6819 = vadd.f32 0.0, %v6818
  %v6820 = vpop.f32.mrb[0].mxu0
  %6821 = vmatprep.mubr.f32.mxu0 0.0
  %6822 = vmatmul.mubr.f32.gmra.mrb[0].mxu0 %v6722
  %v6823 = vpop.f32.mrb[0].mxu0
  %v6824 = vadd.f32 0.0, %v6823
  %v6825 = vpop.f32.mrb[0].mxu0
  %6826 = vmatprep.mubr.f32.mxu0 0.0
  %6827 = vmatmul.mubr.f32.gmra.mrb[0].mxu0 %v6725
  %v6828 = vpop.f32.mrb[0].mxu0
  %v6829 = vadd.f32 0.0, %v6828
  %v6830 = vpop.f32.mrb[0].mxu0
  %6831 = vdwg.mxu0
  %v6833 = vsel %vm672, %v6623, 0
  %v6836 = vsel %vm672, %v6624, 0
  %v6839 = vsel %vm672, %v6625, 0
  %v6842 = vsel %vm672, %v6626, 0
  %v6845 = vsel %vm672, %v6627, 0
  %v6848 = vsel %vm672, %v6628, 0
  %v6851 = vsel %vm672, %v6629, 0
  %v6854 = vsel %vm672, %v6630, 0
  %6856 = vmatprep.subr.mxu0 0.0
  %6857 = vmatpush1.msra.mxu0 %v6302
  %6858 = vmatprep.subr.mxu0 0.0
  %6859 = vmatpush1.msra.mxu0 %v6307
  %6860 = vmatprep.subr.mxu0 0.0
  %6861 = vmatpush1.msra.mxu0 0.0
  %6862 = vmatprep.subr.mxu0 0.0
  %6863 = vmatpush1.msra.mxu0 0.0
  %6864 = vmatprep.subr.mxu0 0.0
  %6865 = vmatpush1.msra.mxu0 0.0
  %6866 = vmatprep.subr.mxu0 0.0
  %6867 = vmatpush1.msra.mxu0 0.0
  %6868 = vmatprep.subr.mxu0 0.0
  %6869 = vmatpush1.msra.mxu0 0.0
  %6870 = vmatprep.subr.mxu0 0.0
  %6871 = vmatpush1.msra.mxu0 0.0
  %6872 = vmatprep.subr.mxu0 0.0
  %6873 = vmatpush1.msra.mxu0 0.0
  %6874 = vmatprep.subr.mxu0 0.0
  %6875 = vmatpush1.msra.mxu0 0.0
  %6876 = vmatprep.subr.mxu0 0.0
  %6877 = vmatpush1.msra.mxu0 0.0
  %6878 = vmatprep.subr.mxu0 0.0
  %6879 = vmatpush1.msra.mxu0 0.0
  %6880 = vmatprep.subr.mxu0 0.0
  %6881 = vmatpush1.msra.mxu0 0.0
  %6882 = vmatprep.subr.mxu0 0.0
  %6883 = vmatpush1.msra.mxu0 0.0
  %6884 = vmatprep.subr.mxu0 0.0
  %6885 = vmatpush1.msra.mxu0 0.0
  %6886 = vmatprep.subr.mxu0 0.0
  %6887 = vmatpush1.msra.mxu0 0.0
  %6888 = vmatprep.subr.mxu0 0.0
  %6889 = vmatpush1.msra.mxu0 0.0
  %6890 = vmatprep.subr.mxu0 0.0
  %6891 = vmatpush1.msra.mxu0 0.0
  %6892 = vmatprep.subr.mxu0 0.0
  %6893 = vmatpush1.msra.mxu0 0.0
  %6894 = vmatprep.subr.mxu0 0.0
  %6895 = vmatpush1.msra.mxu0 0.0
  %6896 = vmatprep.subr.mxu0 0.0
  %6897 = vmatpush1.msra.mxu0 0.0
  %6898 = vmatprep.subr.mxu0 0.0
  %6899 = vmatpush1.msra.mxu0 0.0
  %6900 = vmatprep.subr.mxu0 0.0
  %6901 = vmatpush1.msra.mxu0 0.0
  %6902 = vmatprep.subr.mxu0 0.0
  %6903 = vmatpush1.msra.mxu0 0.0
  %6904 = vmatprep.subr.mxu0 0.0
  %6905 = vmatpush1.msra.mxu0 0.0
  %6906 = vmatprep.subr.mxu0 0.0
  %6907 = vmatpush1.msra.mxu0 0.0
  %6908 = vmatprep.subr.mxu0 0.0
  %6909 = vmatpush1.msra.mxu0 0.0
  %6910 = vmatprep.subr.mxu0 0.0
  %6911 = vmatpush1.msra.mxu0 0.0
  %6912 = vmatprep.subr.mxu0 0.0
  %6913 = vmatpush1.msra.mxu0 0.0
  %6914 = vmatprep.subr.mxu0 0.0
  %6915 = vmatpush1.msra.mxu0 0.0
  %6916 = vmatprep.subr.mxu0 0.0
  %6917 = vmatpush1.msra.mxu0 0.0
  %6918 = vmatprep.subr.mxu0 0.0
  %6919 = vmatpush1.msra.mxu0 0.0
  %6920 = vmatprep.mubr.f32.mxu0 0.0
  %6921 = vmatmul.mubr.f32.gmra.mrb[0].mxu0 %v6833
  %v6922 = vpop.f32.mrb[0].mxu0
  %v6923 = vadd.f32 %v6794, %v6922
  %v6924 = vpop.f32.mrb[0].mxu0
  %6925 = vmatprep.mubr.f32.mxu0 0.0
  %6926 = vmatmul.mubr.f32.gmra.mrb[0].mxu0 %v6836
  %v6927 = vpop.f32.mrb[0].mxu0
  %v6928 = vadd.f32 %v6799, %v6927
  %v6929 = vpop.f32.mrb[0].mxu0
  %6930 = vmatprep.mubr.f32.mxu0 0.0
  %6931 = vmatmul.mubr.f32.gmra.mrb[0].mxu0 %v6839
  %v6932 = vpop.f32.mrb[0].mxu0
  %v6933 = vadd.f32 %v6804, %v6932
  %v6934 = vpop.f32.mrb[0].mxu0
  %6935 = vmatprep.mubr.f32.mxu0 0.0
  %6936 = vmatmul.mubr.f32.gmra.mrb[0].mxu0 %v6842
  %v6937 = vpop.f32.mrb[0].mxu0
  %v6938 = vadd.f32 %v6809, %v6937
  %v6939 = vpop.f32.mrb[0].mxu0
  %6940 = vmatprep.mubr.f32.mxu0 0.0
  %6941 = vmatmul.mubr.f32.gmra.mrb[0].mxu0 %v6845
  %v6942 = vpop.f32.mrb[0].mxu0
  %v6943 = vadd.f32 %v6814, %v6942
  %v6944 = vpop.f32.mrb[0].mxu0
  %6945 = vmatprep.mubr.f32.mxu0 0.0
  %6946 = vmatmul.mubr.f32.gmra.mrb[0].mxu0 %v6848
  %v6947 = vpop.f32.mrb[0].mxu0
  %v6948 = vadd.f32 %v6819, %v6947
  %v6949 = vpop.f32.mrb[0].mxu0
  %6950 = vmatprep.mubr.f32.mxu0 0.0
  %6951 = vmatmul.mubr.f32.gmra.mrb[0].mxu0 %v6851
  %v6952 = vpop.f32.mrb[0].mxu0
  %v6953 = vadd.f32 %v6824, %v6952
  %v6954 = vpop.f32.mrb[0].mxu0
  %6955 = vmatprep.mubr.f32.mxu0 0.0
  %6956 = vmatmul.mubr.f32.gmra.mrb[0].mxu0 %v6854
  %v6957 = vpop.f32.mrb[0].mxu0
  %v6958 = vadd.f32 %v6829, %v6957
  %v6959 = vpop.f32.mrb[0].mxu0
  %6960 = vdwg.mxu0
  %6961 = vmatprep.subr.mxu0 0.0
  %6962 = vmatpush1.msra.mxu0 %v6605
  %6963 = vmatprep.subr.mxu0 0.0
  %6964 = vmatpush1.msra.mxu0 %v6610
  %6965 = vmatprep.subr.mxu0 0.0
  %6966 = vmatpush1.msra.mxu0 0.0
  %6967 = vmatprep.subr.mxu0 0.0
  %6968 = vmatpush1.msra.mxu0 0.0
  %6969 = vmatprep.subr.mxu0 0.0
  %6970 = vmatpush1.msra.mxu0 0.0
  %6971 = vmatprep.subr.mxu0 0.0
  %6972 = vmatpush1.msra.mxu0 0.0
  %6973 = vmatprep.subr.mxu0 0.0
  %6974 = vmatpush1.msra.mxu0 0.0
  %6975 = vmatprep.subr.mxu0 0.0
  %6976 = vmatpush1.msra.mxu0 0.0
  %6977 = vmatprep.subr.mxu0 0.0
  %6978 = vmatpush1.msra.mxu0 0.0
  %6979 = vmatprep.subr.mxu0 0.0
  %6980 = vmatpush1.msra.mxu0 0.0
  %6981 = vmatprep.subr.mxu0 0.0
  %6982 = vmatpush1.msra.mxu0 0.0
  %6983 = vmatprep.subr.mxu0 0.0
  %6984 = vmatpush1.msra.mxu0 0.0
  %6985 = vmatprep.subr.mxu0 0.0
  %6986 = vmatpush1.msra.mxu0 0.0
  %6987 = vmatprep.subr.mxu0 0.0
  %6988 = vmatpush1.msra.mxu0 0.0
  %6989 = vmatprep.subr.mxu0 0.0
  %6990 = vmatpush1.msra.mxu0 0.0
  %6991 = vmatprep.subr.mxu0 0.0
  %6992 = vmatpush1.msra.mxu0 0.0
  %6993 = vmatprep.subr.mxu0 0.0
  %6994 = vmatpush1.msra.mxu0 0.0
  %6995 = vmatprep.subr.mxu0 0.0
  %6996 = vmatpush1.msra.mxu0 0.0
  %6997 = vmatprep.subr.mxu0 0.0
  %6998 = vmatpush1.msra.mxu0 0.0
  %6999 = vmatprep.subr.mxu0 0.0
  %7000 = vmatpush1.msra.mxu0 0.0
  %7001 = vmatprep.subr.mxu0 0.0
  %7002 = vmatpush1.msra.mxu0 0.0
  %7003 = vmatprep.subr.mxu0 0.0
  %7004 = vmatpush1.msra.mxu0 0.0
  %7005 = vmatprep.subr.mxu0 0.0
  %7006 = vmatpush1.msra.mxu0 0.0
  %7007 = vmatprep.subr.mxu0 0.0
  %7008 = vmatpush1.msra.mxu0 0.0
  %7009 = vmatprep.subr.mxu0 0.0
  %7010 = vmatpush1.msra.mxu0 0.0
  %7011 = vmatprep.subr.mxu0 0.0
  %7012 = vmatpush1.msra.mxu0 0.0
  %7013 = vmatprep.subr.mxu0 0.0
  %7014 = vmatpush1.msra.mxu0 0.0
  %7015 = vmatprep.subr.mxu0 0.0
  %7016 = vmatpush1.msra.mxu0 0.0
  %7017 = vmatprep.subr.mxu0 0.0
  %7018 = vmatpush1.msra.mxu0 0.0
  %7019 = vmatprep.subr.mxu0 0.0
  %7020 = vmatpush1.msra.mxu0 0.0
  %7021 = vmatprep.subr.mxu0 0.0
  %7022 = vmatpush1.msra.mxu0 0.0
  %7023 = vmatprep.subr.mxu0 0.0
  %7024 = vmatpush1.msra.mxu0 0.0
  %7025 = vmatprep.mubr.f32.mxu0 0.0
  %7026 = vmatmul.mubr.f32.gmra.mrb[0].mxu0 %v6704
  %v7027 = vpop.f32.mrb[0].mxu0
  %v7028 = vadd.f32 0.0, %v7027
  %v7029 = vpop.f32.mrb[0].mxu0
  %7030 = vmatprep.mubr.f32.mxu0 0.0
  %7031 = vmatmul.mubr.f32.gmra.mrb[0].mxu0 %v6707
  %v7032 = vpop.f32.mrb[0].mxu0
  %v7033 = vadd.f32 0.0, %v7032
  %v7034 = vpop.f32.mrb[0].mxu0
  %7035 = vmatprep.mubr.f32.mxu0 0.0
  %7036 = vmatmul.mubr.f32.gmra.mrb[0].mxu0 %v6710
  %v7037 = vpop.f32.mrb[0].mxu0
  %v7038 = vadd.f32 0.0, %v7037
  %v7039 = vpop.f32.mrb[0].mxu0
  %7040 = vmatprep.mubr.f32.mxu0 0.0
  %7041 = vmatmul.mubr.f32.gmra.mrb[0].mxu0 %v6713
  %v7042 = vpop.f32.mrb[0].mxu0
  %v7043 = vadd.f32 0.0, %v7042
  %v7044 = vpop.f32.mrb[0].mxu0
  %7045 = vmatprep.mubr.f32.mxu0 0.0
  %7046 = vmatmul.mubr.f32.gmra.mrb[0].mxu0 %v6716
  %v7047 = vpop.f32.mrb[0].mxu0
  %v7048 = vadd.f32 0.0, %v7047
  %v7049 = vpop.f32.mrb[0].mxu0
  %7050 = vmatprep.mubr.f32.mxu0 0.0
  %7051 = vmatmul.mubr.f32.gmra.mrb[0].mxu0 %v6719
  %v7052 = vpop.f32.mrb[0].mxu0
  %v7053 = vadd.f32 0.0, %v7052
  %v7054 = vpop.f32.mrb[0].mxu0
  %7055 = vmatprep.mubr.f32.mxu0 0.0
  %7056 = vmatmul.mubr.f32.gmra.mrb[0].mxu0 %v6722
  %v7057 = vpop.f32.mrb[0].mxu0
  %v7058 = vadd.f32 0.0, %v7057
  %v7059 = vpop.f32.mrb[0].mxu0
  %7060 = vmatprep.mubr.f32.mxu0 0.0
  %7061 = vmatmul.mubr.f32.gmra.mrb[0].mxu0 %v6725
  %v7062 = vpop.f32.mrb[0].mxu0
  %v7063 = vadd.f32 0.0, %v7062
  %v7064 = vpop.f32.mrb[0].mxu0
  %7065 = vdwg.mxu0
  %7066 = vmatprep.subr.mxu0 0.0
  %7067 = vmatpush1.msra.mxu0 %v6403
  %7068 = vmatprep.subr.mxu0 0.0
  %7069 = vmatpush1.msra.mxu0 %v6408
  %7070 = vmatprep.subr.mxu0 0.0
  %7071 = vmatpush1.msra.mxu0 0.0
  %7072 = vmatprep.subr.mxu0 0.0
  %7073 = vmatpush1.msra.mxu0 0.0
  %7074 = vmatprep.subr.mxu0 0.0
  %7075 = vmatpush1.msra.mxu0 0.0
  %7076 = vmatprep.subr.mxu0 0.0
  %7077 = vmatpush1.msra.mxu0 0.0
  %7078 = vmatprep.subr.mxu0 0.0
  %7079 = vmatpush1.msra.mxu0 0.0
  %7080 = vmatprep.subr.mxu0 0.0
  %7081 = vmatpush1.msra.mxu0 0.0
  %7082 = vmatprep.subr.mxu0 0.0
  %7083 = vmatpush1.msra.mxu0 0.0
  %7084 = vmatprep.subr.mxu0 0.0
  %7085 = vmatpush1.msra.mxu0 0.0
  %7086 = vmatprep.subr.mxu0 0.0
  %7087 = vmatpush1.msra.mxu0 0.0
  %7088 = vmatprep.subr.mxu0 0.0
  %7089 = vmatpush1.msra.mxu0 0.0
  %7090 = vmatprep.subr.mxu0 0.0
  %7091 = vmatpush1.msra.mxu0 0.0
  %7092 = vmatprep.subr.mxu0 0.0
  %7093 = vmatpush1.msra.mxu0 0.0
  %7094 = vmatprep.subr.mxu0 0.0
  %7095 = vmatpush1.msra.mxu0 0.0
  %7096 = vmatprep.subr.mxu0 0.0
  %7097 = vmatpush1.msra.mxu0 0.0
  %7098 = vmatprep.subr.mxu0 0.0
  %7099 = vmatpush1.msra.mxu0 0.0
  %7100 = vmatprep.subr.mxu0 0.0
  %7101 = vmatpush1.msra.mxu0 0.0
  %7102 = vmatprep.subr.mxu0 0.0
  %7103 = vmatpush1.msra.mxu0 0.0
  %7104 = vmatprep.subr.mxu0 0.0
  %7105 = vmatpush1.msra.mxu0 0.0
  %7106 = vmatprep.subr.mxu0 0.0
  %7107 = vmatpush1.msra.mxu0 0.0
  %7108 = vmatprep.subr.mxu0 0.0
  %7109 = vmatpush1.msra.mxu0 0.0
  %7110 = vmatprep.subr.mxu0 0.0
  %7111 = vmatpush1.msra.mxu0 0.0
  %7112 = vmatprep.subr.mxu0 0.0
  %7113 = vmatpush1.msra.mxu0 0.0
  %7114 = vmatprep.subr.mxu0 0.0
  %7115 = vmatpush1.msra.mxu0 0.0
  %7116 = vmatprep.subr.mxu0 0.0
  %7117 = vmatpush1.msra.mxu0 0.0
  %7118 = vmatprep.subr.mxu0 0.0
  %7119 = vmatpush1.msra.mxu0 0.0
  %7120 = vmatprep.subr.mxu0 0.0
  %7121 = vmatpush1.msra.mxu0 0.0
  %7122 = vmatprep.subr.mxu0 0.0
  %7123 = vmatpush1.msra.mxu0 0.0
  %7124 = vmatprep.subr.mxu0 0.0
  %7125 = vmatpush1.msra.mxu0 0.0
  %7126 = vmatprep.subr.mxu0 0.0
  %7127 = vmatpush1.msra.mxu0 0.0
  %7128 = vmatprep.subr.mxu0 0.0
  %7129 = vmatpush1.msra.mxu0 0.0
  %7130 = vmatprep.mubr.f32.mxu0 0.0
  %7131 = vmatmul.mubr.f32.gmra.mrb[0].mxu0 %v6833
  %v7132 = vpop.f32.mrb[0].mxu0
  %v7133 = vadd.f32 %v7028, %v7132
  %v7134 = vpop.f32.mrb[0].mxu0
  %7135 = vmatprep.mubr.f32.mxu0 0.0
  %7136 = vmatmul.mubr.f32.gmra.mrb[0].mxu0 %v6836
  %v7137 = vpop.f32.mrb[0].mxu0
  %v7138 = vadd.f32 %v7033, %v7137
  %v7139 = vpop.f32.mrb[0].mxu0
  %7140 = vmatprep.mubr.f32.mxu0 0.0
  %7141 = vmatmul.mubr.f32.gmra.mrb[0].mxu0 %v6839
  %v7142 = vpop.f32.mrb[0].mxu0
  %v7143 = vadd.f32 %v7038, %v7142
  %v7144 = vpop.f32.mrb[0].mxu0
  %7145 = vmatprep.mubr.f32.mxu0 0.0
  %7146 = vmatmul.mubr.f32.gmra.mrb[0].mxu0 %v6842
  %v7147 = vpop.f32.mrb[0].mxu0
  %v7148 = vadd.f32 %v7043, %v7147
  %v7149 = vpop.f32.mrb[0].mxu0
  %7150 = vmatprep.mubr.f32.mxu0 0.0
  %7151 = vmatmul.mubr.f32.gmra.mrb[0].mxu0 %v6845
  %v7152 = vpop.f32.mrb[0].mxu0
  %v7153 = vadd.f32 %v7048, %v7152
  %v7154 = vpop.f32.mrb[0].mxu0
  %7155 = vmatprep.mubr.f32.mxu0 0.0
  %7156 = vmatmul.mubr.f32.gmra.mrb[0].mxu0 %v6848
  %v7157 = vpop.f32.mrb[0].mxu0
  %v7158 = vadd.f32 %v7053, %v7157
  %v7159 = vpop.f32.mrb[0].mxu0
  %7160 = vmatprep.mubr.f32.mxu0 0.0
  %7161 = vmatmul.mubr.f32.gmra.mrb[0].mxu0 %v6851
  %v7162 = vpop.f32.mrb[0].mxu0
  %v7163 = vadd.f32 %v7058, %v7162
  %v7164 = vpop.f32.mrb[0].mxu0
  %7165 = vmatprep.mubr.f32.mxu0 0.0
  %7166 = vmatmul.mubr.f32.gmra.mrb[0].mxu0 %v6854
  %v7167 = vpop.f32.mrb[0].mxu0
  %v7168 = vadd.f32 %v7063, %v7167
  %v7169 = vpop.f32.mrb[0].mxu0
  %7170 = vdwg.mxu0
  %v7172 = vsel %vm189, %v6671, 0
  %v7175 = vsel %vm189, %v6672, 0
  %v7178 = vsel %vm189, %v6673, 0
  %v7181 = vsel %vm189, %v6674, 0
  %v7184 = vsel %vm189, %v6675, 0
  %v7187 = vsel %vm189, %v6676, 0
  %v7190 = vsel %vm189, %v6677, 0
  %v7193 = vsel %vm189, %v6678, 0
  %v7196 = vsel %vm189, %v6679, 0
  %v7199 = vsel %vm189, %v6680, 0
  %v7202 = vsel %vm189, %v6681, 0
  %v7205 = vsel %vm189, %v6682, 0
  %v7208 = vsel %vm189, %v6683, 0
  %v7211 = vsel %vm189, %v6684, 0
  %v7214 = vsel %vm189, %v6685, 0
  %v7217 = vsel %vm189, %v6686, 0
  %v7220 = vsel %vm189, %v6687, 0
  %v7223 = vsel %vm189, %v6688, 0
  %v7226 = vsel %vm189, %v6689, 0
  %v7229 = vsel %vm189, %v6690, 0
  %v7232 = vsel %vm189, %v6691, 0
  %v7235 = vsel %vm189, %v6692, 0
  %v7238 = vsel %vm189, %v6693, 0
  %v7241 = vsel %vm189, %v6694, 0
  %v7244 = vsel %vm189, %v6695, 0
  %v7247 = vsel %vm189, %v6696, 0
  %v7250 = vsel %vm189, %v6697, 0
  %v7253 = vsel %vm189, %v6698, 0
  %v7256 = vsel %vm189, %v6699, 0
  %v7259 = vsel %vm189, %v6700, 0
  %v7262 = vsel %vm189, %v6701, 0
  %v7265 = vsel %vm189, %v6702, 0
  %7267 = vmatprep.subr.mxu0 0.0
  %7268 = vmatpush1.msra.mxu0 %v7133
  %7269 = vmatprep.subr.mxu0 0.0
  %7270 = vmatpush1.msra.mxu0 %v7138
  %7271 = vmatprep.subr.mxu0 0.0
  %7272 = vmatpush1.msra.mxu0 %v7143
  %7273 = vmatprep.subr.mxu0 0.0
  %7274 = vmatpush1.msra.mxu0 %v7148
  %7275 = vmatprep.subr.mxu0 0.0
  %7276 = vmatpush1.msra.mxu0 %v7153
  %7277 = vmatprep.subr.mxu0 0.0
  %7278 = vmatpush1.msra.mxu0 %v7158
  %7279 = vmatprep.subr.mxu0 0.0
  %7280 = vmatpush1.msra.mxu0 %v7163
  %7281 = vmatprep.subr.mxu0 0.0
  %7282 = vmatpush1.msra.mxu0 %v7168
  %7283 = vmatprep.subr.mxu0 0.0
  %7284 = vmatpush1.msra.mxu0 0.0
  %7285 = vmatprep.subr.mxu0 0.0
  %7286 = vmatpush1.msra.mxu0 0.0
  %7287 = vmatprep.subr.mxu0 0.0
  %7288 = vmatpush1.msra.mxu0 0.0
  %7289 = vmatprep.subr.mxu0 0.0
  %7290 = vmatpush1.msra.mxu0 0.0
  %7291 = vmatprep.subr.mxu0 0.0
  %7292 = vmatpush1.msra.mxu0 0.0
  %7293 = vmatprep.subr.mxu0 0.0
  %7294 = vmatpush1.msra.mxu0 0.0
  %7295 = vmatprep.subr.mxu0 0.0
  %7296 = vmatpush1.msra.mxu0 0.0
  %7297 = vmatprep.subr.mxu0 0.0
  %7298 = vmatpush1.msra.mxu0 0.0
  %7299 = vmatprep.subr.mxu0 0.0
  %7300 = vmatpush1.msra.mxu0 0.0
  %7301 = vmatprep.subr.mxu0 0.0
  %7302 = vmatpush1.msra.mxu0 0.0
  %7303 = vmatprep.subr.mxu0 0.0
  %7304 = vmatpush1.msra.mxu0 0.0
  %7305 = vmatprep.subr.mxu0 0.0
  %7306 = vmatpush1.msra.mxu0 0.0
  %7307 = vmatprep.subr.mxu0 0.0
  %7308 = vmatpush1.msra.mxu0 0.0
  %7309 = vmatprep.subr.mxu0 0.0
  %7310 = vmatpush1.msra.mxu0 0.0
  %7311 = vmatprep.subr.mxu0 0.0
  %7312 = vmatpush1.msra.mxu0 0.0
  %7313 = vmatprep.subr.mxu0 0.0
  %7314 = vmatpush1.msra.mxu0 0.0
  %7315 = vmatprep.subr.mxu0 0.0
  %7316 = vmatpush1.msra.mxu0 0.0
  %7317 = vmatprep.subr.mxu0 0.0
  %7318 = vmatpush1.msra.mxu0 0.0
  %7319 = vmatprep.subr.mxu0 0.0
  %7320 = vmatpush1.msra.mxu0 0.0
  %7321 = vmatprep.subr.mxu0 0.0
  %7322 = vmatpush1.msra.mxu0 0.0
  %7323 = vmatprep.subr.mxu0 0.0
  %7324 = vmatpush1.msra.mxu0 0.0
  %7325 = vmatprep.subr.mxu0 0.0
  %7326 = vmatpush1.msra.mxu0 0.0
  %7327 = vmatprep.subr.mxu0 0.0
  %7328 = vmatpush1.msra.mxu0 0.0
  %7329 = vmatprep.subr.mxu0 0.0
  %7330 = vmatpush1.msra.mxu0 0.0
  %7331 = vmatprep.mubr.f32.mxu0 0.0
  %7332 = vmatmul.mubr.f32.gmra.mrb[0].mxu0 %v7172
  %v7333 = vpop.f32.mrb[0].mxu0
  %v7334 = vadd.f32 0.0, %v7333
  %v7335 = vpop.f32.mrb[0].mxu0
  %7336 = vmatprep.mubr.f32.mxu0 0.0
  %7337 = vmatmul.mubr.f32.gmra.mrb[0].mxu0 %v7175
  %v7338 = vpop.f32.mrb[0].mxu0
  %v7339 = vadd.f32 0.0, %v7338
  %v7340 = vpop.f32.mrb[0].mxu0
  %7341 = vmatprep.mubr.f32.mxu0 0.0
  %7342 = vmatmul.mubr.f32.gmra.mrb[0].mxu0 %v7178
  %v7343 = vpop.f32.mrb[0].mxu0
  %v7344 = vadd.f32 0.0, %v7343
  %v7345 = vpop.f32.mrb[0].mxu0
  %7346 = vmatprep.mubr.f32.mxu0 0.0
  %7347 = vmatmul.mubr.f32.gmra.mrb[0].mxu0 %v7181
  %v7348 = vpop.f32.mrb[0].mxu0
  %v7349 = vadd.f32 0.0, %v7348
  %v7350 = vpop.f32.mrb[0].mxu0
  %7351 = vmatprep.mubr.f32.mxu0 0.0
  %7352 = vmatmul.mubr.f32.gmra.mrb[0].mxu0 %v7184
  %v7353 = vpop.f32.mrb[0].mxu0
  %v7354 = vadd.f32 0.0, %v7353
  %v7355 = vpop.f32.mrb[0].mxu0
  %7356 = vmatprep.mubr.f32.mxu0 0.0
  %7357 = vmatmul.mubr.f32.gmra.mrb[0].mxu0 %v7187
  %v7358 = vpop.f32.mrb[0].mxu0
  %v7359 = vadd.f32 0.0, %v7358
  %v7360 = vpop.f32.mrb[0].mxu0
  %7361 = vmatprep.mubr.f32.mxu0 0.0
  %7362 = vmatmul.mubr.f32.gmra.mrb[0].mxu0 %v7190
  %v7363 = vpop.f32.mrb[0].mxu0
  %v7364 = vadd.f32 0.0, %v7363
  %v7365 = vpop.f32.mrb[0].mxu0
  %7366 = vmatprep.mubr.f32.mxu0 0.0
  %7367 = vmatmul.mubr.f32.gmra.mrb[0].mxu0 %v7193
  %v7368 = vpop.f32.mrb[0].mxu0
  %v7369 = vadd.f32 0.0, %v7368
  %v7370 = vpop.f32.mrb[0].mxu0
  %7371 = vmatprep.mubr.f32.mxu0 0.0
  %7372 = vmatmul.mubr.f32.gmra.mrb[0].mxu0 %v7196
  %v7373 = vpop.f32.mrb[0].mxu0
  %v7374 = vadd.f32 0.0, %v7373
  %v7375 = vpop.f32.mrb[0].mxu0
  %7376 = vmatprep.mubr.f32.mxu0 0.0
  %7377 = vmatmul.mubr.f32.gmra.mrb[0].mxu0 %v7199
  %v7378 = vpop.f32.mrb[0].mxu0
  %v7379 = vadd.f32 0.0, %v7378
  %v7380 = vpop.f32.mrb[0].mxu0
  %7381 = vmatprep.mubr.f32.mxu0 0.0
  %7382 = vmatmul.mubr.f32.gmra.mrb[0].mxu0 %v7202
  %v7383 = vpop.f32.mrb[0].mxu0
  %v7384 = vadd.f32 0.0, %v7383
  %v7385 = vpop.f32.mrb[0].mxu0
  %7386 = vmatprep.mubr.f32.mxu0 0.0
  %7387 = vmatmul.mubr.f32.gmra.mrb[0].mxu0 %v7205
  %v7388 = vpop.f32.mrb[0].mxu0
  %v7389 = vadd.f32 0.0, %v7388
  %v7390 = vpop.f32.mrb[0].mxu0
  %7391 = vmatprep.mubr.f32.mxu0 0.0
  %7392 = vmatmul.mubr.f32.gmra.mrb[0].mxu0 %v7208
  %v7393 = vpop.f32.mrb[0].mxu0
  %v7394 = vadd.f32 0.0, %v7393
  %v7395 = vpop.f32.mrb[0].mxu0
  %7396 = vmatprep.mubr.f32.mxu0 0.0
  %7397 = vmatmul.mubr.f32.gmra.mrb[0].mxu0 %v7211
  %v7398 = vpop.f32.mrb[0].mxu0
  %v7399 = vadd.f32 0.0, %v7398
  %v7400 = vpop.f32.mrb[0].mxu0
  %7401 = vmatprep.mubr.f32.mxu0 0.0
  %7402 = vmatmul.mubr.f32.gmra.mrb[0].mxu0 %v7214
  %v7403 = vpop.f32.mrb[0].mxu0
  %v7404 = vadd.f32 0.0, %v7403
  %v7405 = vpop.f32.mrb[0].mxu0
  %7406 = vmatprep.mubr.f32.mxu0 0.0
  %7407 = vmatmul.mubr.f32.gmra.mrb[0].mxu0 %v7217
  %v7408 = vpop.f32.mrb[0].mxu0
  %v7409 = vadd.f32 0.0, %v7408
  %v7410 = vpop.f32.mrb[0].mxu0
  %7411 = vmatprep.mubr.f32.mxu0 0.0
  %7412 = vmatmul.mubr.f32.gmra.mrb[0].mxu0 %v7220
  %v7413 = vpop.f32.mrb[0].mxu0
  %v7414 = vadd.f32 0.0, %v7413
  %v7415 = vpop.f32.mrb[0].mxu0
  %7416 = vmatprep.mubr.f32.mxu0 0.0
  %7417 = vmatmul.mubr.f32.gmra.mrb[0].mxu0 %v7223
  %v7418 = vpop.f32.mrb[0].mxu0
  %v7419 = vadd.f32 0.0, %v7418
  %v7420 = vpop.f32.mrb[0].mxu0
  %7421 = vmatprep.mubr.f32.mxu0 0.0
  %7422 = vmatmul.mubr.f32.gmra.mrb[0].mxu0 %v7226
  %v7423 = vpop.f32.mrb[0].mxu0
  %v7424 = vadd.f32 0.0, %v7423
  %v7425 = vpop.f32.mrb[0].mxu0
  %7426 = vmatprep.mubr.f32.mxu0 0.0
  %7427 = vmatmul.mubr.f32.gmra.mrb[0].mxu0 %v7229
  %v7428 = vpop.f32.mrb[0].mxu0
  %v7429 = vadd.f32 0.0, %v7428
  %v7430 = vpop.f32.mrb[0].mxu0
  %7431 = vmatprep.mubr.f32.mxu0 0.0
  %7432 = vmatmul.mubr.f32.gmra.mrb[0].mxu0 %v7232
  %v7433 = vpop.f32.mrb[0].mxu0
  %v7434 = vadd.f32 0.0, %v7433
  %v7435 = vpop.f32.mrb[0].mxu0
  %7436 = vmatprep.mubr.f32.mxu0 0.0
  %7437 = vmatmul.mubr.f32.gmra.mrb[0].mxu0 %v7235
  %v7438 = vpop.f32.mrb[0].mxu0
  %v7439 = vadd.f32 0.0, %v7438
  %v7440 = vpop.f32.mrb[0].mxu0
  %7441 = vmatprep.mubr.f32.mxu0 0.0
  %7442 = vmatmul.mubr.f32.gmra.mrb[0].mxu0 %v7238
  %v7443 = vpop.f32.mrb[0].mxu0
  %v7444 = vadd.f32 0.0, %v7443
  %v7445 = vpop.f32.mrb[0].mxu0
  %7446 = vmatprep.mubr.f32.mxu0 0.0
  %7447 = vmatmul.mubr.f32.gmra.mrb[0].mxu0 %v7241
  %v7448 = vpop.f32.mrb[0].mxu0
  %v7449 = vadd.f32 0.0, %v7448
  %v7450 = vpop.f32.mrb[0].mxu0
  %7451 = vmatprep.mubr.f32.mxu0 0.0
  %7452 = vmatmul.mubr.f32.gmra.mrb[0].mxu0 %v7244
  %v7453 = vpop.f32.mrb[0].mxu0
  %v7454 = vadd.f32 0.0, %v7453
  %v7455 = vpop.f32.mrb[0].mxu0
  %7456 = vmatprep.mubr.f32.mxu0 0.0
  %7457 = vmatmul.mubr.f32.gmra.mrb[0].mxu0 %v7247
  %v7458 = vpop.f32.mrb[0].mxu0
  %v7459 = vadd.f32 0.0, %v7458
  %v7460 = vpop.f32.mrb[0].mxu0
  %7461 = vmatprep.mubr.f32.mxu0 0.0
  %7462 = vmatmul.mubr.f32.gmra.mrb[0].mxu0 %v7250
  %v7463 = vpop.f32.mrb[0].mxu0
  %v7464 = vadd.f32 0.0, %v7463
  %v7465 = vpop.f32.mrb[0].mxu0
  %7466 = vmatprep.mubr.f32.mxu0 0.0
  %7467 = vmatmul.mubr.f32.gmra.mrb[0].mxu0 %v7253
  %v7468 = vpop.f32.mrb[0].mxu0
  %v7469 = vadd.f32 0.0, %v7468
  %v7470 = vpop.f32.mrb[0].mxu0
  %7471 = vmatprep.mubr.f32.mxu0 0.0
  %7472 = vmatmul.mubr.f32.gmra.mrb[0].mxu0 %v7256
  %v7473 = vpop.f32.mrb[0].mxu0
  %v7474 = vadd.f32 0.0, %v7473
  %v7475 = vpop.f32.mrb[0].mxu0
  %7476 = vmatprep.mubr.f32.mxu0 0.0
  %7477 = vmatmul.mubr.f32.gmra.mrb[0].mxu0 %v7259
  %v7478 = vpop.f32.mrb[0].mxu0
  %v7479 = vadd.f32 0.0, %v7478
  %v7480 = vpop.f32.mrb[0].mxu0
  %7481 = vmatprep.mubr.f32.mxu0 0.0
  %7482 = vmatmul.mubr.f32.gmra.mrb[0].mxu0 %v7262
  %v7483 = vpop.f32.mrb[0].mxu0
  %v7484 = vadd.f32 0.0, %v7483
  %v7485 = vpop.f32.mrb[0].mxu0
  %7486 = vmatprep.mubr.f32.mxu0 0.0
  %7487 = vmatmul.mubr.f32.gmra.mrb[0].mxu0 %v7265
  %v7488 = vpop.f32.mrb[0].mxu0
  %v7489 = vadd.f32 0.0, %v7488
  %v7490 = vpop.f32.mrb[0].mxu0
  %7491 = vdwg.mxu0
  %v7493 = vsel %vm189, %v6639, 0
  %v7496 = vsel %vm189, %v6640, 0
  %v7499 = vsel %vm189, %v6641, 0
  %v7502 = vsel %vm189, %v6642, 0
  %v7505 = vsel %vm189, %v6643, 0
  %v7508 = vsel %vm189, %v6644, 0
  %v7511 = vsel %vm189, %v6645, 0
  %v7514 = vsel %vm189, %v6646, 0
  %v7517 = vsel %vm189, %v6647, 0
  %v7520 = vsel %vm189, %v6648, 0
  %v7523 = vsel %vm189, %v6649, 0
  %v7526 = vsel %vm189, %v6650, 0
  %v7529 = vsel %vm189, %v6651, 0
  %v7532 = vsel %vm189, %v6652, 0
  %v7535 = vsel %vm189, %v6653, 0
  %v7538 = vsel %vm189, %v6654, 0
  %v7541 = vsel %vm189, %v6655, 0
  %v7544 = vsel %vm189, %v6656, 0
  %v7547 = vsel %vm189, %v6657, 0
  %v7550 = vsel %vm189, %v6658, 0
  %v7553 = vsel %vm189, %v6659, 0
  %v7556 = vsel %vm189, %v6660, 0
  %v7559 = vsel %vm189, %v6661, 0
  %v7562 = vsel %vm189, %v6662, 0
  %v7565 = vsel %vm189, %v6663, 0
  %v7568 = vsel %vm189, %v6664, 0
  %v7571 = vsel %vm189, %v6665, 0
  %v7574 = vsel %vm189, %v6666, 0
  %v7577 = vsel %vm189, %v6667, 0
  %v7580 = vsel %vm189, %v6668, 0
  %v7583 = vsel %vm189, %v6669, 0
  %v7586 = vsel %vm189, %v6670, 0
  %7588 = vmatprep.subr.mxu0 0.0
  %7589 = vmatpush1.msra.mxu0 %v6923
  %7590 = vmatprep.subr.mxu0 0.0
  %7591 = vmatpush1.msra.mxu0 %v6928
  %7592 = vmatprep.subr.mxu0 0.0
  %7593 = vmatpush1.msra.mxu0 %v6933
  %7594 = vmatprep.subr.mxu0 0.0
  %7595 = vmatpush1.msra.mxu0 %v6938
  %7596 = vmatprep.subr.mxu0 0.0
  %7597 = vmatpush1.msra.mxu0 %v6943
  %7598 = vmatprep.subr.mxu0 0.0
  %7599 = vmatpush1.msra.mxu0 %v6948
  %7600 = vmatprep.subr.mxu0 0.0
  %7601 = vmatpush1.msra.mxu0 %v6953
  %7602 = vmatprep.subr.mxu0 0.0
  %7603 = vmatpush1.msra.mxu0 %v6958
  %7604 = vmatprep.subr.mxu0 0.0
  %7605 = vmatpush1.msra.mxu0 0.0
  %7606 = vmatprep.subr.mxu0 0.0
  %7607 = vmatpush1.msra.mxu0 0.0
  %7608 = vmatprep.subr.mxu0 0.0
  %7609 = vmatpush1.msra.mxu0 0.0
  %7610 = vmatprep.subr.mxu0 0.0
  %7611 = vmatpush1.msra.mxu0 0.0
  %7612 = vmatprep.subr.mxu0 0.0
  %7613 = vmatpush1.msra.mxu0 0.0
  %7614 = vmatprep.subr.mxu0 0.0
  %7615 = vmatpush1.msra.mxu0 0.0
  %7616 = vmatprep.subr.mxu0 0.0
  %7617 = vmatpush1.msra.mxu0 0.0
  %7618 = vmatprep.subr.mxu0 0.0
  %7619 = vmatpush1.msra.mxu0 0.0
  %7620 = vmatprep.subr.mxu0 0.0
  %7621 = vmatpush1.msra.mxu0 0.0
  %7622 = vmatprep.subr.mxu0 0.0
  %7623 = vmatpush1.msra.mxu0 0.0
  %7624 = vmatprep.subr.mxu0 0.0
  %7625 = vmatpush1.msra.mxu0 0.0
  %7626 = vmatprep.subr.mxu0 0.0
  %7627 = vmatpush1.msra.mxu0 0.0
  %7628 = vmatprep.subr.mxu0 0.0
  %7629 = vmatpush1.msra.mxu0 0.0
  %7630 = vmatprep.subr.mxu0 0.0
  %7631 = vmatpush1.msra.mxu0 0.0
  %7632 = vmatprep.subr.mxu0 0.0
  %7633 = vmatpush1.msra.mxu0 0.0
  %7634 = vmatprep.subr.mxu0 0.0
  %7635 = vmatpush1.msra.mxu0 0.0
  %7636 = vmatprep.subr.mxu0 0.0
  %7637 = vmatpush1.msra.mxu0 0.0
  %7638 = vmatprep.subr.mxu0 0.0
  %7639 = vmatpush1.msra.mxu0 0.0
  %7640 = vmatprep.subr.mxu0 0.0
  %7641 = vmatpush1.msra.mxu0 0.0
  %7642 = vmatprep.subr.mxu0 0.0
  %7643 = vmatpush1.msra.mxu0 0.0
  %7644 = vmatprep.subr.mxu0 0.0
  %7645 = vmatpush1.msra.mxu0 0.0
  %7646 = vmatprep.subr.mxu0 0.0
  %7647 = vmatpush1.msra.mxu0 0.0
  %7648 = vmatprep.subr.mxu0 0.0
  %7649 = vmatpush1.msra.mxu0 0.0
  %7650 = vmatprep.subr.mxu0 0.0
  %7651 = vmatpush1.msra.mxu0 0.0
  %7652 = vmatprep.mubr.f32.mxu0 0.0
  %7653 = vmatmul.mubr.f32.gmra.mrb[0].mxu0 %v7493
  %v7654 = vpop.f32.mrb[0].mxu0
  %v7655 = vadd.f32 %v7334, %v7654
  %v7656 = vpop.f32.mrb[0].mxu0
  %7657 = vmatprep.mubr.f32.mxu0 0.0
  %7658 = vmatmul.mubr.f32.gmra.mrb[0].mxu0 %v7496
  %v7659 = vpop.f32.mrb[0].mxu0
  %v7660 = vadd.f32 %v7339, %v7659
  %v7661 = vpop.f32.mrb[0].mxu0
  %7662 = vmatprep.mubr.f32.mxu0 0.0
  %7663 = vmatmul.mubr.f32.gmra.mrb[0].mxu0 %v7499
  %v7664 = vpop.f32.mrb[0].mxu0
  %v7665 = vadd.f32 %v7344, %v7664
  %v7666 = vpop.f32.mrb[0].mxu0
  %7667 = vmatprep.mubr.f32.mxu0 0.0
  %7668 = vmatmul.mubr.f32.gmra.mrb[0].mxu0 %v7502
  %v7669 = vpop.f32.mrb[0].mxu0
  %v7670 = vadd.f32 %v7349, %v7669
  %v7671 = vpop.f32.mrb[0].mxu0
  %7672 = vmatprep.mubr.f32.mxu0 0.0
  %7673 = vmatmul.mubr.f32.gmra.mrb[0].mxu0 %v7505
  %v7674 = vpop.f32.mrb[0].mxu0
  %v7675 = vadd.f32 %v7354, %v7674
  %v7676 = vpop.f32.mrb[0].mxu0
  %7677 = vmatprep.mubr.f32.mxu0 0.0
  %7678 = vmatmul.mubr.f32.gmra.mrb[0].mxu0 %v7508
  %v7679 = vpop.f32.mrb[0].mxu0
  %v7680 = vadd.f32 %v7359, %v7679
  %v7681 = vpop.f32.mrb[0].mxu0
  %7682 = vmatprep.mubr.f32.mxu0 0.0
  %7683 = vmatmul.mubr.f32.gmra.mrb[0].mxu0 %v7511
  %v7684 = vpop.f32.mrb[0].mxu0
  %v7685 = vadd.f32 %v7364, %v7684
  %v7686 = vpop.f32.mrb[0].mxu0
  %7687 = vmatprep.mubr.f32.mxu0 0.0
  %7688 = vmatmul.mubr.f32.gmra.mrb[0].mxu0 %v7514
  %v7689 = vpop.f32.mrb[0].mxu0
  %v7690 = vadd.f32 %v7369, %v7689
  %v7691 = vpop.f32.mrb[0].mxu0
  %7692 = vmatprep.mubr.f32.mxu0 0.0
  %7693 = vmatmul.mubr.f32.gmra.mrb[0].mxu0 %v7517
  %v7694 = vpop.f32.mrb[0].mxu0
  %v7695 = vadd.f32 %v7374, %v7694
  %v7696 = vpop.f32.mrb[0].mxu0
  %7697 = vmatprep.mubr.f32.mxu0 0.0
  %7698 = vmatmul.mubr.f32.gmra.mrb[0].mxu0 %v7520
  %v7699 = vpop.f32.mrb[0].mxu0
  %v7700 = vadd.f32 %v7379, %v7699
  %v7701 = vpop.f32.mrb[0].mxu0
  %7702 = vmatprep.mubr.f32.mxu0 0.0
  %7703 = vmatmul.mubr.f32.gmra.mrb[0].mxu0 %v7523
  %v7704 = vpop.f32.mrb[0].mxu0
  %v7705 = vadd.f32 %v7384, %v7704
  %v7706 = vpop.f32.mrb[0].mxu0
  %7707 = vmatprep.mubr.f32.mxu0 0.0
  %7708 = vmatmul.mubr.f32.gmra.mrb[0].mxu0 %v7526
  %v7709 = vpop.f32.mrb[0].mxu0
  %v7710 = vadd.f32 %v7389, %v7709
  %v7711 = vpop.f32.mrb[0].mxu0
  %7712 = vmatprep.mubr.f32.mxu0 0.0
  %7713 = vmatmul.mubr.f32.gmra.mrb[0].mxu0 %v7529
  %v7714 = vpop.f32.mrb[0].mxu0
  %v7715 = vadd.f32 %v7394, %v7714
  %v7716 = vpop.f32.mrb[0].mxu0
  %7717 = vmatprep.mubr.f32.mxu0 0.0
  %7718 = vmatmul.mubr.f32.gmra.mrb[0].mxu0 %v7532
  %v7719 = vpop.f32.mrb[0].mxu0
  %v7720 = vadd.f32 %v7399, %v7719
  %v7721 = vpop.f32.mrb[0].mxu0
  %7722 = vmatprep.mubr.f32.mxu0 0.0
  %7723 = vmatmul.mubr.f32.gmra.mrb[0].mxu0 %v7535
  %v7724 = vpop.f32.mrb[0].mxu0
  %v7725 = vadd.f32 %v7404, %v7724
  %v7726 = vpop.f32.mrb[0].mxu0
  %7727 = vmatprep.mubr.f32.mxu0 0.0
  %7728 = vmatmul.mubr.f32.gmra.mrb[0].mxu0 %v7538
  %v7729 = vpop.f32.mrb[0].mxu0
  %v7730 = vadd.f32 %v7409, %v7729
  %v7731 = vpop.f32.mrb[0].mxu0
  %7732 = vmatprep.mubr.f32.mxu0 0.0
  %7733 = vmatmul.mubr.f32.gmra.mrb[0].mxu0 %v7541
  %v7734 = vpop.f32.mrb[0].mxu0
  %v7735 = vadd.f32 %v7414, %v7734
  %v7736 = vpop.f32.mrb[0].mxu0
  %7737 = vmatprep.mubr.f32.mxu0 0.0
  %7738 = vmatmul.mubr.f32.gmra.mrb[0].mxu0 %v7544
  %v7739 = vpop.f32.mrb[0].mxu0
  %v7740 = vadd.f32 %v7419, %v7739
  %v7741 = vpop.f32.mrb[0].mxu0
  %7742 = vmatprep.mubr.f32.mxu0 0.0
  %7743 = vmatmul.mubr.f32.gmra.mrb[0].mxu0 %v7547
  %v7744 = vpop.f32.mrb[0].mxu0
  %v7745 = vadd.f32 %v7424, %v7744
  %v7746 = vpop.f32.mrb[0].mxu0
  %7747 = vmatprep.mubr.f32.mxu0 0.0
  %7748 = vmatmul.mubr.f32.gmra.mrb[0].mxu0 %v7550
  %v7749 = vpop.f32.mrb[0].mxu0
  %v7750 = vadd.f32 %v7429, %v7749
  %v7751 = vpop.f32.mrb[0].mxu0
  %7752 = vmatprep.mubr.f32.mxu0 0.0
  %7753 = vmatmul.mubr.f32.gmra.mrb[0].mxu0 %v7553
  %v7754 = vpop.f32.mrb[0].mxu0
  %v7755 = vadd.f32 %v7434, %v7754
  %v7756 = vpop.f32.mrb[0].mxu0
  %7757 = vmatprep.mubr.f32.mxu0 0.0
  %7758 = vmatmul.mubr.f32.gmra.mrb[0].mxu0 %v7556
  %v7759 = vpop.f32.mrb[0].mxu0
  %v7760 = vadd.f32 %v7439, %v7759
  %v7761 = vpop.f32.mrb[0].mxu0
  %7762 = vmatprep.mubr.f32.mxu0 0.0
  %7763 = vmatmul.mubr.f32.gmra.mrb[0].mxu0 %v7559
  %v7764 = vpop.f32.mrb[0].mxu0
  %v7765 = vadd.f32 %v7444, %v7764
  %v7766 = vpop.f32.mrb[0].mxu0
  %7767 = vmatprep.mubr.f32.mxu0 0.0
  %7768 = vmatmul.mubr.f32.gmra.mrb[0].mxu0 %v7562
  %v7769 = vpop.f32.mrb[0].mxu0
  %v7770 = vadd.f32 %v7449, %v7769
  %v7771 = vpop.f32.mrb[0].mxu0
  %7772 = vmatprep.mubr.f32.mxu0 0.0
  %7773 = vmatmul.mubr.f32.gmra.mrb[0].mxu0 %v7565
  %v7774 = vpop.f32.mrb[0].mxu0
  %v7775 = vadd.f32 %v7454, %v7774
  %v7776 = vpop.f32.mrb[0].mxu0
  %7777 = vmatprep.mubr.f32.mxu0 0.0
  %7778 = vmatmul.mubr.f32.gmra.mrb[0].mxu0 %v7568
  %v7779 = vpop.f32.mrb[0].mxu0
  %v7780 = vadd.f32 %v7459, %v7779
  %v7781 = vpop.f32.mrb[0].mxu0
  %7782 = vmatprep.mubr.f32.mxu0 0.0
  %7783 = vmatmul.mubr.f32.gmra.mrb[0].mxu0 %v7571
  %v7784 = vpop.f32.mrb[0].mxu0
  %v7785 = vadd.f32 %v7464, %v7784
  %v7786 = vpop.f32.mrb[0].mxu0
  %7787 = vmatprep.mubr.f32.mxu0 0.0
  %7788 = vmatmul.mubr.f32.gmra.mrb[0].mxu0 %v7574
  %v7789 = vpop.f32.mrb[0].mxu0
  %v7790 = vadd.f32 %v7469, %v7789
  %v7791 = vpop.f32.mrb[0].mxu0
  %7792 = vmatprep.mubr.f32.mxu0 0.0
  %7793 = vmatmul.mubr.f32.gmra.mrb[0].mxu0 %v7577
  %v7794 = vpop.f32.mrb[0].mxu0
  %v7795 = vadd.f32 %v7474, %v7794
  %v7796 = vpop.f32.mrb[0].mxu0
  %7797 = vmatprep.mubr.f32.mxu0 0.0
  %7798 = vmatmul.mubr.f32.gmra.mrb[0].mxu0 %v7580
  %v7799 = vpop.f32.mrb[0].mxu0
  %v7800 = vadd.f32 %v7479, %v7799
  %v7801 = vpop.f32.mrb[0].mxu0
  %7802 = vmatprep.mubr.f32.mxu0 0.0
  %7803 = vmatmul.mubr.f32.gmra.mrb[0].mxu0 %v7583
  %v7804 = vpop.f32.mrb[0].mxu0
  %v7805 = vadd.f32 %v7484, %v7804
  %v7806 = vpop.f32.mrb[0].mxu0
  %7807 = vmatprep.mubr.f32.mxu0 0.0
  %7808 = vmatmul.mubr.f32.gmra.mrb[0].mxu0 %v7586
  %v7809 = vpop.f32.mrb[0].mxu0
  %v7810 = vadd.f32 %v7489, %v7809
  %v7811 = vpop.f32.mrb[0].mxu0
  %7812 = vdwg.mxu0
  %vm7813 = vcmask 23552
  %7814 = vst.msk [vmem:[%s83] sm:$0xff] %vm7813, %v7655
  %7815 = vst.msk [vmem:[%s83 + $0x8] sm:$0xff] %vm7813, %v7660
  %7816 = vst.msk [vmem:[%s83 + $0x10] sm:$0xff] %vm7813, %v7665
  %7817 = vst.msk [vmem:[%s83 + $0x18] sm:$0xff] %vm7813, %v7670
  %7818 = vst.msk [vmem:[%s83 + $0x20] sm:$0xff] %vm7813, %v7675
  %7819 = vst.msk [vmem:[%s83 + $0x28] sm:$0xff] %vm7813, %v7680
  %7820 = vst.msk [vmem:[%s83 + $0x30] sm:$0xff] %vm7813, %v7685
  %7821 = vst.msk [vmem:[%s83 + $0x38] sm:$0xff] %vm7813, %v7690
  %7822 = vst.msk [vmem:[%s83 + $0x40] sm:$0xff] %vm7813, %v7695
  %7823 = vst.msk [vmem:[%s83 + $0x48] sm:$0xff] %vm7813, %v7700
  %7824 = vst.msk [vmem:[%s83 + $0x50] sm:$0xff] %vm7813, %v7705
  %7825 = vst.msk [vmem:[%s83 + $0x58] sm:$0xff] %vm7813, %v7710
  %7826 = vst.msk [vmem:[%s83 + $0x60] sm:$0xff] %vm7813, %v7715
  %7827 = vst.msk [vmem:[%s83 + $0x68] sm:$0xff] %vm7813, %v7720
  %7828 = vst.msk [vmem:[%s83 + $0x70] sm:$0xff] %vm7813, %v7725
  %7829 = vst.msk [vmem:[%s83 + $0x78] sm:$0xff] %vm7813, %v7730
  %7830 = vst.msk [vmem:[%s83 + $0x80] sm:$0xff] %vm7813, %v7735
  %7831 = vst.msk [vmem:[%s83 + $0x88] sm:$0xff] %vm7813, %v7740
  %7832 = vst.msk [vmem:[%s83 + $0x90] sm:$0xff] %vm7813, %v7745
  %7833 = vst.msk [vmem:[%s83 + $0x98] sm:$0xff] %vm7813, %v7750
  %7834 = vst.msk [vmem:[%s83 + $0xa0] sm:$0xff] %vm7813, %v7755
  %7835 = vst.msk [vmem:[%s83 + $0xa8] sm:$0xff] %vm7813, %v7760
  %7836 = vst.msk [vmem:[%s83 + $0xb0] sm:$0xff] %vm7813, %v7765
  %7837 = vst.msk [vmem:[%s83 + $0xb8] sm:$0xff] %vm7813, %v7770
  %7838 = vst.msk [vmem:[%s83 + $0xc0] sm:$0xff] %vm7813, %v7775
  %7839 = vst.msk [vmem:[%s83 + $0xc8] sm:$0xff] %vm7813, %v7780
  %7840 = vst.msk [vmem:[%s83 + $0xd0] sm:$0xff] %vm7813, %v7785
  %7841 = vst.msk [vmem:[%s83 + $0xd8] sm:$0xff] %vm7813, %v7790
  %7842 = vst.msk [vmem:[%s83 + $0xe0] sm:$0xff] %vm7813, %v7795
  %7843 = vst.msk [vmem:[%s83 + $0xe8] sm:$0xff] %vm7813, %v7800
  %7844 = vst.msk [vmem:[%s83 + $0xf0] sm:$0xff] %vm7813, %v7805
  %7845 = vst.msk [vmem:[%s83 + $0xf8] sm:$0xff] %vm7813, %v7810
  %7846 = vmatprep.subr.mxu0 0.0
  %7847 = vmatpush1.msra.mxu0 %v6514
  %7848 = vmatprep.subr.mxu0 0.0
  %7849 = vmatpush1.msra.mxu0 %v6519
  %7850 = vmatprep.subr.mxu0 0.0
  %7851 = vmatpush1.msra.mxu0 0.0
  %7852 = vmatprep.subr.mxu0 0.0
  %7853 = vmatpush1.msra.mxu0 0.0
  %7854 = vmatprep.subr.mxu0 0.0
  %7855 = vmatpush1.msra.mxu0 0.0
  %7856 = vmatprep.subr.mxu0 0.0
  %7857 = vmatpush1.msra.mxu0 0.0
  %7858 = vmatprep.subr.mxu0 0.0
  %7859 = vmatpush1.msra.mxu0 0.0
  %7860 = vmatprep.subr.mxu0 0.0
  %7861 = vmatpush1.msra.mxu0 0.0
  %7862 = vmatprep.subr.mxu0 0.0
  %7863 = vmatpush1.msra.mxu0 0.0
  %7864 = vmatprep.subr.mxu0 0.0
  %7865 = vmatpush1.msra.mxu0 0.0
  %7866 = vmatprep.subr.mxu0 0.0
  %7867 = vmatpush1.msra.mxu0 0.0
  %7868 = vmatprep.subr.mxu0 0.0
  %7869 = vmatpush1.msra.mxu0 0.0
  %7870 = vmatprep.subr.mxu0 0.0
  %7871 = vmatpush1.msra.mxu0 0.0
  %7872 = vmatprep.subr.mxu0 0.0
  %7873 = vmatpush1.msra.mxu0 0.0
  %7874 = vmatprep.subr.mxu0 0.0
  %7875 = vmatpush1.msra.mxu0 0.0
  %7876 = vmatprep.subr.mxu0 0.0
  %7877 = vmatpush1.msra.mxu0 0.0
  %7878 = vmatprep.subr.mxu0 0.0
  %7879 = vmatpush1.msra.mxu0 0.0
  %7880 = vmatprep.subr.mxu0 0.0
  %7881 = vmatpush1.msra.mxu0 0.0
  %7882 = vmatprep.subr.mxu0 0.0
  %7883 = vmatpush1.msra.mxu0 0.0
  %7884 = vmatprep.subr.mxu0 0.0
  %7885 = vmatpush1.msra.mxu0 0.0
  %7886 = vmatprep.subr.mxu0 0.0
  %7887 = vmatpush1.msra.mxu0 0.0
  %7888 = vmatprep.subr.mxu0 0.0
  %7889 = vmatpush1.msra.mxu0 0.0
  %7890 = vmatprep.subr.mxu0 0.0
  %7891 = vmatpush1.msra.mxu0 0.0
  %7892 = vmatprep.subr.mxu0 0.0
  %7893 = vmatpush1.msra.mxu0 0.0
  %7894 = vmatprep.subr.mxu0 0.0
  %7895 = vmatpush1.msra.mxu0 0.0
  %7896 = vmatprep.subr.mxu0 0.0
  %7897 = vmatpush1.msra.mxu0 0.0
  %7898 = vmatprep.subr.mxu0 0.0
  %7899 = vmatpush1.msra.mxu0 0.0
  %7900 = vmatprep.subr.mxu0 0.0
  %7901 = vmatpush1.msra.mxu0 0.0
  %7902 = vmatprep.subr.mxu0 0.0
  %7903 = vmatpush1.msra.mxu0 0.0
  %7904 = vmatprep.subr.mxu0 0.0
  %7905 = vmatpush1.msra.mxu0 0.0
  %7906 = vmatprep.subr.mxu0 0.0
  %7907 = vmatpush1.msra.mxu0 0.0
  %7908 = vmatprep.subr.mxu0 0.0
  %7909 = vmatpush1.msra.mxu0 0.0
  %7910 = vmatprep.mubr.f32.mxu0 0.0
  %7911 = vmatmul.mubr.f32.gmra.mrb[0].mxu0 %v6704
  %v7912 = vpop.f32.mrb[0].mxu0
  %v7913 = vadd.f32 0.0, %v7912
  %v7914 = vpop.f32.mrb[0].mxu0
  %7915 = vmatprep.mubr.f32.mxu0 0.0
  %7916 = vmatmul.mubr.f32.gmra.mrb[0].mxu0 %v6707
  %v7917 = vpop.f32.mrb[0].mxu0
  %v7918 = vadd.f32 0.0, %v7917
  %v7919 = vpop.f32.mrb[0].mxu0
  %7920 = vmatprep.mubr.f32.mxu0 0.0
  %7921 = vmatmul.mubr.f32.gmra.mrb[0].mxu0 %v6710
  %v7922 = vpop.f32.mrb[0].mxu0
  %v7923 = vadd.f32 0.0, %v7922
  %v7924 = vpop.f32.mrb[0].mxu0
  %7925 = vmatprep.mubr.f32.mxu0 0.0
  %7926 = vmatmul.mubr.f32.gmra.mrb[0].mxu0 %v6713
  %v7927 = vpop.f32.mrb[0].mxu0
  %v7928 = vadd.f32 0.0, %v7927
  %v7929 = vpop.f32.mrb[0].mxu0
  %7930 = vmatprep.mubr.f32.mxu0 0.0
  %7931 = vmatmul.mubr.f32.gmra.mrb[0].mxu0 %v6716
  %v7932 = vpop.f32.mrb[0].mxu0
  %v7933 = vadd.f32 0.0, %v7932
  %v7934 = vpop.f32.mrb[0].mxu0
  %7935 = vmatprep.mubr.f32.mxu0 0.0
  %7936 = vmatmul.mubr.f32.gmra.mrb[0].mxu0 %v6719
  %v7937 = vpop.f32.mrb[0].mxu0
  %v7938 = vadd.f32 0.0, %v7937
  %v7939 = vpop.f32.mrb[0].mxu0
  %7940 = vmatprep.mubr.f32.mxu0 0.0
  %7941 = vmatmul.mubr.f32.gmra.mrb[0].mxu0 %v6722
  %v7942 = vpop.f32.mrb[0].mxu0
  %v7943 = vadd.f32 0.0, %v7942
  %v7944 = vpop.f32.mrb[0].mxu0
  %7945 = vmatprep.mubr.f32.mxu0 0.0
  %7946 = vmatmul.mubr.f32.gmra.mrb[0].mxu0 %v6725
  %v7947 = vpop.f32.mrb[0].mxu0
  %v7948 = vadd.f32 0.0, %v7947
  %v7949 = vpop.f32.mrb[0].mxu0
  %7950 = vdwg.mxu0
  %7951 = vmatprep.subr.mxu0 0.0
  %7952 = vmatpush1.msra.mxu0 %v6312
  %7953 = vmatprep.subr.mxu0 0.0
  %7954 = vmatpush1.msra.mxu0 %v6317
  %7955 = vmatprep.subr.mxu0 0.0
  %7956 = vmatpush1.msra.mxu0 0.0
  %7957 = vmatprep.subr.mxu0 0.0
  %7958 = vmatpush1.msra.mxu0 0.0
  %7959 = vmatprep.subr.mxu0 0.0
  %7960 = vmatpush1.msra.mxu0 0.0
  %7961 = vmatprep.subr.mxu0 0.0
  %7962 = vmatpush1.msra.mxu0 0.0
  %7963 = vmatprep.subr.mxu0 0.0
  %7964 = vmatpush1.msra.mxu0 0.0
  %7965 = vmatprep.subr.mxu0 0.0
  %7966 = vmatpush1.msra.mxu0 0.0
  %7967 = vmatprep.subr.mxu0 0.0
  %7968 = vmatpush1.msra.mxu0 0.0
  %7969 = vmatprep.subr.mxu0 0.0
  %7970 = vmatpush1.msra.mxu0 0.0
  %7971 = vmatprep.subr.mxu0 0.0
  %7972 = vmatpush1.msra.mxu0 0.0
  %7973 = vmatprep.subr.mxu0 0.0
  %7974 = vmatpush1.msra.mxu0 0.0
  %7975 = vmatprep.subr.mxu0 0.0
  %7976 = vmatpush1.msra.mxu0 0.0
  %7977 = vmatprep.subr.mxu0 0.0
  %7978 = vmatpush1.msra.mxu0 0.0
  %7979 = vmatprep.subr.mxu0 0.0
  %7980 = vmatpush1.msra.mxu0 0.0
  %7981 = vmatprep.subr.mxu0 0.0
  %7982 = vmatpush1.msra.mxu0 0.0
  %7983 = vmatprep.subr.mxu0 0.0
  %7984 = vmatpush1.msra.mxu0 0.0
  %7985 = vmatprep.subr.mxu0 0.0
  %7986 = vmatpush1.msra.mxu0 0.0
  %7987 = vmatprep.subr.mxu0 0.0
  %7988 = vmatpush1.msra.mxu0 0.0
  %7989 = vmatprep.subr.mxu0 0.0
  %7990 = vmatpush1.msra.mxu0 0.0
  %7991 = vmatprep.subr.mxu0 0.0
  %7992 = vmatpush1.msra.mxu0 0.0
  %7993 = vmatprep.subr.mxu0 0.0
  %7994 = vmatpush1.msra.mxu0 0.0
  %7995 = vmatprep.subr.mxu0 0.0
  %7996 = vmatpush1.msra.mxu0 0.0
  %7997 = vmatprep.subr.mxu0 0.0
  %7998 = vmatpush1.msra.mxu0 0.0
  %7999 = vmatprep.subr.mxu0 0.0
  %8000 = vmatpush1.msra.mxu0 0.0
  %8001 = vmatprep.subr.mxu0 0.0
  %8002 = vmatpush1.msra.mxu0 0.0
  %8003 = vmatprep.subr.mxu0 0.0
  %8004 = vmatpush1.msra.mxu0 0.0
  %8005 = vmatprep.subr.mxu0 0.0
  %8006 = vmatpush1.msra.mxu0 0.0
  %8007 = vmatprep.subr.mxu0 0.0
  %8008 = vmatpush1.msra.mxu0 0.0
  %8009 = vmatprep.subr.mxu0 0.0
  %8010 = vmatpush1.msra.mxu0 0.0
  %8011 = vmatprep.subr.mxu0 0.0
  %8012 = vmatpush1.msra.mxu0 0.0
  %8013 = vmatprep.subr.mxu0 0.0
  %8014 = vmatpush1.msra.mxu0 0.0
  %8015 = vmatprep.mubr.f32.mxu0 0.0
  %8016 = vmatmul.mubr.f32.gmra.mrb[0].mxu0 %v6833
  %v8017 = vpop.f32.mrb[0].mxu0
  %v8018 = vadd.f32 %v7913, %v8017
  %v8019 = vpop.f32.mrb[0].mxu0
  %8020 = vmatprep.mubr.f32.mxu0 0.0
  %8021 = vmatmul.mubr.f32.gmra.mrb[0].mxu0 %v6836
  %v8022 = vpop.f32.mrb[0].mxu0
  %v8023 = vadd.f32 %v7918, %v8022
  %v8024 = vpop.f32.mrb[0].mxu0
  %8025 = vmatprep.mubr.f32.mxu0 0.0
  %8026 = vmatmul.mubr.f32.gmra.mrb[0].mxu0 %v6839
  %v8027 = vpop.f32.mrb[0].mxu0
  %v8028 = vadd.f32 %v7923, %v8027
  %v8029 = vpop.f32.mrb[0].mxu0
  %8030 = vmatprep.mubr.f32.mxu0 0.0
  %8031 = vmatmul.mubr.f32.gmra.mrb[0].mxu0 %v6842
  %v8032 = vpop.f32.mrb[0].mxu0
  %v8033 = vadd.f32 %v7928, %v8032
  %v8034 = vpop.f32.mrb[0].mxu0
  %8035 = vmatprep.mubr.f32.mxu0 0.0
  %8036 = vmatmul.mubr.f32.gmra.mrb[0].mxu0 %v6845
  %v8037 = vpop.f32.mrb[0].mxu0
  %v8038 = vadd.f32 %v7933, %v8037
  %v8039 = vpop.f32.mrb[0].mxu0
  %8040 = vmatprep.mubr.f32.mxu0 0.0
  %8041 = vmatmul.mubr.f32.gmra.mrb[0].mxu0 %v6848
  %v8042 = vpop.f32.mrb[0].mxu0
  %v8043 = vadd.f32 %v7938, %v8042
  %v8044 = vpop.f32.mrb[0].mxu0
  %8045 = vmatprep.mubr.f32.mxu0 0.0
  %8046 = vmatmul.mubr.f32.gmra.mrb[0].mxu0 %v6851
  %v8047 = vpop.f32.mrb[0].mxu0
  %v8048 = vadd.f32 %v7943, %v8047
  %v8049 = vpop.f32.mrb[0].mxu0
  %8050 = vmatprep.mubr.f32.mxu0 0.0
  %8051 = vmatmul.mubr.f32.gmra.mrb[0].mxu0 %v6854
  %v8052 = vpop.f32.mrb[0].mxu0
  %v8053 = vadd.f32 %v7948, %v8052
  %v8054 = vpop.f32.mrb[0].mxu0
  %8055 = vdwg.mxu0
  %8056 = vmatprep.subr.mxu0 0.0
  %8057 = vmatpush1.msra.mxu0 %v6615
  %8058 = vmatprep.subr.mxu0 0.0
  %8059 = vmatpush1.msra.mxu0 %v6620
  %8060 = vmatprep.subr.mxu0 0.0
  %8061 = vmatpush1.msra.mxu0 0.0
  %8062 = vmatprep.subr.mxu0 0.0
  %8063 = vmatpush1.msra.mxu0 0.0
  %8064 = vmatprep.subr.mxu0 0.0
  %8065 = vmatpush1.msra.mxu0 0.0
  %8066 = vmatprep.subr.mxu0 0.0
  %8067 = vmatpush1.msra.mxu0 0.0
  %8068 = vmatprep.subr.mxu0 0.0
  %8069 = vmatpush1.msra.mxu0 0.0
  %8070 = vmatprep.subr.mxu0 0.0
  %8071 = vmatpush1.msra.mxu0 0.0
  %8072 = vmatprep.subr.mxu0 0.0
  %8073 = vmatpush1.msra.mxu0 0.0
  %8074 = vmatprep.subr.mxu0 0.0
  %8075 = vmatpush1.msra.mxu0 0.0
  %8076 = vmatprep.subr.mxu0 0.0
  %8077 = vmatpush1.msra.mxu0 0.0
  %8078 = vmatprep.subr.mxu0 0.0
  %8079 = vmatpush1.msra.mxu0 0.0
  %8080 = vmatprep.subr.mxu0 0.0
  %8081 = vmatpush1.msra.mxu0 0.0
  %8082 = vmatprep.subr.mxu0 0.0
  %8083 = vmatpush1.msra.mxu0 0.0
  %8084 = vmatprep.subr.mxu0 0.0
  %8085 = vmatpush1.msra.mxu0 0.0
  %8086 = vmatprep.subr.mxu0 0.0
  %8087 = vmatpush1.msra.mxu0 0.0
  %8088 = vmatprep.subr.mxu0 0.0
  %8089 = vmatpush1.msra.mxu0 0.0
  %8090 = vmatprep.subr.mxu0 0.0
  %8091 = vmatpush1.msra.mxu0 0.0
  %8092 = vmatprep.subr.mxu0 0.0
  %8093 = vmatpush1.msra.mxu0 0.0
  %8094 = vmatprep.subr.mxu0 0.0
  %8095 = vmatpush1.msra.mxu0 0.0
  %8096 = vmatprep.subr.mxu0 0.0
  %8097 = vmatpush1.msra.mxu0 0.0
  %8098 = vmatprep.subr.mxu0 0.0
  %8099 = vmatpush1.msra.mxu0 0.0
  %8100 = vmatprep.subr.mxu0 0.0
  %8101 = vmatpush1.msra.mxu0 0.0
  %8102 = vmatprep.subr.mxu0 0.0
  %8103 = vmatpush1.msra.mxu0 0.0
  %8104 = vmatprep.subr.mxu0 0.0
  %8105 = vmatpush1.msra.mxu0 0.0
  %8106 = vmatprep.subr.mxu0 0.0
  %8107 = vmatpush1.msra.mxu0 0.0
  %8108 = vmatprep.subr.mxu0 0.0
  %8109 = vmatpush1.msra.mxu0 0.0
  %8110 = vmatprep.subr.mxu0 0.0
  %8111 = vmatpush1.msra.mxu0 0.0
  %8112 = vmatprep.subr.mxu0 0.0
  %8113 = vmatpush1.msra.mxu0 0.0
  %8114 = vmatprep.subr.mxu0 0.0
  %8115 = vmatpush1.msra.mxu0 0.0
  %8116 = vmatprep.subr.mxu0 0.0
  %8117 = vmatpush1.msra.mxu0 0.0
  %8118 = vmatprep.subr.mxu0 0.0
  %8119 = vmatpush1.msra.mxu0 0.0
  %8120 = vmatprep.mubr.f32.mxu0 0.0
  %8121 = vmatmul.mubr.f32.gmra.mrb[0].mxu0 %v6704
  %v8122 = vpop.f32.mrb[0].mxu0
  %v8123 = vadd.f32 0.0, %v8122
  %v8124 = vpop.f32.mrb[0].mxu0
  %8125 = vmatprep.mubr.f32.mxu0 0.0
  %8126 = vmatmul.mubr.f32.gmra.mrb[0].mxu0 %v6707
  %v8127 = vpop.f32.mrb[0].mxu0
  %v8128 = vadd.f32 0.0, %v8127
  %v8129 = vpop.f32.mrb[0].mxu0
  %8130 = vmatprep.mubr.f32.mxu0 0.0
  %8131 = vmatmul.mubr.f32.gmra.mrb[0].mxu0 %v6710
  %v8132 = vpop.f32.mrb[0].mxu0
  %v8133 = vadd.f32 0.0, %v8132
  %v8134 = vpop.f32.mrb[0].mxu0
  %8135 = vmatprep.mubr.f32.mxu0 0.0
  %8136 = vmatmul.mubr.f32.gmra.mrb[0].mxu0 %v6713
  %v8137 = vpop.f32.mrb[0].mxu0
  %v8138 = vadd.f32 0.0, %v8137
  %v8139 = vpop.f32.mrb[0].mxu0
  %8140 = vmatprep.mubr.f32.mxu0 0.0
  %8141 = vmatmul.mubr.f32.gmra.mrb[0].mxu0 %v6716
  %v8142 = vpop.f32.mrb[0].mxu0
  %v8143 = vadd.f32 0.0, %v8142
  %v8144 = vpop.f32.mrb[0].mxu0
  %8145 = vmatprep.mubr.f32.mxu0 0.0
  %8146 = vmatmul.mubr.f32.gmra.mrb[0].mxu0 %v6719
  %v8147 = vpop.f32.mrb[0].mxu0
  %v8148 = vadd.f32 0.0, %v8147
  %v8149 = vpop.f32.mrb[0].mxu0
  %8150 = vmatprep.mubr.f32.mxu0 0.0
  %8151 = vmatmul.mubr.f32.gmra.mrb[0].mxu0 %v6722
  %v8152 = vpop.f32.mrb[0].mxu0
  %v8153 = vadd.f32 0.0, %v8152
  %v8154 = vpop.f32.mrb[0].mxu0
  %8155 = vmatprep.mubr.f32.mxu0 0.0
  %8156 = vmatmul.mubr.f32.gmra.mrb[0].mxu0 %v6725
  %v8157 = vpop.f32.mrb[0].mxu0
  %v8158 = vadd.f32 0.0, %v8157
  %v8159 = vpop.f32.mrb[0].mxu0
  %8160 = vdwg.mxu0
  %8161 = vmatprep.subr.mxu0 0.0
  %8162 = vmatpush1.msra.mxu0 %v6413
  %8163 = vmatprep.subr.mxu0 0.0
  %8164 = vmatpush1.msra.mxu0 %v6418
  %8165 = vmatprep.subr.mxu0 0.0
  %8166 = vmatpush1.msra.mxu0 0.0
  %8167 = vmatprep.subr.mxu0 0.0
  %8168 = vmatpush1.msra.mxu0 0.0
  %8169 = vmatprep.subr.mxu0 0.0
  %8170 = vmatpush1.msra.mxu0 0.0
  %8171 = vmatprep.subr.mxu0 0.0
  %8172 = vmatpush1.msra.mxu0 0.0
  %8173 = vmatprep.subr.mxu0 0.0
  %8174 = vmatpush1.msra.mxu0 0.0
  %8175 = vmatprep.subr.mxu0 0.0
  %8176 = vmatpush1.msra.mxu0 0.0
  %8177 = vmatprep.subr.mxu0 0.0
  %8178 = vmatpush1.msra.mxu0 0.0
  %8179 = vmatprep.subr.mxu0 0.0
  %8180 = vmatpush1.msra.mxu0 0.0
  %8181 = vmatprep.subr.mxu0 0.0
  %8182 = vmatpush1.msra.mxu0 0.0
  %8183 = vmatprep.subr.mxu0 0.0
  %8184 = vmatpush1.msra.mxu0 0.0
  %8185 = vmatprep.subr.mxu0 0.0
  %8186 = vmatpush1.msra.mxu0 0.0
  %8187 = vmatprep.subr.mxu0 0.0
  %8188 = vmatpush1.msra.mxu0 0.0
  %8189 = vmatprep.subr.mxu0 0.0
  %8190 = vmatpush1.msra.mxu0 0.0
  %8191 = vmatprep.subr.mxu0 0.0
  %8192 = vmatpush1.msra.mxu0 0.0
  %8193 = vmatprep.subr.mxu0 0.0
  %8194 = vmatpush1.msra.mxu0 0.0
  %8195 = vmatprep.subr.mxu0 0.0
  %8196 = vmatpush1.msra.mxu0 0.0
  %8197 = vmatprep.subr.mxu0 0.0
  %8198 = vmatpush1.msra.mxu0 0.0
  %8199 = vmatprep.subr.mxu0 0.0
  %8200 = vmatpush1.msra.mxu0 0.0
  %8201 = vmatprep.subr.mxu0 0.0
  %8202 = vmatpush1.msra.mxu0 0.0
  %8203 = vmatprep.subr.mxu0 0.0
  %8204 = vmatpush1.msra.mxu0 0.0
  %8205 = vmatprep.subr.mxu0 0.0
  %8206 = vmatpush1.msra.mxu0 0.0
  %8207 = vmatprep.subr.mxu0 0.0
  %8208 = vmatpush1.msra.mxu0 0.0
  %8209 = vmatprep.subr.mxu0 0.0
  %8210 = vmatpush1.msra.mxu0 0.0
  %8211 = vmatprep.subr.mxu0 0.0
  %8212 = vmatpush1.msra.mxu0 0.0
  %8213 = vmatprep.subr.mxu0 0.0
  %8214 = vmatpush1.msra.mxu0 0.0
  %8215 = vmatprep.subr.mxu0 0.0
  %8216 = vmatpush1.msra.mxu0 0.0
  %8217 = vmatprep.subr.mxu0 0.0
  %8218 = vmatpush1.msra.mxu0 0.0
  %8219 = vmatprep.subr.mxu0 0.0
  %8220 = vmatpush1.msra.mxu0 0.0
  %8221 = vmatprep.subr.mxu0 0.0
  %8222 = vmatpush1.msra.mxu0 0.0
  %8223 = vmatprep.subr.mxu0 0.0
  %8224 = vmatpush1.msra.mxu0 0.0
  %8225 = vmatprep.mubr.f32.mxu0 0.0
  %8226 = vmatmul.mubr.f32.gmra.mrb[0].mxu0 %v6833
  %v8227 = vpop.f32.mrb[0].mxu0
  %v8228 = vadd.f32 %v8123, %v8227
  %v8229 = vpop.f32.mrb[0].mxu0
  %8230 = vmatprep.mubr.f32.mxu0 0.0
  %8231 = vmatmul.mubr.f32.gmra.mrb[0].mxu0 %v6836
  %v8232 = vpop.f32.mrb[0].mxu0
  %v8233 = vadd.f32 %v8128, %v8232
  %v8234 = vpop.f32.mrb[0].mxu0
  %8235 = vmatprep.mubr.f32.mxu0 0.0
  %8236 = vmatmul.mubr.f32.gmra.mrb[0].mxu0 %v6839
  %v8237 = vpop.f32.mrb[0].mxu0
  %v8238 = vadd.f32 %v8133, %v8237
  %v8239 = vpop.f32.mrb[0].mxu0
  %8240 = vmatprep.mubr.f32.mxu0 0.0
  %8241 = vmatmul.mubr.f32.gmra.mrb[0].mxu0 %v6842
  %v8242 = vpop.f32.mrb[0].mxu0
  %v8243 = vadd.f32 %v8138, %v8242
  %v8244 = vpop.f32.mrb[0].mxu0
  %8245 = vmatprep.mubr.f32.mxu0 0.0
  %8246 = vmatmul.mubr.f32.gmra.mrb[0].mxu0 %v6845
  %v8247 = vpop.f32.mrb[0].mxu0
  %v8248 = vadd.f32 %v8143, %v8247
  %v8249 = vpop.f32.mrb[0].mxu0
  %8250 = vmatprep.mubr.f32.mxu0 0.0
  %8251 = vmatmul.mubr.f32.gmra.mrb[0].mxu0 %v6848
  %v8252 = vpop.f32.mrb[0].mxu0
  %v8253 = vadd.f32 %v8148, %v8252
  %v8254 = vpop.f32.mrb[0].mxu0
  %8255 = vmatprep.mubr.f32.mxu0 0.0
  %8256 = vmatmul.mubr.f32.gmra.mrb[0].mxu0 %v6851
  %v8257 = vpop.f32.mrb[0].mxu0
  %v8258 = vadd.f32 %v8153, %v8257
  %v8259 = vpop.f32.mrb[0].mxu0
  %8260 = vmatprep.mubr.f32.mxu0 0.0
  %8261 = vmatmul.mubr.f32.gmra.mrb[0].mxu0 %v6854
  %v8262 = vpop.f32.mrb[0].mxu0
  %v8263 = vadd.f32 %v8158, %v8262
  %v8264 = vpop.f32.mrb[0].mxu0
  %8265 = vdwg.mxu0
  %8266 = vmatprep.subr.mxu0 0.0
  %8267 = vmatpush1.msra.mxu0 %v8228
  %8268 = vmatprep.subr.mxu0 0.0
  %8269 = vmatpush1.msra.mxu0 %v8233
  %8270 = vmatprep.subr.mxu0 0.0
  %8271 = vmatpush1.msra.mxu0 %v8238
  %8272 = vmatprep.subr.mxu0 0.0
  %8273 = vmatpush1.msra.mxu0 %v8243
  %8274 = vmatprep.subr.mxu0 0.0
  %8275 = vmatpush1.msra.mxu0 %v8248
  %8276 = vmatprep.subr.mxu0 0.0
  %8277 = vmatpush1.msra.mxu0 %v8253
  %8278 = vmatprep.subr.mxu0 0.0
  %8279 = vmatpush1.msra.mxu0 %v8258
  %8280 = vmatprep.subr.mxu0 0.0
  %8281 = vmatpush1.msra.mxu0 %v8263
  %8282 = vmatprep.subr.mxu0 0.0
  %8283 = vmatpush1.msra.mxu0 0.0
  %8284 = vmatprep.subr.mxu0 0.0
  %8285 = vmatpush1.msra.mxu0 0.0
  %8286 = vmatprep.subr.mxu0 0.0
  %8287 = vmatpush1.msra.mxu0 0.0
  %8288 = vmatprep.subr.mxu0 0.0
  %8289 = vmatpush1.msra.mxu0 0.0
  %8290 = vmatprep.subr.mxu0 0.0
  %8291 = vmatpush1.msra.mxu0 0.0
  %8292 = vmatprep.subr.mxu0 0.0
  %8293 = vmatpush1.msra.mxu0 0.0
  %8294 = vmatprep.subr.mxu0 0.0
  %8295 = vmatpush1.msra.mxu0 0.0
  %8296 = vmatprep.subr.mxu0 0.0
  %8297 = vmatpush1.msra.mxu0 0.0
  %8298 = vmatprep.subr.mxu0 0.0
  %8299 = vmatpush1.msra.mxu0 0.0
  %8300 = vmatprep.subr.mxu0 0.0
  %8301 = vmatpush1.msra.mxu0 0.0
  %8302 = vmatprep.subr.mxu0 0.0
  %8303 = vmatpush1.msra.mxu0 0.0
  %8304 = vmatprep.subr.mxu0 0.0
  %8305 = vmatpush1.msra.mxu0 0.0
  %8306 = vmatprep.subr.mxu0 0.0
  %8307 = vmatpush1.msra.mxu0 0.0
  %8308 = vmatprep.subr.mxu0 0.0
  %8309 = vmatpush1.msra.mxu0 0.0
  %8310 = vmatprep.subr.mxu0 0.0
  %8311 = vmatpush1.msra.mxu0 0.0
  %8312 = vmatprep.subr.mxu0 0.0
  %8313 = vmatpush1.msra.mxu0 0.0
  %8314 = vmatprep.subr.mxu0 0.0
  %8315 = vmatpush1.msra.mxu0 0.0
  %8316 = vmatprep.subr.mxu0 0.0
  %8317 = vmatpush1.msra.mxu0 0.0
  %8318 = vmatprep.subr.mxu0 0.0
  %8319 = vmatpush1.msra.mxu0 0.0
  %8320 = vmatprep.subr.mxu0 0.0
  %8321 = vmatpush1.msra.mxu0 0.0
  %8322 = vmatprep.subr.mxu0 0.0
  %8323 = vmatpush1.msra.mxu0 0.0
  %8324 = vmatprep.subr.mxu0 0.0
  %8325 = vmatpush1.msra.mxu0 0.0
  %8326 = vmatprep.subr.mxu0 0.0
  %8327 = vmatpush1.msra.mxu0 0.0
  %8328 = vmatprep.subr.mxu0 0.0
  %8329 = vmatpush1.msra.mxu0 0.0
  %8330 = vmatprep.mubr.f32.mxu0 0.0
  %8331 = vmatmul.mubr.f32.gmra.mrb[0].mxu0 %v7172
  %v8332 = vpop.f32.mrb[0].mxu0
  %v8333 = vadd.f32 0.0, %v8332
  %v8334 = vpop.f32.mrb[0].mxu0
  %8335 = vmatprep.mubr.f32.mxu0 0.0
  %8336 = vmatmul.mubr.f32.gmra.mrb[0].mxu0 %v7175
  %v8337 = vpop.f32.mrb[0].mxu0
  %v8338 = vadd.f32 0.0, %v8337
  %v8339 = vpop.f32.mrb[0].mxu0
  %8340 = vmatprep.mubr.f32.mxu0 0.0
  %8341 = vmatmul.mubr.f32.gmra.mrb[0].mxu0 %v7178
  %v8342 = vpop.f32.mrb[0].mxu0
  %v8343 = vadd.f32 0.0, %v8342
  %v8344 = vpop.f32.mrb[0].mxu0
  %8345 = vmatprep.mubr.f32.mxu0 0.0
  %8346 = vmatmul.mubr.f32.gmra.mrb[0].mxu0 %v7181
  %v8347 = vpop.f32.mrb[0].mxu0
  %v8348 = vadd.f32 0.0, %v8347
  %v8349 = vpop.f32.mrb[0].mxu0
  %8350 = vmatprep.mubr.f32.mxu0 0.0
  %8351 = vmatmul.mubr.f32.gmra.mrb[0].mxu0 %v7184
  %v8352 = vpop.f32.mrb[0].mxu0
  %v8353 = vadd.f32 0.0, %v8352
  %v8354 = vpop.f32.mrb[0].mxu0
  %8355 = vmatprep.mubr.f32.mxu0 0.0
  %8356 = vmatmul.mubr.f32.gmra.mrb[0].mxu0 %v7187
  %v8357 = vpop.f32.mrb[0].mxu0
  %v8358 = vadd.f32 0.0, %v8357
  %v8359 = vpop.f32.mrb[0].mxu0
  %8360 = vmatprep.mubr.f32.mxu0 0.0
  %8361 = vmatmul.mubr.f32.gmra.mrb[0].mxu0 %v7190
  %v8362 = vpop.f32.mrb[0].mxu0
  %v8363 = vadd.f32 0.0, %v8362
  %v8364 = vpop.f32.mrb[0].mxu0
  %8365 = vmatprep.mubr.f32.mxu0 0.0
  %8366 = vmatmul.mubr.f32.gmra.mrb[0].mxu0 %v7193
  %v8367 = vpop.f32.mrb[0].mxu0
  %v8368 = vadd.f32 0.0, %v8367
  %v8369 = vpop.f32.mrb[0].mxu0
  %8370 = vmatprep.mubr.f32.mxu0 0.0
  %8371 = vmatmul.mubr.f32.gmra.mrb[0].mxu0 %v7196
  %v8372 = vpop.f32.mrb[0].mxu0
  %v8373 = vadd.f32 0.0, %v8372
  %v8374 = vpop.f32.mrb[0].mxu0
  %8375 = vmatprep.mubr.f32.mxu0 0.0
  %8376 = vmatmul.mubr.f32.gmra.mrb[0].mxu0 %v7199
  %v8377 = vpop.f32.mrb[0].mxu0
  %v8378 = vadd.f32 0.0, %v8377
  %v8379 = vpop.f32.mrb[0].mxu0
  %8380 = vmatprep.mubr.f32.mxu0 0.0
  %8381 = vmatmul.mubr.f32.gmra.mrb[0].mxu0 %v7202
  %v8382 = vpop.f32.mrb[0].mxu0
  %v8383 = vadd.f32 0.0, %v8382
  %v8384 = vpop.f32.mrb[0].mxu0
  %8385 = vmatprep.mubr.f32.mxu0 0.0
  %8386 = vmatmul.mubr.f32.gmra.mrb[0].mxu0 %v7205
  %v8387 = vpop.f32.mrb[0].mxu0
  %v8388 = vadd.f32 0.0, %v8387
  %v8389 = vpop.f32.mrb[0].mxu0
  %8390 = vmatprep.mubr.f32.mxu0 0.0
  %8391 = vmatmul.mubr.f32.gmra.mrb[0].mxu0 %v7208
  %v8392 = vpop.f32.mrb[0].mxu0
  %v8393 = vadd.f32 0.0, %v8392
  %v8394 = vpop.f32.mrb[0].mxu0
  %8395 = vmatprep.mubr.f32.mxu0 0.0
  %8396 = vmatmul.mubr.f32.gmra.mrb[0].mxu0 %v7211
  %v8397 = vpop.f32.mrb[0].mxu0
  %v8398 = vadd.f32 0.0, %v8397
  %v8399 = vpop.f32.mrb[0].mxu0
  %8400 = vmatprep.mubr.f32.mxu0 0.0
  %8401 = vmatmul.mubr.f32.gmra.mrb[0].mxu0 %v7214
  %v8402 = vpop.f32.mrb[0].mxu0
  %v8403 = vadd.f32 0.0, %v8402
  %v8404 = vpop.f32.mrb[0].mxu0
  %8405 = vmatprep.mubr.f32.mxu0 0.0
  %8406 = vmatmul.mubr.f32.gmra.mrb[0].mxu0 %v7217
  %v8407 = vpop.f32.mrb[0].mxu0
  %v8408 = vadd.f32 0.0, %v8407
  %v8409 = vpop.f32.mrb[0].mxu0
  %8410 = vmatprep.mubr.f32.mxu0 0.0
  %8411 = vmatmul.mubr.f32.gmra.mrb[0].mxu0 %v7220
  %v8412 = vpop.f32.mrb[0].mxu0
  %v8413 = vadd.f32 0.0, %v8412
  %v8414 = vpop.f32.mrb[0].mxu0
  %8415 = vmatprep.mubr.f32.mxu0 0.0
  %8416 = vmatmul.mubr.f32.gmra.mrb[0].mxu0 %v7223
  %v8417 = vpop.f32.mrb[0].mxu0
  %v8418 = vadd.f32 0.0, %v8417
  %v8419 = vpop.f32.mrb[0].mxu0
  %8420 = vmatprep.mubr.f32.mxu0 0.0
  %8421 = vmatmul.mubr.f32.gmra.mrb[0].mxu0 %v7226
  %v8422 = vpop.f32.mrb[0].mxu0
  %v8423 = vadd.f32 0.0, %v8422
  %v8424 = vpop.f32.mrb[0].mxu0
  %8425 = vmatprep.mubr.f32.mxu0 0.0
  %8426 = vmatmul.mubr.f32.gmra.mrb[0].mxu0 %v7229
  %v8427 = vpop.f32.mrb[0].mxu0
  %v8428 = vadd.f32 0.0, %v8427
  %v8429 = vpop.f32.mrb[0].mxu0
  %8430 = vmatprep.mubr.f32.mxu0 0.0
  %8431 = vmatmul.mubr.f32.gmra.mrb[0].mxu0 %v7232
  %v8432 = vpop.f32.mrb[0].mxu0
  %v8433 = vadd.f32 0.0, %v8432
  %v8434 = vpop.f32.mrb[0].mxu0
  %8435 = vmatprep.mubr.f32.mxu0 0.0
  %8436 = vmatmul.mubr.f32.gmra.mrb[0].mxu0 %v7235
  %v8437 = vpop.f32.mrb[0].mxu0
  %v8438 = vadd.f32 0.0, %v8437
  %v8439 = vpop.f32.mrb[0].mxu0
  %8440 = vmatprep.mubr.f32.mxu0 0.0
  %8441 = vmatmul.mubr.f32.gmra.mrb[0].mxu0 %v7238
  %v8442 = vpop.f32.mrb[0].mxu0
  %v8443 = vadd.f32 0.0, %v8442
  %v8444 = vpop.f32.mrb[0].mxu0
  %8445 = vmatprep.mubr.f32.mxu0 0.0
  %8446 = vmatmul.mubr.f32.gmra.mrb[0].mxu0 %v7241
  %v8447 = vpop.f32.mrb[0].mxu0
  %v8448 = vadd.f32 0.0, %v8447
  %v8449 = vpop.f32.mrb[0].mxu0
  %8450 = vmatprep.mubr.f32.mxu0 0.0
  %8451 = vmatmul.mubr.f32.gmra.mrb[0].mxu0 %v7244
  %v8452 = vpop.f32.mrb[0].mxu0
  %v8453 = vadd.f32 0.0, %v8452
  %v8454 = vpop.f32.mrb[0].mxu0
  %8455 = vmatprep.mubr.f32.mxu0 0.0
  %8456 = vmatmul.mubr.f32.gmra.mrb[0].mxu0 %v7247
  %v8457 = vpop.f32.mrb[0].mxu0
  %v8458 = vadd.f32 0.0, %v8457
  %v8459 = vpop.f32.mrb[0].mxu0
  %8460 = vmatprep.mubr.f32.mxu0 0.0
  %8461 = vmatmul.mubr.f32.gmra.mrb[0].mxu0 %v7250
  %v8462 = vpop.f32.mrb[0].mxu0
  %v8463 = vadd.f32 0.0, %v8462
  %v8464 = vpop.f32.mrb[0].mxu0
  %8465 = vmatprep.mubr.f32.mxu0 0.0
  %8466 = vmatmul.mubr.f32.gmra.mrb[0].mxu0 %v7253
  %v8467 = vpop.f32.mrb[0].mxu0
  %v8468 = vadd.f32 0.0, %v8467
  %v8469 = vpop.f32.mrb[0].mxu0
  %8470 = vmatprep.mubr.f32.mxu0 0.0
  %8471 = vmatmul.mubr.f32.gmra.mrb[0].mxu0 %v7256
  %v8472 = vpop.f32.mrb[0].mxu0
  %v8473 = vadd.f32 0.0, %v8472
  %v8474 = vpop.f32.mrb[0].mxu0
  %8475 = vmatprep.mubr.f32.mxu0 0.0
  %8476 = vmatmul.mubr.f32.gmra.mrb[0].mxu0 %v7259
  %v8477 = vpop.f32.mrb[0].mxu0
  %v8478 = vadd.f32 0.0, %v8477
  %v8479 = vpop.f32.mrb[0].mxu0
  %8480 = vmatprep.mubr.f32.mxu0 0.0
  %8481 = vmatmul.mubr.f32.gmra.mrb[0].mxu0 %v7262
  %v8482 = vpop.f32.mrb[0].mxu0
  %v8483 = vadd.f32 0.0, %v8482
  %v8484 = vpop.f32.mrb[0].mxu0
  %8485 = vmatprep.mubr.f32.mxu0 0.0
  %8486 = vmatmul.mubr.f32.gmra.mrb[0].mxu0 %v7265
  %v8487 = vpop.f32.mrb[0].mxu0
  %v8488 = vadd.f32 0.0, %v8487
  %v8489 = vpop.f32.mrb[0].mxu0
  %8490 = vdwg.mxu0
  %8491 = vmatprep.subr.mxu0 0.0
  %8492 = vmatpush1.msra.mxu0 %v8018
  %8493 = vmatprep.subr.mxu0 0.0
  %8494 = vmatpush1.msra.mxu0 %v8023
  %8495 = vmatprep.subr.mxu0 0.0
  %8496 = vmatpush1.msra.mxu0 %v8028
  %8497 = vmatprep.subr.mxu0 0.0
  %8498 = vmatpush1.msra.mxu0 %v8033
  %8499 = vmatprep.subr.mxu0 0.0
  %8500 = vmatpush1.msra.mxu0 %v8038
  %8501 = vmatprep.subr.mxu0 0.0
  %8502 = vmatpush1.msra.mxu0 %v8043
  %8503 = vmatprep.subr.mxu0 0.0
  %8504 = vmatpush1.msra.mxu0 %v8048
  %8505 = vmatprep.subr.mxu0 0.0
  %8506 = vmatpush1.msra.mxu0 %v8053
  %8507 = vmatprep.subr.mxu0 0.0
  %8508 = vmatpush1.msra.mxu0 0.0
  %8509 = vmatprep.subr.mxu0 0.0
  %8510 = vmatpush1.msra.mxu0 0.0
  %8511 = vmatprep.subr.mxu0 0.0
  %8512 = vmatpush1.msra.mxu0 0.0
  %8513 = vmatprep.subr.mxu0 0.0
  %8514 = vmatpush1.msra.mxu0 0.0
  %8515 = vmatprep.subr.mxu0 0.0
  %8516 = vmatpush1.msra.mxu0 0.0
  %8517 = vmatprep.subr.mxu0 0.0
  %8518 = vmatpush1.msra.mxu0 0.0
  %8519 = vmatprep.subr.mxu0 0.0
  %8520 = vmatpush1.msra.mxu0 0.0
  %8521 = vmatprep.subr.mxu0 0.0
  %8522 = vmatpush1.msra.mxu0 0.0
  %8523 = vmatprep.subr.mxu0 0.0
  %8524 = vmatpush1.msra.mxu0 0.0
  %8525 = vmatprep.subr.mxu0 0.0
  %8526 = vmatpush1.msra.mxu0 0.0
  %8527 = vmatprep.subr.mxu0 0.0
  %8528 = vmatpush1.msra.mxu0 0.0
  %8529 = vmatprep.subr.mxu0 0.0
  %8530 = vmatpush1.msra.mxu0 0.0
  %8531 = vmatprep.subr.mxu0 0.0
  %8532 = vmatpush1.msra.mxu0 0.0
  %8533 = vmatprep.subr.mxu0 0.0
  %8534 = vmatpush1.msra.mxu0 0.0
  %8535 = vmatprep.subr.mxu0 0.0
  %8536 = vmatpush1.msra.mxu0 0.0
  %8537 = vmatprep.subr.mxu0 0.0
  %8538 = vmatpush1.msra.mxu0 0.0
  %8539 = vmatprep.subr.mxu0 0.0
  %8540 = vmatpush1.msra.mxu0 0.0
  %8541 = vmatprep.subr.mxu0 0.0
  %8542 = vmatpush1.msra.mxu0 0.0
  %8543 = vmatprep.subr.mxu0 0.0
  %8544 = vmatpush1.msra.mxu0 0.0
  %8545 = vmatprep.subr.mxu0 0.0
  %8546 = vmatpush1.msra.mxu0 0.0
  %8547 = vmatprep.subr.mxu0 0.0
  %8548 = vmatpush1.msra.mxu0 0.0
  %8549 = vmatprep.subr.mxu0 0.0
  %8550 = vmatpush1.msra.mxu0 0.0
  %8551 = vmatprep.subr.mxu0 0.0
  %8552 = vmatpush1.msra.mxu0 0.0
  %8553 = vmatprep.subr.mxu0 0.0
  %8554 = vmatpush1.msra.mxu0 0.0
  %8555 = vmatprep.mubr.f32.mxu0 0.0
  %8556 = vmatmul.mubr.f32.gmra.mrb[0].mxu0 %v7493
  %v8557 = vpop.f32.mrb[0].mxu0
  %v8558 = vadd.f32 %v8333, %v8557
  %v8559 = vpop.f32.mrb[0].mxu0
  %8560 = vmatprep.mubr.f32.mxu0 0.0
  %8561 = vmatmul.mubr.f32.gmra.mrb[0].mxu0 %v7496
  %v8562 = vpop.f32.mrb[0].mxu0
  %v8563 = vadd.f32 %v8338, %v8562
  %v8564 = vpop.f32.mrb[0].mxu0
  %8565 = vmatprep.mubr.f32.mxu0 0.0
  %8566 = vmatmul.mubr.f32.gmra.mrb[0].mxu0 %v7499
  %v8567 = vpop.f32.mrb[0].mxu0
  %v8568 = vadd.f32 %v8343, %v8567
  %v8569 = vpop.f32.mrb[0].mxu0
  %8570 = vmatprep.mubr.f32.mxu0 0.0
  %8571 = vmatmul.mubr.f32.gmra.mrb[0].mxu0 %v7502
  %v8572 = vpop.f32.mrb[0].mxu0
  %v8573 = vadd.f32 %v8348, %v8572
  %v8574 = vpop.f32.mrb[0].mxu0
  %8575 = vmatprep.mubr.f32.mxu0 0.0
  %8576 = vmatmul.mubr.f32.gmra.mrb[0].mxu0 %v7505
  %v8577 = vpop.f32.mrb[0].mxu0
  %v8578 = vadd.f32 %v8353, %v8577
  %v8579 = vpop.f32.mrb[0].mxu0
  %8580 = vmatprep.mubr.f32.mxu0 0.0
  %8581 = vmatmul.mubr.f32.gmra.mrb[0].mxu0 %v7508
  %v8582 = vpop.f32.mrb[0].mxu0
  %v8583 = vadd.f32 %v8358, %v8582
  %v8584 = vpop.f32.mrb[0].mxu0
  %8585 = vmatprep.mubr.f32.mxu0 0.0
  %8586 = vmatmul.mubr.f32.gmra.mrb[0].mxu0 %v7511
  %v8587 = vpop.f32.mrb[0].mxu0
  %v8588 = vadd.f32 %v8363, %v8587
  %v8589 = vpop.f32.mrb[0].mxu0
  %8590 = vmatprep.mubr.f32.mxu0 0.0
  %8591 = vmatmul.mubr.f32.gmra.mrb[0].mxu0 %v7514
  %v8592 = vpop.f32.mrb[0].mxu0
  %v8593 = vadd.f32 %v8368, %v8592
  %v8594 = vpop.f32.mrb[0].mxu0
  %8595 = vmatprep.mubr.f32.mxu0 0.0
  %8596 = vmatmul.mubr.f32.gmra.mrb[0].mxu0 %v7517
  %v8597 = vpop.f32.mrb[0].mxu0
  %v8598 = vadd.f32 %v8373, %v8597
  %v8599 = vpop.f32.mrb[0].mxu0
  %8600 = vmatprep.mubr.f32.mxu0 0.0
  %8601 = vmatmul.mubr.f32.gmra.mrb[0].mxu0 %v7520
  %v8602 = vpop.f32.mrb[0].mxu0
  %v8603 = vadd.f32 %v8378, %v8602
  %v8604 = vpop.f32.mrb[0].mxu0
  %8605 = vmatprep.mubr.f32.mxu0 0.0
  %8606 = vmatmul.mubr.f32.gmra.mrb[0].mxu0 %v7523
  %v8607 = vpop.f32.mrb[0].mxu0
  %v8608 = vadd.f32 %v8383, %v8607
  %v8609 = vpop.f32.mrb[0].mxu0
  %8610 = vmatprep.mubr.f32.mxu0 0.0
  %8611 = vmatmul.mubr.f32.gmra.mrb[0].mxu0 %v7526
  %v8612 = vpop.f32.mrb[0].mxu0
  %v8613 = vadd.f32 %v8388, %v8612
  %v8614 = vpop.f32.mrb[0].mxu0
  %8615 = vmatprep.mubr.f32.mxu0 0.0
  %8616 = vmatmul.mubr.f32.gmra.mrb[0].mxu0 %v7529
  %v8617 = vpop.f32.mrb[0].mxu0
  %v8618 = vadd.f32 %v8393, %v8617
  %v8619 = vpop.f32.mrb[0].mxu0
  %8620 = vmatprep.mubr.f32.mxu0 0.0
  %8621 = vmatmul.mubr.f32.gmra.mrb[0].mxu0 %v7532
  %v8622 = vpop.f32.mrb[0].mxu0
  %v8623 = vadd.f32 %v8398, %v8622
  %v8624 = vpop.f32.mrb[0].mxu0
  %8625 = vmatprep.mubr.f32.mxu0 0.0
  %8626 = vmatmul.mubr.f32.gmra.mrb[0].mxu0 %v7535
  %v8627 = vpop.f32.mrb[0].mxu0
  %v8628 = vadd.f32 %v8403, %v8627
  %v8629 = vpop.f32.mrb[0].mxu0
  %8630 = vmatprep.mubr.f32.mxu0 0.0
  %8631 = vmatmul.mubr.f32.gmra.mrb[0].mxu0 %v7538
  %v8632 = vpop.f32.mrb[0].mxu0
  %v8633 = vadd.f32 %v8408, %v8632
  %v8634 = vpop.f32.mrb[0].mxu0
  %8635 = vmatprep.mubr.f32.mxu0 0.0
  %8636 = vmatmul.mubr.f32.gmra.mrb[0].mxu0 %v7541
  %v8637 = vpop.f32.mrb[0].mxu0
  %v8638 = vadd.f32 %v8413, %v8637
  %v8639 = vpop.f32.mrb[0].mxu0
  %8640 = vmatprep.mubr.f32.mxu0 0.0
  %8641 = vmatmul.mubr.f32.gmra.mrb[0].mxu0 %v7544
  %v8642 = vpop.f32.mrb[0].mxu0
  %v8643 = vadd.f32 %v8418, %v8642
  %v8644 = vpop.f32.mrb[0].mxu0
  %8645 = vmatprep.mubr.f32.mxu0 0.0
  %8646 = vmatmul.mubr.f32.gmra.mrb[0].mxu0 %v7547
  %v8647 = vpop.f32.mrb[0].mxu0
  %v8648 = vadd.f32 %v8423, %v8647
  %v8649 = vpop.f32.mrb[0].mxu0
  %8650 = vmatprep.mubr.f32.mxu0 0.0
  %8651 = vmatmul.mubr.f32.gmra.mrb[0].mxu0 %v7550
  %v8652 = vpop.f32.mrb[0].mxu0
  %v8653 = vadd.f32 %v8428, %v8652
  %v8654 = vpop.f32.mrb[0].mxu0
  %8655 = vmatprep.mubr.f32.mxu0 0.0
  %8656 = vmatmul.mubr.f32.gmra.mrb[0].mxu0 %v7553
  %v8657 = vpop.f32.mrb[0].mxu0
  %v8658 = vadd.f32 %v8433, %v8657
  %v8659 = vpop.f32.mrb[0].mxu0
  %8660 = vmatprep.mubr.f32.mxu0 0.0
  %8661 = vmatmul.mubr.f32.gmra.mrb[0].mxu0 %v7556
  %v8662 = vpop.f32.mrb[0].mxu0
  %v8663 = vadd.f32 %v8438, %v8662
  %v8664 = vpop.f32.mrb[0].mxu0
  %8665 = vmatprep.mubr.f32.mxu0 0.0
  %8666 = vmatmul.mubr.f32.gmra.mrb[0].mxu0 %v7559
  %v8667 = vpop.f32.mrb[0].mxu0
  %v8668 = vadd.f32 %v8443, %v8667
  %v8669 = vpop.f32.mrb[0].mxu0
  %8670 = vmatprep.mubr.f32.mxu0 0.0
  %8671 = vmatmul.mubr.f32.gmra.mrb[0].mxu0 %v7562
  %v8672 = vpop.f32.mrb[0].mxu0
  %v8673 = vadd.f32 %v8448, %v8672
  %v8674 = vpop.f32.mrb[0].mxu0
  %8675 = vmatprep.mubr.f32.mxu0 0.0
  %8676 = vmatmul.mubr.f32.gmra.mrb[0].mxu0 %v7565
  %v8677 = vpop.f32.mrb[0].mxu0
  %v8678 = vadd.f32 %v8453, %v8677
  %v8679 = vpop.f32.mrb[0].mxu0
  %8680 = vmatprep.mubr.f32.mxu0 0.0
  %8681 = vmatmul.mubr.f32.gmra.mrb[0].mxu0 %v7568
  %v8682 = vpop.f32.mrb[0].mxu0
  %v8683 = vadd.f32 %v8458, %v8682
  %v8684 = vpop.f32.mrb[0].mxu0
  %8685 = vmatprep.mubr.f32.mxu0 0.0
  %8686 = vmatmul.mubr.f32.gmra.mrb[0].mxu0 %v7571
  %v8687 = vpop.f32.mrb[0].mxu0
  %v8688 = vadd.f32 %v8463, %v8687
  %v8689 = vpop.f32.mrb[0].mxu0
  %8690 = vmatprep.mubr.f32.mxu0 0.0
  %8691 = vmatmul.mubr.f32.gmra.mrb[0].mxu0 %v7574
  %v8692 = vpop.f32.mrb[0].mxu0
  %v8693 = vadd.f32 %v8468, %v8692
  %v8694 = vpop.f32.mrb[0].mxu0
  %8695 = vmatprep.mubr.f32.mxu0 0.0
  %8696 = vmatmul.mubr.f32.gmra.mrb[0].mxu0 %v7577
  %v8697 = vpop.f32.mrb[0].mxu0
  %v8698 = vadd.f32 %v8473, %v8697
  %v8699 = vpop.f32.mrb[0].mxu0
  %8700 = vmatprep.mubr.f32.mxu0 0.0
  %8701 = vmatmul.mubr.f32.gmra.mrb[0].mxu0 %v7580
  %v8702 = vpop.f32.mrb[0].mxu0
  %v8703 = vadd.f32 %v8478, %v8702
  %v8704 = vpop.f32.mrb[0].mxu0
  %8705 = vmatprep.mubr.f32.mxu0 0.0
  %8706 = vmatmul.mubr.f32.gmra.mrb[0].mxu0 %v7583
  %v8707 = vpop.f32.mrb[0].mxu0
  %v8708 = vadd.f32 %v8483, %v8707
  %v8709 = vpop.f32.mrb[0].mxu0
  %8710 = vmatprep.mubr.f32.mxu0 0.0
  %8711 = vmatmul.mubr.f32.gmra.mrb[0].mxu0 %v7586
  %v8712 = vpop.f32.mrb[0].mxu0
  %v8713 = vadd.f32 %v8488, %v8712
  %v8714 = vpop.f32.mrb[0].mxu0
  %8715 = vdwg.mxu0
  %8716 = vst.msk [vmem:[%s83 + $0x100] sm:$0xff] %vm7813, %v8558
  %8717 = vst.msk [vmem:[%s83 + $0x108] sm:$0xff] %vm7813, %v8563
  %8718 = vst.msk [vmem:[%s83 + $0x110] sm:$0xff] %vm7813, %v8568
  %8719 = vst.msk [vmem:[%s83 + $0x118] sm:$0xff] %vm7813, %v8573
  %8720 = vst.msk [vmem:[%s83 + $0x120] sm:$0xff] %vm7813, %v8578
  %8721 = vst.msk [vmem:[%s83 + $0x128] sm:$0xff] %vm7813, %v8583
  %8722 = vst.msk [vmem:[%s83 + $0x130] sm:$0xff] %vm7813, %v8588
  %8723 = vst.msk [vmem:[%s83 + $0x138] sm:$0xff] %vm7813, %v8593
  %8724 = vst.msk [vmem:[%s83 + $0x140] sm:$0xff] %vm7813, %v8598
  %8725 = vst.msk [vmem:[%s83 + $0x148] sm:$0xff] %vm7813, %v8603
  %8726 = vst.msk [vmem:[%s83 + $0x150] sm:$0xff] %vm7813, %v8608
  %8727 = vst.msk [vmem:[%s83 + $0x158] sm:$0xff] %vm7813, %v8613
  %8728 = vst.msk [vmem:[%s83 + $0x160] sm:$0xff] %vm7813, %v8618
  %8729 = vst.msk [vmem:[%s83 + $0x168] sm:$0xff] %vm7813, %v8623
  %8730 = vst.msk [vmem:[%s83 + $0x170] sm:$0xff] %vm7813, %v8628
  %8731 = vst.msk [vmem:[%s83 + $0x178] sm:$0xff] %vm7813, %v8633
  %8732 = vst.msk [vmem:[%s83 + $0x180] sm:$0xff] %vm7813, %v8638
  %8733 = vst.msk [vmem:[%s83 + $0x188] sm:$0xff] %vm7813, %v8643
  %8734 = vst.msk [vmem:[%s83 + $0x190] sm:$0xff] %vm7813, %v8648
  %8735 = vst.msk [vmem:[%s83 + $0x198] sm:$0xff] %vm7813, %v8653
  %8736 = vst.msk [vmem:[%s83 + $0x1a0] sm:$0xff] %vm7813, %v8658
  %8737 = vst.msk [vmem:[%s83 + $0x1a8] sm:$0xff] %vm7813, %v8663
  %8738 = vst.msk [vmem:[%s83 + $0x1b0] sm:$0xff] %vm7813, %v8668
  %8739 = vst.msk [vmem:[%s83 + $0x1b8] sm:$0xff] %vm7813, %v8673
  %8740 = vst.msk [vmem:[%s83 + $0x1c0] sm:$0xff] %vm7813, %v8678
  %8741 = vst.msk [vmem:[%s83 + $0x1c8] sm:$0xff] %vm7813, %v8683
  %8742 = vst.msk [vmem:[%s83 + $0x1d0] sm:$0xff] %vm7813, %v8688
  %8743 = vst.msk [vmem:[%s83 + $0x1d8] sm:$0xff] %vm7813, %v8693
  %8744 = vst.msk [vmem:[%s83 + $0x1e0] sm:$0xff] %vm7813, %v8698
  %8745 = vst.msk [vmem:[%s83 + $0x1e8] sm:$0xff] %vm7813, %v8703
  %8746 = vst.msk [vmem:[%s83 + $0x1f0] sm:$0xff] %vm7813, %v8708
  %8747 = vst.msk [vmem:[%s83 + $0x1f8] sm:$0xff] %vm7813, %v8713
  // Predicated region
  $region166: #{aegis_forward.1} parent=0 // pred_check
    _
  $region167: #{aegis_forward.1} parent=0 // pred_check_branch
    %8749 = sbr.rel (0) target = $region169
  $region168: #{aegis_forward.1} parent=0 // pred_region
    _
  $region169: #{aegis_forward.1} parent=0 // pred_fallthru
    _
  // Predicated region
  $region170: #{aegis_forward.1} parent=0 // pred_check
    _
  $region171: #{aegis_forward.1} parent=0 // pred_check_branch
    %8751 = sbr.rel (0) target = $region173
  $region172: #{aegis_forward.1} parent=0 // pred_region
    _
  $region173: #{aegis_forward.1} parent=0 // pred_fallthru
    _

</llo_original>
